<compile_context>
chip_gen: v7x
topology: tpu7x:2x2x1
jax: 0.10.0
libtpu: 0.0.40
codegen_flags: <defaults>
</compile_context>

<pallas_src>
import functools

import jax
import jax.numpy as jnp
import numpy as np
from jax import lax
from jax.experimental import pallas as pl
from jax.experimental.pallas import tpu as pltpu


# ----------------------------------------------------------------------------
# Helpers: full-array blocks that are identical for every grid step.
# ----------------------------------------------------------------------------
def _const_spec2(shape):  # for the 2-D grid of the point-wise MLP
    nd = len(shape)
    return pl.BlockSpec(shape, lambda b, j, _nd=nd: (0,) * _nd)


def _const_spec1(shape):  # for the 1-D grid of the FC head
    nd = len(shape)
    return pl.BlockSpec(shape, lambda i, _nd=nd: (0,) * _nd)


# ----------------------------------------------------------------------------
# Kernel 1: point-wise MLP (conv1/2/3 + folded BN + ReLU) on one (k, TN) tile
# of one batch element, with a running global max-pool over the points axis
# accumulated directly in the resident (1, 1024) output block.
#   x_ref : (k, TN) f32   w*_ref: (Cin, Cout) bf16   b*_ref: (1, Cout) f32
#   out_ref: (1, 1024) f32 -- running max; bias+ReLU applied in finalize.
# ----------------------------------------------------------------------------
def _pointwise_mlp_kernel(x_ref, w1_ref, b1_ref, w2_ref, b2_ref, w3_ref, b3_ref,
                          out_ref, *, n_points, tile_n, mask_tail):
    j = pl.program_id(1)

    @pl.when(j == 0)
    def _init():
        out_ref[...] = jnp.full(out_ref.shape, -jnp.inf, dtype=out_ref.dtype)

    x = x_ref[...]                                       # (k, TN), channel-major
    if mask_tail:
        # Last tile overhangs N: zero the garbage columns before the matmul.
        col = lax.broadcasted_iota(jnp.int32, (1, tile_n), 1) + j * tile_n
        x = jnp.where(col < n_points, x, 0.0)
    xb = x.astype(jnp.bfloat16)

    # conv1: contract the channel axis of both operands directly (no explicit
    # lane-sparse (TN, k) transpose in the kernel).
    h1 = jnp.maximum(
        lax.dot_general(xb, w1_ref[...],
                        dimension_numbers=(((0,), (0,)), ((), ())),
                        preferred_element_type=jnp.float32) + b1_ref[...], 0.0)
    h2 = jnp.maximum(
        jnp.dot(h1.astype(jnp.bfloat16), w2_ref[...],
                preferred_element_type=jnp.float32) + b2_ref[...], 0.0)

    # conv3: RAW matmul only -- its bias-add and ReLU commute with the max
    # over points and are applied once in the finalize branch, keeping the
    # (TN, 1024) per-tile epilogue off the VPU.
    d3 = jnp.dot(h2.astype(jnp.bfloat16), w3_ref[...],
                 preferred_element_type=jnp.float32)       # (TN, 1024) f32
    if mask_tail:
        # Invalid points (zeroed inputs) still produce finite rows; push them
        # to -inf so they cannot win the max.
        row = lax.broadcasted_iota(jnp.int32, (tile_n, 1), 0) + j * tile_n
        d3 = jnp.where(row < n_points, d3, -jnp.inf)

    # torch.max(out, 2)[0]: running max over point tiles, accumulated in the
    # resident output block (its index_map ignores j).
    out_ref[...] = jnp.maximum(out_ref[...], jnp.max(d3, axis=0, keepdims=True))

    @pl.when(j == pl.num_programs(1) - 1)
    def _finalize():
        out_ref[...] = jnp.maximum(out_ref[...] + b3_ref[...], 0.0)


# ----------------------------------------------------------------------------
# Kernel 2: FC head (fc1/fc2 + folded BN + ReLU, fc3, + flattened identity).
#   g_ref: (TB, 1024)   eye_ref: (1, k*k)   out_ref: (TB, k*k)
# ----------------------------------------------------------------------------
def _fc_head_kernel(g_ref, w4_ref, b4_ref, w5_ref, b5_ref, w6_ref, b6_ref,
                    eye_ref, out_ref):
    g = g_ref[...].astype(jnp.bfloat16)
    h4 = jnp.maximum(
        jnp.dot(g, w4_ref[...], preferred_element_type=jnp.float32)
        + b4_ref[...], 0.0)
    h5 = jnp.maximum(
        jnp.dot(h4.astype(jnp.bfloat16), w5_ref[...],
                preferred_element_type=jnp.float32) + b5_ref[...], 0.0)
    out = jnp.dot(h5.astype(jnp.bfloat16), w6_ref[...],
                  preferred_element_type=jnp.float32) + b6_ref[...]
    out_ref[...] = out + eye_ref[...]


# ----------------------------------------------------------------------------
# Wrappers
# ----------------------------------------------------------------------------
def pointwise_mlp(x_ncl, w1, b1, w2, b2, w3, b3, *, tn=2048):
    """x_ncl: (B, k, N) NCL input -> (B, 1024) global feature."""
    B, K, N = x_ncl.shape
    # Lane-aligned point tile, no larger than N rounded up to the next 128.
    tn = int(min(tn, 128 * pl.cdiv(N, 128)))
    n_tiles = int(pl.cdiv(N, tn))
    mask_tail = (N % tn) != 0      # static: last tile overhangs N -> mask it

    kernel = functools.partial(_pointwise_mlp_kernel,
                               n_points=N, tile_n=tn, mask_tail=mask_tail)

    pooled = pl.pallas_call(
        kernel,
        out_shape=jax.ShapeDtypeStruct((B, 1, 1024), jnp.float32),
        grid=(B, n_tiles),
        in_specs=[
            pl.BlockSpec((None, K, tn), lambda b, j: (b, 0, j)),
            _const_spec2(w1.shape), _const_spec2(b1.shape),
            _const_spec2(w2.shape), _const_spec2(b2.shape),
            _const_spec2(w3.shape), _const_spec2(b3.shape),
        ],
        out_specs=pl.BlockSpec((None, 1, 1024), lambda b, j: (b, 0, 0)),
        compiler_params=pltpu.CompilerParams(
            dimension_semantics=("parallel", "arbitrary"),
            vmem_limit_bytes=32 * 1024 * 1024),
    )(x_ncl, w1, b1, w2, b2, w3, b3)
    return pooled.reshape(B, 1024)


def fc_head(g, w4, b4, w5, b5, w6, b6, eye_flat):
    """g: (B, 1024) -> (B, k*k) with the flattened identity added."""
    B, F = g.shape
    kk = w6.shape[1]
    tb = B if B <= 256 else 256
    pad = (-B) % tb
    if pad:
        g = jnp.concatenate([g, jnp.zeros((pad, F), g.dtype)], axis=0)
    b_padded = B + pad

    out = pl.pallas_call(
        _fc_head_kernel,
        out_shape=jax.ShapeDtypeStruct((b_padded, kk), jnp.float32),
        grid=(b_padded // tb,),
        in_specs=[
            pl.BlockSpec((tb, F), lambda i: (i, 0)),
            _const_spec1(w4.shape), _const_spec1(b4.shape),
            _const_spec1(w5.shape), _const_spec1(b5.shape),
            _const_spec1(w6.shape), _const_spec1(b6.shape),
            _const_spec1(eye_flat.shape),
        ],
        out_specs=pl.BlockSpec((tb, kk), lambda i: (i, 0)),
        compiler_params=pltpu.CompilerParams(
            dimension_semantics=("parallel",),
            vmem_limit_bytes=32 * 1024 * 1024),
    )(g, w4, b4, w5, b5, w6, b6, eye_flat)
    return out[:B]


# ----------------------------------------------------------------------------
# Parameter handling (eval-mode BN folded into bf16 weights, f32 biases).
# ----------------------------------------------------------------------------
def _fold_bn(w, b, gamma, beta, mean, var, eps=1e-5):
    s = gamma / jnp.sqrt(var + eps)
    w_eff = (w * s[None, :]).astype(jnp.bfloat16)
    b_eff = ((b - mean) * s + beta).reshape(1, -1).astype(jnp.float32)
    return w_eff, b_eff


def init_params(key, k):
    """Deterministic parameters matching the PyTorch module's shapes."""
    dims = [
        ("conv1", k, 64, True),
        ("conv2", 64, 128, True),
        ("conv3", 128, 1024, True),
        ("fc1", 1024, 512, True),
        ("fc2", 512, 256, True),
        ("fc3", 256, k * k, False),
    ]
    params = {}
    keys = jax.random.split(key, len(dims) * 6)
    i = 0
    for name, cin, cout, has_bn in dims:
        bound = 1.0 / np.sqrt(cin)
        w = jax.random.uniform(keys[i], (cin, cout), jnp.float32, -bound, bound)
        b = jax.random.uniform(keys[i + 1], (cout,), jnp.float32, -bound, bound)
        params[name] = {"w": w, "b": b}
        if has_bn:
            params[name]["gamma"] = 1.0 + 0.1 * jax.random.uniform(
                keys[i + 2], (cout,), jnp.float32, -1.0, 1.0)
            params[name]["beta"] = 0.1 * jax.random.uniform(
                keys[i + 3], (cout,), jnp.float32, -1.0, 1.0)
            params[name]["mean"] = 0.1 * jax.random.uniform(
                keys[i + 4], (cout,), jnp.float32, -1.0, 1.0)
            params[name]["var"] = 1.0 + 0.1 * jax.random.uniform(
                keys[i + 5], (cout,), jnp.float32, 0.0, 1.0)
        i += 6
    return params


def fold_params(params):
    folded = {}
    for name in ("conv1", "conv2", "conv3", "fc1", "fc2"):
        p = params[name]
        folded[name] = _fold_bn(p["w"], p["b"], p["gamma"], p["beta"],
                                p["mean"], p["var"])
    p = params["fc3"]
    folded["fc3"] = (p["w"].astype(jnp.bfloat16),
                     p["b"].reshape(1, -1).astype(jnp.float32))
    return folded


# ----------------------------------------------------------------------------
# Full forward pass (same semantics as the PyTorch module in eval mode).
# ----------------------------------------------------------------------------
def spatial_transformer_dim_k(x_ncl, folded, k, *, tn=2048):
    """x_ncl: (B, k, N) exactly like the PyTorch module."""
    g = pointwise_mlp(x_ncl, *folded["conv1"], *folded["conv2"],
                      *folded["conv3"], tn=tn)
    eye_flat = jnp.eye(k, dtype=jnp.float32).reshape(1, k * k)
    out = fc_head(g, *folded["fc1"], *folded["fc2"], *folded["fc3"], eye_flat)
    return out.reshape(-1, k, k)


def reference(x_ncl, folded, k):
    """Pure-JAX reference with identical folded-BN / bf16-matmul policy."""
    f = folded

    def mm(a, w, b):
        return jnp.dot(a.astype(jnp.bfloat16), w,
                       preferred_element_type=jnp.float32) + b

    x = jnp.transpose(x_ncl, (0, 2, 1))  # (B, N, k)
    h = jnp.maximum(mm(x, *f["conv1"]), 0.0)
    h = jnp.maximum(mm(h, *f["conv2"]), 0.0)
    h = jnp.maximum(mm(h, *f["conv3"]), 0.0)
    g = jnp.max(h, axis=1)               # (B, 1024)
    h = jnp.maximum(mm(g, *f["fc1"]), 0.0)
    h = jnp.maximum(mm(h, *f["fc2"]), 0.0)
    out = mm(h, *f["fc3"])
    out = out + jnp.eye(k, dtype=jnp.float32).reshape(1, k * k)
    return out.reshape(-1, k, k)


if __name__ == "__main__":
    # batch=2, k=16 channels, 1200 points (not a multiple of 128 -> exercises
    # the in-kernel tail mask; N kept small for a quick test).
    B, K, N = 2, 16, 1200
    key = jax.random.PRNGKey(0)
    kx, kp = jax.random.split(key)
    x = jax.random.normal(kx, (B, K, N), dtype=jnp.float32)  # NCL, like PyTorch
    params = init_params(kp, K)
    folded = fold_params(params)

    ref = reference(x, folded, K)

    # Default large tile (clamped to round_up(N,128)): single masked tile.
    out = spatial_transformer_dim_k(x, folded, K)
    out = jax.block_until_ready(out)
    assert out.shape == (B, K, K), out.shape
    assert bool(jnp.allclose(out, ref, atol=2e-2, rtol=2e-2)), "mismatch (default tn)"

    # Small tile: multi-tile max accumulation + masked last tile.
    out2 = spatial_transformer_dim_k(x, folded, K, tn=512)
    out2 = jax.block_until_ready(out2)
    assert bool(jnp.allclose(out2, ref, atol=2e-2, rtol=2e-2)), "mismatch (tn=512)"

    print("KERNEL_OK")
</pallas_src>

<mosaic_0001>
module attributes {stable_mosaic.version = 11 : i64} {
  func.func @_pointwise_mlp_kernel(%arg0: i32, %arg1: i32, %arg2: memref<1x16x1280xf32, #tpu.memory_space<vmem>>, %arg3: memref<16x64xbf16, #tpu.memory_space<vmem>>, %arg4: memref<1x64xf32, #tpu.memory_space<vmem>>, %arg5: memref<64x128xbf16, #tpu.memory_space<vmem>>, %arg6: memref<1x128xf32, #tpu.memory_space<vmem>>, %arg7: memref<128x1024xbf16, #tpu.memory_space<vmem>>, %arg8: memref<1x1024xf32, #tpu.memory_space<vmem>>, %arg9: memref<1x1x1024xf32, #tpu.memory_space<vmem>>) attributes {dimension_semantics = [#tpu.dimension_semantics<parallel>, #tpu.dimension_semantics<arbitrary>], iteration_bounds = array<i64: 2, 1>, scalar_prefetch = 0 : i64, scratch_operands = 0 : i64, tpu.core_type = #tpu.core_type<tc>, window_params = [{transform_indices = @transform_0, window_bounds = array<i64: 1, 16, 1280>}, {pipeline_mode = #tpu.pipeline_mode<synchronous>, transform_indices = @transform_1, window_bounds = array<i64: 16, 64>}, {pipeline_mode = #tpu.pipeline_mode<synchronous>, transform_indices = @transform_2, window_bounds = array<i64: 1, 64>}, {pipeline_mode = #tpu.pipeline_mode<synchronous>, transform_indices = @transform_3, window_bounds = array<i64: 64, 128>}, {pipeline_mode = #tpu.pipeline_mode<synchronous>, transform_indices = @transform_4, window_bounds = array<i64: 1, 128>}, {pipeline_mode = #tpu.pipeline_mode<synchronous>, transform_indices = @transform_5, window_bounds = array<i64: 128, 1024>}, {pipeline_mode = #tpu.pipeline_mode<synchronous>, transform_indices = @transform_6, window_bounds = array<i64: 1, 1024>}, {transform_indices = @transform_7, window_bounds = array<i64: 1, 1, 1024>}]} {
    %c0_i32 = arith.constant 0 : i32
    %0 = arith.cmpi eq, %arg1, %c0_i32 : i32
    %1 = arith.extui %0 : i1 to i32
    %c0_i32_0 = arith.constant 0 : i32
    %2 = arith.cmpi ne, %1, %c0_i32_0 : i32
    scf.if %2 {
      %cst_30 = arith.constant 0xFF800000 : f32
      %55 = vector.broadcast %cst_30 : f32 to vector<1x1024xf32>
      %c0_31 = arith.constant 0 : index
      %c0_32 = arith.constant 0 : index
      %c0_33 = arith.constant 0 : index
      %56 = vector.load %arg9[%c0_31, %c0_32, %c0_33] : memref<1x1x1024xf32, #tpu.memory_space<vmem>>, vector<1x1x1024xf32>
      %57 = vector.shape_cast %56 : vector<1x1x1024xf32> to vector<1x1024xf32>
      %58 = vector.shape_cast %55 : vector<1x1024xf32> to vector<1x1x1024xf32>
      tpu.vector_store %arg9[%c0_31, %c0_32, %c0_33], %58 {strides = array<i32>} : memref<1x1x1024xf32, #tpu.memory_space<vmem>>, vector<1x1x1024xf32>,
    } else {
    }
    %c0 = arith.constant 0 : index
    %c0_1 = arith.constant 0 : index
    %c0_2 = arith.constant 0 : index
    %3 = vector.load %arg2[%c0, %c0_1, %c0_2] : memref<1x16x1280xf32, #tpu.memory_space<vmem>>, vector<1x16x1280xf32>
    %4 = vector.shape_cast %3 : vector<1x16x1280xf32> to vector<16x1280xf32>
    %5 = tpu.iota {dimensions = array<i32: 1>} : vector<1x1280xi32>
    %c1280_i32 = arith.constant 1280 : i32
    %6 = arith.muli %arg1, %c1280_i32 : i32
    %7 = vector.broadcast %6 : i32 to vector<1x1280xi32>
    %8 = arith.addi %5, %7 : vector<1x1280xi32>
    %c1200_i32 = arith.constant 1200 : i32
    %9 = vector.broadcast %c1200_i32 : i32 to vector<1x1280xi32>
    %10 = arith.cmpi slt, %8, %9 : vector<1x1280xi32>
    %cst = arith.constant 0.000000e+00 : f32
    %11 = vector.shape_cast %10 : vector<1x1280xi1> to vector<1x1280xi1>
    %12 = vector.broadcast %11 : vector<1x1280xi1> to vector<16x1280xi1>
    %13 = vector.broadcast %cst : f32 to vector<16x1280xf32>
    %14 = arith.select %12, %4, %13 : vector<16x1280xi1>, vector<16x1280xf32>
    %15 = arith.truncf %14 : vector<16x1280xf32> to vector<16x1280xbf16>
    %c0_3 = arith.constant 0 : index
    %c0_4 = arith.constant 0 : index
    %16 = vector.load %arg3[%c0_3, %c0_4] : memref<16x64xbf16, #tpu.memory_space<vmem>>, vector<16x64xbf16>
    %cst_5 = arith.constant dense<0.000000e+00> : vector<1280x64xf32>
    %17 = tpu.matmul %15, %16, %cst_5 {dimension_numbers = #tpu.dot_dimension_numbers<[0], [0], [1], [1], [0, 1, 1, 1], [], []>} : vector<16x1280xbf16>, vector<16x64xbf16>, vector<1280x64xf32> -> vector<1280x64xf32>
    %c0_6 = arith.constant 0 : index
    %c0_7 = arith.constant 0 : index
    %18 = vector.load %arg4[%c0_6, %c0_7] : memref<1x64xf32, #tpu.memory_space<vmem>>, vector<1x64xf32>
    %19 = vector.broadcast %18 : vector<1x64xf32> to vector<1280x64xf32>
    %20 = arith.addf %17, %19 : vector<1280x64xf32>
    %cst_8 = arith.constant 0.000000e+00 : f32
    %21 = vector.broadcast %cst_8 : f32 to vector<1280x64xf32>
    %22 = arith.maximumf %20, %21 : vector<1280x64xf32>
    %23 = arith.truncf %22 : vector<1280x64xf32> to vector<1280x64xbf16>
    %c0_9 = arith.constant 0 : index
    %c0_10 = arith.constant 0 : index
    %24 = vector.load %arg5[%c0_9, %c0_10] : memref<64x128xbf16, #tpu.memory_space<vmem>>, vector<64x128xbf16>
    %cst_11 = arith.constant dense<0.000000e+00> : vector<1280x128xf32>
    %25 = tpu.matmul %23, %24, %cst_11 {dimension_numbers = #tpu.dot_dimension_numbers<[1], [0], [0], [1], [0, 0, 1, 1], [], []>} : vector<1280x64xbf16>, vector<64x128xbf16>, vector<1280x128xf32> -> vector<1280x128xf32>
    %c0_12 = arith.constant 0 : index
    %c0_13 = arith.constant 0 : index
    %26 = vector.load %arg6[%c0_12, %c0_13] : memref<1x128xf32, #tpu.memory_space<vmem>>, vector<1x128xf32>
    %27 = vector.broadcast %26 : vector<1x128xf32> to vector<1280x128xf32>
    %28 = arith.addf %25, %27 : vector<1280x128xf32>
    %cst_14 = arith.constant 0.000000e+00 : f32
    %29 = vector.broadcast %cst_14 : f32 to vector<1280x128xf32>
    %30 = arith.maximumf %28, %29 : vector<1280x128xf32>
    %31 = arith.truncf %30 : vector<1280x128xf32> to vector<1280x128xbf16>
    %c0_15 = arith.constant 0 : index
    %c0_16 = arith.constant 0 : index
    %32 = vector.load %arg7[%c0_15, %c0_16] : memref<128x1024xbf16, #tpu.memory_space<vmem>>, vector<128x1024xbf16>
    %cst_17 = arith.constant dense<0.000000e+00> : vector<1280x1024xf32>
    %33 = tpu.matmul %31, %32, %cst_17 {dimension_numbers = #tpu.dot_dimension_numbers<[1], [0], [0], [1], [0, 0, 1, 1], [], []>} : vector<1280x128xbf16>, vector<128x1024xbf16>, vector<1280x1024xf32> -> vector<1280x1024xf32>
    %34 = tpu.iota {dimensions = array<i32: 0>} : vector<1280x1xi32>
    %c1280_i32_18 = arith.constant 1280 : i32
    %35 = arith.muli %arg1, %c1280_i32_18 : i32
    %36 = vector.broadcast %35 : i32 to vector<1280x1xi32>
    %37 = arith.addi %34, %36 : vector<1280x1xi32>
    %c1200_i32_19 = arith.constant 1200 : i32
    %38 = vector.broadcast %c1200_i32_19 : i32 to vector<1280x1xi32>
    %39 = arith.cmpi slt, %37, %38 : vector<1280x1xi32>
    %cst_20 = arith.constant 0xFF800000 : f32
    %40 = vector.shape_cast %39 : vector<1280x1xi1> to vector<1280x1xi1>
    %41 = vector.broadcast %40 : vector<1280x1xi1> to vector<1280x1024xi1>
    %42 = vector.broadcast %cst_20 : f32 to vector<1280x1024xf32>
    %43 = arith.select %41, %33, %42 : vector<1280x1024xi1>, vector<1280x1024xf32>
    %c0_21 = arith.constant 0 : index
    %c0_22 = arith.constant 0 : index
    %c0_23 = arith.constant 0 : index
    %44 = vector.load %arg9[%c0_21, %c0_22, %c0_23] : memref<1x1x1024xf32, #tpu.memory_space<vmem>>, vector<1x1x1024xf32>
    %45 = vector.shape_cast %44 : vector<1x1x1024xf32> to vector<1x1024xf32>
    %cst_24 = arith.constant dense<0xFF800000> : vector<1024xf32>
    %46 = vector.multi_reduction <maximumf>, %43, %cst_24 [0] : vector<1280x1024xf32> to vector<1024xf32>
    %47 = vector.shape_cast %46 : vector<1024xf32> to vector<1x1024xf32>
    %48 = arith.maximumf %45, %47 : vector<1x1024xf32>
    %c0_25 = arith.constant 0 : index
    %c0_26 = arith.constant 0 : index
    %c0_27 = arith.constant 0 : index
    %49 = vector.load %arg9[%c0_25, %c0_26, %c0_27] : memref<1x1x1024xf32, #tpu.memory_space<vmem>>, vector<1x1x1024xf32>
    %50 = vector.shape_cast %49 : vector<1x1x1024xf32> to vector<1x1024xf32>
    %51 = vector.shape_cast %48 : vector<1x1024xf32> to vector<1x1x1024xf32>
    tpu.vector_store %arg9[%c0_25, %c0_26, %c0_27], %51 {strides = array<i32>} : memref<1x1x1024xf32, #tpu.memory_space<vmem>>, vector<1x1x1024xf32>,
    %c0_i32_28 = arith.constant 0 : i32
    %52 = arith.cmpi eq, %arg1, %c0_i32_28 : i32
    %53 = arith.extui %52 : i1 to i32
    %c0_i32_29 = arith.constant 0 : i32
    %54 = arith.cmpi ne, %53, %c0_i32_29 : i32
    scf.if %54 {
      %c0_30 = arith.constant 0 : index
      %c0_31 = arith.constant 0 : index
      %c0_32 = arith.constant 0 : index
      %55 = vector.load %arg9[%c0_30, %c0_31, %c0_32] : memref<1x1x1024xf32, #tpu.memory_space<vmem>>, vector<1x1x1024xf32>
      %56 = vector.shape_cast %55 : vector<1x1x1024xf32> to vector<1x1024xf32>
      %c0_33 = arith.constant 0 : index
      %c0_34 = arith.constant 0 : index
      %57 = vector.load %arg8[%c0_33, %c0_34] : memref<1x1024xf32, #tpu.memory_space<vmem>>, vector<1x1024xf32>
      %58 = arith.addf %56, %57 : vector<1x1024xf32>
      %cst_35 = arith.constant 0.000000e+00 : f32
      %59 = vector.broadcast %cst_35 : f32 to vector<1x1024xf32>
      %60 = arith.maximumf %58, %59 : vector<1x1024xf32>
      %c0_36 = arith.constant 0 : index
      %c0_37 = arith.constant 0 : index
      %c0_38 = arith.constant 0 : index
      %61 = vector.load %arg9[%c0_36, %c0_37, %c0_38] : memref<1x1x1024xf32, #tpu.memory_space<vmem>>, vector<1x1x1024xf32>
      %62 = vector.shape_cast %61 : vector<1x1x1024xf32> to vector<1x1024xf32>
      %63 = vector.shape_cast %60 : vector<1x1024xf32> to vector<1x1x1024xf32>
      tpu.vector_store %arg9[%c0_36, %c0_37, %c0_38], %63 {strides = array<i32>} : memref<1x1x1024xf32, #tpu.memory_space<vmem>>, vector<1x1x1024xf32>,
    } else {
    }
    return
  }
  func.func @transform_0(%arg0: i32, %arg1: i32) -> (i32, i32, i32) {
    %c0_i32 = arith.constant 0 : i32
    %c0_i32_0 = arith.constant 0 : i32
    return %arg0, %c0_i32, %arg1 : i32, i32, i32
  }
  func.func @transform_1(%arg0: i32, %arg1: i32) -> (i32, i32) {
    %c0_i32 = arith.constant 0 : i32
    %c0_i32_0 = arith.constant 0 : i32
    %c0_i32_1 = arith.constant 0 : i32
    return %c0_i32, %c0_i32_0 : i32, i32
  }
  func.func @transform_2(%arg0: i32, %arg1: i32) -> (i32, i32) {
    %c0_i32 = arith.constant 0 : i32
    %c0_i32_0 = arith.constant 0 : i32
    %c0_i32_1 = arith.constant 0 : i32
    return %c0_i32, %c0_i32_0 : i32, i32
  }
  func.func @transform_3(%arg0: i32, %arg1: i32) -> (i32, i32) {
    %c0_i32 = arith.constant 0 : i32
    %c0_i32_0 = arith.constant 0 : i32
    %c0_i32_1 = arith.constant 0 : i32
    return %c0_i32, %c0_i32_0 : i32, i32
  }
  func.func @transform_4(%arg0: i32, %arg1: i32) -> (i32, i32) {
    %c0_i32 = arith.constant 0 : i32
    %c0_i32_0 = arith.constant 0 : i32
    %c0_i32_1 = arith.constant 0 : i32
    return %c0_i32, %c0_i32_0 : i32, i32
  }
  func.func @transform_5(%arg0: i32, %arg1: i32) -> (i32, i32) {
    %c0_i32 = arith.constant 0 : i32
    %c0_i32_0 = arith.constant 0 : i32
    %c0_i32_1 = arith.constant 0 : i32
    return %c0_i32, %c0_i32_0 : i32, i32
  }
  func.func @transform_6(%arg0: i32, %arg1: i32) -> (i32, i32) {
    %c0_i32 = arith.constant 0 : i32
    %c0_i32_0 = arith.constant 0 : i32
    %c0_i32_1 = arith.constant 0 : i32
    return %c0_i32, %c0_i32_0 : i32, i32
  }
  func.func @transform_7(%arg0: i32, %arg1: i32) -> (i32, i32, i32) {
    %c0_i32 = arith.constant 0 : i32
    %c0_i32_0 = arith.constant 0 : i32
    %c0_i32_1 = arith.constant 0 : i32
    return %arg0, %c0_i32, %c0_i32_0 : i32, i32, i32
  }
}

</mosaic_0001>

<llo_original>
// kernel: tpu_custom_call.1
$region0: #{tpu_custom_call.1}
  #allocation0 [shape = 'u32[]', space=smem, size = 0x4, offset = 0x4, fixed_abs, tag = 'smem constant byte address 0x4 - core index']
  #allocation1 [shape = 'u32[144,128]{1,0:T(1,128)}', space=vmem, size = 0x12000, scoped, tag = 'internal scratch']
  %s0 = inlined_call_operand.hbm [shape: f32[2,16,1200], index: 0, kind: input, shape index: {}]
  %s1 = inlined_call_operand.hbm [shape: bf16[16,64], index: 1, kind: input, shape index: {}]
  %s2 = inlined_call_operand.vmem [shape: f32[1,64], index: 2, kind: input, shape index: {}]
  %s3 = inlined_call_operand.hbm [shape: bf16[64,128], index: 3, kind: input, shape index: {}]
  %s4 = inlined_call_operand.vmem [shape: f32[1,128], index: 4, kind: input, shape index: {}]
  %s5 = inlined_call_operand.hbm [shape: bf16[128,1024], index: 5, kind: input, shape index: {}]
  %s6 = inlined_call_operand.vmem [shape: f32[1,1024], index: 6, kind: input, shape index: {}]
  %s7 = inlined_call_operand.hbm [shape: f32[2,1,1024], index: 7, kind: output, shape index: {}]
  %s8 = sld [smem:[#allocation0]]
  $region85: #{tpu_custom_call.1} parent=0
    _
  %s10 = ssub.s32 1, %s8
  %s11 = scalar_select 0, %s10, %s8
  $region1: #{tpu_custom_call.1} parent=0
    #allocation2 [shape = 'u8[163840]{0}', space=vmem, size = 0x28000, scoped, tag = 'input window, operand 0']
    #allocation3 [shape = 's32[2]{0}', space=sflag, size = 0x8, scoped, tag = 'scoped memory for tpu_custom_call.1']
    #allocation4 [shape = 's32[2]{0}', space=sflag, size = 0x8, scoped, tag = 'scoped memory for tpu_custom_call.1']
    #allocation5 [shape = 'u8[4096]{0}', space=vmem, size = 0x1000, scoped, tag = 'input window, operand 1, single buffered']
    #allocation6 [shape = 's32[1]{0}', space=sflag, size = 0x4, scoped, tag = 'scoped memory for tpu_custom_call.1']
    #allocation7 [shape = 'u8[16384]{0}', space=vmem, size = 0x4000, scoped, tag = 'input window, operand 3, single buffered']
    #allocation8 [shape = 'u8[262144]{0}', space=vmem, size = 0x40000, scoped, tag = 'input window, operand 5, single buffered']
    #allocation9 [shape = 's32[1]{0}', space=sflag, size = 0x4, scoped, tag = 'scoped memory for tpu_custom_call.1']
    #allocation10 [shape = 'u8[8192]{0}', space=vmem, size = 0x2000, scoped, tag = 'output window, operand 0']
    %12 = vsyncpa [#allocation3], 0
    %s13 = scalar_lea.sflag [#allocation3], 1
    %14 = vsyncpa %s13, 0
    %15 = vsyncpa [#allocation6], 0
    %16 = vsyncpa [#allocation9], 0
    %17 = vsyncpa [#allocation4], 0
    %s18 = scalar_lea.sflag [#allocation4], 1
    %19 = vsyncpa %s18, 0
    loop: start=0, step=1, limit=4
    $region2: #{tpu_custom_call.1} parent=1 // loop_pre_header
      _
    $region3: #{tpu_custom_call.1} parent=1 // loop_header
      %s21 = sphi 0, %s25
      %p22 = scmp.ge.s32.totalorder %s21, 4
      %s28 = sphi 0, %s40
      %s29 = sphi 0, %s36
      %s30 = sphi 0, %s28
      %s31 = sphi 0, %s29
      %s32 = sphi 0, %s30
      %s33 = sphi 0, %s31
      %s45 = sphi 0, %s47
      %s48 = sphi 0, %s45
      %s49 = sphi 0, %s48
      %s65 = sphi 0, %s49
      %s69 = sphi 0, %s69
      %s71 = sphi 0, %s69
      %s72 = sphi 0, %s71
      %s86 = sphi 0, %s72
      %s90 = sphi 0, %s90
      %s92 = sphi 0, %s90
      %s93 = sphi 0, %s92
      %s107 = sphi 0, %s93
      %s111 = sphi 0, %s111
      %s113 = sphi 0, %s111
      %s114 = sphi 0, %s113
      %s128 = sphi 0, %s114
      %s132 = sphi 0, %s132
      %s134 = sphi 0, %s132
      %s135 = sphi 0, %s134
      %s149 = sphi 0, %s135
      %s153 = sphi 0, %s153
      %s155 = sphi 0, %s153
      %s156 = sphi 0, %s155
      %s170 = sphi 0, %s156
      %s174 = sphi 0, %s174
      %s176 = sphi 0, %s174
      %s177 = sphi 0, %s176
      %s191 = sphi 0, %s177
      %s197 = sphi 0, %s199
      %s200 = sphi 0, %s197
      %s201 = sphi 0, %s200
      %s217 = sphi 0, %s201
    $region4: #{tpu_custom_call.1} parent=1 // loop_header_branch
      %24 = sbr.rel (%p22) target = $region8
    $region5: #{tpu_custom_call.1} parent=1 // loop_body
      %s26 = ssub.s32 %s21, 1
      %s27 = ssub.s32 %s21, 2
      %s34 = sadd.s32 1, %s29
      %p35 = scmp.ge.s32.totalorder %s34, 1
      %s36 = scalar_select %p35, 0, %s34
      %s37 = sadd.s32 1, %s28
      %s38 = scalar_select %p35, %s37, %s28
      %p39 = scmp.ge.s32.totalorder %s38, 2
      %s40 = scalar_select %p39, 0, %s38
      %s41 = ssub.s32 %s28, %s40
      %s42 = ssub.s32 %s29, %s36
      %s43 = sor.u32 %s41, %s42
      %p44 = scmp.eq.s32.totalorder %s43, 0
      %s46 = sadd.s32 %s45, 1
      %s47 = scalar_select %p44, %s45, %s46
      %p50 = pneg %p44
      %p51 = scmp.eq.s32.totalorder %s21, 1
      %p52 = por %p50, %p51
      %p53 = scmp.ne.s32.totalorder %s45, %s48
      %p54 = scmp.eq.s32.totalorder %s21, 0
      %p55 = por %p53, %p54
      %p56 = scmp.ne.s32.totalorder %s45, %s48
      %p57 = scmp.eq.s32.totalorder %s26, 1
      %p58 = por %p56, %p57
      %p59 = scmp.ne.s32.totalorder %s48, %s49
      %p60 = scmp.eq.s32.totalorder %s26, 0
      %p61 = por %p59, %p60
      %p62 = scmp.ne.s32.totalorder %s48, %s49
      %p63 = scmp.eq.s32.totalorder %s27, 1
      %p64 = por %p62, %p63
      %p66 = scmp.ne.s32.totalorder %s49, %s65
      %p67 = scmp.eq.s32.totalorder %s27, 0
      %p68 = por %p66, %p67
      %s70 = sadd.s32 %s69, 1
      %p73 = scmp.eq.s32.totalorder %s21, 1
      %p74 = scmp.ne.s32.totalorder %s69, %s71
      %p75 = scmp.eq.s32.totalorder %s21, 0
      %p76 = por %p74, %p75
      %p77 = scmp.ne.s32.totalorder %s69, %s71
      %p78 = scmp.eq.s32.totalorder %s26, 1
      %p79 = por %p77, %p78
      %p80 = scmp.ne.s32.totalorder %s71, %s72
      %p81 = scmp.eq.s32.totalorder %s26, 0
      %p82 = por %p80, %p81
      %p83 = scmp.ne.s32.totalorder %s71, %s72
      %p84 = scmp.eq.s32.totalorder %s27, 1
      %p85 = por %p83, %p84
      %p87 = scmp.ne.s32.totalorder %s72, %s86
      %p88 = scmp.eq.s32.totalorder %s27, 0
      %p89 = por %p87, %p88
      %s91 = sadd.s32 %s90, 1
      %p94 = scmp.eq.s32.totalorder %s21, 1
      %p95 = scmp.ne.s32.totalorder %s90, %s92
      %p96 = scmp.eq.s32.totalorder %s21, 0
      %p97 = por %p95, %p96
      %p98 = scmp.ne.s32.totalorder %s90, %s92
      %p99 = scmp.eq.s32.totalorder %s26, 1
      %p100 = por %p98, %p99
      %p101 = scmp.ne.s32.totalorder %s92, %s93
      %p102 = scmp.eq.s32.totalorder %s26, 0
      %p103 = por %p101, %p102
      %p104 = scmp.ne.s32.totalorder %s92, %s93
      %p105 = scmp.eq.s32.totalorder %s27, 1
      %p106 = por %p104, %p105
      %p108 = scmp.ne.s32.totalorder %s93, %s107
      %p109 = scmp.eq.s32.totalorder %s27, 0
      %p110 = por %p108, %p109
      %s112 = sadd.s32 %s111, 1
      %p115 = scmp.eq.s32.totalorder %s21, 1
      %p116 = scmp.ne.s32.totalorder %s111, %s113
      %p117 = scmp.eq.s32.totalorder %s21, 0
      %p118 = por %p116, %p117
      %p119 = scmp.ne.s32.totalorder %s111, %s113
      %p120 = scmp.eq.s32.totalorder %s26, 1
      %p121 = por %p119, %p120
      %p122 = scmp.ne.s32.totalorder %s113, %s114
      %p123 = scmp.eq.s32.totalorder %s26, 0
      %p124 = por %p122, %p123
      %p125 = scmp.ne.s32.totalorder %s113, %s114
      %p126 = scmp.eq.s32.totalorder %s27, 1
      %p127 = por %p125, %p126
      %p129 = scmp.ne.s32.totalorder %s114, %s128
      %p130 = scmp.eq.s32.totalorder %s27, 0
      %p131 = por %p129, %p130
      %s133 = sadd.s32 %s132, 1
      %p136 = scmp.eq.s32.totalorder %s21, 1
      %p137 = scmp.ne.s32.totalorder %s132, %s134
      %p138 = scmp.eq.s32.totalorder %s21, 0
      %p139 = por %p137, %p138
      %p140 = scmp.ne.s32.totalorder %s132, %s134
      %p141 = scmp.eq.s32.totalorder %s26, 1
      %p142 = por %p140, %p141
      %p143 = scmp.ne.s32.totalorder %s134, %s135
      %p144 = scmp.eq.s32.totalorder %s26, 0
      %p145 = por %p143, %p144
      %p146 = scmp.ne.s32.totalorder %s134, %s135
      %p147 = scmp.eq.s32.totalorder %s27, 1
      %p148 = por %p146, %p147
      %p150 = scmp.ne.s32.totalorder %s135, %s149
      %p151 = scmp.eq.s32.totalorder %s27, 0
      %p152 = por %p150, %p151
      %s154 = sadd.s32 %s153, 1
      %p157 = scmp.eq.s32.totalorder %s21, 1
      %p158 = scmp.ne.s32.totalorder %s153, %s155
      %p159 = scmp.eq.s32.totalorder %s21, 0
      %p160 = por %p158, %p159
      %p161 = scmp.ne.s32.totalorder %s153, %s155
      %p162 = scmp.eq.s32.totalorder %s26, 1
      %p163 = por %p161, %p162
      %p164 = scmp.ne.s32.totalorder %s155, %s156
      %p165 = scmp.eq.s32.totalorder %s26, 0
      %p166 = por %p164, %p165
      %p167 = scmp.ne.s32.totalorder %s155, %s156
      %p168 = scmp.eq.s32.totalorder %s27, 1
      %p169 = por %p167, %p168
      %p171 = scmp.ne.s32.totalorder %s156, %s170
      %p172 = scmp.eq.s32.totalorder %s27, 0
      %p173 = por %p171, %p172
      %s175 = sadd.s32 %s174, 1
      %p178 = scmp.eq.s32.totalorder %s21, 1
      %p179 = scmp.ne.s32.totalorder %s174, %s176
      %p180 = scmp.eq.s32.totalorder %s21, 0
      %p181 = por %p179, %p180
      %p182 = scmp.ne.s32.totalorder %s174, %s176
      %p183 = scmp.eq.s32.totalorder %s26, 1
      %p184 = por %p182, %p183
      %p185 = scmp.ne.s32.totalorder %s176, %s177
      %p186 = scmp.eq.s32.totalorder %s26, 0
      %p187 = por %p185, %p186
      %p188 = scmp.ne.s32.totalorder %s176, %s177
      %p189 = scmp.eq.s32.totalorder %s27, 1
      %p190 = por %p188, %p189
      %p192 = scmp.ne.s32.totalorder %s177, %s191
      %p193 = scmp.eq.s32.totalorder %s27, 0
      %p194 = por %p192, %p193
      %s195 = ssub.s32 %s28, %s40
      %p196 = scmp.eq.s32.totalorder %s195, 0
      %s198 = sadd.s32 %s197, 1
      %s199 = scalar_select %p196, %s197, %s198
      %p202 = pneg %p196
      %p203 = scmp.eq.s32.totalorder %s21, 1
      %p204 = por %p202, %p203
      %p205 = scmp.ne.s32.totalorder %s197, %s200
      %p206 = scmp.eq.s32.totalorder %s21, 0
      %p207 = por %p205, %p206
      %p208 = scmp.ne.s32.totalorder %s197, %s200
      %p209 = scmp.eq.s32.totalorder %s26, 1
      %p210 = por %p208, %p209
      %p211 = scmp.ne.s32.totalorder %s200, %s201
      %p212 = scmp.eq.s32.totalorder %s26, 0
      %p213 = por %p211, %p212
      %p214 = scmp.ne.s32.totalorder %s200, %s201
      %p215 = scmp.eq.s32.totalorder %s27, 1
      %p216 = por %p214, %p215
      %p218 = scmp.ne.s32.totalorder %s201, %s217
      %p219 = scmp.eq.s32.totalorder %s27, 0
      %p220 = por %p218, %p219
      %p221 = scmp.le.s32.totalorder 1, %s21
      %p222 = scmp.lt.s32.totalorder %s21, 3
      %p223 = pnand %p221, %p222
      %p224 = pneg %p223
      // Predicated region
      $region9: #{tpu_custom_call.1} parent=5 // pred_check
        _
      $region10: #{tpu_custom_call.1} parent=5 // pred_check_branch
        %226 = sbr.rel (%p223) target = $region12
      $region11: #{tpu_custom_call.1} parent=5 // pred_region
        %s227 = ssub.s32 %s21, 1
        // Predicated region
        $region13: #{tpu_custom_call.1} parent=11 // pred_check
          %p228 = pneg %p82
        $region14: #{tpu_custom_call.1} parent=11 // pred_check_branch
          %230 = sbr.rel (%p228) target = $region16
        $region15: #{tpu_custom_call.1} parent=11 // pred_region
          %s232 = ssub.s32 128, 128
          %233 = vsyncadd [#allocation6], %s232
          %s234 = sshll.u32 [#allocation5], 4
          %s235 = int_to_ptr.vmem [resolvable:$true] %s234
          %240 = dma.hbm_to_vmem [thread:$0]  %s1, 128, %s235, [#allocation6], 64, 64, 4
        $region16: #{tpu_custom_call.1} parent=11 // pred_fallthru
          _
        // Predicated region
        $region17: #{tpu_custom_call.1} parent=11 // pred_check
          %p241 = pneg %p103
        $region18: #{tpu_custom_call.1} parent=11 // pred_check_branch
          %243 = sbr.rel (%p241) target = $region20
        $region19: #{tpu_custom_call.1} parent=11 // pred_region
          _
        $region20: #{tpu_custom_call.1} parent=11 // pred_fallthru
          _
        // Predicated region
        $region21: #{tpu_custom_call.1} parent=11 // pred_check
          %p244 = pneg %p124
        $region22: #{tpu_custom_call.1} parent=11 // pred_check_branch
          %246 = sbr.rel (%p244) target = $region24
        $region23: #{tpu_custom_call.1} parent=11 // pred_region
          %s248 = ssub.s32 512, 512
          %249 = vsyncadd [#allocation6], %s248
          %s250 = sshll.u32 [#allocation7], 4
          %s251 = int_to_ptr.vmem [resolvable:$true] %s250
          %256 = dma.hbm_to_vmem [thread:$0]  %s3, 512, %s251, [#allocation6], 64, 64, 4
        $region24: #{tpu_custom_call.1} parent=11 // pred_fallthru
          _
        // Predicated region
        $region25: #{tpu_custom_call.1} parent=11 // pred_check
          %p257 = pneg %p145
        $region26: #{tpu_custom_call.1} parent=11 // pred_check_branch
          %259 = sbr.rel (%p257) target = $region28
        $region27: #{tpu_custom_call.1} parent=11 // pred_region
          _
        $region28: #{tpu_custom_call.1} parent=11 // pred_fallthru
          _
        // Predicated region
        $region29: #{tpu_custom_call.1} parent=11 // pred_check
          %p260 = pneg %p166
        $region30: #{tpu_custom_call.1} parent=11 // pred_check_branch
          %262 = sbr.rel (%p260) target = $region32
        $region31: #{tpu_custom_call.1} parent=11 // pred_region
          %s264 = ssub.s32 8192, 8192
          %265 = vsyncadd [#allocation9], %s264
          %s266 = sshll.u32 [#allocation8], 4
          %s267 = int_to_ptr.vmem [resolvable:$true] %s266
          %272 = dma.hbm_to_vmem [thread:$0]  %s5, 8192, %s267, [#allocation9], 512, 512, 32
        $region32: #{tpu_custom_call.1} parent=11 // pred_fallthru
          _
        // Predicated region
        $region33: #{tpu_custom_call.1} parent=11 // pred_check
          %p273 = pneg %p187
        $region34: #{tpu_custom_call.1} parent=11 // pred_check_branch
          %275 = sbr.rel (%p273) target = $region36
        $region35: #{tpu_custom_call.1} parent=11 // pred_region
          _
        $region36: #{tpu_custom_call.1} parent=11 // pred_fallthru
          _
      $region12: #{tpu_custom_call.1} parent=5 // pred_fallthru
        _
      %p276 = scmp.lt.s32.totalorder %s21, 2
      // Predicated region
      $region37: #{tpu_custom_call.1} parent=5 // pred_check
        %p277 = pneg %p276
      $region38: #{tpu_custom_call.1} parent=5 // pred_check_branch
        %279 = sbr.rel (%p277) target = $region40
      $region39: #{tpu_custom_call.1} parent=5 // pred_region
        // Predicated region
        $region41: #{tpu_custom_call.1} parent=39 // pred_check
          %p280 = pneg %p55
        $region42: #{tpu_custom_call.1} parent=39 // pred_check_branch
          %282 = sbr.rel (%p280) target = $region44
        $region43: #{tpu_custom_call.1} parent=39 // pred_region
          %s283 = sand.u32 %s45, 1
          %s284 = scalar_lea.sflag [#allocation3], %s283
          %s285 = sand.u32 %s45, 1
          %s286 = smul.addr %s285, 160
          %s287 = scalar_lea.vmem [#allocation2], %s286
          %s288 = smul.u32 10, %s29
          %s290 = ssub.s32 2560, 2560
          %291 = vsyncadd %s284, %s290
          %s292 = smul.addr %s28, 20
          %s293 = sadd.s32 %s288, %s292
          %s294 = smul.addr %s293, 128
          %s295 = scalar_lea.hbm %s0, %s294
          %s296 = sshll.u32 %s287, 4
          %s297 = int_to_ptr.vmem [resolvable:$true] %s296
          %302 = dma.hbm_to_vmem [thread:$0]  %s295, 2560, %s297, %s284, 1280, 1280, 80
        $region44: #{tpu_custom_call.1} parent=39 // pred_fallthru
          _
      $region40: #{tpu_custom_call.1} parent=5 // pred_fallthru
        _
      %p303 = scmp.le.s32.totalorder 1, %s21
      %p304 = scmp.lt.s32.totalorder %s21, 3
      %p305 = pnand %p303, %p304
      %p306 = pneg %p305
      // Predicated region
      $region45: #{tpu_custom_call.1} parent=5 // pred_check
        _
      $region46: #{tpu_custom_call.1} parent=5 // pred_check_branch
        %308 = sbr.rel (%p305) target = $region48
      $region47: #{tpu_custom_call.1} parent=5 // pred_region
        %s309 = ssub.s32 %s21, 1
        %s310 = sand.u32 %s48, 1
        %s311 = scalar_lea.sflag [#allocation3], %s310
        %s312 = sand.u32 %s48, 1
        %s313 = smul.addr %s312, 160
        %s314 = scalar_lea.vmem [#allocation2], %s313
        // Predicated region
        $region49: #{tpu_custom_call.1} parent=47 // pred_check
          %p315 = pneg %p61
        $region50: #{tpu_custom_call.1} parent=47 // pred_check_branch
          %317 = sbr.rel (%p315) target = $region52
        $region51: #{tpu_custom_call.1} parent=47 // pred_region
          %318 = dma.done %s311, 2560
        $region52: #{tpu_custom_call.1} parent=47 // pred_fallthru
          _
        // Predicated region
        $region53: #{tpu_custom_call.1} parent=47 // pred_check
          %p319 = pneg %p82
        $region54: #{tpu_custom_call.1} parent=47 // pred_check_branch
          %321 = sbr.rel (%p319) target = $region56
        $region55: #{tpu_custom_call.1} parent=47 // pred_region
          %322 = dma.done [#allocation6], 128
        $region56: #{tpu_custom_call.1} parent=47 // pred_fallthru
          _
        // Predicated region
        $region57: #{tpu_custom_call.1} parent=47 // pred_check
          %p323 = pneg %p124
        $region58: #{tpu_custom_call.1} parent=47 // pred_check_branch
          %325 = sbr.rel (%p323) target = $region60
        $region59: #{tpu_custom_call.1} parent=47 // pred_region
          %326 = dma.done [#allocation6], 512
        $region60: #{tpu_custom_call.1} parent=47 // pred_fallthru
          _
        // Predicated region
        $region61: #{tpu_custom_call.1} parent=47 // pred_check
          %p327 = pneg %p166
        $region62: #{tpu_custom_call.1} parent=47 // pred_check_branch
          %329 = sbr.rel (%p327) target = $region64
        $region63: #{tpu_custom_call.1} parent=47 // pred_region
          %330 = dma.done [#allocation9], 8192
        $region64: #{tpu_custom_call.1} parent=47 // pred_fallthru
          _
        %s331 = sand.u32 %s48, 1
        %s332 = scalar_lea.sflag [#allocation3], %s331
        %s333 = sand.u32 %s48, 1
        %s334 = smul.addr %s333, 160
        %s335 = scalar_lea.vmem [#allocation2], %s334
        %p336 = pneg %p61
        %p337 = pneg %p58
        %p338 = pneg %p82
        %p339 = pneg %p79
        %p340 = pneg %p103
        %p341 = pneg %p100
        %p342 = pneg %p124
        %p343 = pneg %p121
        %p344 = pneg %p145
        %p345 = pneg %p142
        %p346 = pneg %p166
        %p347 = pneg %p163
        %p348 = pneg %p187
        %p349 = pneg %p184
        %p350 = pneg %p213
        %p351 = pneg %p210
        %s352 = sand.u32 %s200, 1
        %s353 = scalar_lea.sflag [#allocation4], %s352
        %s354 = sand.u32 %s200, 1
        %s355 = smul.addr %s354, 8
        %s356 = scalar_lea.vmem [#allocation10], %s355
        %s357 = smul.u32 10, %s31
        %p359 = scmp.eq.s32.totalorder %s31, 0
        // Predicated region
        $region65: #{tpu_custom_call.1} parent=47 // pred_check
          %p360 = pneg %p359
        $region66: #{tpu_custom_call.1} parent=47 // pred_check_branch
          %362 = sbr.rel (%p360) target = $region68
        $region67: #{tpu_custom_call.1} parent=47 // pred_region
          %363 = vst [vmem:[%s356] sm:$0xff] -inf
        $region68: #{tpu_custom_call.1} parent=47 // pred_fallthru
          _
        %v364 = vld [vmem:[%s314] sm:$0xff]
        %v365 = vld [vmem:[%s314 + $0x8] sm:$0xff]
        %v366 = vld [vmem:[%s314 + $0x10] sm:$0xff]
        %v367 = vld [vmem:[%s314 + $0x18] sm:$0xff]
        %v368 = vld [vmem:[%s314 + $0x20] sm:$0xff]
        %v369 = vld [vmem:[%s314 + $0x28] sm:$0xff]
        %v370 = vld [vmem:[%s314 + $0x30] sm:$0xff]
        %v371 = vld [vmem:[%s314 + $0x38] sm:$0xff]
        %v372 = vld [vmem:[%s314 + $0x40] sm:$0xff]
        %v373 = vld [vmem:[%s314 + $0x48] sm:$0xff]
        %v374 = vld [vmem:[%s314 + $0x50] sm:$0xff]
        %v375 = vld [vmem:[%s314 + $0x58] sm:$0xff]
        %v376 = vld [vmem:[%s314 + $0x60] sm:$0xff]
        %v377 = vld [vmem:[%s314 + $0x68] sm:$0xff]
        %v378 = vld [vmem:[%s314 + $0x70] sm:$0xff]
        %v379 = vld [vmem:[%s314 + $0x78] sm:$0xff]
        %v380 = vld [vmem:[%s314 + $0x80] sm:$0xff]
        %v381 = vld [vmem:[%s314 + $0x88] sm:$0xff]
        %v382 = vld [vmem:[%s314 + $0x90] sm:$0xff]
        %v383 = vld [vmem:[%s314 + $0x98] sm:$0xff]
        %v384 = vlaneseq
        %v385 = vand.u32 %v384, 127
        %v386 = vadd.s32 %v385, 128
        %v387 = vadd.s32 %v385, 256
        %v388 = vadd.s32 %v385, 384
        %v389 = vadd.s32 %v385, 512
        %v390 = vadd.s32 %v385, 640
        %v391 = vadd.s32 %v385, 768
        %v392 = vadd.s32 %v385, 896
        %v393 = vadd.s32 %v385, 1024
        %v394 = vadd.s32 %v385, 1152
        %s395 = smul.u32 %s31, 1280
        %v396 = vstv %s395
        %v397 = vadd.s32 %v385, %v396
        %v398 = vadd.s32 %v386, %v396
        %v399 = vadd.s32 %v387, %v396
        %v400 = vadd.s32 %v388, %v396
        %v401 = vadd.s32 %v389, %v396
        %v402 = vadd.s32 %v390, %v396
        %v403 = vadd.s32 %v391, %v396
        %v404 = vadd.s32 %v392, %v396
        %v405 = vadd.s32 %v393, %v396
        %v406 = vadd.s32 %v394, %v396
        %vm407 = vcmp.lt.s32.totalorder %v397, 1200
        %vm408 = vcmp.lt.s32.totalorder %v398, 1200
        %vm409 = vcmp.lt.s32.totalorder %v399, 1200
        %vm410 = vcmp.lt.s32.totalorder %v400, 1200
        %vm411 = vcmp.lt.s32.totalorder %v401, 1200
        %vm412 = vcmp.lt.s32.totalorder %v402, 1200
        %vm413 = vcmp.lt.s32.totalorder %v403, 1200
        %vm414 = vcmp.lt.s32.totalorder %v404, 1200
        %vm415 = vcmp.lt.s32.totalorder %v405, 1200
        %vm416 = vcmp.lt.s32.totalorder %v406, 1200
        %v417 = vsel %vm407, 1, 0
        %v418 = vsel %vm408, 1, 0
        %v419 = vsel %vm409, 1, 0
        %v420 = vsel %vm410, 1, 0
        %v421 = vsel %vm411, 1, 0
        %v422 = vsel %vm412, 1, 0
        %v423 = vsel %vm413, 1, 0
        %v424 = vsel %vm414, 1, 0
        %v425 = vsel %vm415, 1, 0
        %v426 = vsel %vm416, 1, 0
        %vm427 = vcmp.eq.s32.totalorder %v417, 1
        %vm428 = vcmp.eq.s32.totalorder %v418, 1
        %vm429 = vcmp.eq.s32.totalorder %v419, 1
        %vm430 = vcmp.eq.s32.totalorder %v420, 1
        %vm431 = vcmp.eq.s32.totalorder %v421, 1
        %vm432 = vcmp.eq.s32.totalorder %v422, 1
        %vm433 = vcmp.eq.s32.totalorder %v423, 1
        %vm434 = vcmp.eq.s32.totalorder %v424, 1
        %vm435 = vcmp.eq.s32.totalorder %v425, 1
        %vm436 = vcmp.eq.s32.totalorder %v426, 1
        %v437 = vsel %vm427, %v364, 0.0
        %v438 = vsel %vm428, %v365, 0.0
        %v439 = vsel %vm429, %v366, 0.0
        %v440 = vsel %vm430, %v367, 0.0
        %v441 = vsel %vm431, %v368, 0.0
        %v442 = vsel %vm432, %v369, 0.0
        %v443 = vsel %vm433, %v370, 0.0
        %v444 = vsel %vm434, %v371, 0.0
        %v445 = vsel %vm435, %v372, 0.0
        %v446 = vsel %vm436, %v373, 0.0
        %v447 = vsel %vm427, %v374, 0.0
        %v448 = vsel %vm428, %v375, 0.0
        %v449 = vsel %vm429, %v376, 0.0
        %v450 = vsel %vm430, %v377, 0.0
        %v451 = vsel %vm431, %v378, 0.0
        %v452 = vsel %vm432, %v379, 0.0
        %v453 = vsel %vm433, %v380, 0.0
        %v454 = vsel %vm434, %v381, 0.0
        %v455 = vsel %vm435, %v382, 0.0
        %v456 = vsel %vm436, %v383, 0.0
        %v457 = vpack.c.bf16 %v447, %v437
        %v458 = vpack.c.bf16 %v448, %v438
        %v459 = vpack.c.bf16 %v449, %v439
        %v460 = vpack.c.bf16 %v450, %v440
        %v461 = vpack.c.bf16 %v451, %v441
        %v462 = vpack.c.bf16 %v452, %v442
        %v463 = vpack.c.bf16 %v453, %v443
        %v464 = vpack.c.bf16 %v454, %v444
        %v465 = vpack.c.bf16 %v455, %v445
        %v466 = vpack.c.bf16 %v456, %v446
        %v467 = vld [vmem:[#allocation5] sm:$0xf]
        %v468 = vld [vmem:[#allocation5 + $0x4] sm:$0xf]
        %v469 = vld [vmem:[%s2] sm:$0x1]
        %v471 = vlaneseq
        %v472 = vshrl.u32 %v471, 7
        %v473 = vsub.s32 0, %v472
        %v474 = vrot.slane %v469, %v473
        %476 = vxpose.xlu0.c.b16.start [1/8] %v457, 128
        %477 = vxpose.xlu0.c.b16.cont [2/8] 0, 128
        %478 = vxpose.xlu0.c.b16.cont [3/8] 0, 128
        %479 = vxpose.xlu0.c.b16.cont [4/8] 0, 128
        %480 = vxpose.xlu0.c.b16.cont [5/8] 0, 128
        %481 = vxpose.xlu0.c.b16.cont [6/8] 0, 128
        %482 = vxpose.xlu0.c.b16.cont [7/8] 0, 128
        %483 = vxpose.xlu0.c.b16.end [8/8] 0, 128
        %v484 = vpop.trf.xlu0
        %v485 = vpop.trf.xlu0
        %v486 = vpop.trf.xlu0
        %v487 = vpop.trf.xlu0
        %v488 = vpop.trf.xlu0
        %v489 = vpop.trf.xlu0
        %v490 = vpop.trf.xlu0
        %v491 = vpop.trf.xlu0
        %492 = vxpose.xlu0.c.b16.start [1/8] %v458, 128
        %493 = vxpose.xlu0.c.b16.cont [2/8] 0, 128
        %494 = vxpose.xlu0.c.b16.cont [3/8] 0, 128
        %495 = vxpose.xlu0.c.b16.cont [4/8] 0, 128
        %496 = vxpose.xlu0.c.b16.cont [5/8] 0, 128
        %497 = vxpose.xlu0.c.b16.cont [6/8] 0, 128
        %498 = vxpose.xlu0.c.b16.cont [7/8] 0, 128
        %499 = vxpose.xlu0.c.b16.end [8/8] 0, 128
        %v500 = vpop.trf.xlu0
        %v501 = vpop.trf.xlu0
        %v502 = vpop.trf.xlu0
        %v503 = vpop.trf.xlu0
        %v504 = vpop.trf.xlu0
        %v505 = vpop.trf.xlu0
        %v506 = vpop.trf.xlu0
        %v507 = vpop.trf.xlu0
        %508 = vxpose.xlu0.c.b16.start [1/8] %v459, 128
        %509 = vxpose.xlu0.c.b16.cont [2/8] 0, 128
        %510 = vxpose.xlu0.c.b16.cont [3/8] 0, 128
        %511 = vxpose.xlu0.c.b16.cont [4/8] 0, 128
        %512 = vxpose.xlu0.c.b16.cont [5/8] 0, 128
        %513 = vxpose.xlu0.c.b16.cont [6/8] 0, 128
        %514 = vxpose.xlu0.c.b16.cont [7/8] 0, 128
        %515 = vxpose.xlu0.c.b16.end [8/8] 0, 128
        %v516 = vpop.trf.xlu0
        %v517 = vpop.trf.xlu0
        %v518 = vpop.trf.xlu0
        %v519 = vpop.trf.xlu0
        %v520 = vpop.trf.xlu0
        %v521 = vpop.trf.xlu0
        %v522 = vpop.trf.xlu0
        %v523 = vpop.trf.xlu0
        %524 = vxpose.xlu0.c.b16.start [1/8] %v460, 128
        %525 = vxpose.xlu0.c.b16.cont [2/8] 0, 128
        %526 = vxpose.xlu0.c.b16.cont [3/8] 0, 128
        %527 = vxpose.xlu0.c.b16.cont [4/8] 0, 128
        %528 = vxpose.xlu0.c.b16.cont [5/8] 0, 128
        %529 = vxpose.xlu0.c.b16.cont [6/8] 0, 128
        %530 = vxpose.xlu0.c.b16.cont [7/8] 0, 128
        %531 = vxpose.xlu0.c.b16.end [8/8] 0, 128
        %v532 = vpop.trf.xlu0
        %v533 = vpop.trf.xlu0
        %v534 = vpop.trf.xlu0
        %v535 = vpop.trf.xlu0
        %v536 = vpop.trf.xlu0
        %v537 = vpop.trf.xlu0
        %v538 = vpop.trf.xlu0
        %v539 = vpop.trf.xlu0
        %540 = vxpose.xlu0.c.b16.start [1/8] %v461, 128
        %541 = vxpose.xlu0.c.b16.cont [2/8] 0, 128
        %542 = vxpose.xlu0.c.b16.cont [3/8] 0, 128
        %543 = vxpose.xlu0.c.b16.cont [4/8] 0, 128
        %544 = vxpose.xlu0.c.b16.cont [5/8] 0, 128
        %545 = vxpose.xlu0.c.b16.cont [6/8] 0, 128
        %546 = vxpose.xlu0.c.b16.cont [7/8] 0, 128
        %547 = vxpose.xlu0.c.b16.end [8/8] 0, 128
        %v548 = vpop.trf.xlu0
        %v549 = vpop.trf.xlu0
        %v550 = vpop.trf.xlu0
        %v551 = vpop.trf.xlu0
        %v552 = vpop.trf.xlu0
        %v553 = vpop.trf.xlu0
        %v554 = vpop.trf.xlu0
        %v555 = vpop.trf.xlu0
        %556 = vxpose.xlu0.c.b16.start [1/8] %v462, 128
        %557 = vxpose.xlu0.c.b16.cont [2/8] 0, 128
        %558 = vxpose.xlu0.c.b16.cont [3/8] 0, 128
        %559 = vxpose.xlu0.c.b16.cont [4/8] 0, 128
        %560 = vxpose.xlu0.c.b16.cont [5/8] 0, 128
        %561 = vxpose.xlu0.c.b16.cont [6/8] 0, 128
        %562 = vxpose.xlu0.c.b16.cont [7/8] 0, 128
        %563 = vxpose.xlu0.c.b16.end [8/8] 0, 128
        %v564 = vpop.trf.xlu0
        %v565 = vpop.trf.xlu0
        %v566 = vpop.trf.xlu0
        %v567 = vpop.trf.xlu0
        %v568 = vpop.trf.xlu0
        %v569 = vpop.trf.xlu0
        %v570 = vpop.trf.xlu0
        %v571 = vpop.trf.xlu0
        %572 = vxpose.xlu0.c.b16.start [1/8] %v463, 128
        %573 = vxpose.xlu0.c.b16.cont [2/8] 0, 128
        %574 = vxpose.xlu0.c.b16.cont [3/8] 0, 128
        %575 = vxpose.xlu0.c.b16.cont [4/8] 0, 128
        %576 = vxpose.xlu0.c.b16.cont [5/8] 0, 128
        %577 = vxpose.xlu0.c.b16.cont [6/8] 0, 128
        %578 = vxpose.xlu0.c.b16.cont [7/8] 0, 128
        %579 = vxpose.xlu0.c.b16.end [8/8] 0, 128
        %v580 = vpop.trf.xlu0
        %v581 = vpop.trf.xlu0
        %v582 = vpop.trf.xlu0
        %v583 = vpop.trf.xlu0
        %v584 = vpop.trf.xlu0
        %v585 = vpop.trf.xlu0
        %v586 = vpop.trf.xlu0
        %v587 = vpop.trf.xlu0
        %588 = vxpose.xlu0.c.b16.start [1/8] %v464, 128
        %589 = vxpose.xlu0.c.b16.cont [2/8] 0, 128
        %590 = vxpose.xlu0.c.b16.cont [3/8] 0, 128
        %591 = vxpose.xlu0.c.b16.cont [4/8] 0, 128
        %592 = vxpose.xlu0.c.b16.cont [5/8] 0, 128
        %593 = vxpose.xlu0.c.b16.cont [6/8] 0, 128
        %594 = vxpose.xlu0.c.b16.cont [7/8] 0, 128
        %595 = vxpose.xlu0.c.b16.end [8/8] 0, 128
        %v596 = vpop.trf.xlu0
        %v597 = vpop.trf.xlu0
        %v598 = vpop.trf.xlu0
        %v599 = vpop.trf.xlu0
        %v600 = vpop.trf.xlu0
        %v601 = vpop.trf.xlu0
        %v602 = vpop.trf.xlu0
        %v603 = vpop.trf.xlu0
        %604 = vxpose.xlu0.c.b16.start [1/8] %v465, 128
        %605 = vxpose.xlu0.c.b16.cont [2/8] 0, 128
        %606 = vxpose.xlu0.c.b16.cont [3/8] 0, 128
        %607 = vxpose.xlu0.c.b16.cont [4/8] 0, 128
        %608 = vxpose.xlu0.c.b16.cont [5/8] 0, 128
        %609 = vxpose.xlu0.c.b16.cont [6/8] 0, 128
        %610 = vxpose.xlu0.c.b16.cont [7/8] 0, 128
        %611 = vxpose.xlu0.c.b16.end [8/8] 0, 128
        %v612 = vpop.trf.xlu0
        %v613 = vpop.trf.xlu0
        %v614 = vpop.trf.xlu0
        %v615 = vpop.trf.xlu0
        %v616 = vpop.trf.xlu0
        %v617 = vpop.trf.xlu0
        %v618 = vpop.trf.xlu0
        %v619 = vpop.trf.xlu0
        %620 = vxpose.xlu0.c.b16.start [1/8] %v466, 128
        %621 = vxpose.xlu0.c.b16.cont [2/8] 0, 128
        %622 = vxpose.xlu0.c.b16.cont [3/8] 0, 128
        %623 = vxpose.xlu0.c.b16.cont [4/8] 0, 128
        %624 = vxpose.xlu0.c.b16.cont [5/8] 0, 128
        %625 = vxpose.xlu0.c.b16.cont [6/8] 0, 128
        %626 = vxpose.xlu0.c.b16.cont [7/8] 0, 128
        %627 = vxpose.xlu0.c.b16.end [8/8] 0, 128
        %v628 = vpop.trf.xlu0
        %v629 = vpop.trf.xlu0
        %v630 = vpop.trf.xlu0
        %v631 = vpop.trf.xlu0
        %v632 = vpop.trf.xlu0
        %v633 = vpop.trf.xlu0
        %v634 = vpop.trf.xlu0
        %v635 = vpop.trf.xlu0
        %v638 = vunpack.c.l.b16 %v467
        %v639 = vunpack.c.l.b16 %v468
        %v640 = vpack.c.b16 %v639, %v638
        %vm642 = vcmask 130048
        %v644 = vsel %vm642, %v484, 0
        %v647 = vsel %vm642, %v485, 0
        %v650 = vsel %vm642, %v486, 0
        %v653 = vsel %vm642, %v487, 0
        %v656 = vsel %vm642, %v488, 0
        %v659 = vsel %vm642, %v489, 0
        %v662 = vsel %vm642, %v490, 0
        %v665 = vsel %vm642, %v491, 0
        %v668 = vsel %vm642, %v500, 0
        %v671 = vsel %vm642, %v501, 0
        %v674 = vsel %vm642, %v502, 0
        %v677 = vsel %vm642, %v503, 0
        %v680 = vsel %vm642, %v504, 0
        %v683 = vsel %vm642, %v505, 0
        %v686 = vsel %vm642, %v506, 0
        %v689 = vsel %vm642, %v507, 0
        %v692 = vsel %vm642, %v516, 0
        %v695 = vsel %vm642, %v517, 0
        %v698 = vsel %vm642, %v518, 0
        %v701 = vsel %vm642, %v519, 0
        %v704 = vsel %vm642, %v520, 0
        %v707 = vsel %vm642, %v521, 0
        %v710 = vsel %vm642, %v522, 0
        %v713 = vsel %vm642, %v523, 0
        %v716 = vsel %vm642, %v532, 0
        %v719 = vsel %vm642, %v533, 0
        %v722 = vsel %vm642, %v534, 0
        %v725 = vsel %vm642, %v535, 0
        %v728 = vsel %vm642, %v536, 0
        %v731 = vsel %vm642, %v537, 0
        %v734 = vsel %vm642, %v538, 0
        %v737 = vsel %vm642, %v539, 0
        %v740 = vsel %vm642, %v548, 0
        %v743 = vsel %vm642, %v549, 0
        %v746 = vsel %vm642, %v550, 0
        %v749 = vsel %vm642, %v551, 0
        %v752 = vsel %vm642, %v552, 0
        %v755 = vsel %vm642, %v553, 0
        %v758 = vsel %vm642, %v554, 0
        %v761 = vsel %vm642, %v555, 0
        %v764 = vsel %vm642, %v564, 0
        %v767 = vsel %vm642, %v565, 0
        %v770 = vsel %vm642, %v566, 0
        %v773 = vsel %vm642, %v567, 0
        %v776 = vsel %vm642, %v568, 0
        %v779 = vsel %vm642, %v569, 0
        %v782 = vsel %vm642, %v570, 0
        %v785 = vsel %vm642, %v571, 0
        %v788 = vsel %vm642, %v580, 0
        %v791 = vsel %vm642, %v581, 0
        %v794 = vsel %vm642, %v582, 0
        %v797 = vsel %vm642, %v583, 0
        %v800 = vsel %vm642, %v584, 0
        %v803 = vsel %vm642, %v585, 0
        %v806 = vsel %vm642, %v586, 0
        %v809 = vsel %vm642, %v587, 0
        %v812 = vsel %vm642, %v596, 0
        %v815 = vsel %vm642, %v597, 0
        %v818 = vsel %vm642, %v598, 0
        %v821 = vsel %vm642, %v599, 0
        %v824 = vsel %vm642, %v600, 0
        %v827 = vsel %vm642, %v601, 0
        %v830 = vsel %vm642, %v602, 0
        %v833 = vsel %vm642, %v603, 0
        %v836 = vsel %vm642, %v612, 0
        %v839 = vsel %vm642, %v613, 0
        %v842 = vsel %vm642, %v614, 0
        %v845 = vsel %vm642, %v615, 0
        %v848 = vsel %vm642, %v616, 0
        %v851 = vsel %vm642, %v617, 0
        %v854 = vsel %vm642, %v618, 0
        %v857 = vsel %vm642, %v619, 0
        %v860 = vsel %vm642, %v628, 0
        %v863 = vsel %vm642, %v629, 0
        %v866 = vsel %vm642, %v630, 0
        %v869 = vsel %vm642, %v631, 0
        %v872 = vsel %vm642, %v632, 0
        %v875 = vsel %vm642, %v633, 0
        %v878 = vsel %vm642, %v634, 0
        %v881 = vsel %vm642, %v635, 0
        %883 = vmatprep.subr.bf16.mxu0 0
        %884 = vmatpush1.bf16.msra.mxu0 %v640
        %885 = vmatprep.subr.bf16.mxu0 0
        %886 = vmatpush1.bf16.msra.mxu0 0
        %887 = vmatprep.subr.bf16.mxu0 0
        %888 = vmatpush1.bf16.msra.mxu0 0
        %889 = vmatprep.subr.bf16.mxu0 0
        %890 = vmatpush1.bf16.msra.mxu0 0
        %891 = vmatprep.subr.bf16.mxu0 0
        %892 = vmatpush1.bf16.msra.mxu0 0
        %893 = vmatprep.subr.bf16.mxu0 0
        %894 = vmatpush1.bf16.msra.mxu0 0
        %895 = vmatprep.subr.bf16.mxu0 0
        %896 = vmatpush1.bf16.msra.mxu0 0
        %897 = vmatprep.subr.bf16.mxu0 0
        %898 = vmatpush1.bf16.msra.mxu0 0
        %899 = vmatprep.subr.bf16.mxu0 0
        %900 = vmatpush1.bf16.msra.mxu0 0
        %901 = vmatprep.subr.bf16.mxu0 0
        %902 = vmatpush1.bf16.msra.mxu0 0
        %903 = vmatprep.subr.bf16.mxu0 0
        %904 = vmatpush1.bf16.msra.mxu0 0
        %905 = vmatprep.subr.bf16.mxu0 0
        %906 = vmatpush1.bf16.msra.mxu0 0
        %907 = vmatprep.subr.bf16.mxu0 0
        %908 = vmatpush1.bf16.msra.mxu0 0
        %909 = vmatprep.subr.bf16.mxu0 0
        %910 = vmatpush1.bf16.msra.mxu0 0
        %911 = vmatprep.subr.bf16.mxu0 0
        %912 = vmatpush1.bf16.msra.mxu0 0
        %913 = vmatprep.subr.bf16.mxu0 0
        %914 = vmatpush1.bf16.msra.mxu0 0
        %915 = vmatprep.mubr.bf16.mxu0 0
        %916 = vmatmul.mubr.bf16.gmra.mrb[0].mxu0 %v644
        %v917 = vpop.f32.mrb[0].mxu0
        %v918 = vadd.f32 %v474, %v917
        %v919 = vpop.f32.mrb[0].mxu0
        %v920 = vpop.f32.mrb[0].mxu0
        %v921 = vadd.f32 %v474, %v920
        %v922 = vpop.f32.mrb[0].mxu0
        %923 = vmatprep.mubr.bf16.mxu0 0
        %924 = vmatmul.mubr.bf16.gmra.mrb[0].mxu0 %v647
        %v925 = vpop.f32.mrb[0].mxu0
        %v926 = vadd.f32 %v474, %v925
        %v927 = vpop.f32.mrb[0].mxu0
        %v928 = vpop.f32.mrb[0].mxu0
        %v929 = vadd.f32 %v474, %v928
        %v930 = vpop.f32.mrb[0].mxu0
        %931 = vmatprep.mubr.bf16.mxu0 0
        %932 = vmatmul.mubr.bf16.gmra.mrb[0].mxu0 %v650
        %v933 = vpop.f32.mrb[0].mxu0
        %v934 = vadd.f32 %v474, %v933
        %v935 = vpop.f32.mrb[0].mxu0
        %v936 = vpop.f32.mrb[0].mxu0
        %v937 = vadd.f32 %v474, %v936
        %v938 = vpop.f32.mrb[0].mxu0
        %939 = vmatprep.mubr.bf16.mxu0 0
        %940 = vmatmul.mubr.bf16.gmra.mrb[0].mxu0 %v653
        %v941 = vpop.f32.mrb[0].mxu0
        %v942 = vadd.f32 %v474, %v941
        %v943 = vpop.f32.mrb[0].mxu0
        %v944 = vpop.f32.mrb[0].mxu0
        %v945 = vadd.f32 %v474, %v944
        %v946 = vpop.f32.mrb[0].mxu0
        %947 = vmatprep.mubr.bf16.mxu0 0
        %948 = vmatmul.mubr.bf16.gmra.mrb[0].mxu0 %v656
        %v949 = vpop.f32.mrb[0].mxu0
        %v950 = vadd.f32 %v474, %v949
        %v951 = vpop.f32.mrb[0].mxu0
        %v952 = vpop.f32.mrb[0].mxu0
        %v953 = vadd.f32 %v474, %v952
        %v954 = vpop.f32.mrb[0].mxu0
        %955 = vmatprep.mubr.bf16.mxu0 0
        %956 = vmatmul.mubr.bf16.gmra.mrb[0].mxu0 %v659
        %v957 = vpop.f32.mrb[0].mxu0
        %v958 = vadd.f32 %v474, %v957
        %v959 = vpop.f32.mrb[0].mxu0
        %v960 = vpop.f32.mrb[0].mxu0
        %v961 = vadd.f32 %v474, %v960
        %v962 = vpop.f32.mrb[0].mxu0
        %963 = vmatprep.mubr.bf16.mxu0 0
        %964 = vmatmul.mubr.bf16.gmra.mrb[0].mxu0 %v662
        %v965 = vpop.f32.mrb[0].mxu0
        %v966 = vadd.f32 %v474, %v965
        %v967 = vpop.f32.mrb[0].mxu0
        %v968 = vpop.f32.mrb[0].mxu0
        %v969 = vadd.f32 %v474, %v968
        %v970 = vpop.f32.mrb[0].mxu0
        %971 = vmatprep.mubr.bf16.mxu0 0
        %972 = vmatmul.mubr.bf16.gmra.mrb[0].mxu0 %v665
        %v973 = vpop.f32.mrb[0].mxu0
        %v974 = vadd.f32 %v474, %v973
        %v975 = vpop.f32.mrb[0].mxu0
        %v976 = vpop.f32.mrb[0].mxu0
        %v977 = vadd.f32 %v474, %v976
        %v978 = vpop.f32.mrb[0].mxu0
        %979 = vmatprep.mubr.bf16.mxu0 0
        %980 = vmatmul.mubr.bf16.gmra.mrb[0].mxu0 %v668
        %v981 = vpop.f32.mrb[0].mxu0
        %v982 = vadd.f32 %v474, %v981
        %v983 = vpop.f32.mrb[0].mxu0
        %v984 = vpop.f32.mrb[0].mxu0
        %v985 = vadd.f32 %v474, %v984
        %v986 = vpop.f32.mrb[0].mxu0
        %987 = vmatprep.mubr.bf16.mxu0 0
        %988 = vmatmul.mubr.bf16.gmra.mrb[0].mxu0 %v671
        %v989 = vpop.f32.mrb[0].mxu0
        %v990 = vadd.f32 %v474, %v989
        %v991 = vpop.f32.mrb[0].mxu0
        %v992 = vpop.f32.mrb[0].mxu0
        %v993 = vadd.f32 %v474, %v992
        %v994 = vpop.f32.mrb[0].mxu0
        %995 = vmatprep.mubr.bf16.mxu0 0
        %996 = vmatmul.mubr.bf16.gmra.mrb[0].mxu0 %v674
        %v997 = vpop.f32.mrb[0].mxu0
        %v998 = vadd.f32 %v474, %v997
        %v999 = vpop.f32.mrb[0].mxu0
        %v1000 = vpop.f32.mrb[0].mxu0
        %v1001 = vadd.f32 %v474, %v1000
        %v1002 = vpop.f32.mrb[0].mxu0
        %1003 = vmatprep.mubr.bf16.mxu0 0
        %1004 = vmatmul.mubr.bf16.gmra.mrb[0].mxu0 %v677
        %v1005 = vpop.f32.mrb[0].mxu0
        %v1006 = vadd.f32 %v474, %v1005
        %v1007 = vpop.f32.mrb[0].mxu0
        %v1008 = vpop.f32.mrb[0].mxu0
        %v1009 = vadd.f32 %v474, %v1008
        %v1010 = vpop.f32.mrb[0].mxu0
        %1011 = vmatprep.mubr.bf16.mxu0 0
        %1012 = vmatmul.mubr.bf16.gmra.mrb[0].mxu0 %v680
        %v1013 = vpop.f32.mrb[0].mxu0
        %v1014 = vadd.f32 %v474, %v1013
        %v1015 = vpop.f32.mrb[0].mxu0
        %v1016 = vpop.f32.mrb[0].mxu0
        %v1017 = vadd.f32 %v474, %v1016
        %v1018 = vpop.f32.mrb[0].mxu0
        %1019 = vmatprep.mubr.bf16.mxu0 0
        %1020 = vmatmul.mubr.bf16.gmra.mrb[0].mxu0 %v683
        %v1021 = vpop.f32.mrb[0].mxu0
        %v1022 = vadd.f32 %v474, %v1021
        %v1023 = vpop.f32.mrb[0].mxu0
        %v1024 = vpop.f32.mrb[0].mxu0
        %v1025 = vadd.f32 %v474, %v1024
        %v1026 = vpop.f32.mrb[0].mxu0
        %1027 = vmatprep.mubr.bf16.mxu0 0
        %1028 = vmatmul.mubr.bf16.gmra.mrb[0].mxu0 %v686
        %v1029 = vpop.f32.mrb[0].mxu0
        %v1030 = vadd.f32 %v474, %v1029
        %v1031 = vpop.f32.mrb[0].mxu0
        %v1032 = vpop.f32.mrb[0].mxu0
        %v1033 = vadd.f32 %v474, %v1032
        %v1034 = vpop.f32.mrb[0].mxu0
        %1035 = vmatprep.mubr.bf16.mxu0 0
        %1036 = vmatmul.mubr.bf16.gmra.mrb[0].mxu0 %v689
        %v1037 = vpop.f32.mrb[0].mxu0
        %v1038 = vadd.f32 %v474, %v1037
        %v1039 = vpop.f32.mrb[0].mxu0
        %v1040 = vpop.f32.mrb[0].mxu0
        %v1041 = vadd.f32 %v474, %v1040
        %v1042 = vpop.f32.mrb[0].mxu0
        %1043 = vmatprep.mubr.bf16.mxu0 0
        %1044 = vmatmul.mubr.bf16.gmra.mrb[0].mxu0 %v692
        %v1045 = vpop.f32.mrb[0].mxu0
        %v1046 = vadd.f32 %v474, %v1045
        %v1047 = vpop.f32.mrb[0].mxu0
        %v1048 = vpop.f32.mrb[0].mxu0
        %v1049 = vadd.f32 %v474, %v1048
        %v1050 = vpop.f32.mrb[0].mxu0
        %1051 = vmatprep.mubr.bf16.mxu0 0
        %1052 = vmatmul.mubr.bf16.gmra.mrb[0].mxu0 %v695
        %v1053 = vpop.f32.mrb[0].mxu0
        %v1054 = vadd.f32 %v474, %v1053
        %v1055 = vpop.f32.mrb[0].mxu0
        %v1056 = vpop.f32.mrb[0].mxu0
        %v1057 = vadd.f32 %v474, %v1056
        %v1058 = vpop.f32.mrb[0].mxu0
        %1059 = vmatprep.mubr.bf16.mxu0 0
        %1060 = vmatmul.mubr.bf16.gmra.mrb[0].mxu0 %v698
        %v1061 = vpop.f32.mrb[0].mxu0
        %v1062 = vadd.f32 %v474, %v1061
        %v1063 = vpop.f32.mrb[0].mxu0
        %v1064 = vpop.f32.mrb[0].mxu0
        %v1065 = vadd.f32 %v474, %v1064
        %v1066 = vpop.f32.mrb[0].mxu0
        %1067 = vmatprep.mubr.bf16.mxu0 0
        %1068 = vmatmul.mubr.bf16.gmra.mrb[0].mxu0 %v701
        %v1069 = vpop.f32.mrb[0].mxu0
        %v1070 = vadd.f32 %v474, %v1069
        %v1071 = vpop.f32.mrb[0].mxu0
        %v1072 = vpop.f32.mrb[0].mxu0
        %v1073 = vadd.f32 %v474, %v1072
        %v1074 = vpop.f32.mrb[0].mxu0
        %1075 = vmatprep.mubr.bf16.mxu0 0
        %1076 = vmatmul.mubr.bf16.gmra.mrb[0].mxu0 %v704
        %v1077 = vpop.f32.mrb[0].mxu0
        %v1078 = vadd.f32 %v474, %v1077
        %v1079 = vpop.f32.mrb[0].mxu0
        %v1080 = vpop.f32.mrb[0].mxu0
        %v1081 = vadd.f32 %v474, %v1080
        %v1082 = vpop.f32.mrb[0].mxu0
        %1083 = vmatprep.mubr.bf16.mxu0 0
        %1084 = vmatmul.mubr.bf16.gmra.mrb[0].mxu0 %v707
        %v1085 = vpop.f32.mrb[0].mxu0
        %v1086 = vadd.f32 %v474, %v1085
        %v1087 = vpop.f32.mrb[0].mxu0
        %v1088 = vpop.f32.mrb[0].mxu0
        %v1089 = vadd.f32 %v474, %v1088
        %v1090 = vpop.f32.mrb[0].mxu0
        %1091 = vmatprep.mubr.bf16.mxu0 0
        %1092 = vmatmul.mubr.bf16.gmra.mrb[0].mxu0 %v710
        %v1093 = vpop.f32.mrb[0].mxu0
        %v1094 = vadd.f32 %v474, %v1093
        %v1095 = vpop.f32.mrb[0].mxu0
        %v1096 = vpop.f32.mrb[0].mxu0
        %v1097 = vadd.f32 %v474, %v1096
        %v1098 = vpop.f32.mrb[0].mxu0
        %1099 = vmatprep.mubr.bf16.mxu0 0
        %1100 = vmatmul.mubr.bf16.gmra.mrb[0].mxu0 %v713
        %v1101 = vpop.f32.mrb[0].mxu0
        %v1102 = vadd.f32 %v474, %v1101
        %v1103 = vpop.f32.mrb[0].mxu0
        %v1104 = vpop.f32.mrb[0].mxu0
        %v1105 = vadd.f32 %v474, %v1104
        %v1106 = vpop.f32.mrb[0].mxu0
        %1107 = vmatprep.mubr.bf16.mxu0 0
        %1108 = vmatmul.mubr.bf16.gmra.mrb[0].mxu0 %v716
        %v1109 = vpop.f32.mrb[0].mxu0
        %v1110 = vadd.f32 %v474, %v1109
        %v1111 = vpop.f32.mrb[0].mxu0
        %v1112 = vpop.f32.mrb[0].mxu0
        %v1113 = vadd.f32 %v474, %v1112
        %v1114 = vpop.f32.mrb[0].mxu0
        %1115 = vmatprep.mubr.bf16.mxu0 0
        %1116 = vmatmul.mubr.bf16.gmra.mrb[0].mxu0 %v719
        %v1117 = vpop.f32.mrb[0].mxu0
        %v1118 = vadd.f32 %v474, %v1117
        %v1119 = vpop.f32.mrb[0].mxu0
        %v1120 = vpop.f32.mrb[0].mxu0
        %v1121 = vadd.f32 %v474, %v1120
        %v1122 = vpop.f32.mrb[0].mxu0
        %1123 = vmatprep.mubr.bf16.mxu0 0
        %1124 = vmatmul.mubr.bf16.gmra.mrb[0].mxu0 %v722
        %v1125 = vpop.f32.mrb[0].mxu0
        %v1126 = vadd.f32 %v474, %v1125
        %v1127 = vpop.f32.mrb[0].mxu0
        %v1128 = vpop.f32.mrb[0].mxu0
        %v1129 = vadd.f32 %v474, %v1128
        %v1130 = vpop.f32.mrb[0].mxu0
        %1131 = vmatprep.mubr.bf16.mxu0 0
        %1132 = vmatmul.mubr.bf16.gmra.mrb[0].mxu0 %v725
        %v1133 = vpop.f32.mrb[0].mxu0
        %v1134 = vadd.f32 %v474, %v1133
        %v1135 = vpop.f32.mrb[0].mxu0
        %v1136 = vpop.f32.mrb[0].mxu0
        %v1137 = vadd.f32 %v474, %v1136
        %v1138 = vpop.f32.mrb[0].mxu0
        %1139 = vmatprep.mubr.bf16.mxu0 0
        %1140 = vmatmul.mubr.bf16.gmra.mrb[0].mxu0 %v728
        %v1141 = vpop.f32.mrb[0].mxu0
        %v1142 = vadd.f32 %v474, %v1141
        %v1143 = vpop.f32.mrb[0].mxu0
        %v1144 = vpop.f32.mrb[0].mxu0
        %v1145 = vadd.f32 %v474, %v1144
        %v1146 = vpop.f32.mrb[0].mxu0
        %1147 = vmatprep.mubr.bf16.mxu0 0
        %1148 = vmatmul.mubr.bf16.gmra.mrb[0].mxu0 %v731
        %v1149 = vpop.f32.mrb[0].mxu0
        %v1150 = vadd.f32 %v474, %v1149
        %v1151 = vpop.f32.mrb[0].mxu0
        %v1152 = vpop.f32.mrb[0].mxu0
        %v1153 = vadd.f32 %v474, %v1152
        %v1154 = vpop.f32.mrb[0].mxu0
        %1155 = vmatprep.mubr.bf16.mxu0 0
        %1156 = vmatmul.mubr.bf16.gmra.mrb[0].mxu0 %v734
        %v1157 = vpop.f32.mrb[0].mxu0
        %v1158 = vadd.f32 %v474, %v1157
        %v1159 = vpop.f32.mrb[0].mxu0
        %v1160 = vpop.f32.mrb[0].mxu0
        %v1161 = vadd.f32 %v474, %v1160
        %v1162 = vpop.f32.mrb[0].mxu0
        %1163 = vmatprep.mubr.bf16.mxu0 0
        %1164 = vmatmul.mubr.bf16.gmra.mrb[0].mxu0 %v737
        %v1165 = vpop.f32.mrb[0].mxu0
        %v1166 = vadd.f32 %v474, %v1165
        %v1167 = vpop.f32.mrb[0].mxu0
        %v1168 = vpop.f32.mrb[0].mxu0
        %v1169 = vadd.f32 %v474, %v1168
        %v1170 = vpop.f32.mrb[0].mxu0
        %1171 = vmatprep.mubr.bf16.mxu0 0
        %1172 = vmatmul.mubr.bf16.gmra.mrb[0].mxu0 %v740
        %v1173 = vpop.f32.mrb[0].mxu0
        %v1174 = vadd.f32 %v474, %v1173
        %v1175 = vpop.f32.mrb[0].mxu0
        %v1176 = vpop.f32.mrb[0].mxu0
        %v1177 = vadd.f32 %v474, %v1176
        %v1178 = vpop.f32.mrb[0].mxu0
        %1179 = vmatprep.mubr.bf16.mxu0 0
        %1180 = vmatmul.mubr.bf16.gmra.mrb[0].mxu0 %v743
        %v1181 = vpop.f32.mrb[0].mxu0
        %v1182 = vadd.f32 %v474, %v1181
        %v1183 = vpop.f32.mrb[0].mxu0
        %v1184 = vpop.f32.mrb[0].mxu0
        %v1185 = vadd.f32 %v474, %v1184
        %v1186 = vpop.f32.mrb[0].mxu0
        %1187 = vmatprep.mubr.bf16.mxu0 0
        %1188 = vmatmul.mubr.bf16.gmra.mrb[0].mxu0 %v746
        %v1189 = vpop.f32.mrb[0].mxu0
        %v1190 = vadd.f32 %v474, %v1189
        %v1191 = vpop.f32.mrb[0].mxu0
        %v1192 = vpop.f32.mrb[0].mxu0
        %v1193 = vadd.f32 %v474, %v1192
        %v1194 = vpop.f32.mrb[0].mxu0
        %1195 = vmatprep.mubr.bf16.mxu0 0
        %1196 = vmatmul.mubr.bf16.gmra.mrb[0].mxu0 %v749
        %v1197 = vpop.f32.mrb[0].mxu0
        %v1198 = vadd.f32 %v474, %v1197
        %v1199 = vpop.f32.mrb[0].mxu0
        %v1200 = vpop.f32.mrb[0].mxu0
        %v1201 = vadd.f32 %v474, %v1200
        %v1202 = vpop.f32.mrb[0].mxu0
        %1203 = vmatprep.mubr.bf16.mxu0 0
        %1204 = vmatmul.mubr.bf16.gmra.mrb[0].mxu0 %v752
        %v1205 = vpop.f32.mrb[0].mxu0
        %v1206 = vadd.f32 %v474, %v1205
        %v1207 = vpop.f32.mrb[0].mxu0
        %v1208 = vpop.f32.mrb[0].mxu0
        %v1209 = vadd.f32 %v474, %v1208
        %v1210 = vpop.f32.mrb[0].mxu0
        %1211 = vmatprep.mubr.bf16.mxu0 0
        %1212 = vmatmul.mubr.bf16.gmra.mrb[0].mxu0 %v755
        %v1213 = vpop.f32.mrb[0].mxu0
        %v1214 = vadd.f32 %v474, %v1213
        %v1215 = vpop.f32.mrb[0].mxu0
        %v1216 = vpop.f32.mrb[0].mxu0
        %v1217 = vadd.f32 %v474, %v1216
        %v1218 = vpop.f32.mrb[0].mxu0
        %1219 = vmatprep.mubr.bf16.mxu0 0
        %1220 = vmatmul.mubr.bf16.gmra.mrb[0].mxu0 %v758
        %v1221 = vpop.f32.mrb[0].mxu0
        %v1222 = vadd.f32 %v474, %v1221
        %v1223 = vpop.f32.mrb[0].mxu0
        %v1224 = vpop.f32.mrb[0].mxu0
        %v1225 = vadd.f32 %v474, %v1224
        %v1226 = vpop.f32.mrb[0].mxu0
        %1227 = vmatprep.mubr.bf16.mxu0 0
        %1228 = vmatmul.mubr.bf16.gmra.mrb[0].mxu0 %v761
        %v1229 = vpop.f32.mrb[0].mxu0
        %v1230 = vadd.f32 %v474, %v1229
        %v1231 = vpop.f32.mrb[0].mxu0
        %v1232 = vpop.f32.mrb[0].mxu0
        %v1233 = vadd.f32 %v474, %v1232
        %v1234 = vpop.f32.mrb[0].mxu0
        %1235 = vmatprep.mubr.bf16.mxu0 0
        %1236 = vmatmul.mubr.bf16.gmra.mrb[0].mxu0 %v764
        %v1237 = vpop.f32.mrb[0].mxu0
        %v1238 = vadd.f32 %v474, %v1237
        %v1239 = vpop.f32.mrb[0].mxu0
        %v1240 = vpop.f32.mrb[0].mxu0
        %v1241 = vadd.f32 %v474, %v1240
        %v1242 = vpop.f32.mrb[0].mxu0
        %1243 = vmatprep.mubr.bf16.mxu0 0
        %1244 = vmatmul.mubr.bf16.gmra.mrb[0].mxu0 %v767
        %v1245 = vpop.f32.mrb[0].mxu0
        %v1246 = vadd.f32 %v474, %v1245
        %v1247 = vpop.f32.mrb[0].mxu0
        %v1248 = vpop.f32.mrb[0].mxu0
        %v1249 = vadd.f32 %v474, %v1248
        %v1250 = vpop.f32.mrb[0].mxu0
        %1251 = vmatprep.mubr.bf16.mxu0 0
        %1252 = vmatmul.mubr.bf16.gmra.mrb[0].mxu0 %v770
        %v1253 = vpop.f32.mrb[0].mxu0
        %v1254 = vadd.f32 %v474, %v1253
        %v1255 = vpop.f32.mrb[0].mxu0
        %v1256 = vpop.f32.mrb[0].mxu0
        %v1257 = vadd.f32 %v474, %v1256
        %v1258 = vpop.f32.mrb[0].mxu0
        %1259 = vmatprep.mubr.bf16.mxu0 0
        %1260 = vmatmul.mubr.bf16.gmra.mrb[0].mxu0 %v773
        %v1261 = vpop.f32.mrb[0].mxu0
        %v1262 = vadd.f32 %v474, %v1261
        %v1263 = vpop.f32.mrb[0].mxu0
        %v1264 = vpop.f32.mrb[0].mxu0
        %v1265 = vadd.f32 %v474, %v1264
        %v1266 = vpop.f32.mrb[0].mxu0
        %1267 = vmatprep.mubr.bf16.mxu0 0
        %1268 = vmatmul.mubr.bf16.gmra.mrb[0].mxu0 %v776
        %v1269 = vpop.f32.mrb[0].mxu0
        %v1270 = vadd.f32 %v474, %v1269
        %v1271 = vpop.f32.mrb[0].mxu0
        %v1272 = vpop.f32.mrb[0].mxu0
        %v1273 = vadd.f32 %v474, %v1272
        %v1274 = vpop.f32.mrb[0].mxu0
        %1275 = vmatprep.mubr.bf16.mxu0 0
        %1276 = vmatmul.mubr.bf16.gmra.mrb[0].mxu0 %v779
        %v1277 = vpop.f32.mrb[0].mxu0
        %v1278 = vadd.f32 %v474, %v1277
        %v1279 = vpop.f32.mrb[0].mxu0
        %v1280 = vpop.f32.mrb[0].mxu0
        %v1281 = vadd.f32 %v474, %v1280
        %v1282 = vpop.f32.mrb[0].mxu0
        %1283 = vmatprep.mubr.bf16.mxu0 0
        %1284 = vmatmul.mubr.bf16.gmra.mrb[0].mxu0 %v782
        %v1285 = vpop.f32.mrb[0].mxu0
        %v1286 = vadd.f32 %v474, %v1285
        %v1287 = vpop.f32.mrb[0].mxu0
        %v1288 = vpop.f32.mrb[0].mxu0
        %v1289 = vadd.f32 %v474, %v1288
        %v1290 = vpop.f32.mrb[0].mxu0
        %1291 = vmatprep.mubr.bf16.mxu0 0
        %1292 = vmatmul.mubr.bf16.gmra.mrb[0].mxu0 %v785
        %v1293 = vpop.f32.mrb[0].mxu0
        %v1294 = vadd.f32 %v474, %v1293
        %v1295 = vpop.f32.mrb[0].mxu0
        %v1296 = vpop.f32.mrb[0].mxu0
        %v1297 = vadd.f32 %v474, %v1296
        %v1298 = vpop.f32.mrb[0].mxu0
        %1299 = vmatprep.mubr.bf16.mxu0 0
        %1300 = vmatmul.mubr.bf16.gmra.mrb[0].mxu0 %v788
        %v1301 = vpop.f32.mrb[0].mxu0
        %v1302 = vadd.f32 %v474, %v1301
        %v1303 = vpop.f32.mrb[0].mxu0
        %v1304 = vpop.f32.mrb[0].mxu0
        %v1305 = vadd.f32 %v474, %v1304
        %v1306 = vpop.f32.mrb[0].mxu0
        %1307 = vmatprep.mubr.bf16.mxu0 0
        %1308 = vmatmul.mubr.bf16.gmra.mrb[0].mxu0 %v791
        %v1309 = vpop.f32.mrb[0].mxu0
        %v1310 = vadd.f32 %v474, %v1309
        %v1311 = vpop.f32.mrb[0].mxu0
        %v1312 = vpop.f32.mrb[0].mxu0
        %v1313 = vadd.f32 %v474, %v1312
        %v1314 = vpop.f32.mrb[0].mxu0
        %1315 = vmatprep.mubr.bf16.mxu0 0
        %1316 = vmatmul.mubr.bf16.gmra.mrb[0].mxu0 %v794
        %v1317 = vpop.f32.mrb[0].mxu0
        %v1318 = vadd.f32 %v474, %v1317
        %v1319 = vpop.f32.mrb[0].mxu0
        %v1320 = vpop.f32.mrb[0].mxu0
        %v1321 = vadd.f32 %v474, %v1320
        %v1322 = vpop.f32.mrb[0].mxu0
        %1323 = vmatprep.mubr.bf16.mxu0 0
        %1324 = vmatmul.mubr.bf16.gmra.mrb[0].mxu0 %v797
        %v1325 = vpop.f32.mrb[0].mxu0
        %v1326 = vadd.f32 %v474, %v1325
        %v1327 = vpop.f32.mrb[0].mxu0
        %v1328 = vpop.f32.mrb[0].mxu0
        %v1329 = vadd.f32 %v474, %v1328
        %v1330 = vpop.f32.mrb[0].mxu0
        %1331 = vmatprep.mubr.bf16.mxu0 0
        %1332 = vmatmul.mubr.bf16.gmra.mrb[0].mxu0 %v800
        %v1333 = vpop.f32.mrb[0].mxu0
        %v1334 = vadd.f32 %v474, %v1333
        %v1335 = vpop.f32.mrb[0].mxu0
        %v1336 = vpop.f32.mrb[0].mxu0
        %v1337 = vadd.f32 %v474, %v1336
        %v1338 = vpop.f32.mrb[0].mxu0
        %1339 = vmatprep.mubr.bf16.mxu0 0
        %1340 = vmatmul.mubr.bf16.gmra.mrb[0].mxu0 %v803
        %v1341 = vpop.f32.mrb[0].mxu0
        %v1342 = vadd.f32 %v474, %v1341
        %v1343 = vpop.f32.mrb[0].mxu0
        %v1344 = vpop.f32.mrb[0].mxu0
        %v1345 = vadd.f32 %v474, %v1344
        %v1346 = vpop.f32.mrb[0].mxu0
        %1347 = vmatprep.mubr.bf16.mxu0 0
        %1348 = vmatmul.mubr.bf16.gmra.mrb[0].mxu0 %v806
        %v1349 = vpop.f32.mrb[0].mxu0
        %v1350 = vadd.f32 %v474, %v1349
        %v1351 = vpop.f32.mrb[0].mxu0
        %v1352 = vpop.f32.mrb[0].mxu0
        %v1353 = vadd.f32 %v474, %v1352
        %v1354 = vpop.f32.mrb[0].mxu0
        %1355 = vmatprep.mubr.bf16.mxu0 0
        %1356 = vmatmul.mubr.bf16.gmra.mrb[0].mxu0 %v809
        %v1357 = vpop.f32.mrb[0].mxu0
        %v1358 = vadd.f32 %v474, %v1357
        %v1359 = vpop.f32.mrb[0].mxu0
        %v1360 = vpop.f32.mrb[0].mxu0
        %v1361 = vadd.f32 %v474, %v1360
        %v1362 = vpop.f32.mrb[0].mxu0
        %1363 = vmatprep.mubr.bf16.mxu0 0
        %1364 = vmatmul.mubr.bf16.gmra.mrb[0].mxu0 %v812
        %v1365 = vpop.f32.mrb[0].mxu0
        %v1366 = vadd.f32 %v474, %v1365
        %v1367 = vpop.f32.mrb[0].mxu0
        %v1368 = vpop.f32.mrb[0].mxu0
        %v1369 = vadd.f32 %v474, %v1368
        %v1370 = vpop.f32.mrb[0].mxu0
        %1371 = vmatprep.mubr.bf16.mxu0 0
        %1372 = vmatmul.mubr.bf16.gmra.mrb[0].mxu0 %v815
        %v1373 = vpop.f32.mrb[0].mxu0
        %v1374 = vadd.f32 %v474, %v1373
        %v1375 = vpop.f32.mrb[0].mxu0
        %v1376 = vpop.f32.mrb[0].mxu0
        %v1377 = vadd.f32 %v474, %v1376
        %v1378 = vpop.f32.mrb[0].mxu0
        %1379 = vmatprep.mubr.bf16.mxu0 0
        %1380 = vmatmul.mubr.bf16.gmra.mrb[0].mxu0 %v818
        %v1381 = vpop.f32.mrb[0].mxu0
        %v1382 = vadd.f32 %v474, %v1381
        %v1383 = vpop.f32.mrb[0].mxu0
        %v1384 = vpop.f32.mrb[0].mxu0
        %v1385 = vadd.f32 %v474, %v1384
        %v1386 = vpop.f32.mrb[0].mxu0
        %1387 = vmatprep.mubr.bf16.mxu0 0
        %1388 = vmatmul.mubr.bf16.gmra.mrb[0].mxu0 %v821
        %v1389 = vpop.f32.mrb[0].mxu0
        %v1390 = vadd.f32 %v474, %v1389
        %v1391 = vpop.f32.mrb[0].mxu0
        %v1392 = vpop.f32.mrb[0].mxu0
        %v1393 = vadd.f32 %v474, %v1392
        %v1394 = vpop.f32.mrb[0].mxu0
        %1395 = vmatprep.mubr.bf16.mxu0 0
        %1396 = vmatmul.mubr.bf16.gmra.mrb[0].mxu0 %v824
        %v1397 = vpop.f32.mrb[0].mxu0
        %v1398 = vadd.f32 %v474, %v1397
        %v1399 = vpop.f32.mrb[0].mxu0
        %v1400 = vpop.f32.mrb[0].mxu0
        %v1401 = vadd.f32 %v474, %v1400
        %v1402 = vpop.f32.mrb[0].mxu0
        %1403 = vmatprep.mubr.bf16.mxu0 0
        %1404 = vmatmul.mubr.bf16.gmra.mrb[0].mxu0 %v827
        %v1405 = vpop.f32.mrb[0].mxu0
        %v1406 = vadd.f32 %v474, %v1405
        %v1407 = vpop.f32.mrb[0].mxu0
        %v1408 = vpop.f32.mrb[0].mxu0
        %v1409 = vadd.f32 %v474, %v1408
        %v1410 = vpop.f32.mrb[0].mxu0
        %1411 = vmatprep.mubr.bf16.mxu0 0
        %1412 = vmatmul.mubr.bf16.gmra.mrb[0].mxu0 %v830
        %v1413 = vpop.f32.mrb[0].mxu0
        %v1414 = vadd.f32 %v474, %v1413
        %v1415 = vpop.f32.mrb[0].mxu0
        %v1416 = vpop.f32.mrb[0].mxu0
        %v1417 = vadd.f32 %v474, %v1416
        %v1418 = vpop.f32.mrb[0].mxu0
        %1419 = vmatprep.mubr.bf16.mxu0 0
        %1420 = vmatmul.mubr.bf16.gmra.mrb[0].mxu0 %v833
        %v1421 = vpop.f32.mrb[0].mxu0
        %v1422 = vadd.f32 %v474, %v1421
        %v1423 = vpop.f32.mrb[0].mxu0
        %v1424 = vpop.f32.mrb[0].mxu0
        %v1425 = vadd.f32 %v474, %v1424
        %v1426 = vpop.f32.mrb[0].mxu0
        %1427 = vmatprep.mubr.bf16.mxu0 0
        %1428 = vmatmul.mubr.bf16.gmra.mrb[0].mxu0 %v836
        %v1429 = vpop.f32.mrb[0].mxu0
        %v1430 = vadd.f32 %v474, %v1429
        %v1431 = vpop.f32.mrb[0].mxu0
        %v1432 = vpop.f32.mrb[0].mxu0
        %v1433 = vadd.f32 %v474, %v1432
        %v1434 = vpop.f32.mrb[0].mxu0
        %1435 = vmatprep.mubr.bf16.mxu0 0
        %1436 = vmatmul.mubr.bf16.gmra.mrb[0].mxu0 %v839
        %v1437 = vpop.f32.mrb[0].mxu0
        %v1438 = vadd.f32 %v474, %v1437
        %v1439 = vpop.f32.mrb[0].mxu0
        %v1440 = vpop.f32.mrb[0].mxu0
        %v1441 = vadd.f32 %v474, %v1440
        %v1442 = vpop.f32.mrb[0].mxu0
        %1443 = vmatprep.mubr.bf16.mxu0 0
        %1444 = vmatmul.mubr.bf16.gmra.mrb[0].mxu0 %v842
        %v1445 = vpop.f32.mrb[0].mxu0
        %v1446 = vadd.f32 %v474, %v1445
        %v1447 = vpop.f32.mrb[0].mxu0
        %v1448 = vpop.f32.mrb[0].mxu0
        %v1449 = vadd.f32 %v474, %v1448
        %v1450 = vpop.f32.mrb[0].mxu0
        %1451 = vmatprep.mubr.bf16.mxu0 0
        %1452 = vmatmul.mubr.bf16.gmra.mrb[0].mxu0 %v845
        %v1453 = vpop.f32.mrb[0].mxu0
        %v1454 = vadd.f32 %v474, %v1453
        %v1455 = vpop.f32.mrb[0].mxu0
        %v1456 = vpop.f32.mrb[0].mxu0
        %v1457 = vadd.f32 %v474, %v1456
        %v1458 = vpop.f32.mrb[0].mxu0
        %1459 = vmatprep.mubr.bf16.mxu0 0
        %1460 = vmatmul.mubr.bf16.gmra.mrb[0].mxu0 %v848
        %v1461 = vpop.f32.mrb[0].mxu0
        %v1462 = vadd.f32 %v474, %v1461
        %v1463 = vpop.f32.mrb[0].mxu0
        %v1464 = vpop.f32.mrb[0].mxu0
        %v1465 = vadd.f32 %v474, %v1464
        %v1466 = vpop.f32.mrb[0].mxu0
        %1467 = vmatprep.mubr.bf16.mxu0 0
        %1468 = vmatmul.mubr.bf16.gmra.mrb[0].mxu0 %v851
        %v1469 = vpop.f32.mrb[0].mxu0
        %v1470 = vadd.f32 %v474, %v1469
        %v1471 = vpop.f32.mrb[0].mxu0
        %v1472 = vpop.f32.mrb[0].mxu0
        %v1473 = vadd.f32 %v474, %v1472
        %v1474 = vpop.f32.mrb[0].mxu0
        %1475 = vmatprep.mubr.bf16.mxu0 0
        %1476 = vmatmul.mubr.bf16.gmra.mrb[0].mxu0 %v854
        %v1477 = vpop.f32.mrb[0].mxu0
        %v1478 = vadd.f32 %v474, %v1477
        %v1479 = vpop.f32.mrb[0].mxu0
        %v1480 = vpop.f32.mrb[0].mxu0
        %v1481 = vadd.f32 %v474, %v1480
        %v1482 = vpop.f32.mrb[0].mxu0
        %1483 = vmatprep.mubr.bf16.mxu0 0
        %1484 = vmatmul.mubr.bf16.gmra.mrb[0].mxu0 %v857
        %v1485 = vpop.f32.mrb[0].mxu0
        %v1486 = vadd.f32 %v474, %v1485
        %v1487 = vpop.f32.mrb[0].mxu0
        %v1488 = vpop.f32.mrb[0].mxu0
        %v1489 = vadd.f32 %v474, %v1488
        %v1490 = vpop.f32.mrb[0].mxu0
        %1491 = vmatprep.mubr.bf16.mxu0 0
        %1492 = vmatmul.mubr.bf16.gmra.mrb[0].mxu0 %v860
        %v1493 = vpop.f32.mrb[0].mxu0
        %v1494 = vadd.f32 %v474, %v1493
        %v1495 = vpop.f32.mrb[0].mxu0
        %v1496 = vpop.f32.mrb[0].mxu0
        %v1497 = vadd.f32 %v474, %v1496
        %v1498 = vpop.f32.mrb[0].mxu0
        %1499 = vmatprep.mubr.bf16.mxu0 0
        %1500 = vmatmul.mubr.bf16.gmra.mrb[0].mxu0 %v863
        %v1501 = vpop.f32.mrb[0].mxu0
        %v1502 = vadd.f32 %v474, %v1501
        %v1503 = vpop.f32.mrb[0].mxu0
        %v1504 = vpop.f32.mrb[0].mxu0
        %v1505 = vadd.f32 %v474, %v1504
        %v1506 = vpop.f32.mrb[0].mxu0
        %1507 = vmatprep.mubr.bf16.mxu0 0
        %1508 = vmatmul.mubr.bf16.gmra.mrb[0].mxu0 %v866
        %v1509 = vpop.f32.mrb[0].mxu0
        %v1510 = vadd.f32 %v474, %v1509
        %v1511 = vpop.f32.mrb[0].mxu0
        %v1512 = vpop.f32.mrb[0].mxu0
        %v1513 = vadd.f32 %v474, %v1512
        %v1514 = vpop.f32.mrb[0].mxu0
        %1515 = vmatprep.mubr.bf16.mxu0 0
        %1516 = vmatmul.mubr.bf16.gmra.mrb[0].mxu0 %v869
        %v1517 = vpop.f32.mrb[0].mxu0
        %v1518 = vadd.f32 %v474, %v1517
        %v1519 = vpop.f32.mrb[0].mxu0
        %v1520 = vpop.f32.mrb[0].mxu0
        %v1521 = vadd.f32 %v474, %v1520
        %v1522 = vpop.f32.mrb[0].mxu0
        %1523 = vmatprep.mubr.bf16.mxu0 0
        %1524 = vmatmul.mubr.bf16.gmra.mrb[0].mxu0 %v872
        %v1525 = vpop.f32.mrb[0].mxu0
        %v1526 = vadd.f32 %v474, %v1525
        %v1527 = vpop.f32.mrb[0].mxu0
        %v1528 = vpop.f32.mrb[0].mxu0
        %v1529 = vadd.f32 %v474, %v1528
        %v1530 = vpop.f32.mrb[0].mxu0
        %1531 = vmatprep.mubr.bf16.mxu0 0
        %1532 = vmatmul.mubr.bf16.gmra.mrb[0].mxu0 %v875
        %v1533 = vpop.f32.mrb[0].mxu0
        %v1534 = vadd.f32 %v474, %v1533
        %v1535 = vpop.f32.mrb[0].mxu0
        %v1536 = vpop.f32.mrb[0].mxu0
        %v1537 = vadd.f32 %v474, %v1536
        %v1538 = vpop.f32.mrb[0].mxu0
        %1539 = vmatprep.mubr.bf16.mxu0 0
        %1540 = vmatmul.mubr.bf16.gmra.mrb[0].mxu0 %v878
        %v1541 = vpop.f32.mrb[0].mxu0
        %v1542 = vadd.f32 %v474, %v1541
        %v1543 = vpop.f32.mrb[0].mxu0
        %v1544 = vpop.f32.mrb[0].mxu0
        %v1545 = vadd.f32 %v474, %v1544
        %v1546 = vpop.f32.mrb[0].mxu0
        %1547 = vmatprep.mubr.bf16.mxu0 0
        %1548 = vmatmul.mubr.bf16.gmra.mrb[0].mxu0 %v881
        %v1549 = vpop.f32.mrb[0].mxu0
        %v1550 = vadd.f32 %v474, %v1549
        %v1551 = vpop.f32.mrb[0].mxu0
        %v1552 = vpop.f32.mrb[0].mxu0
        %v1553 = vadd.f32 %v474, %v1552
        %v1554 = vpop.f32.mrb[0].mxu0
        %1555 = vdwg.mxu0
        %v1556 = vmax.f32 %v918, 0.0
        %v1557 = vmax.f32 %v921, 0.0
        %v1558 = vmax.f32 %v926, 0.0
        %v1559 = vmax.f32 %v929, 0.0
        %v1560 = vmax.f32 %v934, 0.0
        %v1561 = vmax.f32 %v937, 0.0
        %v1562 = vmax.f32 %v942, 0.0
        %v1563 = vmax.f32 %v945, 0.0
        %v1564 = vmax.f32 %v950, 0.0
        %v1565 = vmax.f32 %v953, 0.0
        %v1566 = vmax.f32 %v958, 0.0
        %v1567 = vmax.f32 %v961, 0.0
        %v1568 = vmax.f32 %v966, 0.0
        %v1569 = vmax.f32 %v969, 0.0
        %v1570 = vmax.f32 %v974, 0.0
        %v1571 = vmax.f32 %v977, 0.0
        %v1572 = vmax.f32 %v982, 0.0
        %v1573 = vmax.f32 %v985, 0.0
        %v1574 = vmax.f32 %v990, 0.0
        %v1575 = vmax.f32 %v993, 0.0
        %v1576 = vmax.f32 %v998, 0.0
        %v1577 = vmax.f32 %v1001, 0.0
        %v1578 = vmax.f32 %v1006, 0.0
        %v1579 = vmax.f32 %v1009, 0.0
        %v1580 = vmax.f32 %v1014, 0.0
        %v1581 = vmax.f32 %v1017, 0.0
        %v1582 = vmax.f32 %v1022, 0.0
        %v1583 = vmax.f32 %v1025, 0.0
        %v1584 = vmax.f32 %v1030, 0.0
        %v1585 = vmax.f32 %v1033, 0.0
        %v1586 = vmax.f32 %v1038, 0.0
        %v1587 = vmax.f32 %v1041, 0.0
        %v1588 = vmax.f32 %v1046, 0.0
        %v1589 = vmax.f32 %v1049, 0.0
        %v1590 = vmax.f32 %v1054, 0.0
        %v1591 = vmax.f32 %v1057, 0.0
        %v1592 = vmax.f32 %v1062, 0.0
        %v1593 = vmax.f32 %v1065, 0.0
        %v1594 = vmax.f32 %v1070, 0.0
        %v1595 = vmax.f32 %v1073, 0.0
        %v1596 = vmax.f32 %v1078, 0.0
        %v1597 = vmax.f32 %v1081, 0.0
        %v1598 = vmax.f32 %v1086, 0.0
        %v1599 = vmax.f32 %v1089, 0.0
        %v1600 = vmax.f32 %v1094, 0.0
        %v1601 = vmax.f32 %v1097, 0.0
        %v1602 = vmax.f32 %v1102, 0.0
        %v1603 = vmax.f32 %v1105, 0.0
        %v1604 = vmax.f32 %v1110, 0.0
        %v1605 = vmax.f32 %v1113, 0.0
        %v1606 = vmax.f32 %v1118, 0.0
        %v1607 = vmax.f32 %v1121, 0.0
        %v1608 = vmax.f32 %v1126, 0.0
        %v1609 = vmax.f32 %v1129, 0.0
        %v1610 = vmax.f32 %v1134, 0.0
        %v1611 = vmax.f32 %v1137, 0.0
        %v1612 = vmax.f32 %v1142, 0.0
        %v1613 = vmax.f32 %v1145, 0.0
        %v1614 = vmax.f32 %v1150, 0.0
        %v1615 = vmax.f32 %v1153, 0.0
        %v1616 = vmax.f32 %v1158, 0.0
        %v1617 = vmax.f32 %v1161, 0.0
        %v1618 = vmax.f32 %v1166, 0.0
        %v1619 = vmax.f32 %v1169, 0.0
        %v1620 = vmax.f32 %v1174, 0.0
        %v1621 = vmax.f32 %v1177, 0.0
        %v1622 = vmax.f32 %v1182, 0.0
        %v1623 = vmax.f32 %v1185, 0.0
        %v1624 = vmax.f32 %v1190, 0.0
        %v1625 = vmax.f32 %v1193, 0.0
        %v1626 = vmax.f32 %v1198, 0.0
        %v1627 = vmax.f32 %v1201, 0.0
        %v1628 = vmax.f32 %v1206, 0.0
        %v1629 = vmax.f32 %v1209, 0.0
        %v1630 = vmax.f32 %v1214, 0.0
        %v1631 = vmax.f32 %v1217, 0.0
        %v1632 = vmax.f32 %v1222, 0.0
        %v1633 = vmax.f32 %v1225, 0.0
        %v1634 = vmax.f32 %v1230, 0.0
        %v1635 = vmax.f32 %v1233, 0.0
        %v1636 = vmax.f32 %v1238, 0.0
        %v1637 = vmax.f32 %v1241, 0.0
        %v1638 = vmax.f32 %v1246, 0.0
        %v1639 = vmax.f32 %v1249, 0.0
        %v1640 = vmax.f32 %v1254, 0.0
        %v1641 = vmax.f32 %v1257, 0.0
        %v1642 = vmax.f32 %v1262, 0.0
        %v1643 = vmax.f32 %v1265, 0.0
        %v1644 = vmax.f32 %v1270, 0.0
        %v1645 = vmax.f32 %v1273, 0.0
        %v1646 = vmax.f32 %v1278, 0.0
        %v1647 = vmax.f32 %v1281, 0.0
        %v1648 = vmax.f32 %v1286, 0.0
        %v1649 = vmax.f32 %v1289, 0.0
        %v1650 = vmax.f32 %v1294, 0.0
        %v1651 = vmax.f32 %v1297, 0.0
        %v1652 = vmax.f32 %v1302, 0.0
        %v1653 = vmax.f32 %v1305, 0.0
        %v1654 = vmax.f32 %v1310, 0.0
        %v1655 = vmax.f32 %v1313, 0.0
        %v1656 = vmax.f32 %v1318, 0.0
        %v1657 = vmax.f32 %v1321, 0.0
        %v1658 = vmax.f32 %v1326, 0.0
        %v1659 = vmax.f32 %v1329, 0.0
        %v1660 = vmax.f32 %v1334, 0.0
        %v1661 = vmax.f32 %v1337, 0.0
        %v1662 = vmax.f32 %v1342, 0.0
        %v1663 = vmax.f32 %v1345, 0.0
        %v1664 = vmax.f32 %v1350, 0.0
        %v1665 = vmax.f32 %v1353, 0.0
        %v1666 = vmax.f32 %v1358, 0.0
        %v1667 = vmax.f32 %v1361, 0.0
        %v1668 = vmax.f32 %v1366, 0.0
        %v1669 = vmax.f32 %v1369, 0.0
        %v1670 = vmax.f32 %v1374, 0.0
        %v1671 = vmax.f32 %v1377, 0.0
        %v1672 = vmax.f32 %v1382, 0.0
        %v1673 = vmax.f32 %v1385, 0.0
        %v1674 = vmax.f32 %v1390, 0.0
        %v1675 = vmax.f32 %v1393, 0.0
        %v1676 = vmax.f32 %v1398, 0.0
        %v1677 = vmax.f32 %v1401, 0.0
        %v1678 = vmax.f32 %v1406, 0.0
        %v1679 = vmax.f32 %v1409, 0.0
        %v1680 = vmax.f32 %v1414, 0.0
        %v1681 = vmax.f32 %v1417, 0.0
        %v1682 = vmax.f32 %v1422, 0.0
        %v1683 = vmax.f32 %v1425, 0.0
        %v1684 = vmax.f32 %v1430, 0.0
        %v1685 = vmax.f32 %v1433, 0.0
        %v1686 = vmax.f32 %v1438, 0.0
        %v1687 = vmax.f32 %v1441, 0.0
        %v1688 = vmax.f32 %v1446, 0.0
        %v1689 = vmax.f32 %v1449, 0.0
        %v1690 = vmax.f32 %v1454, 0.0
        %v1691 = vmax.f32 %v1457, 0.0
        %v1692 = vmax.f32 %v1462, 0.0
        %v1693 = vmax.f32 %v1465, 0.0
        %v1694 = vmax.f32 %v1470, 0.0
        %v1695 = vmax.f32 %v1473, 0.0
        %v1696 = vmax.f32 %v1478, 0.0
        %v1697 = vmax.f32 %v1481, 0.0
        %v1698 = vmax.f32 %v1486, 0.0
        %v1699 = vmax.f32 %v1489, 0.0
        %v1700 = vmax.f32 %v1494, 0.0
        %v1701 = vmax.f32 %v1497, 0.0
        %v1702 = vmax.f32 %v1502, 0.0
        %v1703 = vmax.f32 %v1505, 0.0
        %v1704 = vmax.f32 %v1510, 0.0
        %v1705 = vmax.f32 %v1513, 0.0
        %v1706 = vmax.f32 %v1518, 0.0
        %v1707 = vmax.f32 %v1521, 0.0
        %v1708 = vmax.f32 %v1526, 0.0
        %v1709 = vmax.f32 %v1529, 0.0
        %v1710 = vmax.f32 %v1534, 0.0
        %v1711 = vmax.f32 %v1537, 0.0
        %v1712 = vmax.f32 %v1542, 0.0
        %v1713 = vmax.f32 %v1545, 0.0
        %v1714 = vmax.f32 %v1550, 0.0
        %v1715 = vmax.f32 %v1553, 0.0
        %v1716 = vpack.c.bf16 %v1557, %v1556
        %v1717 = vpack.c.bf16 %v1559, %v1558
        %v1718 = vpack.c.bf16 %v1561, %v1560
        %v1719 = vpack.c.bf16 %v1563, %v1562
        %v1720 = vpack.c.bf16 %v1565, %v1564
        %v1721 = vpack.c.bf16 %v1567, %v1566
        %v1722 = vpack.c.bf16 %v1569, %v1568
        %v1723 = vpack.c.bf16 %v1571, %v1570
        %v1724 = vpack.c.bf16 %v1573, %v1572
        %v1725 = vpack.c.bf16 %v1575, %v1574
        %v1726 = vpack.c.bf16 %v1577, %v1576
        %v1727 = vpack.c.bf16 %v1579, %v1578
        %v1728 = vpack.c.bf16 %v1581, %v1580
        %v1729 = vpack.c.bf16 %v1583, %v1582
        %v1730 = vpack.c.bf16 %v1585, %v1584
        %v1731 = vpack.c.bf16 %v1587, %v1586
        %v1732 = vpack.c.bf16 %v1589, %v1588
        %v1733 = vpack.c.bf16 %v1591, %v1590
        %v1734 = vpack.c.bf16 %v1593, %v1592
        %v1735 = vpack.c.bf16 %v1595, %v1594
        %v1736 = vpack.c.bf16 %v1597, %v1596
        %v1737 = vpack.c.bf16 %v1599, %v1598
        %v1738 = vpack.c.bf16 %v1601, %v1600
        %v1739 = vpack.c.bf16 %v1603, %v1602
        %v1740 = vpack.c.bf16 %v1605, %v1604
        %v1741 = vpack.c.bf16 %v1607, %v1606
        %v1742 = vpack.c.bf16 %v1609, %v1608
        %v1743 = vpack.c.bf16 %v1611, %v1610
        %v1744 = vpack.c.bf16 %v1613, %v1612
        %v1745 = vpack.c.bf16 %v1615, %v1614
        %v1746 = vpack.c.bf16 %v1617, %v1616
        %v1747 = vpack.c.bf16 %v1619, %v1618
        %v1748 = vpack.c.bf16 %v1621, %v1620
        %v1749 = vpack.c.bf16 %v1623, %v1622
        %v1750 = vpack.c.bf16 %v1625, %v1624
        %v1751 = vpack.c.bf16 %v1627, %v1626
        %v1752 = vpack.c.bf16 %v1629, %v1628
        %v1753 = vpack.c.bf16 %v1631, %v1630
        %v1754 = vpack.c.bf16 %v1633, %v1632
        %v1755 = vpack.c.bf16 %v1635, %v1634
        %v1756 = vpack.c.bf16 %v1637, %v1636
        %v1757 = vpack.c.bf16 %v1639, %v1638
        %v1758 = vpack.c.bf16 %v1641, %v1640
        %v1759 = vpack.c.bf16 %v1643, %v1642
        %v1760 = vpack.c.bf16 %v1645, %v1644
        %v1761 = vpack.c.bf16 %v1647, %v1646
        %v1762 = vpack.c.bf16 %v1649, %v1648
        %v1763 = vpack.c.bf16 %v1651, %v1650
        %v1764 = vpack.c.bf16 %v1653, %v1652
        %v1765 = vpack.c.bf16 %v1655, %v1654
        %v1766 = vpack.c.bf16 %v1657, %v1656
        %v1767 = vpack.c.bf16 %v1659, %v1658
        %v1768 = vpack.c.bf16 %v1661, %v1660
        %v1769 = vpack.c.bf16 %v1663, %v1662
        %v1770 = vpack.c.bf16 %v1665, %v1664
        %v1771 = vpack.c.bf16 %v1667, %v1666
        %v1772 = vpack.c.bf16 %v1669, %v1668
        %v1773 = vpack.c.bf16 %v1671, %v1670
        %v1774 = vpack.c.bf16 %v1673, %v1672
        %v1775 = vpack.c.bf16 %v1675, %v1674
        %v1776 = vpack.c.bf16 %v1677, %v1676
        %v1777 = vpack.c.bf16 %v1679, %v1678
        %v1778 = vpack.c.bf16 %v1681, %v1680
        %v1779 = vpack.c.bf16 %v1683, %v1682
        %v1780 = vpack.c.bf16 %v1685, %v1684
        %v1781 = vpack.c.bf16 %v1687, %v1686
        %v1782 = vpack.c.bf16 %v1689, %v1688
        %v1783 = vpack.c.bf16 %v1691, %v1690
        %v1784 = vpack.c.bf16 %v1693, %v1692
        %v1785 = vpack.c.bf16 %v1695, %v1694
        %v1786 = vpack.c.bf16 %v1697, %v1696
        %v1787 = vpack.c.bf16 %v1699, %v1698
        %v1788 = vpack.c.bf16 %v1701, %v1700
        %v1789 = vpack.c.bf16 %v1703, %v1702
        %v1790 = vpack.c.bf16 %v1705, %v1704
        %v1791 = vpack.c.bf16 %v1707, %v1706
        %v1792 = vpack.c.bf16 %v1709, %v1708
        %v1793 = vpack.c.bf16 %v1711, %v1710
        %v1794 = vpack.c.bf16 %v1713, %v1712
        %v1795 = vpack.c.bf16 %v1715, %v1714
        %v1796 = vld [vmem:[#allocation7] sm:$0xf]
        %v1797 = vld [vmem:[#allocation7 + $0x4] sm:$0xf]
        %v1798 = vld [vmem:[#allocation7 + $0x8] sm:$0xf]
        %v1799 = vld [vmem:[#allocation7 + $0xc] sm:$0xf]
        %v1800 = vld [vmem:[#allocation7 + $0x10] sm:$0xf]
        %v1801 = vld [vmem:[#allocation7 + $0x14] sm:$0xf]
        %v1802 = vld [vmem:[#allocation7 + $0x18] sm:$0xf]
        %v1803 = vld [vmem:[#allocation7 + $0x1c] sm:$0xf]
        %v1804 = vld [vmem:[%s4] sm:$0x1]
        %v1806 = vlaneseq
        %v1807 = vshrl.u32 %v1806, 7
        %v1808 = vsub.s32 0, %v1807
        %v1809 = vrot.slane %v1804, %v1808
        %v1819 = vunpack.c.l.b16 %v1796
        %v1820 = vunpack.c.l.b16 %v1797
        %v1821 = vunpack.c.l.b16 %v1798
        %v1822 = vunpack.c.l.b16 %v1799
        %v1823 = vunpack.c.l.b16 %v1800
        %v1824 = vunpack.c.l.b16 %v1801
        %v1825 = vunpack.c.l.b16 %v1802
        %v1826 = vunpack.c.l.b16 %v1803
        %v1827 = vpack.c.b16 %v1820, %v1819
        %v1828 = vpack.c.b16 %v1822, %v1821
        %v1829 = vpack.c.b16 %v1824, %v1823
        %v1830 = vpack.c.b16 %v1826, %v1825
        %vm1835 = vcmask 523264
        %v1837 = vsel %vm1835, %v1716, 0
        %v1840 = vsel %vm1835, %v1717, 0
        %v1843 = vsel %vm1835, %v1718, 0
        %v1846 = vsel %vm1835, %v1719, 0
        %v1849 = vsel %vm1835, %v1720, 0
        %v1852 = vsel %vm1835, %v1721, 0
        %v1855 = vsel %vm1835, %v1722, 0
        %v1858 = vsel %vm1835, %v1723, 0
        %v1861 = vsel %vm1835, %v1724, 0
        %v1864 = vsel %vm1835, %v1725, 0
        %v1867 = vsel %vm1835, %v1726, 0
        %v1870 = vsel %vm1835, %v1727, 0
        %v1873 = vsel %vm1835, %v1728, 0
        %v1876 = vsel %vm1835, %v1729, 0
        %v1879 = vsel %vm1835, %v1730, 0
        %v1882 = vsel %vm1835, %v1731, 0
        %v1885 = vsel %vm1835, %v1732, 0
        %v1888 = vsel %vm1835, %v1733, 0
        %v1891 = vsel %vm1835, %v1734, 0
        %v1894 = vsel %vm1835, %v1735, 0
        %v1897 = vsel %vm1835, %v1736, 0
        %v1900 = vsel %vm1835, %v1737, 0
        %v1903 = vsel %vm1835, %v1738, 0
        %v1906 = vsel %vm1835, %v1739, 0
        %v1909 = vsel %vm1835, %v1740, 0
        %v1912 = vsel %vm1835, %v1741, 0
        %v1915 = vsel %vm1835, %v1742, 0
        %v1918 = vsel %vm1835, %v1743, 0
        %v1921 = vsel %vm1835, %v1744, 0
        %v1924 = vsel %vm1835, %v1745, 0
        %v1927 = vsel %vm1835, %v1746, 0
        %v1930 = vsel %vm1835, %v1747, 0
        %v1933 = vsel %vm1835, %v1748, 0
        %v1936 = vsel %vm1835, %v1749, 0
        %v1939 = vsel %vm1835, %v1750, 0
        %v1942 = vsel %vm1835, %v1751, 0
        %v1945 = vsel %vm1835, %v1752, 0
        %v1948 = vsel %vm1835, %v1753, 0
        %v1951 = vsel %vm1835, %v1754, 0
        %v1954 = vsel %vm1835, %v1755, 0
        %v1957 = vsel %vm1835, %v1756, 0
        %v1960 = vsel %vm1835, %v1757, 0
        %v1963 = vsel %vm1835, %v1758, 0
        %v1966 = vsel %vm1835, %v1759, 0
        %v1969 = vsel %vm1835, %v1760, 0
        %v1972 = vsel %vm1835, %v1761, 0
        %v1975 = vsel %vm1835, %v1762, 0
        %v1978 = vsel %vm1835, %v1763, 0
        %v1981 = vsel %vm1835, %v1764, 0
        %v1984 = vsel %vm1835, %v1765, 0
        %v1987 = vsel %vm1835, %v1766, 0
        %v1990 = vsel %vm1835, %v1767, 0
        %v1993 = vsel %vm1835, %v1768, 0
        %v1996 = vsel %vm1835, %v1769, 0
        %v1999 = vsel %vm1835, %v1770, 0
        %v2002 = vsel %vm1835, %v1771, 0
        %v2005 = vsel %vm1835, %v1772, 0
        %v2008 = vsel %vm1835, %v1773, 0
        %v2011 = vsel %vm1835, %v1774, 0
        %v2014 = vsel %vm1835, %v1775, 0
        %v2017 = vsel %vm1835, %v1776, 0
        %v2020 = vsel %vm1835, %v1777, 0
        %v2023 = vsel %vm1835, %v1778, 0
        %v2026 = vsel %vm1835, %v1779, 0
        %v2029 = vsel %vm1835, %v1780, 0
        %v2032 = vsel %vm1835, %v1781, 0
        %v2035 = vsel %vm1835, %v1782, 0
        %v2038 = vsel %vm1835, %v1783, 0
        %v2041 = vsel %vm1835, %v1784, 0
        %v2044 = vsel %vm1835, %v1785, 0
        %v2047 = vsel %vm1835, %v1786, 0
        %v2050 = vsel %vm1835, %v1787, 0
        %v2053 = vsel %vm1835, %v1788, 0
        %v2056 = vsel %vm1835, %v1789, 0
        %v2059 = vsel %vm1835, %v1790, 0
        %v2062 = vsel %vm1835, %v1791, 0
        %v2065 = vsel %vm1835, %v1792, 0
        %v2068 = vsel %vm1835, %v1793, 0
        %v2071 = vsel %vm1835, %v1794, 0
        %v2074 = vsel %vm1835, %v1795, 0
        %2076 = vmatprep.subr.bf16.mxu0 0
        %2077 = vmatpush1.bf16.msra.mxu0 %v1827
        %2078 = vmatprep.subr.bf16.mxu0 0
        %2079 = vmatpush1.bf16.msra.mxu0 %v1828
        %2080 = vmatprep.subr.bf16.mxu0 0
        %2081 = vmatpush1.bf16.msra.mxu0 %v1829
        %2082 = vmatprep.subr.bf16.mxu0 0
        %2083 = vmatpush1.bf16.msra.mxu0 %v1830
        %2084 = vmatprep.subr.bf16.mxu0 0
        %2085 = vmatpush1.bf16.msra.mxu0 0
        %2086 = vmatprep.subr.bf16.mxu0 0
        %2087 = vmatpush1.bf16.msra.mxu0 0
        %2088 = vmatprep.subr.bf16.mxu0 0
        %2089 = vmatpush1.bf16.msra.mxu0 0
        %2090 = vmatprep.subr.bf16.mxu0 0
        %2091 = vmatpush1.bf16.msra.mxu0 0
        %2092 = vmatprep.subr.bf16.mxu0 0
        %2093 = vmatpush1.bf16.msra.mxu0 0
        %2094 = vmatprep.subr.bf16.mxu0 0
        %2095 = vmatpush1.bf16.msra.mxu0 0
        %2096 = vmatprep.subr.bf16.mxu0 0
        %2097 = vmatpush1.bf16.msra.mxu0 0
        %2098 = vmatprep.subr.bf16.mxu0 0
        %2099 = vmatpush1.bf16.msra.mxu0 0
        %2100 = vmatprep.subr.bf16.mxu0 0
        %2101 = vmatpush1.bf16.msra.mxu0 0
        %2102 = vmatprep.subr.bf16.mxu0 0
        %2103 = vmatpush1.bf16.msra.mxu0 0
        %2104 = vmatprep.subr.bf16.mxu0 0
        %2105 = vmatpush1.bf16.msra.mxu0 0
        %2106 = vmatprep.subr.bf16.mxu0 0
        %2107 = vmatpush1.bf16.msra.mxu0 0
        %2108 = vmatprep.mubr.bf16.mxu0 0
        %2109 = vmatmul.mubr.bf16.gmra.mrb[0].mxu0 %v1837
        %v2110 = vpop.f32.mrb[0].mxu0
        %v2111 = vadd.f32 %v1809, %v2110
        %v2112 = vpop.f32.mrb[0].mxu0
        %v2113 = vpop.f32.mrb[0].mxu0
        %v2114 = vadd.f32 %v1809, %v2113
        %v2115 = vpop.f32.mrb[0].mxu0
        %2116 = vmatprep.mubr.bf16.mxu0 0
        %2117 = vmatmul.mubr.bf16.gmra.mrb[0].mxu0 %v1840
        %v2118 = vpop.f32.mrb[0].mxu0
        %v2119 = vadd.f32 %v1809, %v2118
        %v2120 = vpop.f32.mrb[0].mxu0
        %v2121 = vpop.f32.mrb[0].mxu0
        %v2122 = vadd.f32 %v1809, %v2121
        %v2123 = vpop.f32.mrb[0].mxu0
        %2124 = vmatprep.mubr.bf16.mxu0 0
        %2125 = vmatmul.mubr.bf16.gmra.mrb[0].mxu0 %v1843
        %v2126 = vpop.f32.mrb[0].mxu0
        %v2127 = vadd.f32 %v1809, %v2126
        %v2128 = vpop.f32.mrb[0].mxu0
        %v2129 = vpop.f32.mrb[0].mxu0
        %v2130 = vadd.f32 %v1809, %v2129
        %v2131 = vpop.f32.mrb[0].mxu0
        %2132 = vmatprep.mubr.bf16.mxu0 0
        %2133 = vmatmul.mubr.bf16.gmra.mrb[0].mxu0 %v1846
        %v2134 = vpop.f32.mrb[0].mxu0
        %v2135 = vadd.f32 %v1809, %v2134
        %v2136 = vpop.f32.mrb[0].mxu0
        %v2137 = vpop.f32.mrb[0].mxu0
        %v2138 = vadd.f32 %v1809, %v2137
        %v2139 = vpop.f32.mrb[0].mxu0
        %2140 = vmatprep.mubr.bf16.mxu0 0
        %2141 = vmatmul.mubr.bf16.gmra.mrb[0].mxu0 %v1849
        %v2142 = vpop.f32.mrb[0].mxu0
        %v2143 = vadd.f32 %v1809, %v2142
        %v2144 = vpop.f32.mrb[0].mxu0
        %v2145 = vpop.f32.mrb[0].mxu0
        %v2146 = vadd.f32 %v1809, %v2145
        %v2147 = vpop.f32.mrb[0].mxu0
        %2148 = vmatprep.mubr.bf16.mxu0 0
        %2149 = vmatmul.mubr.bf16.gmra.mrb[0].mxu0 %v1852
        %v2150 = vpop.f32.mrb[0].mxu0
        %v2151 = vadd.f32 %v1809, %v2150
        %v2152 = vpop.f32.mrb[0].mxu0
        %v2153 = vpop.f32.mrb[0].mxu0
        %v2154 = vadd.f32 %v1809, %v2153
        %v2155 = vpop.f32.mrb[0].mxu0
        %2156 = vmatprep.mubr.bf16.mxu0 0
        %2157 = vmatmul.mubr.bf16.gmra.mrb[0].mxu0 %v1855
        %v2158 = vpop.f32.mrb[0].mxu0
        %v2159 = vadd.f32 %v1809, %v2158
        %v2160 = vpop.f32.mrb[0].mxu0
        %v2161 = vpop.f32.mrb[0].mxu0
        %v2162 = vadd.f32 %v1809, %v2161
        %v2163 = vpop.f32.mrb[0].mxu0
        %2164 = vmatprep.mubr.bf16.mxu0 0
        %2165 = vmatmul.mubr.bf16.gmra.mrb[0].mxu0 %v1858
        %v2166 = vpop.f32.mrb[0].mxu0
        %v2167 = vadd.f32 %v1809, %v2166
        %v2168 = vpop.f32.mrb[0].mxu0
        %v2169 = vpop.f32.mrb[0].mxu0
        %v2170 = vadd.f32 %v1809, %v2169
        %v2171 = vpop.f32.mrb[0].mxu0
        %2172 = vmatprep.mubr.bf16.mxu0 0
        %2173 = vmatmul.mubr.bf16.gmra.mrb[0].mxu0 %v1861
        %v2174 = vpop.f32.mrb[0].mxu0
        %v2175 = vadd.f32 %v1809, %v2174
        %v2176 = vpop.f32.mrb[0].mxu0
        %v2177 = vpop.f32.mrb[0].mxu0
        %v2178 = vadd.f32 %v1809, %v2177
        %v2179 = vpop.f32.mrb[0].mxu0
        %2180 = vmatprep.mubr.bf16.mxu0 0
        %2181 = vmatmul.mubr.bf16.gmra.mrb[0].mxu0 %v1864
        %v2182 = vpop.f32.mrb[0].mxu0
        %v2183 = vadd.f32 %v1809, %v2182
        %v2184 = vpop.f32.mrb[0].mxu0
        %v2185 = vpop.f32.mrb[0].mxu0
        %v2186 = vadd.f32 %v1809, %v2185
        %v2187 = vpop.f32.mrb[0].mxu0
        %2188 = vmatprep.mubr.bf16.mxu0 0
        %2189 = vmatmul.mubr.bf16.gmra.mrb[0].mxu0 %v1867
        %v2190 = vpop.f32.mrb[0].mxu0
        %v2191 = vadd.f32 %v1809, %v2190
        %v2192 = vpop.f32.mrb[0].mxu0
        %v2193 = vpop.f32.mrb[0].mxu0
        %v2194 = vadd.f32 %v1809, %v2193
        %v2195 = vpop.f32.mrb[0].mxu0
        %2196 = vmatprep.mubr.bf16.mxu0 0
        %2197 = vmatmul.mubr.bf16.gmra.mrb[0].mxu0 %v1870
        %v2198 = vpop.f32.mrb[0].mxu0
        %v2199 = vadd.f32 %v1809, %v2198
        %v2200 = vpop.f32.mrb[0].mxu0
        %v2201 = vpop.f32.mrb[0].mxu0
        %v2202 = vadd.f32 %v1809, %v2201
        %v2203 = vpop.f32.mrb[0].mxu0
        %2204 = vmatprep.mubr.bf16.mxu0 0
        %2205 = vmatmul.mubr.bf16.gmra.mrb[0].mxu0 %v1873
        %v2206 = vpop.f32.mrb[0].mxu0
        %v2207 = vadd.f32 %v1809, %v2206
        %v2208 = vpop.f32.mrb[0].mxu0
        %v2209 = vpop.f32.mrb[0].mxu0
        %v2210 = vadd.f32 %v1809, %v2209
        %v2211 = vpop.f32.mrb[0].mxu0
        %2212 = vmatprep.mubr.bf16.mxu0 0
        %2213 = vmatmul.mubr.bf16.gmra.mrb[0].mxu0 %v1876
        %v2214 = vpop.f32.mrb[0].mxu0
        %v2215 = vadd.f32 %v1809, %v2214
        %v2216 = vpop.f32.mrb[0].mxu0
        %v2217 = vpop.f32.mrb[0].mxu0
        %v2218 = vadd.f32 %v1809, %v2217
        %v2219 = vpop.f32.mrb[0].mxu0
        %2220 = vmatprep.mubr.bf16.mxu0 0
        %2221 = vmatmul.mubr.bf16.gmra.mrb[0].mxu0 %v1879
        %v2222 = vpop.f32.mrb[0].mxu0
        %v2223 = vadd.f32 %v1809, %v2222
        %v2224 = vpop.f32.mrb[0].mxu0
        %v2225 = vpop.f32.mrb[0].mxu0
        %v2226 = vadd.f32 %v1809, %v2225
        %v2227 = vpop.f32.mrb[0].mxu0
        %2228 = vmatprep.mubr.bf16.mxu0 0
        %2229 = vmatmul.mubr.bf16.gmra.mrb[0].mxu0 %v1882
        %v2230 = vpop.f32.mrb[0].mxu0
        %v2231 = vadd.f32 %v1809, %v2230
        %v2232 = vpop.f32.mrb[0].mxu0
        %v2233 = vpop.f32.mrb[0].mxu0
        %v2234 = vadd.f32 %v1809, %v2233
        %v2235 = vpop.f32.mrb[0].mxu0
        %2236 = vmatprep.mubr.bf16.mxu0 0
        %2237 = vmatmul.mubr.bf16.gmra.mrb[0].mxu0 %v1885
        %v2238 = vpop.f32.mrb[0].mxu0
        %v2239 = vadd.f32 %v1809, %v2238
        %v2240 = vpop.f32.mrb[0].mxu0
        %v2241 = vpop.f32.mrb[0].mxu0
        %v2242 = vadd.f32 %v1809, %v2241
        %v2243 = vpop.f32.mrb[0].mxu0
        %2244 = vmatprep.mubr.bf16.mxu0 0
        %2245 = vmatmul.mubr.bf16.gmra.mrb[0].mxu0 %v1888
        %v2246 = vpop.f32.mrb[0].mxu0
        %v2247 = vadd.f32 %v1809, %v2246
        %v2248 = vpop.f32.mrb[0].mxu0
        %v2249 = vpop.f32.mrb[0].mxu0
        %v2250 = vadd.f32 %v1809, %v2249
        %v2251 = vpop.f32.mrb[0].mxu0
        %2252 = vmatprep.mubr.bf16.mxu0 0
        %2253 = vmatmul.mubr.bf16.gmra.mrb[0].mxu0 %v1891
        %v2254 = vpop.f32.mrb[0].mxu0
        %v2255 = vadd.f32 %v1809, %v2254
        %v2256 = vpop.f32.mrb[0].mxu0
        %v2257 = vpop.f32.mrb[0].mxu0
        %v2258 = vadd.f32 %v1809, %v2257
        %v2259 = vpop.f32.mrb[0].mxu0
        %2260 = vmatprep.mubr.bf16.mxu0 0
        %2261 = vmatmul.mubr.bf16.gmra.mrb[0].mxu0 %v1894
        %v2262 = vpop.f32.mrb[0].mxu0
        %v2263 = vadd.f32 %v1809, %v2262
        %v2264 = vpop.f32.mrb[0].mxu0
        %v2265 = vpop.f32.mrb[0].mxu0
        %v2266 = vadd.f32 %v1809, %v2265
        %v2267 = vpop.f32.mrb[0].mxu0
        %2268 = vmatprep.mubr.bf16.mxu0 0
        %2269 = vmatmul.mubr.bf16.gmra.mrb[0].mxu0 %v1897
        %v2270 = vpop.f32.mrb[0].mxu0
        %v2271 = vadd.f32 %v1809, %v2270
        %v2272 = vpop.f32.mrb[0].mxu0
        %v2273 = vpop.f32.mrb[0].mxu0
        %v2274 = vadd.f32 %v1809, %v2273
        %v2275 = vpop.f32.mrb[0].mxu0
        %2276 = vmatprep.mubr.bf16.mxu0 0
        %2277 = vmatmul.mubr.bf16.gmra.mrb[0].mxu0 %v1900
        %v2278 = vpop.f32.mrb[0].mxu0
        %v2279 = vadd.f32 %v1809, %v2278
        %v2280 = vpop.f32.mrb[0].mxu0
        %v2281 = vpop.f32.mrb[0].mxu0
        %v2282 = vadd.f32 %v1809, %v2281
        %v2283 = vpop.f32.mrb[0].mxu0
        %2284 = vmatprep.mubr.bf16.mxu0 0
        %2285 = vmatmul.mubr.bf16.gmra.mrb[0].mxu0 %v1903
        %v2286 = vpop.f32.mrb[0].mxu0
        %v2287 = vadd.f32 %v1809, %v2286
        %v2288 = vpop.f32.mrb[0].mxu0
        %v2289 = vpop.f32.mrb[0].mxu0
        %v2290 = vadd.f32 %v1809, %v2289
        %v2291 = vpop.f32.mrb[0].mxu0
        %2292 = vmatprep.mubr.bf16.mxu0 0
        %2293 = vmatmul.mubr.bf16.gmra.mrb[0].mxu0 %v1906
        %v2294 = vpop.f32.mrb[0].mxu0
        %v2295 = vadd.f32 %v1809, %v2294
        %v2296 = vpop.f32.mrb[0].mxu0
        %v2297 = vpop.f32.mrb[0].mxu0
        %v2298 = vadd.f32 %v1809, %v2297
        %v2299 = vpop.f32.mrb[0].mxu0
        %2300 = vmatprep.mubr.bf16.mxu0 0
        %2301 = vmatmul.mubr.bf16.gmra.mrb[0].mxu0 %v1909
        %v2302 = vpop.f32.mrb[0].mxu0
        %v2303 = vadd.f32 %v1809, %v2302
        %v2304 = vpop.f32.mrb[0].mxu0
        %v2305 = vpop.f32.mrb[0].mxu0
        %v2306 = vadd.f32 %v1809, %v2305
        %v2307 = vpop.f32.mrb[0].mxu0
        %2308 = vmatprep.mubr.bf16.mxu0 0
        %2309 = vmatmul.mubr.bf16.gmra.mrb[0].mxu0 %v1912
        %v2310 = vpop.f32.mrb[0].mxu0
        %v2311 = vadd.f32 %v1809, %v2310
        %v2312 = vpop.f32.mrb[0].mxu0
        %v2313 = vpop.f32.mrb[0].mxu0
        %v2314 = vadd.f32 %v1809, %v2313
        %v2315 = vpop.f32.mrb[0].mxu0
        %2316 = vmatprep.mubr.bf16.mxu0 0
        %2317 = vmatmul.mubr.bf16.gmra.mrb[0].mxu0 %v1915
        %v2318 = vpop.f32.mrb[0].mxu0
        %v2319 = vadd.f32 %v1809, %v2318
        %v2320 = vpop.f32.mrb[0].mxu0
        %v2321 = vpop.f32.mrb[0].mxu0
        %v2322 = vadd.f32 %v1809, %v2321
        %v2323 = vpop.f32.mrb[0].mxu0
        %2324 = vmatprep.mubr.bf16.mxu0 0
        %2325 = vmatmul.mubr.bf16.gmra.mrb[0].mxu0 %v1918
        %v2326 = vpop.f32.mrb[0].mxu0
        %v2327 = vadd.f32 %v1809, %v2326
        %v2328 = vpop.f32.mrb[0].mxu0
        %v2329 = vpop.f32.mrb[0].mxu0
        %v2330 = vadd.f32 %v1809, %v2329
        %v2331 = vpop.f32.mrb[0].mxu0
        %2332 = vmatprep.mubr.bf16.mxu0 0
        %2333 = vmatmul.mubr.bf16.gmra.mrb[0].mxu0 %v1921
        %v2334 = vpop.f32.mrb[0].mxu0
        %v2335 = vadd.f32 %v1809, %v2334
        %v2336 = vpop.f32.mrb[0].mxu0
        %v2337 = vpop.f32.mrb[0].mxu0
        %v2338 = vadd.f32 %v1809, %v2337
        %v2339 = vpop.f32.mrb[0].mxu0
        %2340 = vmatprep.mubr.bf16.mxu0 0
        %2341 = vmatmul.mubr.bf16.gmra.mrb[0].mxu0 %v1924
        %v2342 = vpop.f32.mrb[0].mxu0
        %v2343 = vadd.f32 %v1809, %v2342
        %v2344 = vpop.f32.mrb[0].mxu0
        %v2345 = vpop.f32.mrb[0].mxu0
        %v2346 = vadd.f32 %v1809, %v2345
        %v2347 = vpop.f32.mrb[0].mxu0
        %2348 = vmatprep.mubr.bf16.mxu0 0
        %2349 = vmatmul.mubr.bf16.gmra.mrb[0].mxu0 %v1927
        %v2350 = vpop.f32.mrb[0].mxu0
        %v2351 = vadd.f32 %v1809, %v2350
        %v2352 = vpop.f32.mrb[0].mxu0
        %v2353 = vpop.f32.mrb[0].mxu0
        %v2354 = vadd.f32 %v1809, %v2353
        %v2355 = vpop.f32.mrb[0].mxu0
        %2356 = vmatprep.mubr.bf16.mxu0 0
        %2357 = vmatmul.mubr.bf16.gmra.mrb[0].mxu0 %v1930
        %v2358 = vpop.f32.mrb[0].mxu0
        %v2359 = vadd.f32 %v1809, %v2358
        %v2360 = vpop.f32.mrb[0].mxu0
        %v2361 = vpop.f32.mrb[0].mxu0
        %v2362 = vadd.f32 %v1809, %v2361
        %v2363 = vpop.f32.mrb[0].mxu0
        %2364 = vmatprep.mubr.bf16.mxu0 0
        %2365 = vmatmul.mubr.bf16.gmra.mrb[0].mxu0 %v1933
        %v2366 = vpop.f32.mrb[0].mxu0
        %v2367 = vadd.f32 %v1809, %v2366
        %v2368 = vpop.f32.mrb[0].mxu0
        %v2369 = vpop.f32.mrb[0].mxu0
        %v2370 = vadd.f32 %v1809, %v2369
        %v2371 = vpop.f32.mrb[0].mxu0
        %2372 = vmatprep.mubr.bf16.mxu0 0
        %2373 = vmatmul.mubr.bf16.gmra.mrb[0].mxu0 %v1936
        %v2374 = vpop.f32.mrb[0].mxu0
        %v2375 = vadd.f32 %v1809, %v2374
        %v2376 = vpop.f32.mrb[0].mxu0
        %v2377 = vpop.f32.mrb[0].mxu0
        %v2378 = vadd.f32 %v1809, %v2377
        %v2379 = vpop.f32.mrb[0].mxu0
        %2380 = vmatprep.mubr.bf16.mxu0 0
        %2381 = vmatmul.mubr.bf16.gmra.mrb[0].mxu0 %v1939
        %v2382 = vpop.f32.mrb[0].mxu0
        %v2383 = vadd.f32 %v1809, %v2382
        %v2384 = vpop.f32.mrb[0].mxu0
        %v2385 = vpop.f32.mrb[0].mxu0
        %v2386 = vadd.f32 %v1809, %v2385
        %v2387 = vpop.f32.mrb[0].mxu0
        %2388 = vmatprep.mubr.bf16.mxu0 0
        %2389 = vmatmul.mubr.bf16.gmra.mrb[0].mxu0 %v1942
        %v2390 = vpop.f32.mrb[0].mxu0
        %v2391 = vadd.f32 %v1809, %v2390
        %v2392 = vpop.f32.mrb[0].mxu0
        %v2393 = vpop.f32.mrb[0].mxu0
        %v2394 = vadd.f32 %v1809, %v2393
        %v2395 = vpop.f32.mrb[0].mxu0
        %2396 = vmatprep.mubr.bf16.mxu0 0
        %2397 = vmatmul.mubr.bf16.gmra.mrb[0].mxu0 %v1945
        %v2398 = vpop.f32.mrb[0].mxu0
        %v2399 = vadd.f32 %v1809, %v2398
        %v2400 = vpop.f32.mrb[0].mxu0
        %v2401 = vpop.f32.mrb[0].mxu0
        %v2402 = vadd.f32 %v1809, %v2401
        %v2403 = vpop.f32.mrb[0].mxu0
        %2404 = vmatprep.mubr.bf16.mxu0 0
        %2405 = vmatmul.mubr.bf16.gmra.mrb[0].mxu0 %v1948
        %v2406 = vpop.f32.mrb[0].mxu0
        %v2407 = vadd.f32 %v1809, %v2406
        %v2408 = vpop.f32.mrb[0].mxu0
        %v2409 = vpop.f32.mrb[0].mxu0
        %v2410 = vadd.f32 %v1809, %v2409
        %v2411 = vpop.f32.mrb[0].mxu0
        %2412 = vmatprep.mubr.bf16.mxu0 0
        %2413 = vmatmul.mubr.bf16.gmra.mrb[0].mxu0 %v1951
        %v2414 = vpop.f32.mrb[0].mxu0
        %v2415 = vadd.f32 %v1809, %v2414
        %v2416 = vpop.f32.mrb[0].mxu0
        %v2417 = vpop.f32.mrb[0].mxu0
        %v2418 = vadd.f32 %v1809, %v2417
        %v2419 = vpop.f32.mrb[0].mxu0
        %2420 = vmatprep.mubr.bf16.mxu0 0
        %2421 = vmatmul.mubr.bf16.gmra.mrb[0].mxu0 %v1954
        %v2422 = vpop.f32.mrb[0].mxu0
        %v2423 = vadd.f32 %v1809, %v2422
        %v2424 = vpop.f32.mrb[0].mxu0
        %v2425 = vpop.f32.mrb[0].mxu0
        %v2426 = vadd.f32 %v1809, %v2425
        %v2427 = vpop.f32.mrb[0].mxu0
        %2428 = vmatprep.mubr.bf16.mxu0 0
        %2429 = vmatmul.mubr.bf16.gmra.mrb[0].mxu0 %v1957
        %v2430 = vpop.f32.mrb[0].mxu0
        %v2431 = vadd.f32 %v1809, %v2430
        %v2432 = vpop.f32.mrb[0].mxu0
        %v2433 = vpop.f32.mrb[0].mxu0
        %v2434 = vadd.f32 %v1809, %v2433
        %v2435 = vpop.f32.mrb[0].mxu0
        %2436 = vmatprep.mubr.bf16.mxu0 0
        %2437 = vmatmul.mubr.bf16.gmra.mrb[0].mxu0 %v1960
        %v2438 = vpop.f32.mrb[0].mxu0
        %v2439 = vadd.f32 %v1809, %v2438
        %v2440 = vpop.f32.mrb[0].mxu0
        %v2441 = vpop.f32.mrb[0].mxu0
        %v2442 = vadd.f32 %v1809, %v2441
        %v2443 = vpop.f32.mrb[0].mxu0
        %2444 = vmatprep.mubr.bf16.mxu0 0
        %2445 = vmatmul.mubr.bf16.gmra.mrb[0].mxu0 %v1963
        %v2446 = vpop.f32.mrb[0].mxu0
        %v2447 = vadd.f32 %v1809, %v2446
        %v2448 = vpop.f32.mrb[0].mxu0
        %v2449 = vpop.f32.mrb[0].mxu0
        %v2450 = vadd.f32 %v1809, %v2449
        %v2451 = vpop.f32.mrb[0].mxu0
        %2452 = vmatprep.mubr.bf16.mxu0 0
        %2453 = vmatmul.mubr.bf16.gmra.mrb[0].mxu0 %v1966
        %v2454 = vpop.f32.mrb[0].mxu0
        %v2455 = vadd.f32 %v1809, %v2454
        %v2456 = vpop.f32.mrb[0].mxu0
        %v2457 = vpop.f32.mrb[0].mxu0
        %v2458 = vadd.f32 %v1809, %v2457
        %v2459 = vpop.f32.mrb[0].mxu0
        %2460 = vmatprep.mubr.bf16.mxu0 0
        %2461 = vmatmul.mubr.bf16.gmra.mrb[0].mxu0 %v1969
        %v2462 = vpop.f32.mrb[0].mxu0
        %v2463 = vadd.f32 %v1809, %v2462
        %v2464 = vpop.f32.mrb[0].mxu0
        %v2465 = vpop.f32.mrb[0].mxu0
        %v2466 = vadd.f32 %v1809, %v2465
        %v2467 = vpop.f32.mrb[0].mxu0
        %2468 = vmatprep.mubr.bf16.mxu0 0
        %2469 = vmatmul.mubr.bf16.gmra.mrb[0].mxu0 %v1972
        %v2470 = vpop.f32.mrb[0].mxu0
        %v2471 = vadd.f32 %v1809, %v2470
        %v2472 = vpop.f32.mrb[0].mxu0
        %v2473 = vpop.f32.mrb[0].mxu0
        %v2474 = vadd.f32 %v1809, %v2473
        %v2475 = vpop.f32.mrb[0].mxu0
        %2476 = vmatprep.mubr.bf16.mxu0 0
        %2477 = vmatmul.mubr.bf16.gmra.mrb[0].mxu0 %v1975
        %v2478 = vpop.f32.mrb[0].mxu0
        %v2479 = vadd.f32 %v1809, %v2478
        %v2480 = vpop.f32.mrb[0].mxu0
        %v2481 = vpop.f32.mrb[0].mxu0
        %v2482 = vadd.f32 %v1809, %v2481
        %v2483 = vpop.f32.mrb[0].mxu0
        %2484 = vmatprep.mubr.bf16.mxu0 0
        %2485 = vmatmul.mubr.bf16.gmra.mrb[0].mxu0 %v1978
        %v2486 = vpop.f32.mrb[0].mxu0
        %v2487 = vadd.f32 %v1809, %v2486
        %v2488 = vpop.f32.mrb[0].mxu0
        %v2489 = vpop.f32.mrb[0].mxu0
        %v2490 = vadd.f32 %v1809, %v2489
        %v2491 = vpop.f32.mrb[0].mxu0
        %2492 = vmatprep.mubr.bf16.mxu0 0
        %2493 = vmatmul.mubr.bf16.gmra.mrb[0].mxu0 %v1981
        %v2494 = vpop.f32.mrb[0].mxu0
        %v2495 = vadd.f32 %v1809, %v2494
        %v2496 = vpop.f32.mrb[0].mxu0
        %v2497 = vpop.f32.mrb[0].mxu0
        %v2498 = vadd.f32 %v1809, %v2497
        %v2499 = vpop.f32.mrb[0].mxu0
        %2500 = vmatprep.mubr.bf16.mxu0 0
        %2501 = vmatmul.mubr.bf16.gmra.mrb[0].mxu0 %v1984
        %v2502 = vpop.f32.mrb[0].mxu0
        %v2503 = vadd.f32 %v1809, %v2502
        %v2504 = vpop.f32.mrb[0].mxu0
        %v2505 = vpop.f32.mrb[0].mxu0
        %v2506 = vadd.f32 %v1809, %v2505
        %v2507 = vpop.f32.mrb[0].mxu0
        %2508 = vmatprep.mubr.bf16.mxu0 0
        %2509 = vmatmul.mubr.bf16.gmra.mrb[0].mxu0 %v1987
        %v2510 = vpop.f32.mrb[0].mxu0
        %v2511 = vadd.f32 %v1809, %v2510
        %v2512 = vpop.f32.mrb[0].mxu0
        %v2513 = vpop.f32.mrb[0].mxu0
        %v2514 = vadd.f32 %v1809, %v2513
        %v2515 = vpop.f32.mrb[0].mxu0
        %2516 = vmatprep.mubr.bf16.mxu0 0
        %2517 = vmatmul.mubr.bf16.gmra.mrb[0].mxu0 %v1990
        %v2518 = vpop.f32.mrb[0].mxu0
        %v2519 = vadd.f32 %v1809, %v2518
        %v2520 = vpop.f32.mrb[0].mxu0
        %v2521 = vpop.f32.mrb[0].mxu0
        %v2522 = vadd.f32 %v1809, %v2521
        %v2523 = vpop.f32.mrb[0].mxu0
        %2524 = vmatprep.mubr.bf16.mxu0 0
        %2525 = vmatmul.mubr.bf16.gmra.mrb[0].mxu0 %v1993
        %v2526 = vpop.f32.mrb[0].mxu0
        %v2527 = vadd.f32 %v1809, %v2526
        %v2528 = vpop.f32.mrb[0].mxu0
        %v2529 = vpop.f32.mrb[0].mxu0
        %v2530 = vadd.f32 %v1809, %v2529
        %v2531 = vpop.f32.mrb[0].mxu0
        %2532 = vmatprep.mubr.bf16.mxu0 0
        %2533 = vmatmul.mubr.bf16.gmra.mrb[0].mxu0 %v1996
        %v2534 = vpop.f32.mrb[0].mxu0
        %v2535 = vadd.f32 %v1809, %v2534
        %v2536 = vpop.f32.mrb[0].mxu0
        %v2537 = vpop.f32.mrb[0].mxu0
        %v2538 = vadd.f32 %v1809, %v2537
        %v2539 = vpop.f32.mrb[0].mxu0
        %2540 = vmatprep.mubr.bf16.mxu0 0
        %2541 = vmatmul.mubr.bf16.gmra.mrb[0].mxu0 %v1999
        %v2542 = vpop.f32.mrb[0].mxu0
        %v2543 = vadd.f32 %v1809, %v2542
        %v2544 = vpop.f32.mrb[0].mxu0
        %v2545 = vpop.f32.mrb[0].mxu0
        %v2546 = vadd.f32 %v1809, %v2545
        %v2547 = vpop.f32.mrb[0].mxu0
        %2548 = vmatprep.mubr.bf16.mxu0 0
        %2549 = vmatmul.mubr.bf16.gmra.mrb[0].mxu0 %v2002
        %v2550 = vpop.f32.mrb[0].mxu0
        %v2551 = vadd.f32 %v1809, %v2550
        %v2552 = vpop.f32.mrb[0].mxu0
        %v2553 = vpop.f32.mrb[0].mxu0
        %v2554 = vadd.f32 %v1809, %v2553
        %v2555 = vpop.f32.mrb[0].mxu0
        %2556 = vmatprep.mubr.bf16.mxu0 0
        %2557 = vmatmul.mubr.bf16.gmra.mrb[0].mxu0 %v2005
        %v2558 = vpop.f32.mrb[0].mxu0
        %v2559 = vadd.f32 %v1809, %v2558
        %v2560 = vpop.f32.mrb[0].mxu0
        %v2561 = vpop.f32.mrb[0].mxu0
        %v2562 = vadd.f32 %v1809, %v2561
        %v2563 = vpop.f32.mrb[0].mxu0
        %2564 = vmatprep.mubr.bf16.mxu0 0
        %2565 = vmatmul.mubr.bf16.gmra.mrb[0].mxu0 %v2008
        %v2566 = vpop.f32.mrb[0].mxu0
        %v2567 = vadd.f32 %v1809, %v2566
        %v2568 = vpop.f32.mrb[0].mxu0
        %v2569 = vpop.f32.mrb[0].mxu0
        %v2570 = vadd.f32 %v1809, %v2569
        %v2571 = vpop.f32.mrb[0].mxu0
        %2572 = vmatprep.mubr.bf16.mxu0 0
        %2573 = vmatmul.mubr.bf16.gmra.mrb[0].mxu0 %v2011
        %v2574 = vpop.f32.mrb[0].mxu0
        %v2575 = vadd.f32 %v1809, %v2574
        %v2576 = vpop.f32.mrb[0].mxu0
        %v2577 = vpop.f32.mrb[0].mxu0
        %v2578 = vadd.f32 %v1809, %v2577
        %v2579 = vpop.f32.mrb[0].mxu0
        %2580 = vmatprep.mubr.bf16.mxu0 0
        %2581 = vmatmul.mubr.bf16.gmra.mrb[0].mxu0 %v2014
        %v2582 = vpop.f32.mrb[0].mxu0
        %v2583 = vadd.f32 %v1809, %v2582
        %v2584 = vpop.f32.mrb[0].mxu0
        %v2585 = vpop.f32.mrb[0].mxu0
        %v2586 = vadd.f32 %v1809, %v2585
        %v2587 = vpop.f32.mrb[0].mxu0
        %2588 = vmatprep.mubr.bf16.mxu0 0
        %2589 = vmatmul.mubr.bf16.gmra.mrb[0].mxu0 %v2017
        %v2590 = vpop.f32.mrb[0].mxu0
        %v2591 = vadd.f32 %v1809, %v2590
        %v2592 = vpop.f32.mrb[0].mxu0
        %v2593 = vpop.f32.mrb[0].mxu0
        %v2594 = vadd.f32 %v1809, %v2593
        %v2595 = vpop.f32.mrb[0].mxu0
        %2596 = vmatprep.mubr.bf16.mxu0 0
        %2597 = vmatmul.mubr.bf16.gmra.mrb[0].mxu0 %v2020
        %v2598 = vpop.f32.mrb[0].mxu0
        %v2599 = vadd.f32 %v1809, %v2598
        %v2600 = vpop.f32.mrb[0].mxu0
        %v2601 = vpop.f32.mrb[0].mxu0
        %v2602 = vadd.f32 %v1809, %v2601
        %v2603 = vpop.f32.mrb[0].mxu0
        %2604 = vmatprep.mubr.bf16.mxu0 0
        %2605 = vmatmul.mubr.bf16.gmra.mrb[0].mxu0 %v2023
        %v2606 = vpop.f32.mrb[0].mxu0
        %v2607 = vadd.f32 %v1809, %v2606
        %v2608 = vpop.f32.mrb[0].mxu0
        %v2609 = vpop.f32.mrb[0].mxu0
        %v2610 = vadd.f32 %v1809, %v2609
        %v2611 = vpop.f32.mrb[0].mxu0
        %2612 = vmatprep.mubr.bf16.mxu0 0
        %2613 = vmatmul.mubr.bf16.gmra.mrb[0].mxu0 %v2026
        %v2614 = vpop.f32.mrb[0].mxu0
        %v2615 = vadd.f32 %v1809, %v2614
        %v2616 = vpop.f32.mrb[0].mxu0
        %v2617 = vpop.f32.mrb[0].mxu0
        %v2618 = vadd.f32 %v1809, %v2617
        %v2619 = vpop.f32.mrb[0].mxu0
        %2620 = vmatprep.mubr.bf16.mxu0 0
        %2621 = vmatmul.mubr.bf16.gmra.mrb[0].mxu0 %v2029
        %v2622 = vpop.f32.mrb[0].mxu0
        %v2623 = vadd.f32 %v1809, %v2622
        %v2624 = vpop.f32.mrb[0].mxu0
        %v2625 = vpop.f32.mrb[0].mxu0
        %v2626 = vadd.f32 %v1809, %v2625
        %v2627 = vpop.f32.mrb[0].mxu0
        %2628 = vmatprep.mubr.bf16.mxu0 0
        %2629 = vmatmul.mubr.bf16.gmra.mrb[0].mxu0 %v2032
        %v2630 = vpop.f32.mrb[0].mxu0
        %v2631 = vadd.f32 %v1809, %v2630
        %v2632 = vpop.f32.mrb[0].mxu0
        %v2633 = vpop.f32.mrb[0].mxu0
        %v2634 = vadd.f32 %v1809, %v2633
        %v2635 = vpop.f32.mrb[0].mxu0
        %2636 = vmatprep.mubr.bf16.mxu0 0
        %2637 = vmatmul.mubr.bf16.gmra.mrb[0].mxu0 %v2035
        %v2638 = vpop.f32.mrb[0].mxu0
        %v2639 = vadd.f32 %v1809, %v2638
        %v2640 = vpop.f32.mrb[0].mxu0
        %v2641 = vpop.f32.mrb[0].mxu0
        %v2642 = vadd.f32 %v1809, %v2641
        %v2643 = vpop.f32.mrb[0].mxu0
        %2644 = vmatprep.mubr.bf16.mxu0 0
        %2645 = vmatmul.mubr.bf16.gmra.mrb[0].mxu0 %v2038
        %v2646 = vpop.f32.mrb[0].mxu0
        %v2647 = vadd.f32 %v1809, %v2646
        %v2648 = vpop.f32.mrb[0].mxu0
        %v2649 = vpop.f32.mrb[0].mxu0
        %v2650 = vadd.f32 %v1809, %v2649
        %v2651 = vpop.f32.mrb[0].mxu0
        %2652 = vmatprep.mubr.bf16.mxu0 0
        %2653 = vmatmul.mubr.bf16.gmra.mrb[0].mxu0 %v2041
        %v2654 = vpop.f32.mrb[0].mxu0
        %v2655 = vadd.f32 %v1809, %v2654
        %v2656 = vpop.f32.mrb[0].mxu0
        %v2657 = vpop.f32.mrb[0].mxu0
        %v2658 = vadd.f32 %v1809, %v2657
        %v2659 = vpop.f32.mrb[0].mxu0
        %2660 = vmatprep.mubr.bf16.mxu0 0
        %2661 = vmatmul.mubr.bf16.gmra.mrb[0].mxu0 %v2044
        %v2662 = vpop.f32.mrb[0].mxu0
        %v2663 = vadd.f32 %v1809, %v2662
        %v2664 = vpop.f32.mrb[0].mxu0
        %v2665 = vpop.f32.mrb[0].mxu0
        %v2666 = vadd.f32 %v1809, %v2665
        %v2667 = vpop.f32.mrb[0].mxu0
        %2668 = vmatprep.mubr.bf16.mxu0 0
        %2669 = vmatmul.mubr.bf16.gmra.mrb[0].mxu0 %v2047
        %v2670 = vpop.f32.mrb[0].mxu0
        %v2671 = vadd.f32 %v1809, %v2670
        %v2672 = vpop.f32.mrb[0].mxu0
        %v2673 = vpop.f32.mrb[0].mxu0
        %v2674 = vadd.f32 %v1809, %v2673
        %v2675 = vpop.f32.mrb[0].mxu0
        %2676 = vmatprep.mubr.bf16.mxu0 0
        %2677 = vmatmul.mubr.bf16.gmra.mrb[0].mxu0 %v2050
        %v2678 = vpop.f32.mrb[0].mxu0
        %v2679 = vadd.f32 %v1809, %v2678
        %v2680 = vpop.f32.mrb[0].mxu0
        %v2681 = vpop.f32.mrb[0].mxu0
        %v2682 = vadd.f32 %v1809, %v2681
        %v2683 = vpop.f32.mrb[0].mxu0
        %2684 = vmatprep.mubr.bf16.mxu0 0
        %2685 = vmatmul.mubr.bf16.gmra.mrb[0].mxu0 %v2053
        %v2686 = vpop.f32.mrb[0].mxu0
        %v2687 = vadd.f32 %v1809, %v2686
        %v2688 = vpop.f32.mrb[0].mxu0
        %v2689 = vpop.f32.mrb[0].mxu0
        %v2690 = vadd.f32 %v1809, %v2689
        %v2691 = vpop.f32.mrb[0].mxu0
        %2692 = vmatprep.mubr.bf16.mxu0 0
        %2693 = vmatmul.mubr.bf16.gmra.mrb[0].mxu0 %v2056
        %v2694 = vpop.f32.mrb[0].mxu0
        %v2695 = vadd.f32 %v1809, %v2694
        %v2696 = vpop.f32.mrb[0].mxu0
        %v2697 = vpop.f32.mrb[0].mxu0
        %v2698 = vadd.f32 %v1809, %v2697
        %v2699 = vpop.f32.mrb[0].mxu0
        %2700 = vmatprep.mubr.bf16.mxu0 0
        %2701 = vmatmul.mubr.bf16.gmra.mrb[0].mxu0 %v2059
        %v2702 = vpop.f32.mrb[0].mxu0
        %v2703 = vadd.f32 %v1809, %v2702
        %v2704 = vpop.f32.mrb[0].mxu0
        %v2705 = vpop.f32.mrb[0].mxu0
        %v2706 = vadd.f32 %v1809, %v2705
        %v2707 = vpop.f32.mrb[0].mxu0
        %2708 = vmatprep.mubr.bf16.mxu0 0
        %2709 = vmatmul.mubr.bf16.gmra.mrb[0].mxu0 %v2062
        %v2710 = vpop.f32.mrb[0].mxu0
        %v2711 = vadd.f32 %v1809, %v2710
        %v2712 = vpop.f32.mrb[0].mxu0
        %v2713 = vpop.f32.mrb[0].mxu0
        %v2714 = vadd.f32 %v1809, %v2713
        %v2715 = vpop.f32.mrb[0].mxu0
        %2716 = vmatprep.mubr.bf16.mxu0 0
        %2717 = vmatmul.mubr.bf16.gmra.mrb[0].mxu0 %v2065
        %v2718 = vpop.f32.mrb[0].mxu0
        %v2719 = vadd.f32 %v1809, %v2718
        %v2720 = vpop.f32.mrb[0].mxu0
        %v2721 = vpop.f32.mrb[0].mxu0
        %v2722 = vadd.f32 %v1809, %v2721
        %v2723 = vpop.f32.mrb[0].mxu0
        %2724 = vmatprep.mubr.bf16.mxu0 0
        %2725 = vmatmul.mubr.bf16.gmra.mrb[0].mxu0 %v2068
        %v2726 = vpop.f32.mrb[0].mxu0
        %v2727 = vadd.f32 %v1809, %v2726
        %v2728 = vpop.f32.mrb[0].mxu0
        %v2729 = vpop.f32.mrb[0].mxu0
        %v2730 = vadd.f32 %v1809, %v2729
        %v2731 = vpop.f32.mrb[0].mxu0
        %2732 = vmatprep.mubr.bf16.mxu0 0
        %2733 = vmatmul.mubr.bf16.gmra.mrb[0].mxu0 %v2071
        %v2734 = vpop.f32.mrb[0].mxu0
        %v2735 = vadd.f32 %v1809, %v2734
        %v2736 = vpop.f32.mrb[0].mxu0
        %v2737 = vpop.f32.mrb[0].mxu0
        %v2738 = vadd.f32 %v1809, %v2737
        %v2739 = vpop.f32.mrb[0].mxu0
        %2740 = vmatprep.mubr.bf16.mxu0 0
        %2741 = vmatmul.mubr.bf16.gmra.mrb[0].mxu0 %v2074
        %v2742 = vpop.f32.mrb[0].mxu0
        %v2743 = vadd.f32 %v1809, %v2742
        %v2744 = vpop.f32.mrb[0].mxu0
        %v2745 = vpop.f32.mrb[0].mxu0
        %v2746 = vadd.f32 %v1809, %v2745
        %v2747 = vpop.f32.mrb[0].mxu0
        %2748 = vdwg.mxu0
        %v2749 = vmax.f32 %v2111, 0.0
        %v2750 = vmax.f32 %v2114, 0.0
        %v2751 = vmax.f32 %v2119, 0.0
        %v2752 = vmax.f32 %v2122, 0.0
        %v2753 = vmax.f32 %v2127, 0.0
        %v2754 = vmax.f32 %v2130, 0.0
        %v2755 = vmax.f32 %v2135, 0.0
        %v2756 = vmax.f32 %v2138, 0.0
        %v2757 = vmax.f32 %v2143, 0.0
        %v2758 = vmax.f32 %v2146, 0.0
        %v2759 = vmax.f32 %v2151, 0.0
        %v2760 = vmax.f32 %v2154, 0.0
        %v2761 = vmax.f32 %v2159, 0.0
        %v2762 = vmax.f32 %v2162, 0.0
        %v2763 = vmax.f32 %v2167, 0.0
        %v2764 = vmax.f32 %v2170, 0.0
        %v2765 = vmax.f32 %v2175, 0.0
        %v2766 = vmax.f32 %v2178, 0.0
        %v2767 = vmax.f32 %v2183, 0.0
        %v2768 = vmax.f32 %v2186, 0.0
        %v2769 = vmax.f32 %v2191, 0.0
        %v2770 = vmax.f32 %v2194, 0.0
        %v2771 = vmax.f32 %v2199, 0.0
        %v2772 = vmax.f32 %v2202, 0.0
        %v2773 = vmax.f32 %v2207, 0.0
        %v2774 = vmax.f32 %v2210, 0.0
        %v2775 = vmax.f32 %v2215, 0.0
        %v2776 = vmax.f32 %v2218, 0.0
        %v2777 = vmax.f32 %v2223, 0.0
        %v2778 = vmax.f32 %v2226, 0.0
        %v2779 = vmax.f32 %v2231, 0.0
        %v2780 = vmax.f32 %v2234, 0.0
        %v2781 = vmax.f32 %v2239, 0.0
        %v2782 = vmax.f32 %v2242, 0.0
        %v2783 = vmax.f32 %v2247, 0.0
        %v2784 = vmax.f32 %v2250, 0.0
        %v2785 = vmax.f32 %v2255, 0.0
        %v2786 = vmax.f32 %v2258, 0.0
        %v2787 = vmax.f32 %v2263, 0.0
        %v2788 = vmax.f32 %v2266, 0.0
        %v2789 = vmax.f32 %v2271, 0.0
        %v2790 = vmax.f32 %v2274, 0.0
        %v2791 = vmax.f32 %v2279, 0.0
        %v2792 = vmax.f32 %v2282, 0.0
        %v2793 = vmax.f32 %v2287, 0.0
        %v2794 = vmax.f32 %v2290, 0.0
        %v2795 = vmax.f32 %v2295, 0.0
        %v2796 = vmax.f32 %v2298, 0.0
        %v2797 = vmax.f32 %v2303, 0.0
        %v2798 = vmax.f32 %v2306, 0.0
        %v2799 = vmax.f32 %v2311, 0.0
        %v2800 = vmax.f32 %v2314, 0.0
        %v2801 = vmax.f32 %v2319, 0.0
        %v2802 = vmax.f32 %v2322, 0.0
        %v2803 = vmax.f32 %v2327, 0.0
        %v2804 = vmax.f32 %v2330, 0.0
        %v2805 = vmax.f32 %v2335, 0.0
        %v2806 = vmax.f32 %v2338, 0.0
        %v2807 = vmax.f32 %v2343, 0.0
        %v2808 = vmax.f32 %v2346, 0.0
        %v2809 = vmax.f32 %v2351, 0.0
        %v2810 = vmax.f32 %v2354, 0.0
        %v2811 = vmax.f32 %v2359, 0.0
        %v2812 = vmax.f32 %v2362, 0.0
        %v2813 = vmax.f32 %v2367, 0.0
        %v2814 = vmax.f32 %v2370, 0.0
        %v2815 = vmax.f32 %v2375, 0.0
        %v2816 = vmax.f32 %v2378, 0.0
        %v2817 = vmax.f32 %v2383, 0.0
        %v2818 = vmax.f32 %v2386, 0.0
        %v2819 = vmax.f32 %v2391, 0.0
        %v2820 = vmax.f32 %v2394, 0.0
        %v2821 = vmax.f32 %v2399, 0.0
        %v2822 = vmax.f32 %v2402, 0.0
        %v2823 = vmax.f32 %v2407, 0.0
        %v2824 = vmax.f32 %v2410, 0.0
        %v2825 = vmax.f32 %v2415, 0.0
        %v2826 = vmax.f32 %v2418, 0.0
        %v2827 = vmax.f32 %v2423, 0.0
        %v2828 = vmax.f32 %v2426, 0.0
        %v2829 = vmax.f32 %v2431, 0.0
        %v2830 = vmax.f32 %v2434, 0.0
        %v2831 = vmax.f32 %v2439, 0.0
        %v2832 = vmax.f32 %v2442, 0.0
        %v2833 = vmax.f32 %v2447, 0.0
        %v2834 = vmax.f32 %v2450, 0.0
        %v2835 = vmax.f32 %v2455, 0.0
        %v2836 = vmax.f32 %v2458, 0.0
        %v2837 = vmax.f32 %v2463, 0.0
        %v2838 = vmax.f32 %v2466, 0.0
        %v2839 = vmax.f32 %v2471, 0.0
        %v2840 = vmax.f32 %v2474, 0.0
        %v2841 = vmax.f32 %v2479, 0.0
        %v2842 = vmax.f32 %v2482, 0.0
        %v2843 = vmax.f32 %v2487, 0.0
        %v2844 = vmax.f32 %v2490, 0.0
        %v2845 = vmax.f32 %v2495, 0.0
        %v2846 = vmax.f32 %v2498, 0.0
        %v2847 = vmax.f32 %v2503, 0.0
        %v2848 = vmax.f32 %v2506, 0.0
        %v2849 = vmax.f32 %v2511, 0.0
        %v2850 = vmax.f32 %v2514, 0.0
        %v2851 = vmax.f32 %v2519, 0.0
        %v2852 = vmax.f32 %v2522, 0.0
        %v2853 = vmax.f32 %v2527, 0.0
        %v2854 = vmax.f32 %v2530, 0.0
        %v2855 = vmax.f32 %v2535, 0.0
        %v2856 = vmax.f32 %v2538, 0.0
        %v2857 = vmax.f32 %v2543, 0.0
        %v2858 = vmax.f32 %v2546, 0.0
        %v2859 = vmax.f32 %v2551, 0.0
        %v2860 = vmax.f32 %v2554, 0.0
        %v2861 = vmax.f32 %v2559, 0.0
        %v2862 = vmax.f32 %v2562, 0.0
        %v2863 = vmax.f32 %v2567, 0.0
        %v2864 = vmax.f32 %v2570, 0.0
        %v2865 = vmax.f32 %v2575, 0.0
        %v2866 = vmax.f32 %v2578, 0.0
        %v2867 = vmax.f32 %v2583, 0.0
        %v2868 = vmax.f32 %v2586, 0.0
        %v2869 = vmax.f32 %v2591, 0.0
        %v2870 = vmax.f32 %v2594, 0.0
        %v2871 = vmax.f32 %v2599, 0.0
        %v2872 = vmax.f32 %v2602, 0.0
        %v2873 = vmax.f32 %v2607, 0.0
        %v2874 = vmax.f32 %v2610, 0.0
        %v2875 = vmax.f32 %v2615, 0.0
        %v2876 = vmax.f32 %v2618, 0.0
        %v2877 = vmax.f32 %v2623, 0.0
        %v2878 = vmax.f32 %v2626, 0.0
        %v2879 = vmax.f32 %v2631, 0.0
        %v2880 = vmax.f32 %v2634, 0.0
        %v2881 = vmax.f32 %v2639, 0.0
        %v2882 = vmax.f32 %v2642, 0.0
        %v2883 = vmax.f32 %v2647, 0.0
        %v2884 = vmax.f32 %v2650, 0.0
        %v2885 = vmax.f32 %v2655, 0.0
        %v2886 = vmax.f32 %v2658, 0.0
        %v2887 = vmax.f32 %v2663, 0.0
        %v2888 = vmax.f32 %v2666, 0.0
        %v2889 = vmax.f32 %v2671, 0.0
        %v2890 = vmax.f32 %v2674, 0.0
        %v2891 = vmax.f32 %v2679, 0.0
        %v2892 = vmax.f32 %v2682, 0.0
        %v2893 = vmax.f32 %v2687, 0.0
        %v2894 = vmax.f32 %v2690, 0.0
        %v2895 = vmax.f32 %v2695, 0.0
        %v2896 = vmax.f32 %v2698, 0.0
        %v2897 = vmax.f32 %v2703, 0.0
        %v2898 = vmax.f32 %v2706, 0.0
        %v2899 = vmax.f32 %v2711, 0.0
        %v2900 = vmax.f32 %v2714, 0.0
        %v2901 = vmax.f32 %v2719, 0.0
        %v2902 = vmax.f32 %v2722, 0.0
        %v2903 = vmax.f32 %v2727, 0.0
        %v2904 = vmax.f32 %v2730, 0.0
        %v2905 = vmax.f32 %v2735, 0.0
        %v2906 = vmax.f32 %v2738, 0.0
        %v2907 = vmax.f32 %v2743, 0.0
        %v2908 = vmax.f32 %v2746, 0.0
        %v2909 = vpack.c.bf16 %v2750, %v2749
        %v2910 = vpack.c.bf16 %v2752, %v2751
        %v2911 = vpack.c.bf16 %v2754, %v2753
        %v2912 = vpack.c.bf16 %v2756, %v2755
        %v2913 = vpack.c.bf16 %v2758, %v2757
        %v2914 = vpack.c.bf16 %v2760, %v2759
        %v2915 = vpack.c.bf16 %v2762, %v2761
        %v2916 = vpack.c.bf16 %v2764, %v2763
        %v2917 = vpack.c.bf16 %v2766, %v2765
        %v2918 = vpack.c.bf16 %v2768, %v2767
        %v2919 = vpack.c.bf16 %v2770, %v2769
        %v2920 = vpack.c.bf16 %v2772, %v2771
        %v2921 = vpack.c.bf16 %v2774, %v2773
        %v2922 = vpack.c.bf16 %v2776, %v2775
        %v2923 = vpack.c.bf16 %v2778, %v2777
        %v2924 = vpack.c.bf16 %v2780, %v2779
        %v2925 = vpack.c.bf16 %v2782, %v2781
        %v2926 = vpack.c.bf16 %v2784, %v2783
        %v2927 = vpack.c.bf16 %v2786, %v2785
        %v2928 = vpack.c.bf16 %v2788, %v2787
        %v2929 = vpack.c.bf16 %v2790, %v2789
        %v2930 = vpack.c.bf16 %v2792, %v2791
        %v2931 = vpack.c.bf16 %v2794, %v2793
        %v2932 = vpack.c.bf16 %v2796, %v2795
        %v2933 = vpack.c.bf16 %v2798, %v2797
        %v2934 = vpack.c.bf16 %v2800, %v2799
        %v2935 = vpack.c.bf16 %v2802, %v2801
        %v2936 = vpack.c.bf16 %v2804, %v2803
        %v2937 = vpack.c.bf16 %v2806, %v2805
        %v2938 = vpack.c.bf16 %v2808, %v2807
        %v2939 = vpack.c.bf16 %v2810, %v2809
        %v2940 = vpack.c.bf16 %v2812, %v2811
        %v2941 = vpack.c.bf16 %v2814, %v2813
        %v2942 = vpack.c.bf16 %v2816, %v2815
        %v2943 = vpack.c.bf16 %v2818, %v2817
        %v2944 = vpack.c.bf16 %v2820, %v2819
        %v2945 = vpack.c.bf16 %v2822, %v2821
        %v2946 = vpack.c.bf16 %v2824, %v2823
        %v2947 = vpack.c.bf16 %v2826, %v2825
        %v2948 = vpack.c.bf16 %v2828, %v2827
        %v2949 = vpack.c.bf16 %v2830, %v2829
        %v2950 = vpack.c.bf16 %v2832, %v2831
        %v2951 = vpack.c.bf16 %v2834, %v2833
        %v2952 = vpack.c.bf16 %v2836, %v2835
        %v2953 = vpack.c.bf16 %v2838, %v2837
        %v2954 = vpack.c.bf16 %v2840, %v2839
        %v2955 = vpack.c.bf16 %v2842, %v2841
        %v2956 = vpack.c.bf16 %v2844, %v2843
        %v2957 = vpack.c.bf16 %v2846, %v2845
        %v2958 = vpack.c.bf16 %v2848, %v2847
        %v2959 = vpack.c.bf16 %v2850, %v2849
        %v2960 = vpack.c.bf16 %v2852, %v2851
        %v2961 = vpack.c.bf16 %v2854, %v2853
        %v2962 = vpack.c.bf16 %v2856, %v2855
        %v2963 = vpack.c.bf16 %v2858, %v2857
        %v2964 = vpack.c.bf16 %v2860, %v2859
        %v2965 = vpack.c.bf16 %v2862, %v2861
        %v2966 = vpack.c.bf16 %v2864, %v2863
        %v2967 = vpack.c.bf16 %v2866, %v2865
        %v2968 = vpack.c.bf16 %v2868, %v2867
        %v2969 = vpack.c.bf16 %v2870, %v2869
        %v2970 = vpack.c.bf16 %v2872, %v2871
        %v2971 = vpack.c.bf16 %v2874, %v2873
        %v2972 = vpack.c.bf16 %v2876, %v2875
        %v2973 = vpack.c.bf16 %v2878, %v2877
        %v2974 = vpack.c.bf16 %v2880, %v2879
        %v2975 = vpack.c.bf16 %v2882, %v2881
        %v2976 = vpack.c.bf16 %v2884, %v2883
        %v2977 = vpack.c.bf16 %v2886, %v2885
        %v2978 = vpack.c.bf16 %v2888, %v2887
        %v2979 = vpack.c.bf16 %v2890, %v2889
        %v2980 = vpack.c.bf16 %v2892, %v2891
        %v2981 = vpack.c.bf16 %v2894, %v2893
        %v2982 = vpack.c.bf16 %v2896, %v2895
        %v2983 = vpack.c.bf16 %v2898, %v2897
        %v2984 = vpack.c.bf16 %v2900, %v2899
        %v2985 = vpack.c.bf16 %v2902, %v2901
        %v2986 = vpack.c.bf16 %v2904, %v2903
        %v2987 = vpack.c.bf16 %v2906, %v2905
        %v2988 = vpack.c.bf16 %v2908, %v2907
        %v2989 = vld [vmem:[#allocation8] sm:$0xff]
        %v2990 = vld [vmem:[#allocation8 + $0x8] sm:$0xff]
        %v2991 = vld [vmem:[#allocation8 + $0x10] sm:$0xff]
        %v2992 = vld [vmem:[#allocation8 + $0x18] sm:$0xff]
        %v2993 = vld [vmem:[#allocation8 + $0x20] sm:$0xff]
        %v2994 = vld [vmem:[#allocation8 + $0x28] sm:$0xff]
        %v2995 = vld [vmem:[#allocation8 + $0x30] sm:$0xff]
        %v2996 = vld [vmem:[#allocation8 + $0x38] sm:$0xff]
        %v2997 = vld [vmem:[#allocation8 + $0x40] sm:$0xff]
        %v2998 = vld [vmem:[#allocation8 + $0x48] sm:$0xff]
        %v2999 = vld [vmem:[#allocation8 + $0x50] sm:$0xff]
        %v3000 = vld [vmem:[#allocation8 + $0x58] sm:$0xff]
        %v3001 = vld [vmem:[#allocation8 + $0x60] sm:$0xff]
        %v3002 = vld [vmem:[#allocation8 + $0x68] sm:$0xff]
        %v3003 = vld [vmem:[#allocation8 + $0x70] sm:$0xff]
        %v3004 = vld [vmem:[#allocation8 + $0x78] sm:$0xff]
        %v3005 = vld [vmem:[#allocation8 + $0x80] sm:$0xff]
        %v3006 = vld [vmem:[#allocation8 + $0x88] sm:$0xff]
        %v3007 = vld [vmem:[#allocation8 + $0x90] sm:$0xff]
        %v3008 = vld [vmem:[#allocation8 + $0x98] sm:$0xff]
        %v3009 = vld [vmem:[#allocation8 + $0xa0] sm:$0xff]
        %v3010 = vld [vmem:[#allocation8 + $0xa8] sm:$0xff]
        %v3011 = vld [vmem:[#allocation8 + $0xb0] sm:$0xff]
        %v3012 = vld [vmem:[#allocation8 + $0xb8] sm:$0xff]
        %v3013 = vld [vmem:[#allocation8 + $0xc0] sm:$0xff]
        %v3014 = vld [vmem:[#allocation8 + $0xc8] sm:$0xff]
        %v3015 = vld [vmem:[#allocation8 + $0xd0] sm:$0xff]
        %v3016 = vld [vmem:[#allocation8 + $0xd8] sm:$0xff]
        %v3017 = vld [vmem:[#allocation8 + $0xe0] sm:$0xff]
        %v3018 = vld [vmem:[#allocation8 + $0xe8] sm:$0xff]
        %v3019 = vld [vmem:[#allocation8 + $0xf0] sm:$0xff]
        %v3020 = vld [vmem:[#allocation8 + $0xf8] sm:$0xff]
        %v3021 = vld [vmem:[#allocation8 + $0x100] sm:$0xff]
        %v3022 = vld [vmem:[#allocation8 + $0x108] sm:$0xff]
        %v3023 = vld [vmem:[#allocation8 + $0x110] sm:$0xff]
        %v3024 = vld [vmem:[#allocation8 + $0x118] sm:$0xff]
        %v3025 = vld [vmem:[#allocation8 + $0x120] sm:$0xff]
        %v3026 = vld [vmem:[#allocation8 + $0x128] sm:$0xff]
        %v3027 = vld [vmem:[#allocation8 + $0x130] sm:$0xff]
        %v3028 = vld [vmem:[#allocation8 + $0x138] sm:$0xff]
        %v3029 = vld [vmem:[#allocation8 + $0x140] sm:$0xff]
        %v3030 = vld [vmem:[#allocation8 + $0x148] sm:$0xff]
        %v3031 = vld [vmem:[#allocation8 + $0x150] sm:$0xff]
        %v3032 = vld [vmem:[#allocation8 + $0x158] sm:$0xff]
        %v3033 = vld [vmem:[#allocation8 + $0x160] sm:$0xff]
        %v3034 = vld [vmem:[#allocation8 + $0x168] sm:$0xff]
        %v3035 = vld [vmem:[#allocation8 + $0x170] sm:$0xff]
        %v3036 = vld [vmem:[#allocation8 + $0x178] sm:$0xff]
        %v3037 = vld [vmem:[#allocation8 + $0x180] sm:$0xff]
        %v3038 = vld [vmem:[#allocation8 + $0x188] sm:$0xff]
        %v3039 = vld [vmem:[#allocation8 + $0x190] sm:$0xff]
        %v3040 = vld [vmem:[#allocation8 + $0x198] sm:$0xff]
        %v3041 = vld [vmem:[#allocation8 + $0x1a0] sm:$0xff]
        %v3042 = vld [vmem:[#allocation8 + $0x1a8] sm:$0xff]
        %v3043 = vld [vmem:[#allocation8 + $0x1b0] sm:$0xff]
        %v3044 = vld [vmem:[#allocation8 + $0x1b8] sm:$0xff]
        %v3045 = vld [vmem:[#allocation8 + $0x1c0] sm:$0xff]
        %v3046 = vld [vmem:[#allocation8 + $0x1c8] sm:$0xff]
        %v3047 = vld [vmem:[#allocation8 + $0x1d0] sm:$0xff]
        %v3048 = vld [vmem:[#allocation8 + $0x1d8] sm:$0xff]
        %v3049 = vld [vmem:[#allocation8 + $0x1e0] sm:$0xff]
        %v3050 = vld [vmem:[#allocation8 + $0x1e8] sm:$0xff]
        %v3051 = vld [vmem:[#allocation8 + $0x1f0] sm:$0xff]
        %v3052 = vld [vmem:[#allocation8 + $0x1f8] sm:$0xff]
        %v3117 = vunpack.c.l.b16 %v2989
        %v3118 = vunpack.c.h.b16 %v2989
        %v3119 = vunpack.c.l.b16 %v2990
        %v3120 = vunpack.c.h.b16 %v2990
        %v3121 = vunpack.c.l.b16 %v2991
        %v3122 = vunpack.c.h.b16 %v2991
        %v3123 = vunpack.c.l.b16 %v2992
        %v3124 = vunpack.c.h.b16 %v2992
        %v3125 = vunpack.c.l.b16 %v2993
        %v3126 = vunpack.c.h.b16 %v2993
        %v3127 = vunpack.c.l.b16 %v2994
        %v3128 = vunpack.c.h.b16 %v2994
        %v3129 = vunpack.c.l.b16 %v2995
        %v3130 = vunpack.c.h.b16 %v2995
        %v3131 = vunpack.c.l.b16 %v2996
        %v3132 = vunpack.c.h.b16 %v2996
        %v3133 = vunpack.c.l.b16 %v2997
        %v3134 = vunpack.c.h.b16 %v2997
        %v3135 = vunpack.c.l.b16 %v2998
        %v3136 = vunpack.c.h.b16 %v2998
        %v3137 = vunpack.c.l.b16 %v2999
        %v3138 = vunpack.c.h.b16 %v2999
        %v3139 = vunpack.c.l.b16 %v3000
        %v3140 = vunpack.c.h.b16 %v3000
        %v3141 = vunpack.c.l.b16 %v3001
        %v3142 = vunpack.c.h.b16 %v3001
        %v3143 = vunpack.c.l.b16 %v3002
        %v3144 = vunpack.c.h.b16 %v3002
        %v3145 = vunpack.c.l.b16 %v3003
        %v3146 = vunpack.c.h.b16 %v3003
        %v3147 = vunpack.c.l.b16 %v3004
        %v3148 = vunpack.c.h.b16 %v3004
        %v3149 = vunpack.c.l.b16 %v3005
        %v3150 = vunpack.c.h.b16 %v3005
        %v3151 = vunpack.c.l.b16 %v3006
        %v3152 = vunpack.c.h.b16 %v3006
        %v3153 = vunpack.c.l.b16 %v3007
        %v3154 = vunpack.c.h.b16 %v3007
        %v3155 = vunpack.c.l.b16 %v3008
        %v3156 = vunpack.c.h.b16 %v3008
        %v3157 = vunpack.c.l.b16 %v3009
        %v3158 = vunpack.c.h.b16 %v3009
        %v3159 = vunpack.c.l.b16 %v3010
        %v3160 = vunpack.c.h.b16 %v3010
        %v3161 = vunpack.c.l.b16 %v3011
        %v3162 = vunpack.c.h.b16 %v3011
        %v3163 = vunpack.c.l.b16 %v3012
        %v3164 = vunpack.c.h.b16 %v3012
        %v3165 = vunpack.c.l.b16 %v3013
        %v3166 = vunpack.c.h.b16 %v3013
        %v3167 = vunpack.c.l.b16 %v3014
        %v3168 = vunpack.c.h.b16 %v3014
        %v3169 = vunpack.c.l.b16 %v3015
        %v3170 = vunpack.c.h.b16 %v3015
        %v3171 = vunpack.c.l.b16 %v3016
        %v3172 = vunpack.c.h.b16 %v3016
        %v3173 = vunpack.c.l.b16 %v3017
        %v3174 = vunpack.c.h.b16 %v3017
        %v3175 = vunpack.c.l.b16 %v3018
        %v3176 = vunpack.c.h.b16 %v3018
        %v3177 = vunpack.c.l.b16 %v3019
        %v3178 = vunpack.c.h.b16 %v3019
        %v3179 = vunpack.c.l.b16 %v3020
        %v3180 = vunpack.c.h.b16 %v3020
        %v3181 = vunpack.c.l.b16 %v3021
        %v3182 = vunpack.c.h.b16 %v3021
        %v3183 = vunpack.c.l.b16 %v3022
        %v3184 = vunpack.c.h.b16 %v3022
        %v3185 = vunpack.c.l.b16 %v3023
        %v3186 = vunpack.c.h.b16 %v3023
        %v3187 = vunpack.c.l.b16 %v3024
        %v3188 = vunpack.c.h.b16 %v3024
        %v3189 = vunpack.c.l.b16 %v3025
        %v3190 = vunpack.c.h.b16 %v3025
        %v3191 = vunpack.c.l.b16 %v3026
        %v3192 = vunpack.c.h.b16 %v3026
        %v3193 = vunpack.c.l.b16 %v3027
        %v3194 = vunpack.c.h.b16 %v3027
        %v3195 = vunpack.c.l.b16 %v3028
        %v3196 = vunpack.c.h.b16 %v3028
        %v3197 = vunpack.c.l.b16 %v3029
        %v3198 = vunpack.c.h.b16 %v3029
        %v3199 = vunpack.c.l.b16 %v3030
        %v3200 = vunpack.c.h.b16 %v3030
        %v3201 = vunpack.c.l.b16 %v3031
        %v3202 = vunpack.c.h.b16 %v3031
        %v3203 = vunpack.c.l.b16 %v3032
        %v3204 = vunpack.c.h.b16 %v3032
        %v3205 = vunpack.c.l.b16 %v3033
        %v3206 = vunpack.c.h.b16 %v3033
        %v3207 = vunpack.c.l.b16 %v3034
        %v3208 = vunpack.c.h.b16 %v3034
        %v3209 = vunpack.c.l.b16 %v3035
        %v3210 = vunpack.c.h.b16 %v3035
        %v3211 = vunpack.c.l.b16 %v3036
        %v3212 = vunpack.c.h.b16 %v3036
        %v3213 = vunpack.c.l.b16 %v3037
        %v3214 = vunpack.c.h.b16 %v3037
        %v3215 = vunpack.c.l.b16 %v3038
        %v3216 = vunpack.c.h.b16 %v3038
        %v3217 = vunpack.c.l.b16 %v3039
        %v3218 = vunpack.c.h.b16 %v3039
        %v3219 = vunpack.c.l.b16 %v3040
        %v3220 = vunpack.c.h.b16 %v3040
        %v3221 = vunpack.c.l.b16 %v3041
        %v3222 = vunpack.c.h.b16 %v3041
        %v3223 = vunpack.c.l.b16 %v3042
        %v3224 = vunpack.c.h.b16 %v3042
        %v3225 = vunpack.c.l.b16 %v3043
        %v3226 = vunpack.c.h.b16 %v3043
        %v3227 = vunpack.c.l.b16 %v3044
        %v3228 = vunpack.c.h.b16 %v3044
        %v3229 = vunpack.c.l.b16 %v3045
        %v3230 = vunpack.c.h.b16 %v3045
        %v3231 = vunpack.c.l.b16 %v3046
        %v3232 = vunpack.c.h.b16 %v3046
        %v3233 = vunpack.c.l.b16 %v3047
        %v3234 = vunpack.c.h.b16 %v3047
        %v3235 = vunpack.c.l.b16 %v3048
        %v3236 = vunpack.c.h.b16 %v3048
        %v3237 = vunpack.c.l.b16 %v3049
        %v3238 = vunpack.c.h.b16 %v3049
        %v3239 = vunpack.c.l.b16 %v3050
        %v3240 = vunpack.c.h.b16 %v3050
        %v3241 = vunpack.c.l.b16 %v3051
        %v3242 = vunpack.c.h.b16 %v3051
        %v3243 = vunpack.c.l.b16 %v3052
        %v3244 = vunpack.c.h.b16 %v3052
        %v3245 = vpack.c.b16 %v3125, %v3117
        %v3246 = vpack.c.b16 %v3126, %v3118
        %v3247 = vpack.c.b16 %v3127, %v3119
        %v3248 = vpack.c.b16 %v3128, %v3120
        %v3249 = vpack.c.b16 %v3129, %v3121
        %v3250 = vpack.c.b16 %v3130, %v3122
        %v3251 = vpack.c.b16 %v3131, %v3123
        %v3252 = vpack.c.b16 %v3132, %v3124
        %v3253 = vpack.c.b16 %v3141, %v3133
        %v3254 = vpack.c.b16 %v3142, %v3134
        %v3255 = vpack.c.b16 %v3143, %v3135
        %v3256 = vpack.c.b16 %v3144, %v3136
        %v3257 = vpack.c.b16 %v3145, %v3137
        %v3258 = vpack.c.b16 %v3146, %v3138
        %v3259 = vpack.c.b16 %v3147, %v3139
        %v3260 = vpack.c.b16 %v3148, %v3140
        %v3261 = vpack.c.b16 %v3157, %v3149
        %v3262 = vpack.c.b16 %v3158, %v3150
        %v3263 = vpack.c.b16 %v3159, %v3151
        %v3264 = vpack.c.b16 %v3160, %v3152
        %v3265 = vpack.c.b16 %v3161, %v3153
        %v3266 = vpack.c.b16 %v3162, %v3154
        %v3267 = vpack.c.b16 %v3163, %v3155
        %v3268 = vpack.c.b16 %v3164, %v3156
        %v3269 = vpack.c.b16 %v3173, %v3165
        %v3270 = vpack.c.b16 %v3174, %v3166
        %v3271 = vpack.c.b16 %v3175, %v3167
        %v3272 = vpack.c.b16 %v3176, %v3168
        %v3273 = vpack.c.b16 %v3177, %v3169
        %v3274 = vpack.c.b16 %v3178, %v3170
        %v3275 = vpack.c.b16 %v3179, %v3171
        %v3276 = vpack.c.b16 %v3180, %v3172
        %v3277 = vpack.c.b16 %v3189, %v3181
        %v3278 = vpack.c.b16 %v3190, %v3182
        %v3279 = vpack.c.b16 %v3191, %v3183
        %v3280 = vpack.c.b16 %v3192, %v3184
        %v3281 = vpack.c.b16 %v3193, %v3185
        %v3282 = vpack.c.b16 %v3194, %v3186
        %v3283 = vpack.c.b16 %v3195, %v3187
        %v3284 = vpack.c.b16 %v3196, %v3188
        %v3285 = vpack.c.b16 %v3205, %v3197
        %v3286 = vpack.c.b16 %v3206, %v3198
        %v3287 = vpack.c.b16 %v3207, %v3199
        %v3288 = vpack.c.b16 %v3208, %v3200
        %v3289 = vpack.c.b16 %v3209, %v3201
        %v3290 = vpack.c.b16 %v3210, %v3202
        %v3291 = vpack.c.b16 %v3211, %v3203
        %v3292 = vpack.c.b16 %v3212, %v3204
        %v3293 = vpack.c.b16 %v3221, %v3213
        %v3294 = vpack.c.b16 %v3222, %v3214
        %v3295 = vpack.c.b16 %v3223, %v3215
        %v3296 = vpack.c.b16 %v3224, %v3216
        %v3297 = vpack.c.b16 %v3225, %v3217
        %v3298 = vpack.c.b16 %v3226, %v3218
        %v3299 = vpack.c.b16 %v3227, %v3219
        %v3300 = vpack.c.b16 %v3228, %v3220
        %v3301 = vpack.c.b16 %v3237, %v3229
        %v3302 = vpack.c.b16 %v3238, %v3230
        %v3303 = vpack.c.b16 %v3239, %v3231
        %v3304 = vpack.c.b16 %v3240, %v3232
        %v3305 = vpack.c.b16 %v3241, %v3233
        %v3306 = vpack.c.b16 %v3242, %v3234
        %v3307 = vpack.c.b16 %v3243, %v3235
        %v3308 = vpack.c.b16 %v3244, %v3236
        %3373 = vmatprep.subr.bf16.mxu0 %v3246
        %3374 = vmatpush1.bf16.msra.mxu0 %v3245
        %3375 = vmatprep.subr.bf16.mxu0 %v3254
        %3376 = vmatpush1.bf16.msra.mxu0 %v3253
        %3377 = vmatprep.subr.bf16.mxu0 %v3262
        %3378 = vmatpush1.bf16.msra.mxu0 %v3261
        %3379 = vmatprep.subr.bf16.mxu0 %v3270
        %3380 = vmatpush1.bf16.msra.mxu0 %v3269
        %3381 = vmatprep.subr.bf16.mxu0 %v3278
        %3382 = vmatpush1.bf16.msra.mxu0 %v3277
        %3383 = vmatprep.subr.bf16.mxu0 %v3286
        %3384 = vmatpush1.bf16.msra.mxu0 %v3285
        %3385 = vmatprep.subr.bf16.mxu0 %v3294
        %3386 = vmatpush1.bf16.msra.mxu0 %v3293
        %3387 = vmatprep.subr.bf16.mxu0 %v3302
        %3388 = vmatpush1.bf16.msra.mxu0 %v3301
        %3389 = vmatprep.subr.bf16.mxu0 0
        %3390 = vmatpush1.bf16.msra.mxu0 0
        %3391 = vmatprep.subr.bf16.mxu0 0
        %3392 = vmatpush1.bf16.msra.mxu0 0
        %3393 = vmatprep.subr.bf16.mxu0 0
        %3394 = vmatpush1.bf16.msra.mxu0 0
        %3395 = vmatprep.subr.bf16.mxu0 0
        %3396 = vmatpush1.bf16.msra.mxu0 0
        %3397 = vmatprep.subr.bf16.mxu0 0
        %3398 = vmatpush1.bf16.msra.mxu0 0
        %3399 = vmatprep.subr.bf16.mxu0 0
        %3400 = vmatpush1.bf16.msra.mxu0 0
        %3401 = vmatprep.subr.bf16.mxu0 0
        %3402 = vmatpush1.bf16.msra.mxu0 0
        %3403 = vmatprep.subr.bf16.mxu0 0
        %3404 = vmatpush1.bf16.msra.mxu0 0
        %3405 = vmatprep.mubr.bf16.mxu0 0
        %3406 = vmatmul.mubr.bf16.gmra.mrb[0].mxu0 %v2909
        %v3407 = vpop.f32.mrb[0].mxu0
        %v3408 = vadd.f32 0.0, %v3407
        %v3409 = vpop.f32.mrb[0].mxu0
        %v3410 = vadd.f32 0.0, %v3409
        %v3411 = vpop.f32.mrb[0].mxu0
        %v3412 = vadd.f32 0.0, %v3411
        %v3413 = vpop.f32.mrb[0].mxu0
        %v3414 = vadd.f32 0.0, %v3413
        %3415 = vmatprep.mubr.bf16.mxu0 0
        %3416 = vmatmul.mubr.bf16.gmra.mrb[0].mxu0 %v2910
        %v3417 = vpop.f32.mrb[0].mxu0
        %v3418 = vadd.f32 0.0, %v3417
        %v3419 = vpop.f32.mrb[0].mxu0
        %v3420 = vadd.f32 0.0, %v3419
        %v3421 = vpop.f32.mrb[0].mxu0
        %v3422 = vadd.f32 0.0, %v3421
        %v3423 = vpop.f32.mrb[0].mxu0
        %v3424 = vadd.f32 0.0, %v3423
        %3425 = vmatprep.mubr.bf16.mxu0 0
        %3426 = vmatmul.mubr.bf16.gmra.mrb[0].mxu0 %v2911
        %v3427 = vpop.f32.mrb[0].mxu0
        %v3428 = vadd.f32 0.0, %v3427
        %v3429 = vpop.f32.mrb[0].mxu0
        %v3430 = vadd.f32 0.0, %v3429
        %v3431 = vpop.f32.mrb[0].mxu0
        %v3432 = vadd.f32 0.0, %v3431
        %v3433 = vpop.f32.mrb[0].mxu0
        %v3434 = vadd.f32 0.0, %v3433
        %3435 = vmatprep.mubr.bf16.mxu0 0
        %3436 = vmatmul.mubr.bf16.gmra.mrb[0].mxu0 %v2912
        %v3437 = vpop.f32.mrb[0].mxu0
        %v3438 = vadd.f32 0.0, %v3437
        %v3439 = vpop.f32.mrb[0].mxu0
        %v3440 = vadd.f32 0.0, %v3439
        %v3441 = vpop.f32.mrb[0].mxu0
        %v3442 = vadd.f32 0.0, %v3441
        %v3443 = vpop.f32.mrb[0].mxu0
        %v3444 = vadd.f32 0.0, %v3443
        %3445 = vmatprep.mubr.bf16.mxu0 0
        %3446 = vmatmul.mubr.bf16.gmra.mrb[0].mxu0 %v2913
        %v3447 = vpop.f32.mrb[0].mxu0
        %v3448 = vadd.f32 0.0, %v3447
        %v3449 = vpop.f32.mrb[0].mxu0
        %v3450 = vadd.f32 0.0, %v3449
        %v3451 = vpop.f32.mrb[0].mxu0
        %v3452 = vadd.f32 0.0, %v3451
        %v3453 = vpop.f32.mrb[0].mxu0
        %v3454 = vadd.f32 0.0, %v3453
        %3455 = vmatprep.mubr.bf16.mxu0 0
        %3456 = vmatmul.mubr.bf16.gmra.mrb[0].mxu0 %v2914
        %v3457 = vpop.f32.mrb[0].mxu0
        %v3458 = vadd.f32 0.0, %v3457
        %v3459 = vpop.f32.mrb[0].mxu0
        %v3460 = vadd.f32 0.0, %v3459
        %v3461 = vpop.f32.mrb[0].mxu0
        %v3462 = vadd.f32 0.0, %v3461
        %v3463 = vpop.f32.mrb[0].mxu0
        %v3464 = vadd.f32 0.0, %v3463
        %3465 = vmatprep.mubr.bf16.mxu0 0
        %3466 = vmatmul.mubr.bf16.gmra.mrb[0].mxu0 %v2915
        %v3467 = vpop.f32.mrb[0].mxu0
        %v3468 = vadd.f32 0.0, %v3467
        %v3469 = vpop.f32.mrb[0].mxu0
        %v3470 = vadd.f32 0.0, %v3469
        %v3471 = vpop.f32.mrb[0].mxu0
        %v3472 = vadd.f32 0.0, %v3471
        %v3473 = vpop.f32.mrb[0].mxu0
        %v3474 = vadd.f32 0.0, %v3473
        %3475 = vmatprep.mubr.bf16.mxu0 0
        %3476 = vmatmul.mubr.bf16.gmra.mrb[0].mxu0 %v2916
        %v3477 = vpop.f32.mrb[0].mxu0
        %v3478 = vadd.f32 0.0, %v3477
        %v3479 = vpop.f32.mrb[0].mxu0
        %v3480 = vadd.f32 0.0, %v3479
        %v3481 = vpop.f32.mrb[0].mxu0
        %v3482 = vadd.f32 0.0, %v3481
        %v3483 = vpop.f32.mrb[0].mxu0
        %v3484 = vadd.f32 0.0, %v3483
        %3485 = vmatprep.mubr.bf16.mxu0 0
        %3486 = vmatmul.mubr.bf16.gmra.mrb[0].mxu0 %v2917
        %v3487 = vpop.f32.mrb[0].mxu0
        %v3488 = vadd.f32 0.0, %v3487
        %v3489 = vpop.f32.mrb[0].mxu0
        %v3490 = vadd.f32 0.0, %v3489
        %v3491 = vpop.f32.mrb[0].mxu0
        %v3492 = vadd.f32 0.0, %v3491
        %v3493 = vpop.f32.mrb[0].mxu0
        %v3494 = vadd.f32 0.0, %v3493
        %3495 = vmatprep.mubr.bf16.mxu0 0
        %3496 = vmatmul.mubr.bf16.gmra.mrb[0].mxu0 %v2918
        %v3497 = vpop.f32.mrb[0].mxu0
        %v3498 = vadd.f32 0.0, %v3497
        %v3499 = vpop.f32.mrb[0].mxu0
        %v3500 = vadd.f32 0.0, %v3499
        %v3501 = vpop.f32.mrb[0].mxu0
        %v3502 = vadd.f32 0.0, %v3501
        %v3503 = vpop.f32.mrb[0].mxu0
        %v3504 = vadd.f32 0.0, %v3503
        %3505 = vmatprep.mubr.bf16.mxu0 0
        %3506 = vmatmul.mubr.bf16.gmra.mrb[0].mxu0 %v2919
        %v3507 = vpop.f32.mrb[0].mxu0
        %v3508 = vadd.f32 0.0, %v3507
        %v3509 = vpop.f32.mrb[0].mxu0
        %v3510 = vadd.f32 0.0, %v3509
        %v3511 = vpop.f32.mrb[0].mxu0
        %v3512 = vadd.f32 0.0, %v3511
        %v3513 = vpop.f32.mrb[0].mxu0
        %v3514 = vadd.f32 0.0, %v3513
        %3515 = vmatprep.mubr.bf16.mxu0 0
        %3516 = vmatmul.mubr.bf16.gmra.mrb[0].mxu0 %v2920
        %v3517 = vpop.f32.mrb[0].mxu0
        %v3518 = vadd.f32 0.0, %v3517
        %v3519 = vpop.f32.mrb[0].mxu0
        %v3520 = vadd.f32 0.0, %v3519
        %v3521 = vpop.f32.mrb[0].mxu0
        %v3522 = vadd.f32 0.0, %v3521
        %v3523 = vpop.f32.mrb[0].mxu0
        %v3524 = vadd.f32 0.0, %v3523
        %3525 = vmatprep.mubr.bf16.mxu0 0
        %3526 = vmatmul.mubr.bf16.gmra.mrb[0].mxu0 %v2921
        %v3527 = vpop.f32.mrb[0].mxu0
        %v3528 = vadd.f32 0.0, %v3527
        %v3529 = vpop.f32.mrb[0].mxu0
        %v3530 = vadd.f32 0.0, %v3529
        %v3531 = vpop.f32.mrb[0].mxu0
        %v3532 = vadd.f32 0.0, %v3531
        %v3533 = vpop.f32.mrb[0].mxu0
        %v3534 = vadd.f32 0.0, %v3533
        %3535 = vmatprep.mubr.bf16.mxu0 0
        %3536 = vmatmul.mubr.bf16.gmra.mrb[0].mxu0 %v2922
        %v3537 = vpop.f32.mrb[0].mxu0
        %v3538 = vadd.f32 0.0, %v3537
        %v3539 = vpop.f32.mrb[0].mxu0
        %v3540 = vadd.f32 0.0, %v3539
        %v3541 = vpop.f32.mrb[0].mxu0
        %v3542 = vadd.f32 0.0, %v3541
        %v3543 = vpop.f32.mrb[0].mxu0
        %v3544 = vadd.f32 0.0, %v3543
        %3545 = vmatprep.mubr.bf16.mxu0 0
        %3546 = vmatmul.mubr.bf16.gmra.mrb[0].mxu0 %v2923
        %v3547 = vpop.f32.mrb[0].mxu0
        %v3548 = vadd.f32 0.0, %v3547
        %v3549 = vpop.f32.mrb[0].mxu0
        %v3550 = vadd.f32 0.0, %v3549
        %v3551 = vpop.f32.mrb[0].mxu0
        %v3552 = vadd.f32 0.0, %v3551
        %v3553 = vpop.f32.mrb[0].mxu0
        %v3554 = vadd.f32 0.0, %v3553
        %3555 = vmatprep.mubr.bf16.mxu0 0
        %3556 = vmatmul.mubr.bf16.gmra.mrb[0].mxu0 %v2924
        %v3557 = vpop.f32.mrb[0].mxu0
        %v3558 = vadd.f32 0.0, %v3557
        %v3559 = vpop.f32.mrb[0].mxu0
        %v3560 = vadd.f32 0.0, %v3559
        %v3561 = vpop.f32.mrb[0].mxu0
        %v3562 = vadd.f32 0.0, %v3561
        %v3563 = vpop.f32.mrb[0].mxu0
        %v3564 = vadd.f32 0.0, %v3563
        %3565 = vmatprep.mubr.bf16.mxu0 0
        %3566 = vmatmul.mubr.bf16.gmra.mrb[0].mxu0 %v2925
        %v3567 = vpop.f32.mrb[0].mxu0
        %v3568 = vadd.f32 0.0, %v3567
        %v3569 = vpop.f32.mrb[0].mxu0
        %v3570 = vadd.f32 0.0, %v3569
        %v3571 = vpop.f32.mrb[0].mxu0
        %v3572 = vadd.f32 0.0, %v3571
        %v3573 = vpop.f32.mrb[0].mxu0
        %v3574 = vadd.f32 0.0, %v3573
        %3575 = vmatprep.mubr.bf16.mxu0 0
        %3576 = vmatmul.mubr.bf16.gmra.mrb[0].mxu0 %v2926
        %v3577 = vpop.f32.mrb[0].mxu0
        %v3578 = vadd.f32 0.0, %v3577
        %v3579 = vpop.f32.mrb[0].mxu0
        %v3580 = vadd.f32 0.0, %v3579
        %v3581 = vpop.f32.mrb[0].mxu0
        %v3582 = vadd.f32 0.0, %v3581
        %v3583 = vpop.f32.mrb[0].mxu0
        %v3584 = vadd.f32 0.0, %v3583
        %3585 = vmatprep.mubr.bf16.mxu0 0
        %3586 = vmatmul.mubr.bf16.gmra.mrb[0].mxu0 %v2927
        %v3587 = vpop.f32.mrb[0].mxu0
        %v3588 = vadd.f32 0.0, %v3587
        %v3589 = vpop.f32.mrb[0].mxu0
        %v3590 = vadd.f32 0.0, %v3589
        %v3591 = vpop.f32.mrb[0].mxu0
        %v3592 = vadd.f32 0.0, %v3591
        %v3593 = vpop.f32.mrb[0].mxu0
        %v3594 = vadd.f32 0.0, %v3593
        %3595 = vmatprep.mubr.bf16.mxu0 0
        %3596 = vmatmul.mubr.bf16.gmra.mrb[0].mxu0 %v2928
        %v3597 = vpop.f32.mrb[0].mxu0
        %v3598 = vadd.f32 0.0, %v3597
        %v3599 = vpop.f32.mrb[0].mxu0
        %v3600 = vadd.f32 0.0, %v3599
        %v3601 = vpop.f32.mrb[0].mxu0
        %v3602 = vadd.f32 0.0, %v3601
        %v3603 = vpop.f32.mrb[0].mxu0
        %v3604 = vadd.f32 0.0, %v3603
        %3605 = vmatprep.mubr.bf16.mxu0 0
        %3606 = vmatmul.mubr.bf16.gmra.mrb[0].mxu0 %v2929
        %v3607 = vpop.f32.mrb[0].mxu0
        %v3608 = vadd.f32 0.0, %v3607
        %v3609 = vpop.f32.mrb[0].mxu0
        %v3610 = vadd.f32 0.0, %v3609
        %v3611 = vpop.f32.mrb[0].mxu0
        %v3612 = vadd.f32 0.0, %v3611
        %v3613 = vpop.f32.mrb[0].mxu0
        %v3614 = vadd.f32 0.0, %v3613
        %3615 = vmatprep.mubr.bf16.mxu0 0
        %3616 = vmatmul.mubr.bf16.gmra.mrb[0].mxu0 %v2930
        %v3617 = vpop.f32.mrb[0].mxu0
        %v3618 = vadd.f32 0.0, %v3617
        %v3619 = vpop.f32.mrb[0].mxu0
        %v3620 = vadd.f32 0.0, %v3619
        %v3621 = vpop.f32.mrb[0].mxu0
        %v3622 = vadd.f32 0.0, %v3621
        %v3623 = vpop.f32.mrb[0].mxu0
        %v3624 = vadd.f32 0.0, %v3623
        %3625 = vmatprep.mubr.bf16.mxu0 0
        %3626 = vmatmul.mubr.bf16.gmra.mrb[0].mxu0 %v2931
        %v3627 = vpop.f32.mrb[0].mxu0
        %v3628 = vadd.f32 0.0, %v3627
        %v3629 = vpop.f32.mrb[0].mxu0
        %v3630 = vadd.f32 0.0, %v3629
        %v3631 = vpop.f32.mrb[0].mxu0
        %v3632 = vadd.f32 0.0, %v3631
        %v3633 = vpop.f32.mrb[0].mxu0
        %v3634 = vadd.f32 0.0, %v3633
        %3635 = vmatprep.mubr.bf16.mxu0 0
        %3636 = vmatmul.mubr.bf16.gmra.mrb[0].mxu0 %v2932
        %v3637 = vpop.f32.mrb[0].mxu0
        %v3638 = vadd.f32 0.0, %v3637
        %v3639 = vpop.f32.mrb[0].mxu0
        %v3640 = vadd.f32 0.0, %v3639
        %v3641 = vpop.f32.mrb[0].mxu0
        %v3642 = vadd.f32 0.0, %v3641
        %v3643 = vpop.f32.mrb[0].mxu0
        %v3644 = vadd.f32 0.0, %v3643
        %3645 = vmatprep.mubr.bf16.mxu0 0
        %3646 = vmatmul.mubr.bf16.gmra.mrb[0].mxu0 %v2933
        %v3647 = vpop.f32.mrb[0].mxu0
        %v3648 = vadd.f32 0.0, %v3647
        %v3649 = vpop.f32.mrb[0].mxu0
        %v3650 = vadd.f32 0.0, %v3649
        %v3651 = vpop.f32.mrb[0].mxu0
        %v3652 = vadd.f32 0.0, %v3651
        %v3653 = vpop.f32.mrb[0].mxu0
        %v3654 = vadd.f32 0.0, %v3653
        %3655 = vmatprep.mubr.bf16.mxu0 0
        %3656 = vmatmul.mubr.bf16.gmra.mrb[0].mxu0 %v2934
        %v3657 = vpop.f32.mrb[0].mxu0
        %v3658 = vadd.f32 0.0, %v3657
        %v3659 = vpop.f32.mrb[0].mxu0
        %v3660 = vadd.f32 0.0, %v3659
        %v3661 = vpop.f32.mrb[0].mxu0
        %v3662 = vadd.f32 0.0, %v3661
        %v3663 = vpop.f32.mrb[0].mxu0
        %v3664 = vadd.f32 0.0, %v3663
        %3665 = vmatprep.mubr.bf16.mxu0 0
        %3666 = vmatmul.mubr.bf16.gmra.mrb[0].mxu0 %v2935
        %v3667 = vpop.f32.mrb[0].mxu0
        %v3668 = vadd.f32 0.0, %v3667
        %v3669 = vpop.f32.mrb[0].mxu0
        %v3670 = vadd.f32 0.0, %v3669
        %v3671 = vpop.f32.mrb[0].mxu0
        %v3672 = vadd.f32 0.0, %v3671
        %v3673 = vpop.f32.mrb[0].mxu0
        %v3674 = vadd.f32 0.0, %v3673
        %3675 = vmatprep.mubr.bf16.mxu0 0
        %3676 = vmatmul.mubr.bf16.gmra.mrb[0].mxu0 %v2936
        %v3677 = vpop.f32.mrb[0].mxu0
        %v3678 = vadd.f32 0.0, %v3677
        %v3679 = vpop.f32.mrb[0].mxu0
        %v3680 = vadd.f32 0.0, %v3679
        %v3681 = vpop.f32.mrb[0].mxu0
        %v3682 = vadd.f32 0.0, %v3681
        %v3683 = vpop.f32.mrb[0].mxu0
        %v3684 = vadd.f32 0.0, %v3683
        %3685 = vmatprep.mubr.bf16.mxu0 0
        %3686 = vmatmul.mubr.bf16.gmra.mrb[0].mxu0 %v2937
        %v3687 = vpop.f32.mrb[0].mxu0
        %v3688 = vadd.f32 0.0, %v3687
        %v3689 = vpop.f32.mrb[0].mxu0
        %v3690 = vadd.f32 0.0, %v3689
        %v3691 = vpop.f32.mrb[0].mxu0
        %v3692 = vadd.f32 0.0, %v3691
        %v3693 = vpop.f32.mrb[0].mxu0
        %v3694 = vadd.f32 0.0, %v3693
        %3695 = vmatprep.mubr.bf16.mxu0 0
        %3696 = vmatmul.mubr.bf16.gmra.mrb[0].mxu0 %v2938
        %v3697 = vpop.f32.mrb[0].mxu0
        %v3698 = vadd.f32 0.0, %v3697
        %v3699 = vpop.f32.mrb[0].mxu0
        %v3700 = vadd.f32 0.0, %v3699
        %v3701 = vpop.f32.mrb[0].mxu0
        %v3702 = vadd.f32 0.0, %v3701
        %v3703 = vpop.f32.mrb[0].mxu0
        %v3704 = vadd.f32 0.0, %v3703
        %3705 = vmatprep.mubr.bf16.mxu0 0
        %3706 = vmatmul.mubr.bf16.gmra.mrb[0].mxu0 %v2939
        %v3707 = vpop.f32.mrb[0].mxu0
        %v3708 = vadd.f32 0.0, %v3707
        %v3709 = vpop.f32.mrb[0].mxu0
        %v3710 = vadd.f32 0.0, %v3709
        %v3711 = vpop.f32.mrb[0].mxu0
        %v3712 = vadd.f32 0.0, %v3711
        %v3713 = vpop.f32.mrb[0].mxu0
        %v3714 = vadd.f32 0.0, %v3713
        %3715 = vmatprep.mubr.bf16.mxu0 0
        %3716 = vmatmul.mubr.bf16.gmra.mrb[0].mxu0 %v2940
        %v3717 = vpop.f32.mrb[0].mxu0
        %v3718 = vadd.f32 0.0, %v3717
        %v3719 = vpop.f32.mrb[0].mxu0
        %v3720 = vadd.f32 0.0, %v3719
        %v3721 = vpop.f32.mrb[0].mxu0
        %v3722 = vadd.f32 0.0, %v3721
        %v3723 = vpop.f32.mrb[0].mxu0
        %v3724 = vadd.f32 0.0, %v3723
        %3725 = vmatprep.mubr.bf16.mxu0 0
        %3726 = vmatmul.mubr.bf16.gmra.mrb[0].mxu0 %v2941
        %v3727 = vpop.f32.mrb[0].mxu0
        %v3728 = vadd.f32 0.0, %v3727
        %v3729 = vpop.f32.mrb[0].mxu0
        %v3730 = vadd.f32 0.0, %v3729
        %v3731 = vpop.f32.mrb[0].mxu0
        %v3732 = vadd.f32 0.0, %v3731
        %v3733 = vpop.f32.mrb[0].mxu0
        %v3734 = vadd.f32 0.0, %v3733
        %3735 = vmatprep.mubr.bf16.mxu0 0
        %3736 = vmatmul.mubr.bf16.gmra.mrb[0].mxu0 %v2942
        %v3737 = vpop.f32.mrb[0].mxu0
        %v3738 = vadd.f32 0.0, %v3737
        %v3739 = vpop.f32.mrb[0].mxu0
        %v3740 = vadd.f32 0.0, %v3739
        %v3741 = vpop.f32.mrb[0].mxu0
        %v3742 = vadd.f32 0.0, %v3741
        %v3743 = vpop.f32.mrb[0].mxu0
        %v3744 = vadd.f32 0.0, %v3743
        %3745 = vmatprep.mubr.bf16.mxu0 0
        %3746 = vmatmul.mubr.bf16.gmra.mrb[0].mxu0 %v2943
        %v3747 = vpop.f32.mrb[0].mxu0
        %v3748 = vadd.f32 0.0, %v3747
        %v3749 = vpop.f32.mrb[0].mxu0
        %v3750 = vadd.f32 0.0, %v3749
        %v3751 = vpop.f32.mrb[0].mxu0
        %v3752 = vadd.f32 0.0, %v3751
        %v3753 = vpop.f32.mrb[0].mxu0
        %v3754 = vadd.f32 0.0, %v3753
        %3755 = vmatprep.mubr.bf16.mxu0 0
        %3756 = vmatmul.mubr.bf16.gmra.mrb[0].mxu0 %v2944
        %v3757 = vpop.f32.mrb[0].mxu0
        %v3758 = vadd.f32 0.0, %v3757
        %v3759 = vpop.f32.mrb[0].mxu0
        %v3760 = vadd.f32 0.0, %v3759
        %v3761 = vpop.f32.mrb[0].mxu0
        %v3762 = vadd.f32 0.0, %v3761
        %v3763 = vpop.f32.mrb[0].mxu0
        %v3764 = vadd.f32 0.0, %v3763
        %3765 = vmatprep.mubr.bf16.mxu0 0
        %3766 = vmatmul.mubr.bf16.gmra.mrb[0].mxu0 %v2945
        %v3767 = vpop.f32.mrb[0].mxu0
        %v3768 = vadd.f32 0.0, %v3767
        %v3769 = vpop.f32.mrb[0].mxu0
        %v3770 = vadd.f32 0.0, %v3769
        %v3771 = vpop.f32.mrb[0].mxu0
        %v3772 = vadd.f32 0.0, %v3771
        %v3773 = vpop.f32.mrb[0].mxu0
        %v3774 = vadd.f32 0.0, %v3773
        %3775 = vmatprep.mubr.bf16.mxu0 0
        %3776 = vmatmul.mubr.bf16.gmra.mrb[0].mxu0 %v2946
        %v3777 = vpop.f32.mrb[0].mxu0
        %v3778 = vadd.f32 0.0, %v3777
        %v3779 = vpop.f32.mrb[0].mxu0
        %v3780 = vadd.f32 0.0, %v3779
        %v3781 = vpop.f32.mrb[0].mxu0
        %v3782 = vadd.f32 0.0, %v3781
        %v3783 = vpop.f32.mrb[0].mxu0
        %v3784 = vadd.f32 0.0, %v3783
        %3785 = vmatprep.mubr.bf16.mxu0 0
        %3786 = vmatmul.mubr.bf16.gmra.mrb[0].mxu0 %v2947
        %v3787 = vpop.f32.mrb[0].mxu0
        %v3788 = vadd.f32 0.0, %v3787
        %v3789 = vpop.f32.mrb[0].mxu0
        %v3790 = vadd.f32 0.0, %v3789
        %v3791 = vpop.f32.mrb[0].mxu0
        %v3792 = vadd.f32 0.0, %v3791
        %v3793 = vpop.f32.mrb[0].mxu0
        %v3794 = vadd.f32 0.0, %v3793
        %3795 = vmatprep.mubr.bf16.mxu0 0
        %3796 = vmatmul.mubr.bf16.gmra.mrb[0].mxu0 %v2948
        %v3797 = vpop.f32.mrb[0].mxu0
        %v3798 = vadd.f32 0.0, %v3797
        %v3799 = vpop.f32.mrb[0].mxu0
        %v3800 = vadd.f32 0.0, %v3799
        %v3801 = vpop.f32.mrb[0].mxu0
        %v3802 = vadd.f32 0.0, %v3801
        %v3803 = vpop.f32.mrb[0].mxu0
        %v3804 = vadd.f32 0.0, %v3803
        %3805 = vmatprep.mubr.bf16.mxu0 0
        %3806 = vmatmul.mubr.bf16.gmra.mrb[0].mxu0 %v2949
        %v3807 = vpop.f32.mrb[0].mxu0
        %v3808 = vadd.f32 0.0, %v3807
        %v3809 = vpop.f32.mrb[0].mxu0
        %v3810 = vadd.f32 0.0, %v3809
        %v3811 = vpop.f32.mrb[0].mxu0
        %v3812 = vadd.f32 0.0, %v3811
        %v3813 = vpop.f32.mrb[0].mxu0
        %v3814 = vadd.f32 0.0, %v3813
        %3815 = vmatprep.mubr.bf16.mxu0 0
        %3816 = vmatmul.mubr.bf16.gmra.mrb[0].mxu0 %v2950
        %v3817 = vpop.f32.mrb[0].mxu0
        %v3818 = vadd.f32 0.0, %v3817
        %v3819 = vpop.f32.mrb[0].mxu0
        %v3820 = vadd.f32 0.0, %v3819
        %v3821 = vpop.f32.mrb[0].mxu0
        %v3822 = vadd.f32 0.0, %v3821
        %v3823 = vpop.f32.mrb[0].mxu0
        %v3824 = vadd.f32 0.0, %v3823
        %3825 = vmatprep.mubr.bf16.mxu0 0
        %3826 = vmatmul.mubr.bf16.gmra.mrb[0].mxu0 %v2951
        %v3827 = vpop.f32.mrb[0].mxu0
        %v3828 = vadd.f32 0.0, %v3827
        %v3829 = vpop.f32.mrb[0].mxu0
        %v3830 = vadd.f32 0.0, %v3829
        %v3831 = vpop.f32.mrb[0].mxu0
        %v3832 = vadd.f32 0.0, %v3831
        %v3833 = vpop.f32.mrb[0].mxu0
        %v3834 = vadd.f32 0.0, %v3833
        %3835 = vmatprep.mubr.bf16.mxu0 0
        %3836 = vmatmul.mubr.bf16.gmra.mrb[0].mxu0 %v2952
        %v3837 = vpop.f32.mrb[0].mxu0
        %v3838 = vadd.f32 0.0, %v3837
        %v3839 = vpop.f32.mrb[0].mxu0
        %v3840 = vadd.f32 0.0, %v3839
        %v3841 = vpop.f32.mrb[0].mxu0
        %v3842 = vadd.f32 0.0, %v3841
        %v3843 = vpop.f32.mrb[0].mxu0
        %v3844 = vadd.f32 0.0, %v3843
        %3845 = vmatprep.mubr.bf16.mxu0 0
        %3846 = vmatmul.mubr.bf16.gmra.mrb[0].mxu0 %v2953
        %v3847 = vpop.f32.mrb[0].mxu0
        %v3848 = vadd.f32 0.0, %v3847
        %v3849 = vpop.f32.mrb[0].mxu0
        %v3850 = vadd.f32 0.0, %v3849
        %v3851 = vpop.f32.mrb[0].mxu0
        %v3852 = vadd.f32 0.0, %v3851
        %v3853 = vpop.f32.mrb[0].mxu0
        %v3854 = vadd.f32 0.0, %v3853
        %3855 = vmatprep.mubr.bf16.mxu0 0
        %3856 = vmatmul.mubr.bf16.gmra.mrb[0].mxu0 %v2954
        %v3857 = vpop.f32.mrb[0].mxu0
        %v3858 = vadd.f32 0.0, %v3857
        %v3859 = vpop.f32.mrb[0].mxu0
        %v3860 = vadd.f32 0.0, %v3859
        %v3861 = vpop.f32.mrb[0].mxu0
        %v3862 = vadd.f32 0.0, %v3861
        %v3863 = vpop.f32.mrb[0].mxu0
        %v3864 = vadd.f32 0.0, %v3863
        %3865 = vmatprep.mubr.bf16.mxu0 0
        %3866 = vmatmul.mubr.bf16.gmra.mrb[0].mxu0 %v2955
        %v3867 = vpop.f32.mrb[0].mxu0
        %v3868 = vadd.f32 0.0, %v3867
        %v3869 = vpop.f32.mrb[0].mxu0
        %v3870 = vadd.f32 0.0, %v3869
        %v3871 = vpop.f32.mrb[0].mxu0
        %v3872 = vadd.f32 0.0, %v3871
        %v3873 = vpop.f32.mrb[0].mxu0
        %v3874 = vadd.f32 0.0, %v3873
        %3875 = vmatprep.mubr.bf16.mxu0 0
        %3876 = vmatmul.mubr.bf16.gmra.mrb[0].mxu0 %v2956
        %v3877 = vpop.f32.mrb[0].mxu0
        %v3878 = vadd.f32 0.0, %v3877
        %v3879 = vpop.f32.mrb[0].mxu0
        %v3880 = vadd.f32 0.0, %v3879
        %v3881 = vpop.f32.mrb[0].mxu0
        %v3882 = vadd.f32 0.0, %v3881
        %v3883 = vpop.f32.mrb[0].mxu0
        %v3884 = vadd.f32 0.0, %v3883
        %3885 = vmatprep.mubr.bf16.mxu0 0
        %3886 = vmatmul.mubr.bf16.gmra.mrb[0].mxu0 %v2957
        %v3887 = vpop.f32.mrb[0].mxu0
        %v3888 = vadd.f32 0.0, %v3887
        %v3889 = vpop.f32.mrb[0].mxu0
        %v3890 = vadd.f32 0.0, %v3889
        %v3891 = vpop.f32.mrb[0].mxu0
        %v3892 = vadd.f32 0.0, %v3891
        %v3893 = vpop.f32.mrb[0].mxu0
        %v3894 = vadd.f32 0.0, %v3893
        %3895 = vmatprep.mubr.bf16.mxu0 0
        %3896 = vmatmul.mubr.bf16.gmra.mrb[0].mxu0 %v2958
        %v3897 = vpop.f32.mrb[0].mxu0
        %v3898 = vadd.f32 0.0, %v3897
        %v3899 = vpop.f32.mrb[0].mxu0
        %v3900 = vadd.f32 0.0, %v3899
        %v3901 = vpop.f32.mrb[0].mxu0
        %v3902 = vadd.f32 0.0, %v3901
        %v3903 = vpop.f32.mrb[0].mxu0
        %v3904 = vadd.f32 0.0, %v3903
        %3905 = vmatprep.mubr.bf16.mxu0 0
        %3906 = vmatmul.mubr.bf16.gmra.mrb[0].mxu0 %v2959
        %v3907 = vpop.f32.mrb[0].mxu0
        %v3908 = vadd.f32 0.0, %v3907
        %v3909 = vpop.f32.mrb[0].mxu0
        %v3910 = vadd.f32 0.0, %v3909
        %v3911 = vpop.f32.mrb[0].mxu0
        %v3912 = vadd.f32 0.0, %v3911
        %v3913 = vpop.f32.mrb[0].mxu0
        %v3914 = vadd.f32 0.0, %v3913
        %3915 = vmatprep.mubr.bf16.mxu0 0
        %3916 = vmatmul.mubr.bf16.gmra.mrb[0].mxu0 %v2960
        %v3917 = vpop.f32.mrb[0].mxu0
        %v3918 = vadd.f32 0.0, %v3917
        %v3919 = vpop.f32.mrb[0].mxu0
        %v3920 = vadd.f32 0.0, %v3919
        %v3921 = vpop.f32.mrb[0].mxu0
        %v3922 = vadd.f32 0.0, %v3921
        %v3923 = vpop.f32.mrb[0].mxu0
        %v3924 = vadd.f32 0.0, %v3923
        %3925 = vmatprep.mubr.bf16.mxu0 0
        %3926 = vmatmul.mubr.bf16.gmra.mrb[0].mxu0 %v2961
        %v3927 = vpop.f32.mrb[0].mxu0
        %v3928 = vadd.f32 0.0, %v3927
        %v3929 = vpop.f32.mrb[0].mxu0
        %v3930 = vadd.f32 0.0, %v3929
        %v3931 = vpop.f32.mrb[0].mxu0
        %v3932 = vadd.f32 0.0, %v3931
        %v3933 = vpop.f32.mrb[0].mxu0
        %v3934 = vadd.f32 0.0, %v3933
        %3935 = vmatprep.mubr.bf16.mxu0 0
        %3936 = vmatmul.mubr.bf16.gmra.mrb[0].mxu0 %v2962
        %v3937 = vpop.f32.mrb[0].mxu0
        %v3938 = vadd.f32 0.0, %v3937
        %v3939 = vpop.f32.mrb[0].mxu0
        %v3940 = vadd.f32 0.0, %v3939
        %v3941 = vpop.f32.mrb[0].mxu0
        %v3942 = vadd.f32 0.0, %v3941
        %v3943 = vpop.f32.mrb[0].mxu0
        %v3944 = vadd.f32 0.0, %v3943
        %3945 = vmatprep.mubr.bf16.mxu0 0
        %3946 = vmatmul.mubr.bf16.gmra.mrb[0].mxu0 %v2963
        %v3947 = vpop.f32.mrb[0].mxu0
        %v3948 = vadd.f32 0.0, %v3947
        %v3949 = vpop.f32.mrb[0].mxu0
        %v3950 = vadd.f32 0.0, %v3949
        %v3951 = vpop.f32.mrb[0].mxu0
        %v3952 = vadd.f32 0.0, %v3951
        %v3953 = vpop.f32.mrb[0].mxu0
        %v3954 = vadd.f32 0.0, %v3953
        %3955 = vmatprep.mubr.bf16.mxu0 0
        %3956 = vmatmul.mubr.bf16.gmra.mrb[0].mxu0 %v2964
        %v3957 = vpop.f32.mrb[0].mxu0
        %v3958 = vadd.f32 0.0, %v3957
        %v3959 = vpop.f32.mrb[0].mxu0
        %v3960 = vadd.f32 0.0, %v3959
        %v3961 = vpop.f32.mrb[0].mxu0
        %v3962 = vadd.f32 0.0, %v3961
        %v3963 = vpop.f32.mrb[0].mxu0
        %v3964 = vadd.f32 0.0, %v3963
        %3965 = vmatprep.mubr.bf16.mxu0 0
        %3966 = vmatmul.mubr.bf16.gmra.mrb[0].mxu0 %v2965
        %v3967 = vpop.f32.mrb[0].mxu0
        %v3968 = vadd.f32 0.0, %v3967
        %v3969 = vpop.f32.mrb[0].mxu0
        %v3970 = vadd.f32 0.0, %v3969
        %v3971 = vpop.f32.mrb[0].mxu0
        %v3972 = vadd.f32 0.0, %v3971
        %v3973 = vpop.f32.mrb[0].mxu0
        %v3974 = vadd.f32 0.0, %v3973
        %3975 = vmatprep.mubr.bf16.mxu0 0
        %3976 = vmatmul.mubr.bf16.gmra.mrb[0].mxu0 %v2966
        %v3977 = vpop.f32.mrb[0].mxu0
        %v3978 = vadd.f32 0.0, %v3977
        %v3979 = vpop.f32.mrb[0].mxu0
        %v3980 = vadd.f32 0.0, %v3979
        %v3981 = vpop.f32.mrb[0].mxu0
        %v3982 = vadd.f32 0.0, %v3981
        %v3983 = vpop.f32.mrb[0].mxu0
        %v3984 = vadd.f32 0.0, %v3983
        %3985 = vmatprep.mubr.bf16.mxu0 0
        %3986 = vmatmul.mubr.bf16.gmra.mrb[0].mxu0 %v2967
        %v3987 = vpop.f32.mrb[0].mxu0
        %v3988 = vadd.f32 0.0, %v3987
        %v3989 = vpop.f32.mrb[0].mxu0
        %v3990 = vadd.f32 0.0, %v3989
        %v3991 = vpop.f32.mrb[0].mxu0
        %v3992 = vadd.f32 0.0, %v3991
        %v3993 = vpop.f32.mrb[0].mxu0
        %v3994 = vadd.f32 0.0, %v3993
        %3995 = vmatprep.mubr.bf16.mxu0 0
        %3996 = vmatmul.mubr.bf16.gmra.mrb[0].mxu0 %v2968
        %v3997 = vpop.f32.mrb[0].mxu0
        %v3998 = vadd.f32 0.0, %v3997
        %v3999 = vpop.f32.mrb[0].mxu0
        %v4000 = vadd.f32 0.0, %v3999
        %v4001 = vpop.f32.mrb[0].mxu0
        %v4002 = vadd.f32 0.0, %v4001
        %v4003 = vpop.f32.mrb[0].mxu0
        %v4004 = vadd.f32 0.0, %v4003
        %4005 = vmatprep.mubr.bf16.mxu0 0
        %4006 = vmatmul.mubr.bf16.gmra.mrb[0].mxu0 %v2969
        %v4007 = vpop.f32.mrb[0].mxu0
        %v4008 = vadd.f32 0.0, %v4007
        %v4009 = vpop.f32.mrb[0].mxu0
        %v4010 = vadd.f32 0.0, %v4009
        %v4011 = vpop.f32.mrb[0].mxu0
        %v4012 = vadd.f32 0.0, %v4011
        %v4013 = vpop.f32.mrb[0].mxu0
        %v4014 = vadd.f32 0.0, %v4013
        %4015 = vmatprep.mubr.bf16.mxu0 0
        %4016 = vmatmul.mubr.bf16.gmra.mrb[0].mxu0 %v2970
        %v4017 = vpop.f32.mrb[0].mxu0
        %v4018 = vadd.f32 0.0, %v4017
        %v4019 = vpop.f32.mrb[0].mxu0
        %v4020 = vadd.f32 0.0, %v4019
        %v4021 = vpop.f32.mrb[0].mxu0
        %v4022 = vadd.f32 0.0, %v4021
        %v4023 = vpop.f32.mrb[0].mxu0
        %v4024 = vadd.f32 0.0, %v4023
        %4025 = vmatprep.mubr.bf16.mxu0 0
        %4026 = vmatmul.mubr.bf16.gmra.mrb[0].mxu0 %v2971
        %v4027 = vpop.f32.mrb[0].mxu0
        %v4028 = vadd.f32 0.0, %v4027
        %v4029 = vpop.f32.mrb[0].mxu0
        %v4030 = vadd.f32 0.0, %v4029
        %v4031 = vpop.f32.mrb[0].mxu0
        %v4032 = vadd.f32 0.0, %v4031
        %v4033 = vpop.f32.mrb[0].mxu0
        %v4034 = vadd.f32 0.0, %v4033
        %4035 = vmatprep.mubr.bf16.mxu0 0
        %4036 = vmatmul.mubr.bf16.gmra.mrb[0].mxu0 %v2972
        %v4037 = vpop.f32.mrb[0].mxu0
        %v4038 = vadd.f32 0.0, %v4037
        %v4039 = vpop.f32.mrb[0].mxu0
        %v4040 = vadd.f32 0.0, %v4039
        %v4041 = vpop.f32.mrb[0].mxu0
        %v4042 = vadd.f32 0.0, %v4041
        %v4043 = vpop.f32.mrb[0].mxu0
        %v4044 = vadd.f32 0.0, %v4043
        %4045 = vmatprep.mubr.bf16.mxu0 0
        %4046 = vmatmul.mubr.bf16.gmra.mrb[0].mxu0 %v2973
        %v4047 = vpop.f32.mrb[0].mxu0
        %v4048 = vadd.f32 0.0, %v4047
        %v4049 = vpop.f32.mrb[0].mxu0
        %v4050 = vadd.f32 0.0, %v4049
        %v4051 = vpop.f32.mrb[0].mxu0
        %v4052 = vadd.f32 0.0, %v4051
        %v4053 = vpop.f32.mrb[0].mxu0
        %v4054 = vadd.f32 0.0, %v4053
        %4055 = vmatprep.mubr.bf16.mxu0 0
        %4056 = vmatmul.mubr.bf16.gmra.mrb[0].mxu0 %v2974
        %v4057 = vpop.f32.mrb[0].mxu0
        %v4058 = vadd.f32 0.0, %v4057
        %v4059 = vpop.f32.mrb[0].mxu0
        %v4060 = vadd.f32 0.0, %v4059
        %v4061 = vpop.f32.mrb[0].mxu0
        %v4062 = vadd.f32 0.0, %v4061
        %v4063 = vpop.f32.mrb[0].mxu0
        %v4064 = vadd.f32 0.0, %v4063
        %4065 = vmatprep.mubr.bf16.mxu0 0
        %4066 = vmatmul.mubr.bf16.gmra.mrb[0].mxu0 %v2975
        %v4067 = vpop.f32.mrb[0].mxu0
        %v4068 = vadd.f32 0.0, %v4067
        %v4069 = vpop.f32.mrb[0].mxu0
        %v4070 = vadd.f32 0.0, %v4069
        %v4071 = vpop.f32.mrb[0].mxu0
        %v4072 = vadd.f32 0.0, %v4071
        %v4073 = vpop.f32.mrb[0].mxu0
        %v4074 = vadd.f32 0.0, %v4073
        %4075 = vmatprep.mubr.bf16.mxu0 0
        %4076 = vmatmul.mubr.bf16.gmra.mrb[0].mxu0 %v2976
        %v4077 = vpop.f32.mrb[0].mxu0
        %v4078 = vadd.f32 0.0, %v4077
        %v4079 = vpop.f32.mrb[0].mxu0
        %v4080 = vadd.f32 0.0, %v4079
        %v4081 = vpop.f32.mrb[0].mxu0
        %v4082 = vadd.f32 0.0, %v4081
        %v4083 = vpop.f32.mrb[0].mxu0
        %v4084 = vadd.f32 0.0, %v4083
        %4085 = vmatprep.mubr.bf16.mxu0 0
        %4086 = vmatmul.mubr.bf16.gmra.mrb[0].mxu0 %v2977
        %v4087 = vpop.f32.mrb[0].mxu0
        %v4088 = vadd.f32 0.0, %v4087
        %v4089 = vpop.f32.mrb[0].mxu0
        %v4090 = vadd.f32 0.0, %v4089
        %v4091 = vpop.f32.mrb[0].mxu0
        %v4092 = vadd.f32 0.0, %v4091
        %v4093 = vpop.f32.mrb[0].mxu0
        %v4094 = vadd.f32 0.0, %v4093
        %4095 = vmatprep.mubr.bf16.mxu0 0
        %4096 = vmatmul.mubr.bf16.gmra.mrb[0].mxu0 %v2978
        %v4097 = vpop.f32.mrb[0].mxu0
        %v4098 = vadd.f32 0.0, %v4097
        %v4099 = vpop.f32.mrb[0].mxu0
        %v4100 = vadd.f32 0.0, %v4099
        %v4101 = vpop.f32.mrb[0].mxu0
        %v4102 = vadd.f32 0.0, %v4101
        %v4103 = vpop.f32.mrb[0].mxu0
        %v4104 = vadd.f32 0.0, %v4103
        %4105 = vmatprep.mubr.bf16.mxu0 0
        %4106 = vmatmul.mubr.bf16.gmra.mrb[0].mxu0 %v2979
        %v4107 = vpop.f32.mrb[0].mxu0
        %v4108 = vadd.f32 0.0, %v4107
        %v4109 = vpop.f32.mrb[0].mxu0
        %v4110 = vadd.f32 0.0, %v4109
        %v4111 = vpop.f32.mrb[0].mxu0
        %v4112 = vadd.f32 0.0, %v4111
        %v4113 = vpop.f32.mrb[0].mxu0
        %v4114 = vadd.f32 0.0, %v4113
        %4115 = vmatprep.mubr.bf16.mxu0 0
        %4116 = vmatmul.mubr.bf16.gmra.mrb[0].mxu0 %v2980
        %v4117 = vpop.f32.mrb[0].mxu0
        %v4118 = vadd.f32 0.0, %v4117
        %v4119 = vpop.f32.mrb[0].mxu0
        %v4120 = vadd.f32 0.0, %v4119
        %v4121 = vpop.f32.mrb[0].mxu0
        %v4122 = vadd.f32 0.0, %v4121
        %v4123 = vpop.f32.mrb[0].mxu0
        %v4124 = vadd.f32 0.0, %v4123
        %4125 = vmatprep.mubr.bf16.mxu0 0
        %4126 = vmatmul.mubr.bf16.gmra.mrb[0].mxu0 %v2981
        %v4127 = vpop.f32.mrb[0].mxu0
        %v4128 = vadd.f32 0.0, %v4127
        %v4129 = vpop.f32.mrb[0].mxu0
        %v4130 = vadd.f32 0.0, %v4129
        %v4131 = vpop.f32.mrb[0].mxu0
        %v4132 = vadd.f32 0.0, %v4131
        %v4133 = vpop.f32.mrb[0].mxu0
        %v4134 = vadd.f32 0.0, %v4133
        %4135 = vmatprep.mubr.bf16.mxu0 0
        %4136 = vmatmul.mubr.bf16.gmra.mrb[0].mxu0 %v2982
        %v4137 = vpop.f32.mrb[0].mxu0
        %v4138 = vadd.f32 0.0, %v4137
        %v4139 = vpop.f32.mrb[0].mxu0
        %v4140 = vadd.f32 0.0, %v4139
        %v4141 = vpop.f32.mrb[0].mxu0
        %v4142 = vadd.f32 0.0, %v4141
        %v4143 = vpop.f32.mrb[0].mxu0
        %v4144 = vadd.f32 0.0, %v4143
        %4145 = vmatprep.mubr.bf16.mxu0 0
        %4146 = vmatmul.mubr.bf16.gmra.mrb[0].mxu0 %v2983
        %v4147 = vpop.f32.mrb[0].mxu0
        %v4148 = vadd.f32 0.0, %v4147
        %v4149 = vpop.f32.mrb[0].mxu0
        %v4150 = vadd.f32 0.0, %v4149
        %v4151 = vpop.f32.mrb[0].mxu0
        %v4152 = vadd.f32 0.0, %v4151
        %v4153 = vpop.f32.mrb[0].mxu0
        %v4154 = vadd.f32 0.0, %v4153
        %4155 = vmatprep.mubr.bf16.mxu0 0
        %4156 = vmatmul.mubr.bf16.gmra.mrb[0].mxu0 %v2984
        %v4157 = vpop.f32.mrb[0].mxu0
        %v4158 = vadd.f32 0.0, %v4157
        %v4159 = vpop.f32.mrb[0].mxu0
        %v4160 = vadd.f32 0.0, %v4159
        %v4161 = vpop.f32.mrb[0].mxu0
        %v4162 = vadd.f32 0.0, %v4161
        %v4163 = vpop.f32.mrb[0].mxu0
        %v4164 = vadd.f32 0.0, %v4163
        %4165 = vmatprep.mubr.bf16.mxu0 0
        %4166 = vmatmul.mubr.bf16.gmra.mrb[0].mxu0 %v2985
        %v4167 = vpop.f32.mrb[0].mxu0
        %v4168 = vadd.f32 0.0, %v4167
        %v4169 = vpop.f32.mrb[0].mxu0
        %v4170 = vadd.f32 0.0, %v4169
        %v4171 = vpop.f32.mrb[0].mxu0
        %v4172 = vadd.f32 0.0, %v4171
        %v4173 = vpop.f32.mrb[0].mxu0
        %v4174 = vadd.f32 0.0, %v4173
        %4175 = vmatprep.mubr.bf16.mxu0 0
        %4176 = vmatmul.mubr.bf16.gmra.mrb[0].mxu0 %v2986
        %v4177 = vpop.f32.mrb[0].mxu0
        %v4178 = vadd.f32 0.0, %v4177
        %v4179 = vpop.f32.mrb[0].mxu0
        %v4180 = vadd.f32 0.0, %v4179
        %v4181 = vpop.f32.mrb[0].mxu0
        %v4182 = vadd.f32 0.0, %v4181
        %v4183 = vpop.f32.mrb[0].mxu0
        %v4184 = vadd.f32 0.0, %v4183
        %4185 = vmatprep.mubr.bf16.mxu0 0
        %4186 = vmatmul.mubr.bf16.gmra.mrb[0].mxu0 %v2987
        %v4187 = vpop.f32.mrb[0].mxu0
        %v4188 = vadd.f32 0.0, %v4187
        %v4189 = vpop.f32.mrb[0].mxu0
        %v4190 = vadd.f32 0.0, %v4189
        %v4191 = vpop.f32.mrb[0].mxu0
        %v4192 = vadd.f32 0.0, %v4191
        %v4193 = vpop.f32.mrb[0].mxu0
        %v4194 = vadd.f32 0.0, %v4193
        %4195 = vmatprep.mubr.bf16.mxu0 0
        %4196 = vmatmul.mubr.bf16.gmra.mrb[0].mxu0 %v2988
        %v4197 = vpop.f32.mrb[0].mxu0
        %v4198 = vadd.f32 0.0, %v4197
        %v4199 = vpop.f32.mrb[0].mxu0
        %v4200 = vadd.f32 0.0, %v4199
        %v4201 = vpop.f32.mrb[0].mxu0
        %v4202 = vadd.f32 0.0, %v4201
        %v4203 = vpop.f32.mrb[0].mxu0
        %v4204 = vadd.f32 0.0, %v4203
        %4205 = vdwg.mxu0
        %4206 = vmatprep.subr.bf16.mxu0 %v3248
        %4207 = vmatpush1.bf16.msra.mxu0 %v3247
        %4208 = vmatprep.subr.bf16.mxu0 %v3256
        %4209 = vmatpush1.bf16.msra.mxu0 %v3255
        %4210 = vmatprep.subr.bf16.mxu0 %v3264
        %4211 = vmatpush1.bf16.msra.mxu0 %v3263
        %4212 = vmatprep.subr.bf16.mxu0 %v3272
        %4213 = vmatpush1.bf16.msra.mxu0 %v3271
        %4214 = vmatprep.subr.bf16.mxu0 %v3280
        %4215 = vmatpush1.bf16.msra.mxu0 %v3279
        %4216 = vmatprep.subr.bf16.mxu0 %v3288
        %4217 = vmatpush1.bf16.msra.mxu0 %v3287
        %4218 = vmatprep.subr.bf16.mxu0 %v3296
        %4219 = vmatpush1.bf16.msra.mxu0 %v3295
        %4220 = vmatprep.subr.bf16.mxu0 %v3304
        %4221 = vmatpush1.bf16.msra.mxu0 %v3303
        %4222 = vmatprep.subr.bf16.mxu0 0
        %4223 = vmatpush1.bf16.msra.mxu0 0
        %4224 = vmatprep.subr.bf16.mxu0 0
        %4225 = vmatpush1.bf16.msra.mxu0 0
        %4226 = vmatprep.subr.bf16.mxu0 0
        %4227 = vmatpush1.bf16.msra.mxu0 0
        %4228 = vmatprep.subr.bf16.mxu0 0
        %4229 = vmatpush1.bf16.msra.mxu0 0
        %4230 = vmatprep.subr.bf16.mxu0 0
        %4231 = vmatpush1.bf16.msra.mxu0 0
        %4232 = vmatprep.subr.bf16.mxu0 0
        %4233 = vmatpush1.bf16.msra.mxu0 0
        %4234 = vmatprep.subr.bf16.mxu0 0
        %4235 = vmatpush1.bf16.msra.mxu0 0
        %4236 = vmatprep.subr.bf16.mxu0 0
        %4237 = vmatpush1.bf16.msra.mxu0 0
        %4238 = vmatprep.mubr.bf16.mxu0 0
        %4239 = vmatmul.mubr.bf16.gmra.mrb[0].mxu0 %v2909
        %v4240 = vpop.f32.mrb[0].mxu0
        %v4241 = vadd.f32 0.0, %v4240
        %v4242 = vpop.f32.mrb[0].mxu0
        %v4243 = vadd.f32 0.0, %v4242
        %v4244 = vpop.f32.mrb[0].mxu0
        %v4245 = vadd.f32 0.0, %v4244
        %v4246 = vpop.f32.mrb[0].mxu0
        %v4247 = vadd.f32 0.0, %v4246
        %4248 = vmatprep.mubr.bf16.mxu0 0
        %4249 = vmatmul.mubr.bf16.gmra.mrb[0].mxu0 %v2910
        %v4250 = vpop.f32.mrb[0].mxu0
        %v4251 = vadd.f32 0.0, %v4250
        %v4252 = vpop.f32.mrb[0].mxu0
        %v4253 = vadd.f32 0.0, %v4252
        %v4254 = vpop.f32.mrb[0].mxu0
        %v4255 = vadd.f32 0.0, %v4254
        %v4256 = vpop.f32.mrb[0].mxu0
        %v4257 = vadd.f32 0.0, %v4256
        %4258 = vmatprep.mubr.bf16.mxu0 0
        %4259 = vmatmul.mubr.bf16.gmra.mrb[0].mxu0 %v2911
        %v4260 = vpop.f32.mrb[0].mxu0
        %v4261 = vadd.f32 0.0, %v4260
        %v4262 = vpop.f32.mrb[0].mxu0
        %v4263 = vadd.f32 0.0, %v4262
        %v4264 = vpop.f32.mrb[0].mxu0
        %v4265 = vadd.f32 0.0, %v4264
        %v4266 = vpop.f32.mrb[0].mxu0
        %v4267 = vadd.f32 0.0, %v4266
        %4268 = vmatprep.mubr.bf16.mxu0 0
        %4269 = vmatmul.mubr.bf16.gmra.mrb[0].mxu0 %v2912
        %v4270 = vpop.f32.mrb[0].mxu0
        %v4271 = vadd.f32 0.0, %v4270
        %v4272 = vpop.f32.mrb[0].mxu0
        %v4273 = vadd.f32 0.0, %v4272
        %v4274 = vpop.f32.mrb[0].mxu0
        %v4275 = vadd.f32 0.0, %v4274
        %v4276 = vpop.f32.mrb[0].mxu0
        %v4277 = vadd.f32 0.0, %v4276
        %4278 = vmatprep.mubr.bf16.mxu0 0
        %4279 = vmatmul.mubr.bf16.gmra.mrb[0].mxu0 %v2913
        %v4280 = vpop.f32.mrb[0].mxu0
        %v4281 = vadd.f32 0.0, %v4280
        %v4282 = vpop.f32.mrb[0].mxu0
        %v4283 = vadd.f32 0.0, %v4282
        %v4284 = vpop.f32.mrb[0].mxu0
        %v4285 = vadd.f32 0.0, %v4284
        %v4286 = vpop.f32.mrb[0].mxu0
        %v4287 = vadd.f32 0.0, %v4286
        %4288 = vmatprep.mubr.bf16.mxu0 0
        %4289 = vmatmul.mubr.bf16.gmra.mrb[0].mxu0 %v2914
        %v4290 = vpop.f32.mrb[0].mxu0
        %v4291 = vadd.f32 0.0, %v4290
        %v4292 = vpop.f32.mrb[0].mxu0
        %v4293 = vadd.f32 0.0, %v4292
        %v4294 = vpop.f32.mrb[0].mxu0
        %v4295 = vadd.f32 0.0, %v4294
        %v4296 = vpop.f32.mrb[0].mxu0
        %v4297 = vadd.f32 0.0, %v4296
        %4298 = vmatprep.mubr.bf16.mxu0 0
        %4299 = vmatmul.mubr.bf16.gmra.mrb[0].mxu0 %v2915
        %v4300 = vpop.f32.mrb[0].mxu0
        %v4301 = vadd.f32 0.0, %v4300
        %v4302 = vpop.f32.mrb[0].mxu0
        %v4303 = vadd.f32 0.0, %v4302
        %v4304 = vpop.f32.mrb[0].mxu0
        %v4305 = vadd.f32 0.0, %v4304
        %v4306 = vpop.f32.mrb[0].mxu0
        %v4307 = vadd.f32 0.0, %v4306
        %4308 = vmatprep.mubr.bf16.mxu0 0
        %4309 = vmatmul.mubr.bf16.gmra.mrb[0].mxu0 %v2916
        %v4310 = vpop.f32.mrb[0].mxu0
        %v4311 = vadd.f32 0.0, %v4310
        %v4312 = vpop.f32.mrb[0].mxu0
        %v4313 = vadd.f32 0.0, %v4312
        %v4314 = vpop.f32.mrb[0].mxu0
        %v4315 = vadd.f32 0.0, %v4314
        %v4316 = vpop.f32.mrb[0].mxu0
        %v4317 = vadd.f32 0.0, %v4316
        %4318 = vmatprep.mubr.bf16.mxu0 0
        %4319 = vmatmul.mubr.bf16.gmra.mrb[0].mxu0 %v2917
        %v4320 = vpop.f32.mrb[0].mxu0
        %v4321 = vadd.f32 0.0, %v4320
        %v4322 = vpop.f32.mrb[0].mxu0
        %v4323 = vadd.f32 0.0, %v4322
        %v4324 = vpop.f32.mrb[0].mxu0
        %v4325 = vadd.f32 0.0, %v4324
        %v4326 = vpop.f32.mrb[0].mxu0
        %v4327 = vadd.f32 0.0, %v4326
        %4328 = vmatprep.mubr.bf16.mxu0 0
        %4329 = vmatmul.mubr.bf16.gmra.mrb[0].mxu0 %v2918
        %v4330 = vpop.f32.mrb[0].mxu0
        %v4331 = vadd.f32 0.0, %v4330
        %v4332 = vpop.f32.mrb[0].mxu0
        %v4333 = vadd.f32 0.0, %v4332
        %v4334 = vpop.f32.mrb[0].mxu0
        %v4335 = vadd.f32 0.0, %v4334
        %v4336 = vpop.f32.mrb[0].mxu0
        %v4337 = vadd.f32 0.0, %v4336
        %4338 = vmatprep.mubr.bf16.mxu0 0
        %4339 = vmatmul.mubr.bf16.gmra.mrb[0].mxu0 %v2919
        %v4340 = vpop.f32.mrb[0].mxu0
        %v4341 = vadd.f32 0.0, %v4340
        %v4342 = vpop.f32.mrb[0].mxu0
        %v4343 = vadd.f32 0.0, %v4342
        %v4344 = vpop.f32.mrb[0].mxu0
        %v4345 = vadd.f32 0.0, %v4344
        %v4346 = vpop.f32.mrb[0].mxu0
        %v4347 = vadd.f32 0.0, %v4346
        %4348 = vmatprep.mubr.bf16.mxu0 0
        %4349 = vmatmul.mubr.bf16.gmra.mrb[0].mxu0 %v2920
        %v4350 = vpop.f32.mrb[0].mxu0
        %v4351 = vadd.f32 0.0, %v4350
        %v4352 = vpop.f32.mrb[0].mxu0
        %v4353 = vadd.f32 0.0, %v4352
        %v4354 = vpop.f32.mrb[0].mxu0
        %v4355 = vadd.f32 0.0, %v4354
        %v4356 = vpop.f32.mrb[0].mxu0
        %v4357 = vadd.f32 0.0, %v4356
        %4358 = vmatprep.mubr.bf16.mxu0 0
        %4359 = vmatmul.mubr.bf16.gmra.mrb[0].mxu0 %v2921
        %v4360 = vpop.f32.mrb[0].mxu0
        %v4361 = vadd.f32 0.0, %v4360
        %v4362 = vpop.f32.mrb[0].mxu0
        %v4363 = vadd.f32 0.0, %v4362
        %v4364 = vpop.f32.mrb[0].mxu0
        %v4365 = vadd.f32 0.0, %v4364
        %v4366 = vpop.f32.mrb[0].mxu0
        %v4367 = vadd.f32 0.0, %v4366
        %4368 = vmatprep.mubr.bf16.mxu0 0
        %4369 = vmatmul.mubr.bf16.gmra.mrb[0].mxu0 %v2922
        %v4370 = vpop.f32.mrb[0].mxu0
        %v4371 = vadd.f32 0.0, %v4370
        %v4372 = vpop.f32.mrb[0].mxu0
        %v4373 = vadd.f32 0.0, %v4372
        %v4374 = vpop.f32.mrb[0].mxu0
        %v4375 = vadd.f32 0.0, %v4374
        %v4376 = vpop.f32.mrb[0].mxu0
        %v4377 = vadd.f32 0.0, %v4376
        %4378 = vmatprep.mubr.bf16.mxu0 0
        %4379 = vmatmul.mubr.bf16.gmra.mrb[0].mxu0 %v2923
        %v4380 = vpop.f32.mrb[0].mxu0
        %v4381 = vadd.f32 0.0, %v4380
        %v4382 = vpop.f32.mrb[0].mxu0
        %v4383 = vadd.f32 0.0, %v4382
        %v4384 = vpop.f32.mrb[0].mxu0
        %v4385 = vadd.f32 0.0, %v4384
        %v4386 = vpop.f32.mrb[0].mxu0
        %v4387 = vadd.f32 0.0, %v4386
        %4388 = vmatprep.mubr.bf16.mxu0 0
        %4389 = vmatmul.mubr.bf16.gmra.mrb[0].mxu0 %v2924
        %v4390 = vpop.f32.mrb[0].mxu0
        %v4391 = vadd.f32 0.0, %v4390
        %v4392 = vpop.f32.mrb[0].mxu0
        %v4393 = vadd.f32 0.0, %v4392
        %v4394 = vpop.f32.mrb[0].mxu0
        %v4395 = vadd.f32 0.0, %v4394
        %v4396 = vpop.f32.mrb[0].mxu0
        %v4397 = vadd.f32 0.0, %v4396
        %4398 = vmatprep.mubr.bf16.mxu0 0
        %4399 = vmatmul.mubr.bf16.gmra.mrb[0].mxu0 %v2925
        %v4400 = vpop.f32.mrb[0].mxu0
        %v4401 = vadd.f32 0.0, %v4400
        %v4402 = vpop.f32.mrb[0].mxu0
        %v4403 = vadd.f32 0.0, %v4402
        %v4404 = vpop.f32.mrb[0].mxu0
        %v4405 = vadd.f32 0.0, %v4404
        %v4406 = vpop.f32.mrb[0].mxu0
        %v4407 = vadd.f32 0.0, %v4406
        %4408 = vmatprep.mubr.bf16.mxu0 0
        %4409 = vmatmul.mubr.bf16.gmra.mrb[0].mxu0 %v2926
        %v4410 = vpop.f32.mrb[0].mxu0
        %v4411 = vadd.f32 0.0, %v4410
        %v4412 = vpop.f32.mrb[0].mxu0
        %v4413 = vadd.f32 0.0, %v4412
        %v4414 = vpop.f32.mrb[0].mxu0
        %v4415 = vadd.f32 0.0, %v4414
        %v4416 = vpop.f32.mrb[0].mxu0
        %v4417 = vadd.f32 0.0, %v4416
        %4418 = vmatprep.mubr.bf16.mxu0 0
        %4419 = vmatmul.mubr.bf16.gmra.mrb[0].mxu0 %v2927
        %v4420 = vpop.f32.mrb[0].mxu0
        %v4421 = vadd.f32 0.0, %v4420
        %v4422 = vpop.f32.mrb[0].mxu0
        %v4423 = vadd.f32 0.0, %v4422
        %v4424 = vpop.f32.mrb[0].mxu0
        %v4425 = vadd.f32 0.0, %v4424
        %v4426 = vpop.f32.mrb[0].mxu0
        %v4427 = vadd.f32 0.0, %v4426
        %4428 = vmatprep.mubr.bf16.mxu0 0
        %4429 = vmatmul.mubr.bf16.gmra.mrb[0].mxu0 %v2928
        %v4430 = vpop.f32.mrb[0].mxu0
        %v4431 = vadd.f32 0.0, %v4430
        %v4432 = vpop.f32.mrb[0].mxu0
        %v4433 = vadd.f32 0.0, %v4432
        %v4434 = vpop.f32.mrb[0].mxu0
        %v4435 = vadd.f32 0.0, %v4434
        %v4436 = vpop.f32.mrb[0].mxu0
        %v4437 = vadd.f32 0.0, %v4436
        %4438 = vmatprep.mubr.bf16.mxu0 0
        %4439 = vmatmul.mubr.bf16.gmra.mrb[0].mxu0 %v2929
        %v4440 = vpop.f32.mrb[0].mxu0
        %v4441 = vadd.f32 0.0, %v4440
        %v4442 = vpop.f32.mrb[0].mxu0
        %v4443 = vadd.f32 0.0, %v4442
        %v4444 = vpop.f32.mrb[0].mxu0
        %v4445 = vadd.f32 0.0, %v4444
        %v4446 = vpop.f32.mrb[0].mxu0
        %v4447 = vadd.f32 0.0, %v4446
        %4448 = vmatprep.mubr.bf16.mxu0 0
        %4449 = vmatmul.mubr.bf16.gmra.mrb[0].mxu0 %v2930
        %v4450 = vpop.f32.mrb[0].mxu0
        %v4451 = vadd.f32 0.0, %v4450
        %v4452 = vpop.f32.mrb[0].mxu0
        %v4453 = vadd.f32 0.0, %v4452
        %v4454 = vpop.f32.mrb[0].mxu0
        %v4455 = vadd.f32 0.0, %v4454
        %v4456 = vpop.f32.mrb[0].mxu0
        %v4457 = vadd.f32 0.0, %v4456
        %4458 = vmatprep.mubr.bf16.mxu0 0
        %4459 = vmatmul.mubr.bf16.gmra.mrb[0].mxu0 %v2931
        %v4460 = vpop.f32.mrb[0].mxu0
        %v4461 = vadd.f32 0.0, %v4460
        %v4462 = vpop.f32.mrb[0].mxu0
        %v4463 = vadd.f32 0.0, %v4462
        %v4464 = vpop.f32.mrb[0].mxu0
        %v4465 = vadd.f32 0.0, %v4464
        %v4466 = vpop.f32.mrb[0].mxu0
        %v4467 = vadd.f32 0.0, %v4466
        %4468 = vmatprep.mubr.bf16.mxu0 0
        %4469 = vmatmul.mubr.bf16.gmra.mrb[0].mxu0 %v2932
        %v4470 = vpop.f32.mrb[0].mxu0
        %v4471 = vadd.f32 0.0, %v4470
        %v4472 = vpop.f32.mrb[0].mxu0
        %v4473 = vadd.f32 0.0, %v4472
        %v4474 = vpop.f32.mrb[0].mxu0
        %v4475 = vadd.f32 0.0, %v4474
        %v4476 = vpop.f32.mrb[0].mxu0
        %v4477 = vadd.f32 0.0, %v4476
        %4478 = vmatprep.mubr.bf16.mxu0 0
        %4479 = vmatmul.mubr.bf16.gmra.mrb[0].mxu0 %v2933
        %v4480 = vpop.f32.mrb[0].mxu0
        %v4481 = vadd.f32 0.0, %v4480
        %v4482 = vpop.f32.mrb[0].mxu0
        %v4483 = vadd.f32 0.0, %v4482
        %v4484 = vpop.f32.mrb[0].mxu0
        %v4485 = vadd.f32 0.0, %v4484
        %v4486 = vpop.f32.mrb[0].mxu0
        %v4487 = vadd.f32 0.0, %v4486
        %4488 = vmatprep.mubr.bf16.mxu0 0
        %4489 = vmatmul.mubr.bf16.gmra.mrb[0].mxu0 %v2934
        %v4490 = vpop.f32.mrb[0].mxu0
        %v4491 = vadd.f32 0.0, %v4490
        %v4492 = vpop.f32.mrb[0].mxu0
        %v4493 = vadd.f32 0.0, %v4492
        %v4494 = vpop.f32.mrb[0].mxu0
        %v4495 = vadd.f32 0.0, %v4494
        %v4496 = vpop.f32.mrb[0].mxu0
        %v4497 = vadd.f32 0.0, %v4496
        %4498 = vmatprep.mubr.bf16.mxu0 0
        %4499 = vmatmul.mubr.bf16.gmra.mrb[0].mxu0 %v2935
        %v4500 = vpop.f32.mrb[0].mxu0
        %v4501 = vadd.f32 0.0, %v4500
        %v4502 = vpop.f32.mrb[0].mxu0
        %v4503 = vadd.f32 0.0, %v4502
        %v4504 = vpop.f32.mrb[0].mxu0
        %v4505 = vadd.f32 0.0, %v4504
        %v4506 = vpop.f32.mrb[0].mxu0
        %v4507 = vadd.f32 0.0, %v4506
        %4508 = vmatprep.mubr.bf16.mxu0 0
        %4509 = vmatmul.mubr.bf16.gmra.mrb[0].mxu0 %v2936
        %v4510 = vpop.f32.mrb[0].mxu0
        %v4511 = vadd.f32 0.0, %v4510
        %v4512 = vpop.f32.mrb[0].mxu0
        %v4513 = vadd.f32 0.0, %v4512
        %v4514 = vpop.f32.mrb[0].mxu0
        %v4515 = vadd.f32 0.0, %v4514
        %v4516 = vpop.f32.mrb[0].mxu0
        %v4517 = vadd.f32 0.0, %v4516
        %4518 = vmatprep.mubr.bf16.mxu0 0
        %4519 = vmatmul.mubr.bf16.gmra.mrb[0].mxu0 %v2937
        %v4520 = vpop.f32.mrb[0].mxu0
        %v4521 = vadd.f32 0.0, %v4520
        %v4522 = vpop.f32.mrb[0].mxu0
        %v4523 = vadd.f32 0.0, %v4522
        %v4524 = vpop.f32.mrb[0].mxu0
        %v4525 = vadd.f32 0.0, %v4524
        %v4526 = vpop.f32.mrb[0].mxu0
        %v4527 = vadd.f32 0.0, %v4526
        %4528 = vmatprep.mubr.bf16.mxu0 0
        %4529 = vmatmul.mubr.bf16.gmra.mrb[0].mxu0 %v2938
        %v4530 = vpop.f32.mrb[0].mxu0
        %v4531 = vadd.f32 0.0, %v4530
        %v4532 = vpop.f32.mrb[0].mxu0
        %v4533 = vadd.f32 0.0, %v4532
        %v4534 = vpop.f32.mrb[0].mxu0
        %v4535 = vadd.f32 0.0, %v4534
        %v4536 = vpop.f32.mrb[0].mxu0
        %v4537 = vadd.f32 0.0, %v4536
        %4538 = vmatprep.mubr.bf16.mxu0 0
        %4539 = vmatmul.mubr.bf16.gmra.mrb[0].mxu0 %v2939
        %v4540 = vpop.f32.mrb[0].mxu0
        %v4541 = vadd.f32 0.0, %v4540
        %v4542 = vpop.f32.mrb[0].mxu0
        %v4543 = vadd.f32 0.0, %v4542
        %v4544 = vpop.f32.mrb[0].mxu0
        %v4545 = vadd.f32 0.0, %v4544
        %v4546 = vpop.f32.mrb[0].mxu0
        %v4547 = vadd.f32 0.0, %v4546
        %4548 = vmatprep.mubr.bf16.mxu0 0
        %4549 = vmatmul.mubr.bf16.gmra.mrb[0].mxu0 %v2940
        %v4550 = vpop.f32.mrb[0].mxu0
        %v4551 = vadd.f32 0.0, %v4550
        %v4552 = vpop.f32.mrb[0].mxu0
        %v4553 = vadd.f32 0.0, %v4552
        %v4554 = vpop.f32.mrb[0].mxu0
        %v4555 = vadd.f32 0.0, %v4554
        %v4556 = vpop.f32.mrb[0].mxu0
        %v4557 = vadd.f32 0.0, %v4556
        %4558 = vmatprep.mubr.bf16.mxu0 0
        %4559 = vmatmul.mubr.bf16.gmra.mrb[0].mxu0 %v2941
        %v4560 = vpop.f32.mrb[0].mxu0
        %v4561 = vadd.f32 0.0, %v4560
        %v4562 = vpop.f32.mrb[0].mxu0
        %v4563 = vadd.f32 0.0, %v4562
        %v4564 = vpop.f32.mrb[0].mxu0
        %v4565 = vadd.f32 0.0, %v4564
        %v4566 = vpop.f32.mrb[0].mxu0
        %v4567 = vadd.f32 0.0, %v4566
        %4568 = vmatprep.mubr.bf16.mxu0 0
        %4569 = vmatmul.mubr.bf16.gmra.mrb[0].mxu0 %v2942
        %v4570 = vpop.f32.mrb[0].mxu0
        %v4571 = vadd.f32 0.0, %v4570
        %v4572 = vpop.f32.mrb[0].mxu0
        %v4573 = vadd.f32 0.0, %v4572
        %v4574 = vpop.f32.mrb[0].mxu0
        %v4575 = vadd.f32 0.0, %v4574
        %v4576 = vpop.f32.mrb[0].mxu0
        %v4577 = vadd.f32 0.0, %v4576
        %4578 = vmatprep.mubr.bf16.mxu0 0
        %4579 = vmatmul.mubr.bf16.gmra.mrb[0].mxu0 %v2943
        %v4580 = vpop.f32.mrb[0].mxu0
        %v4581 = vadd.f32 0.0, %v4580
        %v4582 = vpop.f32.mrb[0].mxu0
        %v4583 = vadd.f32 0.0, %v4582
        %v4584 = vpop.f32.mrb[0].mxu0
        %v4585 = vadd.f32 0.0, %v4584
        %v4586 = vpop.f32.mrb[0].mxu0
        %v4587 = vadd.f32 0.0, %v4586
        %4588 = vmatprep.mubr.bf16.mxu0 0
        %4589 = vmatmul.mubr.bf16.gmra.mrb[0].mxu0 %v2944
        %v4590 = vpop.f32.mrb[0].mxu0
        %v4591 = vadd.f32 0.0, %v4590
        %v4592 = vpop.f32.mrb[0].mxu0
        %v4593 = vadd.f32 0.0, %v4592
        %v4594 = vpop.f32.mrb[0].mxu0
        %v4595 = vadd.f32 0.0, %v4594
        %v4596 = vpop.f32.mrb[0].mxu0
        %v4597 = vadd.f32 0.0, %v4596
        %4598 = vmatprep.mubr.bf16.mxu0 0
        %4599 = vmatmul.mubr.bf16.gmra.mrb[0].mxu0 %v2945
        %v4600 = vpop.f32.mrb[0].mxu0
        %v4601 = vadd.f32 0.0, %v4600
        %v4602 = vpop.f32.mrb[0].mxu0
        %v4603 = vadd.f32 0.0, %v4602
        %v4604 = vpop.f32.mrb[0].mxu0
        %v4605 = vadd.f32 0.0, %v4604
        %v4606 = vpop.f32.mrb[0].mxu0
        %v4607 = vadd.f32 0.0, %v4606
        %4608 = vmatprep.mubr.bf16.mxu0 0
        %4609 = vmatmul.mubr.bf16.gmra.mrb[0].mxu0 %v2946
        %v4610 = vpop.f32.mrb[0].mxu0
        %v4611 = vadd.f32 0.0, %v4610
        %v4612 = vpop.f32.mrb[0].mxu0
        %v4613 = vadd.f32 0.0, %v4612
        %v4614 = vpop.f32.mrb[0].mxu0
        %v4615 = vadd.f32 0.0, %v4614
        %v4616 = vpop.f32.mrb[0].mxu0
        %v4617 = vadd.f32 0.0, %v4616
        %4618 = vmatprep.mubr.bf16.mxu0 0
        %4619 = vmatmul.mubr.bf16.gmra.mrb[0].mxu0 %v2947
        %v4620 = vpop.f32.mrb[0].mxu0
        %v4621 = vadd.f32 0.0, %v4620
        %v4622 = vpop.f32.mrb[0].mxu0
        %v4623 = vadd.f32 0.0, %v4622
        %v4624 = vpop.f32.mrb[0].mxu0
        %v4625 = vadd.f32 0.0, %v4624
        %v4626 = vpop.f32.mrb[0].mxu0
        %v4627 = vadd.f32 0.0, %v4626
        %4628 = vmatprep.mubr.bf16.mxu0 0
        %4629 = vmatmul.mubr.bf16.gmra.mrb[0].mxu0 %v2948
        %v4630 = vpop.f32.mrb[0].mxu0
        %v4631 = vadd.f32 0.0, %v4630
        %v4632 = vpop.f32.mrb[0].mxu0
        %v4633 = vadd.f32 0.0, %v4632
        %v4634 = vpop.f32.mrb[0].mxu0
        %v4635 = vadd.f32 0.0, %v4634
        %v4636 = vpop.f32.mrb[0].mxu0
        %v4637 = vadd.f32 0.0, %v4636
        %4638 = vmatprep.mubr.bf16.mxu0 0
        %4639 = vmatmul.mubr.bf16.gmra.mrb[0].mxu0 %v2949
        %v4640 = vpop.f32.mrb[0].mxu0
        %v4641 = vadd.f32 0.0, %v4640
        %v4642 = vpop.f32.mrb[0].mxu0
        %v4643 = vadd.f32 0.0, %v4642
        %v4644 = vpop.f32.mrb[0].mxu0
        %v4645 = vadd.f32 0.0, %v4644
        %v4646 = vpop.f32.mrb[0].mxu0
        %v4647 = vadd.f32 0.0, %v4646
        %4648 = vmatprep.mubr.bf16.mxu0 0
        %4649 = vmatmul.mubr.bf16.gmra.mrb[0].mxu0 %v2950
        %v4650 = vpop.f32.mrb[0].mxu0
        %v4651 = vadd.f32 0.0, %v4650
        %v4652 = vpop.f32.mrb[0].mxu0
        %v4653 = vadd.f32 0.0, %v4652
        %v4654 = vpop.f32.mrb[0].mxu0
        %v4655 = vadd.f32 0.0, %v4654
        %v4656 = vpop.f32.mrb[0].mxu0
        %v4657 = vadd.f32 0.0, %v4656
        %4658 = vmatprep.mubr.bf16.mxu0 0
        %4659 = vmatmul.mubr.bf16.gmra.mrb[0].mxu0 %v2951
        %v4660 = vpop.f32.mrb[0].mxu0
        %v4661 = vadd.f32 0.0, %v4660
        %v4662 = vpop.f32.mrb[0].mxu0
        %v4663 = vadd.f32 0.0, %v4662
        %v4664 = vpop.f32.mrb[0].mxu0
        %v4665 = vadd.f32 0.0, %v4664
        %v4666 = vpop.f32.mrb[0].mxu0
        %v4667 = vadd.f32 0.0, %v4666
        %4668 = vmatprep.mubr.bf16.mxu0 0
        %4669 = vmatmul.mubr.bf16.gmra.mrb[0].mxu0 %v2952
        %v4670 = vpop.f32.mrb[0].mxu0
        %v4671 = vadd.f32 0.0, %v4670
        %v4672 = vpop.f32.mrb[0].mxu0
        %v4673 = vadd.f32 0.0, %v4672
        %v4674 = vpop.f32.mrb[0].mxu0
        %v4675 = vadd.f32 0.0, %v4674
        %v4676 = vpop.f32.mrb[0].mxu0
        %v4677 = vadd.f32 0.0, %v4676
        %4678 = vmatprep.mubr.bf16.mxu0 0
        %4679 = vmatmul.mubr.bf16.gmra.mrb[0].mxu0 %v2953
        %v4680 = vpop.f32.mrb[0].mxu0
        %v4681 = vadd.f32 0.0, %v4680
        %v4682 = vpop.f32.mrb[0].mxu0
        %v4683 = vadd.f32 0.0, %v4682
        %v4684 = vpop.f32.mrb[0].mxu0
        %v4685 = vadd.f32 0.0, %v4684
        %v4686 = vpop.f32.mrb[0].mxu0
        %v4687 = vadd.f32 0.0, %v4686
        %4688 = vmatprep.mubr.bf16.mxu0 0
        %4689 = vmatmul.mubr.bf16.gmra.mrb[0].mxu0 %v2954
        %v4690 = vpop.f32.mrb[0].mxu0
        %v4691 = vadd.f32 0.0, %v4690
        %v4692 = vpop.f32.mrb[0].mxu0
        %v4693 = vadd.f32 0.0, %v4692
        %v4694 = vpop.f32.mrb[0].mxu0
        %v4695 = vadd.f32 0.0, %v4694
        %v4696 = vpop.f32.mrb[0].mxu0
        %v4697 = vadd.f32 0.0, %v4696
        %4698 = vmatprep.mubr.bf16.mxu0 0
        %4699 = vmatmul.mubr.bf16.gmra.mrb[0].mxu0 %v2955
        %v4700 = vpop.f32.mrb[0].mxu0
        %v4701 = vadd.f32 0.0, %v4700
        %v4702 = vpop.f32.mrb[0].mxu0
        %v4703 = vadd.f32 0.0, %v4702
        %v4704 = vpop.f32.mrb[0].mxu0
        %v4705 = vadd.f32 0.0, %v4704
        %v4706 = vpop.f32.mrb[0].mxu0
        %v4707 = vadd.f32 0.0, %v4706
        %4708 = vmatprep.mubr.bf16.mxu0 0
        %4709 = vmatmul.mubr.bf16.gmra.mrb[0].mxu0 %v2956
        %v4710 = vpop.f32.mrb[0].mxu0
        %v4711 = vadd.f32 0.0, %v4710
        %v4712 = vpop.f32.mrb[0].mxu0
        %v4713 = vadd.f32 0.0, %v4712
        %v4714 = vpop.f32.mrb[0].mxu0
        %v4715 = vadd.f32 0.0, %v4714
        %v4716 = vpop.f32.mrb[0].mxu0
        %v4717 = vadd.f32 0.0, %v4716
        %4718 = vmatprep.mubr.bf16.mxu0 0
        %4719 = vmatmul.mubr.bf16.gmra.mrb[0].mxu0 %v2957
        %v4720 = vpop.f32.mrb[0].mxu0
        %v4721 = vadd.f32 0.0, %v4720
        %v4722 = vpop.f32.mrb[0].mxu0
        %v4723 = vadd.f32 0.0, %v4722
        %v4724 = vpop.f32.mrb[0].mxu0
        %v4725 = vadd.f32 0.0, %v4724
        %v4726 = vpop.f32.mrb[0].mxu0
        %v4727 = vadd.f32 0.0, %v4726
        %4728 = vmatprep.mubr.bf16.mxu0 0
        %4729 = vmatmul.mubr.bf16.gmra.mrb[0].mxu0 %v2958
        %v4730 = vpop.f32.mrb[0].mxu0
        %v4731 = vadd.f32 0.0, %v4730
        %v4732 = vpop.f32.mrb[0].mxu0
        %v4733 = vadd.f32 0.0, %v4732
        %v4734 = vpop.f32.mrb[0].mxu0
        %v4735 = vadd.f32 0.0, %v4734
        %v4736 = vpop.f32.mrb[0].mxu0
        %v4737 = vadd.f32 0.0, %v4736
        %4738 = vmatprep.mubr.bf16.mxu0 0
        %4739 = vmatmul.mubr.bf16.gmra.mrb[0].mxu0 %v2959
        %v4740 = vpop.f32.mrb[0].mxu0
        %v4741 = vadd.f32 0.0, %v4740
        %v4742 = vpop.f32.mrb[0].mxu0
        %v4743 = vadd.f32 0.0, %v4742
        %v4744 = vpop.f32.mrb[0].mxu0
        %v4745 = vadd.f32 0.0, %v4744
        %v4746 = vpop.f32.mrb[0].mxu0
        %v4747 = vadd.f32 0.0, %v4746
        %4748 = vmatprep.mubr.bf16.mxu0 0
        %4749 = vmatmul.mubr.bf16.gmra.mrb[0].mxu0 %v2960
        %v4750 = vpop.f32.mrb[0].mxu0
        %v4751 = vadd.f32 0.0, %v4750
        %v4752 = vpop.f32.mrb[0].mxu0
        %v4753 = vadd.f32 0.0, %v4752
        %v4754 = vpop.f32.mrb[0].mxu0
        %v4755 = vadd.f32 0.0, %v4754
        %v4756 = vpop.f32.mrb[0].mxu0
        %v4757 = vadd.f32 0.0, %v4756
        %4758 = vmatprep.mubr.bf16.mxu0 0
        %4759 = vmatmul.mubr.bf16.gmra.mrb[0].mxu0 %v2961
        %v4760 = vpop.f32.mrb[0].mxu0
        %v4761 = vadd.f32 0.0, %v4760
        %v4762 = vpop.f32.mrb[0].mxu0
        %v4763 = vadd.f32 0.0, %v4762
        %v4764 = vpop.f32.mrb[0].mxu0
        %v4765 = vadd.f32 0.0, %v4764
        %v4766 = vpop.f32.mrb[0].mxu0
        %v4767 = vadd.f32 0.0, %v4766
        %4768 = vmatprep.mubr.bf16.mxu0 0
        %4769 = vmatmul.mubr.bf16.gmra.mrb[0].mxu0 %v2962
        %v4770 = vpop.f32.mrb[0].mxu0
        %v4771 = vadd.f32 0.0, %v4770
        %v4772 = vpop.f32.mrb[0].mxu0
        %v4773 = vadd.f32 0.0, %v4772
        %v4774 = vpop.f32.mrb[0].mxu0
        %v4775 = vadd.f32 0.0, %v4774
        %v4776 = vpop.f32.mrb[0].mxu0
        %v4777 = vadd.f32 0.0, %v4776
        %4778 = vmatprep.mubr.bf16.mxu0 0
        %4779 = vmatmul.mubr.bf16.gmra.mrb[0].mxu0 %v2963
        %v4780 = vpop.f32.mrb[0].mxu0
        %v4781 = vadd.f32 0.0, %v4780
        %v4782 = vpop.f32.mrb[0].mxu0
        %v4783 = vadd.f32 0.0, %v4782
        %v4784 = vpop.f32.mrb[0].mxu0
        %v4785 = vadd.f32 0.0, %v4784
        %v4786 = vpop.f32.mrb[0].mxu0
        %v4787 = vadd.f32 0.0, %v4786
        %4788 = vmatprep.mubr.bf16.mxu0 0
        %4789 = vmatmul.mubr.bf16.gmra.mrb[0].mxu0 %v2964
        %v4790 = vpop.f32.mrb[0].mxu0
        %v4791 = vadd.f32 0.0, %v4790
        %v4792 = vpop.f32.mrb[0].mxu0
        %v4793 = vadd.f32 0.0, %v4792
        %v4794 = vpop.f32.mrb[0].mxu0
        %v4795 = vadd.f32 0.0, %v4794
        %v4796 = vpop.f32.mrb[0].mxu0
        %v4797 = vadd.f32 0.0, %v4796
        %4798 = vmatprep.mubr.bf16.mxu0 0
        %4799 = vmatmul.mubr.bf16.gmra.mrb[0].mxu0 %v2965
        %v4800 = vpop.f32.mrb[0].mxu0
        %v4801 = vadd.f32 0.0, %v4800
        %v4802 = vpop.f32.mrb[0].mxu0
        %v4803 = vadd.f32 0.0, %v4802
        %v4804 = vpop.f32.mrb[0].mxu0
        %v4805 = vadd.f32 0.0, %v4804
        %v4806 = vpop.f32.mrb[0].mxu0
        %v4807 = vadd.f32 0.0, %v4806
        %4808 = vmatprep.mubr.bf16.mxu0 0
        %4809 = vmatmul.mubr.bf16.gmra.mrb[0].mxu0 %v2966
        %v4810 = vpop.f32.mrb[0].mxu0
        %v4811 = vadd.f32 0.0, %v4810
        %v4812 = vpop.f32.mrb[0].mxu0
        %v4813 = vadd.f32 0.0, %v4812
        %v4814 = vpop.f32.mrb[0].mxu0
        %v4815 = vadd.f32 0.0, %v4814
        %v4816 = vpop.f32.mrb[0].mxu0
        %v4817 = vadd.f32 0.0, %v4816
        %4818 = vmatprep.mubr.bf16.mxu0 0
        %4819 = vmatmul.mubr.bf16.gmra.mrb[0].mxu0 %v2967
        %v4820 = vpop.f32.mrb[0].mxu0
        %v4821 = vadd.f32 0.0, %v4820
        %v4822 = vpop.f32.mrb[0].mxu0
        %v4823 = vadd.f32 0.0, %v4822
        %v4824 = vpop.f32.mrb[0].mxu0
        %v4825 = vadd.f32 0.0, %v4824
        %v4826 = vpop.f32.mrb[0].mxu0
        %v4827 = vadd.f32 0.0, %v4826
        %4828 = vmatprep.mubr.bf16.mxu0 0
        %4829 = vmatmul.mubr.bf16.gmra.mrb[0].mxu0 %v2968
        %v4830 = vpop.f32.mrb[0].mxu0
        %v4831 = vadd.f32 0.0, %v4830
        %v4832 = vpop.f32.mrb[0].mxu0
        %v4833 = vadd.f32 0.0, %v4832
        %v4834 = vpop.f32.mrb[0].mxu0
        %v4835 = vadd.f32 0.0, %v4834
        %v4836 = vpop.f32.mrb[0].mxu0
        %v4837 = vadd.f32 0.0, %v4836
        %4838 = vmatprep.mubr.bf16.mxu0 0
        %4839 = vmatmul.mubr.bf16.gmra.mrb[0].mxu0 %v2969
        %v4840 = vpop.f32.mrb[0].mxu0
        %v4841 = vadd.f32 0.0, %v4840
        %v4842 = vpop.f32.mrb[0].mxu0
        %v4843 = vadd.f32 0.0, %v4842
        %v4844 = vpop.f32.mrb[0].mxu0
        %v4845 = vadd.f32 0.0, %v4844
        %v4846 = vpop.f32.mrb[0].mxu0
        %v4847 = vadd.f32 0.0, %v4846
        %4848 = vmatprep.mubr.bf16.mxu0 0
        %4849 = vmatmul.mubr.bf16.gmra.mrb[0].mxu0 %v2970
        %v4850 = vpop.f32.mrb[0].mxu0
        %v4851 = vadd.f32 0.0, %v4850
        %v4852 = vpop.f32.mrb[0].mxu0
        %v4853 = vadd.f32 0.0, %v4852
        %v4854 = vpop.f32.mrb[0].mxu0
        %v4855 = vadd.f32 0.0, %v4854
        %v4856 = vpop.f32.mrb[0].mxu0
        %v4857 = vadd.f32 0.0, %v4856
        %4858 = vmatprep.mubr.bf16.mxu0 0
        %4859 = vmatmul.mubr.bf16.gmra.mrb[0].mxu0 %v2971
        %v4860 = vpop.f32.mrb[0].mxu0
        %v4861 = vadd.f32 0.0, %v4860
        %v4862 = vpop.f32.mrb[0].mxu0
        %v4863 = vadd.f32 0.0, %v4862
        %v4864 = vpop.f32.mrb[0].mxu0
        %v4865 = vadd.f32 0.0, %v4864
        %v4866 = vpop.f32.mrb[0].mxu0
        %v4867 = vadd.f32 0.0, %v4866
        %4868 = vmatprep.mubr.bf16.mxu0 0
        %4869 = vmatmul.mubr.bf16.gmra.mrb[0].mxu0 %v2972
        %v4870 = vpop.f32.mrb[0].mxu0
        %v4871 = vadd.f32 0.0, %v4870
        %v4872 = vpop.f32.mrb[0].mxu0
        %v4873 = vadd.f32 0.0, %v4872
        %v4874 = vpop.f32.mrb[0].mxu0
        %v4875 = vadd.f32 0.0, %v4874
        %v4876 = vpop.f32.mrb[0].mxu0
        %v4877 = vadd.f32 0.0, %v4876
        %4878 = vmatprep.mubr.bf16.mxu0 0
        %4879 = vmatmul.mubr.bf16.gmra.mrb[0].mxu0 %v2973
        %v4880 = vpop.f32.mrb[0].mxu0
        %v4881 = vadd.f32 0.0, %v4880
        %v4882 = vpop.f32.mrb[0].mxu0
        %v4883 = vadd.f32 0.0, %v4882
        %v4884 = vpop.f32.mrb[0].mxu0
        %v4885 = vadd.f32 0.0, %v4884
        %v4886 = vpop.f32.mrb[0].mxu0
        %v4887 = vadd.f32 0.0, %v4886
        %4888 = vmatprep.mubr.bf16.mxu0 0
        %4889 = vmatmul.mubr.bf16.gmra.mrb[0].mxu0 %v2974
        %v4890 = vpop.f32.mrb[0].mxu0
        %v4891 = vadd.f32 0.0, %v4890
        %v4892 = vpop.f32.mrb[0].mxu0
        %v4893 = vadd.f32 0.0, %v4892
        %v4894 = vpop.f32.mrb[0].mxu0
        %v4895 = vadd.f32 0.0, %v4894
        %v4896 = vpop.f32.mrb[0].mxu0
        %v4897 = vadd.f32 0.0, %v4896
        %4898 = vmatprep.mubr.bf16.mxu0 0
        %4899 = vmatmul.mubr.bf16.gmra.mrb[0].mxu0 %v2975
        %v4900 = vpop.f32.mrb[0].mxu0
        %v4901 = vadd.f32 0.0, %v4900
        %v4902 = vpop.f32.mrb[0].mxu0
        %v4903 = vadd.f32 0.0, %v4902
        %v4904 = vpop.f32.mrb[0].mxu0
        %v4905 = vadd.f32 0.0, %v4904
        %v4906 = vpop.f32.mrb[0].mxu0
        %v4907 = vadd.f32 0.0, %v4906
        %4908 = vmatprep.mubr.bf16.mxu0 0
        %4909 = vmatmul.mubr.bf16.gmra.mrb[0].mxu0 %v2976
        %v4910 = vpop.f32.mrb[0].mxu0
        %v4911 = vadd.f32 0.0, %v4910
        %v4912 = vpop.f32.mrb[0].mxu0
        %v4913 = vadd.f32 0.0, %v4912
        %v4914 = vpop.f32.mrb[0].mxu0
        %v4915 = vadd.f32 0.0, %v4914
        %v4916 = vpop.f32.mrb[0].mxu0
        %v4917 = vadd.f32 0.0, %v4916
        %4918 = vmatprep.mubr.bf16.mxu0 0
        %4919 = vmatmul.mubr.bf16.gmra.mrb[0].mxu0 %v2977
        %v4920 = vpop.f32.mrb[0].mxu0
        %v4921 = vadd.f32 0.0, %v4920
        %v4922 = vpop.f32.mrb[0].mxu0
        %v4923 = vadd.f32 0.0, %v4922
        %v4924 = vpop.f32.mrb[0].mxu0
        %v4925 = vadd.f32 0.0, %v4924
        %v4926 = vpop.f32.mrb[0].mxu0
        %v4927 = vadd.f32 0.0, %v4926
        %4928 = vmatprep.mubr.bf16.mxu0 0
        %4929 = vmatmul.mubr.bf16.gmra.mrb[0].mxu0 %v2978
        %v4930 = vpop.f32.mrb[0].mxu0
        %v4931 = vadd.f32 0.0, %v4930
        %v4932 = vpop.f32.mrb[0].mxu0
        %v4933 = vadd.f32 0.0, %v4932
        %v4934 = vpop.f32.mrb[0].mxu0
        %v4935 = vadd.f32 0.0, %v4934
        %v4936 = vpop.f32.mrb[0].mxu0
        %v4937 = vadd.f32 0.0, %v4936
        %4938 = vmatprep.mubr.bf16.mxu0 0
        %4939 = vmatmul.mubr.bf16.gmra.mrb[0].mxu0 %v2979
        %v4940 = vpop.f32.mrb[0].mxu0
        %v4941 = vadd.f32 0.0, %v4940
        %v4942 = vpop.f32.mrb[0].mxu0
        %v4943 = vadd.f32 0.0, %v4942
        %v4944 = vpop.f32.mrb[0].mxu0
        %v4945 = vadd.f32 0.0, %v4944
        %v4946 = vpop.f32.mrb[0].mxu0
        %v4947 = vadd.f32 0.0, %v4946
        %4948 = vmatprep.mubr.bf16.mxu0 0
        %4949 = vmatmul.mubr.bf16.gmra.mrb[0].mxu0 %v2980
        %v4950 = vpop.f32.mrb[0].mxu0
        %v4951 = vadd.f32 0.0, %v4950
        %v4952 = vpop.f32.mrb[0].mxu0
        %v4953 = vadd.f32 0.0, %v4952
        %v4954 = vpop.f32.mrb[0].mxu0
        %v4955 = vadd.f32 0.0, %v4954
        %v4956 = vpop.f32.mrb[0].mxu0
        %v4957 = vadd.f32 0.0, %v4956
        %4958 = vmatprep.mubr.bf16.mxu0 0
        %4959 = vmatmul.mubr.bf16.gmra.mrb[0].mxu0 %v2981
        %v4960 = vpop.f32.mrb[0].mxu0
        %v4961 = vadd.f32 0.0, %v4960
        %v4962 = vpop.f32.mrb[0].mxu0
        %v4963 = vadd.f32 0.0, %v4962
        %v4964 = vpop.f32.mrb[0].mxu0
        %v4965 = vadd.f32 0.0, %v4964
        %v4966 = vpop.f32.mrb[0].mxu0
        %v4967 = vadd.f32 0.0, %v4966
        %4968 = vmatprep.mubr.bf16.mxu0 0
        %4969 = vmatmul.mubr.bf16.gmra.mrb[0].mxu0 %v2982
        %v4970 = vpop.f32.mrb[0].mxu0
        %v4971 = vadd.f32 0.0, %v4970
        %v4972 = vpop.f32.mrb[0].mxu0
        %v4973 = vadd.f32 0.0, %v4972
        %v4974 = vpop.f32.mrb[0].mxu0
        %v4975 = vadd.f32 0.0, %v4974
        %v4976 = vpop.f32.mrb[0].mxu0
        %v4977 = vadd.f32 0.0, %v4976
        %4978 = vmatprep.mubr.bf16.mxu0 0
        %4979 = vmatmul.mubr.bf16.gmra.mrb[0].mxu0 %v2983
        %v4980 = vpop.f32.mrb[0].mxu0
        %v4981 = vadd.f32 0.0, %v4980
        %v4982 = vpop.f32.mrb[0].mxu0
        %v4983 = vadd.f32 0.0, %v4982
        %v4984 = vpop.f32.mrb[0].mxu0
        %v4985 = vadd.f32 0.0, %v4984
        %v4986 = vpop.f32.mrb[0].mxu0
        %v4987 = vadd.f32 0.0, %v4986
        %4988 = vmatprep.mubr.bf16.mxu0 0
        %4989 = vmatmul.mubr.bf16.gmra.mrb[0].mxu0 %v2984
        %v4990 = vpop.f32.mrb[0].mxu0
        %v4991 = vadd.f32 0.0, %v4990
        %v4992 = vpop.f32.mrb[0].mxu0
        %v4993 = vadd.f32 0.0, %v4992
        %v4994 = vpop.f32.mrb[0].mxu0
        %v4995 = vadd.f32 0.0, %v4994
        %v4996 = vpop.f32.mrb[0].mxu0
        %v4997 = vadd.f32 0.0, %v4996
        %4998 = vmatprep.mubr.bf16.mxu0 0
        %4999 = vmatmul.mubr.bf16.gmra.mrb[0].mxu0 %v2985
        %v5000 = vpop.f32.mrb[0].mxu0
        %v5001 = vadd.f32 0.0, %v5000
        %v5002 = vpop.f32.mrb[0].mxu0
        %v5003 = vadd.f32 0.0, %v5002
        %v5004 = vpop.f32.mrb[0].mxu0
        %v5005 = vadd.f32 0.0, %v5004
        %v5006 = vpop.f32.mrb[0].mxu0
        %v5007 = vadd.f32 0.0, %v5006
        %5008 = vmatprep.mubr.bf16.mxu0 0
        %5009 = vmatmul.mubr.bf16.gmra.mrb[0].mxu0 %v2986
        %v5010 = vpop.f32.mrb[0].mxu0
        %v5011 = vadd.f32 0.0, %v5010
        %v5012 = vpop.f32.mrb[0].mxu0
        %v5013 = vadd.f32 0.0, %v5012
        %v5014 = vpop.f32.mrb[0].mxu0
        %v5015 = vadd.f32 0.0, %v5014
        %v5016 = vpop.f32.mrb[0].mxu0
        %v5017 = vadd.f32 0.0, %v5016
        %5018 = vmatprep.mubr.bf16.mxu0 0
        %5019 = vmatmul.mubr.bf16.gmra.mrb[0].mxu0 %v2987
        %v5020 = vpop.f32.mrb[0].mxu0
        %v5021 = vadd.f32 0.0, %v5020
        %v5022 = vpop.f32.mrb[0].mxu0
        %v5023 = vadd.f32 0.0, %v5022
        %v5024 = vpop.f32.mrb[0].mxu0
        %v5025 = vadd.f32 0.0, %v5024
        %v5026 = vpop.f32.mrb[0].mxu0
        %v5027 = vadd.f32 0.0, %v5026
        %5028 = vmatprep.mubr.bf16.mxu0 0
        %5029 = vmatmul.mubr.bf16.gmra.mrb[0].mxu0 %v2988
        %v5030 = vpop.f32.mrb[0].mxu0
        %v5031 = vadd.f32 0.0, %v5030
        %v5032 = vpop.f32.mrb[0].mxu0
        %v5033 = vadd.f32 0.0, %v5032
        %v5034 = vpop.f32.mrb[0].mxu0
        %v5035 = vadd.f32 0.0, %v5034
        %v5036 = vpop.f32.mrb[0].mxu0
        %v5037 = vadd.f32 0.0, %v5036
        %5038 = vdwg.mxu0
        %5039 = vmatprep.subr.bf16.mxu0 %v3250
        %5040 = vmatpush1.bf16.msra.mxu0 %v3249
        %5041 = vmatprep.subr.bf16.mxu0 %v3258
        %5042 = vmatpush1.bf16.msra.mxu0 %v3257
        %5043 = vmatprep.subr.bf16.mxu0 %v3266
        %5044 = vmatpush1.bf16.msra.mxu0 %v3265
        %5045 = vmatprep.subr.bf16.mxu0 %v3274
        %5046 = vmatpush1.bf16.msra.mxu0 %v3273
        %5047 = vmatprep.subr.bf16.mxu0 %v3282
        %5048 = vmatpush1.bf16.msra.mxu0 %v3281
        %5049 = vmatprep.subr.bf16.mxu0 %v3290
        %5050 = vmatpush1.bf16.msra.mxu0 %v3289
        %5051 = vmatprep.subr.bf16.mxu0 %v3298
        %5052 = vmatpush1.bf16.msra.mxu0 %v3297
        %5053 = vmatprep.subr.bf16.mxu0 %v3306
        %5054 = vmatpush1.bf16.msra.mxu0 %v3305
        %5055 = vmatprep.subr.bf16.mxu0 0
        %5056 = vmatpush1.bf16.msra.mxu0 0
        %5057 = vmatprep.subr.bf16.mxu0 0
        %5058 = vmatpush1.bf16.msra.mxu0 0
        %5059 = vmatprep.subr.bf16.mxu0 0
        %5060 = vmatpush1.bf16.msra.mxu0 0
        %5061 = vmatprep.subr.bf16.mxu0 0
        %5062 = vmatpush1.bf16.msra.mxu0 0
        %5063 = vmatprep.subr.bf16.mxu0 0
        %5064 = vmatpush1.bf16.msra.mxu0 0
        %5065 = vmatprep.subr.bf16.mxu0 0
        %5066 = vmatpush1.bf16.msra.mxu0 0
        %5067 = vmatprep.subr.bf16.mxu0 0
        %5068 = vmatpush1.bf16.msra.mxu0 0
        %5069 = vmatprep.subr.bf16.mxu0 0
        %5070 = vmatpush1.bf16.msra.mxu0 0
        %5071 = vmatprep.mubr.bf16.mxu0 0
        %5072 = vmatmul.mubr.bf16.gmra.mrb[0].mxu0 %v2909
        %v5073 = vpop.f32.mrb[0].mxu0
        %v5074 = vadd.f32 0.0, %v5073
        %v5075 = vpop.f32.mrb[0].mxu0
        %v5076 = vadd.f32 0.0, %v5075
        %v5077 = vpop.f32.mrb[0].mxu0
        %v5078 = vadd.f32 0.0, %v5077
        %v5079 = vpop.f32.mrb[0].mxu0
        %v5080 = vadd.f32 0.0, %v5079
        %5081 = vmatprep.mubr.bf16.mxu0 0
        %5082 = vmatmul.mubr.bf16.gmra.mrb[0].mxu0 %v2910
        %v5083 = vpop.f32.mrb[0].mxu0
        %v5084 = vadd.f32 0.0, %v5083
        %v5085 = vpop.f32.mrb[0].mxu0
        %v5086 = vadd.f32 0.0, %v5085
        %v5087 = vpop.f32.mrb[0].mxu0
        %v5088 = vadd.f32 0.0, %v5087
        %v5089 = vpop.f32.mrb[0].mxu0
        %v5090 = vadd.f32 0.0, %v5089
        %5091 = vmatprep.mubr.bf16.mxu0 0
        %5092 = vmatmul.mubr.bf16.gmra.mrb[0].mxu0 %v2911
        %v5093 = vpop.f32.mrb[0].mxu0
        %v5094 = vadd.f32 0.0, %v5093
        %v5095 = vpop.f32.mrb[0].mxu0
        %v5096 = vadd.f32 0.0, %v5095
        %v5097 = vpop.f32.mrb[0].mxu0
        %v5098 = vadd.f32 0.0, %v5097
        %v5099 = vpop.f32.mrb[0].mxu0
        %v5100 = vadd.f32 0.0, %v5099
        %5101 = vmatprep.mubr.bf16.mxu0 0
        %5102 = vmatmul.mubr.bf16.gmra.mrb[0].mxu0 %v2912
        %v5103 = vpop.f32.mrb[0].mxu0
        %v5104 = vadd.f32 0.0, %v5103
        %v5105 = vpop.f32.mrb[0].mxu0
        %v5106 = vadd.f32 0.0, %v5105
        %v5107 = vpop.f32.mrb[0].mxu0
        %v5108 = vadd.f32 0.0, %v5107
        %v5109 = vpop.f32.mrb[0].mxu0
        %v5110 = vadd.f32 0.0, %v5109
        %5111 = vmatprep.mubr.bf16.mxu0 0
        %5112 = vmatmul.mubr.bf16.gmra.mrb[0].mxu0 %v2913
        %v5113 = vpop.f32.mrb[0].mxu0
        %v5114 = vadd.f32 0.0, %v5113
        %v5115 = vpop.f32.mrb[0].mxu0
        %v5116 = vadd.f32 0.0, %v5115
        %v5117 = vpop.f32.mrb[0].mxu0
        %v5118 = vadd.f32 0.0, %v5117
        %v5119 = vpop.f32.mrb[0].mxu0
        %v5120 = vadd.f32 0.0, %v5119
        %5121 = vmatprep.mubr.bf16.mxu0 0
        %5122 = vmatmul.mubr.bf16.gmra.mrb[0].mxu0 %v2914
        %v5123 = vpop.f32.mrb[0].mxu0
        %v5124 = vadd.f32 0.0, %v5123
        %v5125 = vpop.f32.mrb[0].mxu0
        %v5126 = vadd.f32 0.0, %v5125
        %v5127 = vpop.f32.mrb[0].mxu0
        %v5128 = vadd.f32 0.0, %v5127
        %v5129 = vpop.f32.mrb[0].mxu0
        %v5130 = vadd.f32 0.0, %v5129
        %5131 = vmatprep.mubr.bf16.mxu0 0
        %5132 = vmatmul.mubr.bf16.gmra.mrb[0].mxu0 %v2915
        %v5133 = vpop.f32.mrb[0].mxu0
        %v5134 = vadd.f32 0.0, %v5133
        %v5135 = vpop.f32.mrb[0].mxu0
        %v5136 = vadd.f32 0.0, %v5135
        %v5137 = vpop.f32.mrb[0].mxu0
        %v5138 = vadd.f32 0.0, %v5137
        %v5139 = vpop.f32.mrb[0].mxu0
        %v5140 = vadd.f32 0.0, %v5139
        %5141 = vmatprep.mubr.bf16.mxu0 0
        %5142 = vmatmul.mubr.bf16.gmra.mrb[0].mxu0 %v2916
        %v5143 = vpop.f32.mrb[0].mxu0
        %v5144 = vadd.f32 0.0, %v5143
        %v5145 = vpop.f32.mrb[0].mxu0
        %v5146 = vadd.f32 0.0, %v5145
        %v5147 = vpop.f32.mrb[0].mxu0
        %v5148 = vadd.f32 0.0, %v5147
        %v5149 = vpop.f32.mrb[0].mxu0
        %v5150 = vadd.f32 0.0, %v5149
        %5151 = vmatprep.mubr.bf16.mxu0 0
        %5152 = vmatmul.mubr.bf16.gmra.mrb[0].mxu0 %v2917
        %v5153 = vpop.f32.mrb[0].mxu0
        %v5154 = vadd.f32 0.0, %v5153
        %v5155 = vpop.f32.mrb[0].mxu0
        %v5156 = vadd.f32 0.0, %v5155
        %v5157 = vpop.f32.mrb[0].mxu0
        %v5158 = vadd.f32 0.0, %v5157
        %v5159 = vpop.f32.mrb[0].mxu0
        %v5160 = vadd.f32 0.0, %v5159
        %5161 = vmatprep.mubr.bf16.mxu0 0
        %5162 = vmatmul.mubr.bf16.gmra.mrb[0].mxu0 %v2918
        %v5163 = vpop.f32.mrb[0].mxu0
        %v5164 = vadd.f32 0.0, %v5163
        %v5165 = vpop.f32.mrb[0].mxu0
        %v5166 = vadd.f32 0.0, %v5165
        %v5167 = vpop.f32.mrb[0].mxu0
        %v5168 = vadd.f32 0.0, %v5167
        %v5169 = vpop.f32.mrb[0].mxu0
        %v5170 = vadd.f32 0.0, %v5169
        %5171 = vmatprep.mubr.bf16.mxu0 0
        %5172 = vmatmul.mubr.bf16.gmra.mrb[0].mxu0 %v2919
        %v5173 = vpop.f32.mrb[0].mxu0
        %v5174 = vadd.f32 0.0, %v5173
        %v5175 = vpop.f32.mrb[0].mxu0
        %v5176 = vadd.f32 0.0, %v5175
        %v5177 = vpop.f32.mrb[0].mxu0
        %v5178 = vadd.f32 0.0, %v5177
        %v5179 = vpop.f32.mrb[0].mxu0
        %v5180 = vadd.f32 0.0, %v5179
        %5181 = vmatprep.mubr.bf16.mxu0 0
        %5182 = vmatmul.mubr.bf16.gmra.mrb[0].mxu0 %v2920
        %v5183 = vpop.f32.mrb[0].mxu0
        %v5184 = vadd.f32 0.0, %v5183
        %v5185 = vpop.f32.mrb[0].mxu0
        %v5186 = vadd.f32 0.0, %v5185
        %v5187 = vpop.f32.mrb[0].mxu0
        %v5188 = vadd.f32 0.0, %v5187
        %v5189 = vpop.f32.mrb[0].mxu0
        %v5190 = vadd.f32 0.0, %v5189
        %5191 = vmatprep.mubr.bf16.mxu0 0
        %5192 = vmatmul.mubr.bf16.gmra.mrb[0].mxu0 %v2921
        %v5193 = vpop.f32.mrb[0].mxu0
        %v5194 = vadd.f32 0.0, %v5193
        %v5195 = vpop.f32.mrb[0].mxu0
        %v5196 = vadd.f32 0.0, %v5195
        %v5197 = vpop.f32.mrb[0].mxu0
        %v5198 = vadd.f32 0.0, %v5197
        %v5199 = vpop.f32.mrb[0].mxu0
        %v5200 = vadd.f32 0.0, %v5199
        %5201 = vmatprep.mubr.bf16.mxu0 0
        %5202 = vmatmul.mubr.bf16.gmra.mrb[0].mxu0 %v2922
        %v5203 = vpop.f32.mrb[0].mxu0
        %v5204 = vadd.f32 0.0, %v5203
        %v5205 = vpop.f32.mrb[0].mxu0
        %v5206 = vadd.f32 0.0, %v5205
        %v5207 = vpop.f32.mrb[0].mxu0
        %v5208 = vadd.f32 0.0, %v5207
        %v5209 = vpop.f32.mrb[0].mxu0
        %v5210 = vadd.f32 0.0, %v5209
        %5211 = vmatprep.mubr.bf16.mxu0 0
        %5212 = vmatmul.mubr.bf16.gmra.mrb[0].mxu0 %v2923
        %v5213 = vpop.f32.mrb[0].mxu0
        %v5214 = vadd.f32 0.0, %v5213
        %v5215 = vpop.f32.mrb[0].mxu0
        %v5216 = vadd.f32 0.0, %v5215
        %v5217 = vpop.f32.mrb[0].mxu0
        %v5218 = vadd.f32 0.0, %v5217
        %v5219 = vpop.f32.mrb[0].mxu0
        %v5220 = vadd.f32 0.0, %v5219
        %5221 = vmatprep.mubr.bf16.mxu0 0
        %5222 = vmatmul.mubr.bf16.gmra.mrb[0].mxu0 %v2924
        %v5223 = vpop.f32.mrb[0].mxu0
        %v5224 = vadd.f32 0.0, %v5223
        %v5225 = vpop.f32.mrb[0].mxu0
        %v5226 = vadd.f32 0.0, %v5225
        %v5227 = vpop.f32.mrb[0].mxu0
        %v5228 = vadd.f32 0.0, %v5227
        %v5229 = vpop.f32.mrb[0].mxu0
        %v5230 = vadd.f32 0.0, %v5229
        %5231 = vmatprep.mubr.bf16.mxu0 0
        %5232 = vmatmul.mubr.bf16.gmra.mrb[0].mxu0 %v2925
        %v5233 = vpop.f32.mrb[0].mxu0
        %v5234 = vadd.f32 0.0, %v5233
        %v5235 = vpop.f32.mrb[0].mxu0
        %v5236 = vadd.f32 0.0, %v5235
        %v5237 = vpop.f32.mrb[0].mxu0
        %v5238 = vadd.f32 0.0, %v5237
        %v5239 = vpop.f32.mrb[0].mxu0
        %v5240 = vadd.f32 0.0, %v5239
        %5241 = vmatprep.mubr.bf16.mxu0 0
        %5242 = vmatmul.mubr.bf16.gmra.mrb[0].mxu0 %v2926
        %v5243 = vpop.f32.mrb[0].mxu0
        %v5244 = vadd.f32 0.0, %v5243
        %v5245 = vpop.f32.mrb[0].mxu0
        %v5246 = vadd.f32 0.0, %v5245
        %v5247 = vpop.f32.mrb[0].mxu0
        %v5248 = vadd.f32 0.0, %v5247
        %v5249 = vpop.f32.mrb[0].mxu0
        %v5250 = vadd.f32 0.0, %v5249
        %5251 = vmatprep.mubr.bf16.mxu0 0
        %5252 = vmatmul.mubr.bf16.gmra.mrb[0].mxu0 %v2927
        %v5253 = vpop.f32.mrb[0].mxu0
        %v5254 = vadd.f32 0.0, %v5253
        %v5255 = vpop.f32.mrb[0].mxu0
        %v5256 = vadd.f32 0.0, %v5255
        %v5257 = vpop.f32.mrb[0].mxu0
        %v5258 = vadd.f32 0.0, %v5257
        %v5259 = vpop.f32.mrb[0].mxu0
        %v5260 = vadd.f32 0.0, %v5259
        %5261 = vmatprep.mubr.bf16.mxu0 0
        %5262 = vmatmul.mubr.bf16.gmra.mrb[0].mxu0 %v2928
        %v5263 = vpop.f32.mrb[0].mxu0
        %v5264 = vadd.f32 0.0, %v5263
        %v5265 = vpop.f32.mrb[0].mxu0
        %v5266 = vadd.f32 0.0, %v5265
        %v5267 = vpop.f32.mrb[0].mxu0
        %v5268 = vadd.f32 0.0, %v5267
        %v5269 = vpop.f32.mrb[0].mxu0
        %v5270 = vadd.f32 0.0, %v5269
        %5271 = vmatprep.mubr.bf16.mxu0 0
        %5272 = vmatmul.mubr.bf16.gmra.mrb[0].mxu0 %v2929
        %v5273 = vpop.f32.mrb[0].mxu0
        %v5274 = vadd.f32 0.0, %v5273
        %v5275 = vpop.f32.mrb[0].mxu0
        %v5276 = vadd.f32 0.0, %v5275
        %v5277 = vpop.f32.mrb[0].mxu0
        %v5278 = vadd.f32 0.0, %v5277
        %v5279 = vpop.f32.mrb[0].mxu0
        %v5280 = vadd.f32 0.0, %v5279
        %5281 = vmatprep.mubr.bf16.mxu0 0
        %5282 = vmatmul.mubr.bf16.gmra.mrb[0].mxu0 %v2930
        %v5283 = vpop.f32.mrb[0].mxu0
        %v5284 = vadd.f32 0.0, %v5283
        %v5285 = vpop.f32.mrb[0].mxu0
        %v5286 = vadd.f32 0.0, %v5285
        %v5287 = vpop.f32.mrb[0].mxu0
        %v5288 = vadd.f32 0.0, %v5287
        %v5289 = vpop.f32.mrb[0].mxu0
        %v5290 = vadd.f32 0.0, %v5289
        %5291 = vmatprep.mubr.bf16.mxu0 0
        %5292 = vmatmul.mubr.bf16.gmra.mrb[0].mxu0 %v2931
        %v5293 = vpop.f32.mrb[0].mxu0
        %v5294 = vadd.f32 0.0, %v5293
        %v5295 = vpop.f32.mrb[0].mxu0
        %v5296 = vadd.f32 0.0, %v5295
        %v5297 = vpop.f32.mrb[0].mxu0
        %v5298 = vadd.f32 0.0, %v5297
        %v5299 = vpop.f32.mrb[0].mxu0
        %v5300 = vadd.f32 0.0, %v5299
        %5301 = vmatprep.mubr.bf16.mxu0 0
        %5302 = vmatmul.mubr.bf16.gmra.mrb[0].mxu0 %v2932
        %v5303 = vpop.f32.mrb[0].mxu0
        %v5304 = vadd.f32 0.0, %v5303
        %v5305 = vpop.f32.mrb[0].mxu0
        %v5306 = vadd.f32 0.0, %v5305
        %v5307 = vpop.f32.mrb[0].mxu0
        %v5308 = vadd.f32 0.0, %v5307
        %v5309 = vpop.f32.mrb[0].mxu0
        %v5310 = vadd.f32 0.0, %v5309
        %5311 = vmatprep.mubr.bf16.mxu0 0
        %5312 = vmatmul.mubr.bf16.gmra.mrb[0].mxu0 %v2933
        %v5313 = vpop.f32.mrb[0].mxu0
        %v5314 = vadd.f32 0.0, %v5313
        %v5315 = vpop.f32.mrb[0].mxu0
        %v5316 = vadd.f32 0.0, %v5315
        %v5317 = vpop.f32.mrb[0].mxu0
        %v5318 = vadd.f32 0.0, %v5317
        %v5319 = vpop.f32.mrb[0].mxu0
        %v5320 = vadd.f32 0.0, %v5319
        %5321 = vmatprep.mubr.bf16.mxu0 0
        %5322 = vmatmul.mubr.bf16.gmra.mrb[0].mxu0 %v2934
        %v5323 = vpop.f32.mrb[0].mxu0
        %v5324 = vadd.f32 0.0, %v5323
        %v5325 = vpop.f32.mrb[0].mxu0
        %v5326 = vadd.f32 0.0, %v5325
        %v5327 = vpop.f32.mrb[0].mxu0
        %v5328 = vadd.f32 0.0, %v5327
        %v5329 = vpop.f32.mrb[0].mxu0
        %v5330 = vadd.f32 0.0, %v5329
        %5331 = vmatprep.mubr.bf16.mxu0 0
        %5332 = vmatmul.mubr.bf16.gmra.mrb[0].mxu0 %v2935
        %v5333 = vpop.f32.mrb[0].mxu0
        %v5334 = vadd.f32 0.0, %v5333
        %v5335 = vpop.f32.mrb[0].mxu0
        %v5336 = vadd.f32 0.0, %v5335
        %v5337 = vpop.f32.mrb[0].mxu0
        %v5338 = vadd.f32 0.0, %v5337
        %v5339 = vpop.f32.mrb[0].mxu0
        %v5340 = vadd.f32 0.0, %v5339
        %5341 = vmatprep.mubr.bf16.mxu0 0
        %5342 = vmatmul.mubr.bf16.gmra.mrb[0].mxu0 %v2936
        %v5343 = vpop.f32.mrb[0].mxu0
        %v5344 = vadd.f32 0.0, %v5343
        %v5345 = vpop.f32.mrb[0].mxu0
        %v5346 = vadd.f32 0.0, %v5345
        %v5347 = vpop.f32.mrb[0].mxu0
        %v5348 = vadd.f32 0.0, %v5347
        %v5349 = vpop.f32.mrb[0].mxu0
        %v5350 = vadd.f32 0.0, %v5349
        %5351 = vmatprep.mubr.bf16.mxu0 0
        %5352 = vmatmul.mubr.bf16.gmra.mrb[0].mxu0 %v2937
        %v5353 = vpop.f32.mrb[0].mxu0
        %v5354 = vadd.f32 0.0, %v5353
        %v5355 = vpop.f32.mrb[0].mxu0
        %v5356 = vadd.f32 0.0, %v5355
        %v5357 = vpop.f32.mrb[0].mxu0
        %v5358 = vadd.f32 0.0, %v5357
        %v5359 = vpop.f32.mrb[0].mxu0
        %v5360 = vadd.f32 0.0, %v5359
        %5361 = vmatprep.mubr.bf16.mxu0 0
        %5362 = vmatmul.mubr.bf16.gmra.mrb[0].mxu0 %v2938
        %v5363 = vpop.f32.mrb[0].mxu0
        %v5364 = vadd.f32 0.0, %v5363
        %v5365 = vpop.f32.mrb[0].mxu0
        %v5366 = vadd.f32 0.0, %v5365
        %v5367 = vpop.f32.mrb[0].mxu0
        %v5368 = vadd.f32 0.0, %v5367
        %v5369 = vpop.f32.mrb[0].mxu0
        %v5370 = vadd.f32 0.0, %v5369
        %5371 = vmatprep.mubr.bf16.mxu0 0
        %5372 = vmatmul.mubr.bf16.gmra.mrb[0].mxu0 %v2939
        %v5373 = vpop.f32.mrb[0].mxu0
        %v5374 = vadd.f32 0.0, %v5373
        %v5375 = vpop.f32.mrb[0].mxu0
        %v5376 = vadd.f32 0.0, %v5375
        %v5377 = vpop.f32.mrb[0].mxu0
        %v5378 = vadd.f32 0.0, %v5377
        %v5379 = vpop.f32.mrb[0].mxu0
        %v5380 = vadd.f32 0.0, %v5379
        %5381 = vmatprep.mubr.bf16.mxu0 0
        %5382 = vmatmul.mubr.bf16.gmra.mrb[0].mxu0 %v2940
        %v5383 = vpop.f32.mrb[0].mxu0
        %v5384 = vadd.f32 0.0, %v5383
        %v5385 = vpop.f32.mrb[0].mxu0
        %v5386 = vadd.f32 0.0, %v5385
        %v5387 = vpop.f32.mrb[0].mxu0
        %v5388 = vadd.f32 0.0, %v5387
        %v5389 = vpop.f32.mrb[0].mxu0
        %v5390 = vadd.f32 0.0, %v5389
        %5391 = vmatprep.mubr.bf16.mxu0 0
        %5392 = vmatmul.mubr.bf16.gmra.mrb[0].mxu0 %v2941
        %v5393 = vpop.f32.mrb[0].mxu0
        %v5394 = vadd.f32 0.0, %v5393
        %v5395 = vpop.f32.mrb[0].mxu0
        %v5396 = vadd.f32 0.0, %v5395
        %v5397 = vpop.f32.mrb[0].mxu0
        %v5398 = vadd.f32 0.0, %v5397
        %v5399 = vpop.f32.mrb[0].mxu0
        %v5400 = vadd.f32 0.0, %v5399
        %5401 = vmatprep.mubr.bf16.mxu0 0
        %5402 = vmatmul.mubr.bf16.gmra.mrb[0].mxu0 %v2942
        %v5403 = vpop.f32.mrb[0].mxu0
        %v5404 = vadd.f32 0.0, %v5403
        %v5405 = vpop.f32.mrb[0].mxu0
        %v5406 = vadd.f32 0.0, %v5405
        %v5407 = vpop.f32.mrb[0].mxu0
        %v5408 = vadd.f32 0.0, %v5407
        %v5409 = vpop.f32.mrb[0].mxu0
        %v5410 = vadd.f32 0.0, %v5409
        %5411 = vmatprep.mubr.bf16.mxu0 0
        %5412 = vmatmul.mubr.bf16.gmra.mrb[0].mxu0 %v2943
        %v5413 = vpop.f32.mrb[0].mxu0
        %v5414 = vadd.f32 0.0, %v5413
        %v5415 = vpop.f32.mrb[0].mxu0
        %v5416 = vadd.f32 0.0, %v5415
        %v5417 = vpop.f32.mrb[0].mxu0
        %v5418 = vadd.f32 0.0, %v5417
        %v5419 = vpop.f32.mrb[0].mxu0
        %v5420 = vadd.f32 0.0, %v5419
        %5421 = vmatprep.mubr.bf16.mxu0 0
        %5422 = vmatmul.mubr.bf16.gmra.mrb[0].mxu0 %v2944
        %v5423 = vpop.f32.mrb[0].mxu0
        %v5424 = vadd.f32 0.0, %v5423
        %v5425 = vpop.f32.mrb[0].mxu0
        %v5426 = vadd.f32 0.0, %v5425
        %v5427 = vpop.f32.mrb[0].mxu0
        %v5428 = vadd.f32 0.0, %v5427
        %v5429 = vpop.f32.mrb[0].mxu0
        %v5430 = vadd.f32 0.0, %v5429
        %5431 = vmatprep.mubr.bf16.mxu0 0
        %5432 = vmatmul.mubr.bf16.gmra.mrb[0].mxu0 %v2945
        %v5433 = vpop.f32.mrb[0].mxu0
        %v5434 = vadd.f32 0.0, %v5433
        %v5435 = vpop.f32.mrb[0].mxu0
        %v5436 = vadd.f32 0.0, %v5435
        %v5437 = vpop.f32.mrb[0].mxu0
        %v5438 = vadd.f32 0.0, %v5437
        %v5439 = vpop.f32.mrb[0].mxu0
        %v5440 = vadd.f32 0.0, %v5439
        %5441 = vmatprep.mubr.bf16.mxu0 0
        %5442 = vmatmul.mubr.bf16.gmra.mrb[0].mxu0 %v2946
        %v5443 = vpop.f32.mrb[0].mxu0
        %v5444 = vadd.f32 0.0, %v5443
        %v5445 = vpop.f32.mrb[0].mxu0
        %v5446 = vadd.f32 0.0, %v5445
        %v5447 = vpop.f32.mrb[0].mxu0
        %v5448 = vadd.f32 0.0, %v5447
        %v5449 = vpop.f32.mrb[0].mxu0
        %v5450 = vadd.f32 0.0, %v5449
        %5451 = vmatprep.mubr.bf16.mxu0 0
        %5452 = vmatmul.mubr.bf16.gmra.mrb[0].mxu0 %v2947
        %v5453 = vpop.f32.mrb[0].mxu0
        %v5454 = vadd.f32 0.0, %v5453
        %v5455 = vpop.f32.mrb[0].mxu0
        %v5456 = vadd.f32 0.0, %v5455
        %v5457 = vpop.f32.mrb[0].mxu0
        %v5458 = vadd.f32 0.0, %v5457
        %v5459 = vpop.f32.mrb[0].mxu0
        %v5460 = vadd.f32 0.0, %v5459
        %5461 = vmatprep.mubr.bf16.mxu0 0
        %5462 = vmatmul.mubr.bf16.gmra.mrb[0].mxu0 %v2948
        %v5463 = vpop.f32.mrb[0].mxu0
        %v5464 = vadd.f32 0.0, %v5463
        %v5465 = vpop.f32.mrb[0].mxu0
        %v5466 = vadd.f32 0.0, %v5465
        %v5467 = vpop.f32.mrb[0].mxu0
        %v5468 = vadd.f32 0.0, %v5467
        %v5469 = vpop.f32.mrb[0].mxu0
        %v5470 = vadd.f32 0.0, %v5469
        %5471 = vmatprep.mubr.bf16.mxu0 0
        %5472 = vmatmul.mubr.bf16.gmra.mrb[0].mxu0 %v2949
        %v5473 = vpop.f32.mrb[0].mxu0
        %v5474 = vadd.f32 0.0, %v5473
        %v5475 = vpop.f32.mrb[0].mxu0
        %v5476 = vadd.f32 0.0, %v5475
        %v5477 = vpop.f32.mrb[0].mxu0
        %v5478 = vadd.f32 0.0, %v5477
        %v5479 = vpop.f32.mrb[0].mxu0
        %v5480 = vadd.f32 0.0, %v5479
        %5481 = vmatprep.mubr.bf16.mxu0 0
        %5482 = vmatmul.mubr.bf16.gmra.mrb[0].mxu0 %v2950
        %v5483 = vpop.f32.mrb[0].mxu0
        %v5484 = vadd.f32 0.0, %v5483
        %v5485 = vpop.f32.mrb[0].mxu0
        %v5486 = vadd.f32 0.0, %v5485
        %v5487 = vpop.f32.mrb[0].mxu0
        %v5488 = vadd.f32 0.0, %v5487
        %v5489 = vpop.f32.mrb[0].mxu0
        %v5490 = vadd.f32 0.0, %v5489
        %5491 = vmatprep.mubr.bf16.mxu0 0
        %5492 = vmatmul.mubr.bf16.gmra.mrb[0].mxu0 %v2951
        %v5493 = vpop.f32.mrb[0].mxu0
        %v5494 = vadd.f32 0.0, %v5493
        %v5495 = vpop.f32.mrb[0].mxu0
        %v5496 = vadd.f32 0.0, %v5495
        %v5497 = vpop.f32.mrb[0].mxu0
        %v5498 = vadd.f32 0.0, %v5497
        %v5499 = vpop.f32.mrb[0].mxu0
        %v5500 = vadd.f32 0.0, %v5499
        %5501 = vmatprep.mubr.bf16.mxu0 0
        %5502 = vmatmul.mubr.bf16.gmra.mrb[0].mxu0 %v2952
        %v5503 = vpop.f32.mrb[0].mxu0
        %v5504 = vadd.f32 0.0, %v5503
        %v5505 = vpop.f32.mrb[0].mxu0
        %v5506 = vadd.f32 0.0, %v5505
        %v5507 = vpop.f32.mrb[0].mxu0
        %v5508 = vadd.f32 0.0, %v5507
        %v5509 = vpop.f32.mrb[0].mxu0
        %v5510 = vadd.f32 0.0, %v5509
        %5511 = vmatprep.mubr.bf16.mxu0 0
        %5512 = vmatmul.mubr.bf16.gmra.mrb[0].mxu0 %v2953
        %v5513 = vpop.f32.mrb[0].mxu0
        %v5514 = vadd.f32 0.0, %v5513
        %v5515 = vpop.f32.mrb[0].mxu0
        %v5516 = vadd.f32 0.0, %v5515
        %v5517 = vpop.f32.mrb[0].mxu0
        %v5518 = vadd.f32 0.0, %v5517
        %v5519 = vpop.f32.mrb[0].mxu0
        %v5520 = vadd.f32 0.0, %v5519
        %5521 = vmatprep.mubr.bf16.mxu0 0
        %5522 = vmatmul.mubr.bf16.gmra.mrb[0].mxu0 %v2954
        %v5523 = vpop.f32.mrb[0].mxu0
        %v5524 = vadd.f32 0.0, %v5523
        %v5525 = vpop.f32.mrb[0].mxu0
        %v5526 = vadd.f32 0.0, %v5525
        %v5527 = vpop.f32.mrb[0].mxu0
        %v5528 = vadd.f32 0.0, %v5527
        %v5529 = vpop.f32.mrb[0].mxu0
        %v5530 = vadd.f32 0.0, %v5529
        %5531 = vmatprep.mubr.bf16.mxu0 0
        %5532 = vmatmul.mubr.bf16.gmra.mrb[0].mxu0 %v2955
        %v5533 = vpop.f32.mrb[0].mxu0
        %v5534 = vadd.f32 0.0, %v5533
        %v5535 = vpop.f32.mrb[0].mxu0
        %v5536 = vadd.f32 0.0, %v5535
        %v5537 = vpop.f32.mrb[0].mxu0
        %v5538 = vadd.f32 0.0, %v5537
        %v5539 = vpop.f32.mrb[0].mxu0
        %v5540 = vadd.f32 0.0, %v5539
        %5541 = vmatprep.mubr.bf16.mxu0 0
        %5542 = vmatmul.mubr.bf16.gmra.mrb[0].mxu0 %v2956
        %v5543 = vpop.f32.mrb[0].mxu0
        %v5544 = vadd.f32 0.0, %v5543
        %v5545 = vpop.f32.mrb[0].mxu0
        %v5546 = vadd.f32 0.0, %v5545
        %v5547 = vpop.f32.mrb[0].mxu0
        %v5548 = vadd.f32 0.0, %v5547
        %v5549 = vpop.f32.mrb[0].mxu0
        %v5550 = vadd.f32 0.0, %v5549
        %5551 = vmatprep.mubr.bf16.mxu0 0
        %5552 = vmatmul.mubr.bf16.gmra.mrb[0].mxu0 %v2957
        %v5553 = vpop.f32.mrb[0].mxu0
        %v5554 = vadd.f32 0.0, %v5553
        %v5555 = vpop.f32.mrb[0].mxu0
        %v5556 = vadd.f32 0.0, %v5555
        %v5557 = vpop.f32.mrb[0].mxu0
        %v5558 = vadd.f32 0.0, %v5557
        %v5559 = vpop.f32.mrb[0].mxu0
        %v5560 = vadd.f32 0.0, %v5559
        %5561 = vmatprep.mubr.bf16.mxu0 0
        %5562 = vmatmul.mubr.bf16.gmra.mrb[0].mxu0 %v2958
        %v5563 = vpop.f32.mrb[0].mxu0
        %v5564 = vadd.f32 0.0, %v5563
        %v5565 = vpop.f32.mrb[0].mxu0
        %v5566 = vadd.f32 0.0, %v5565
        %v5567 = vpop.f32.mrb[0].mxu0
        %v5568 = vadd.f32 0.0, %v5567
        %v5569 = vpop.f32.mrb[0].mxu0
        %v5570 = vadd.f32 0.0, %v5569
        %5571 = vmatprep.mubr.bf16.mxu0 0
        %5572 = vmatmul.mubr.bf16.gmra.mrb[0].mxu0 %v2959
        %v5573 = vpop.f32.mrb[0].mxu0
        %v5574 = vadd.f32 0.0, %v5573
        %v5575 = vpop.f32.mrb[0].mxu0
        %v5576 = vadd.f32 0.0, %v5575
        %v5577 = vpop.f32.mrb[0].mxu0
        %v5578 = vadd.f32 0.0, %v5577
        %v5579 = vpop.f32.mrb[0].mxu0
        %v5580 = vadd.f32 0.0, %v5579
        %5581 = vmatprep.mubr.bf16.mxu0 0
        %5582 = vmatmul.mubr.bf16.gmra.mrb[0].mxu0 %v2960
        %v5583 = vpop.f32.mrb[0].mxu0
        %v5584 = vadd.f32 0.0, %v5583
        %v5585 = vpop.f32.mrb[0].mxu0
        %v5586 = vadd.f32 0.0, %v5585
        %v5587 = vpop.f32.mrb[0].mxu0
        %v5588 = vadd.f32 0.0, %v5587
        %v5589 = vpop.f32.mrb[0].mxu0
        %v5590 = vadd.f32 0.0, %v5589
        %5591 = vmatprep.mubr.bf16.mxu0 0
        %5592 = vmatmul.mubr.bf16.gmra.mrb[0].mxu0 %v2961
        %v5593 = vpop.f32.mrb[0].mxu0
        %v5594 = vadd.f32 0.0, %v5593
        %v5595 = vpop.f32.mrb[0].mxu0
        %v5596 = vadd.f32 0.0, %v5595
        %v5597 = vpop.f32.mrb[0].mxu0
        %v5598 = vadd.f32 0.0, %v5597
        %v5599 = vpop.f32.mrb[0].mxu0
        %v5600 = vadd.f32 0.0, %v5599
        %5601 = vmatprep.mubr.bf16.mxu0 0
        %5602 = vmatmul.mubr.bf16.gmra.mrb[0].mxu0 %v2962
        %v5603 = vpop.f32.mrb[0].mxu0
        %v5604 = vadd.f32 0.0, %v5603
        %v5605 = vpop.f32.mrb[0].mxu0
        %v5606 = vadd.f32 0.0, %v5605
        %v5607 = vpop.f32.mrb[0].mxu0
        %v5608 = vadd.f32 0.0, %v5607
        %v5609 = vpop.f32.mrb[0].mxu0
        %v5610 = vadd.f32 0.0, %v5609
        %5611 = vmatprep.mubr.bf16.mxu0 0
        %5612 = vmatmul.mubr.bf16.gmra.mrb[0].mxu0 %v2963
        %v5613 = vpop.f32.mrb[0].mxu0
        %v5614 = vadd.f32 0.0, %v5613
        %v5615 = vpop.f32.mrb[0].mxu0
        %v5616 = vadd.f32 0.0, %v5615
        %v5617 = vpop.f32.mrb[0].mxu0
        %v5618 = vadd.f32 0.0, %v5617
        %v5619 = vpop.f32.mrb[0].mxu0
        %v5620 = vadd.f32 0.0, %v5619
        %5621 = vmatprep.mubr.bf16.mxu0 0
        %5622 = vmatmul.mubr.bf16.gmra.mrb[0].mxu0 %v2964
        %v5623 = vpop.f32.mrb[0].mxu0
        %v5624 = vadd.f32 0.0, %v5623
        %v5625 = vpop.f32.mrb[0].mxu0
        %v5626 = vadd.f32 0.0, %v5625
        %v5627 = vpop.f32.mrb[0].mxu0
        %v5628 = vadd.f32 0.0, %v5627
        %v5629 = vpop.f32.mrb[0].mxu0
        %v5630 = vadd.f32 0.0, %v5629
        %5631 = vmatprep.mubr.bf16.mxu0 0
        %5632 = vmatmul.mubr.bf16.gmra.mrb[0].mxu0 %v2965
        %v5633 = vpop.f32.mrb[0].mxu0
        %v5634 = vadd.f32 0.0, %v5633
        %v5635 = vpop.f32.mrb[0].mxu0
        %v5636 = vadd.f32 0.0, %v5635
        %v5637 = vpop.f32.mrb[0].mxu0
        %v5638 = vadd.f32 0.0, %v5637
        %v5639 = vpop.f32.mrb[0].mxu0
        %v5640 = vadd.f32 0.0, %v5639
        %5641 = vmatprep.mubr.bf16.mxu0 0
        %5642 = vmatmul.mubr.bf16.gmra.mrb[0].mxu0 %v2966
        %v5643 = vpop.f32.mrb[0].mxu0
        %v5644 = vadd.f32 0.0, %v5643
        %v5645 = vpop.f32.mrb[0].mxu0
        %v5646 = vadd.f32 0.0, %v5645
        %v5647 = vpop.f32.mrb[0].mxu0
        %v5648 = vadd.f32 0.0, %v5647
        %v5649 = vpop.f32.mrb[0].mxu0
        %v5650 = vadd.f32 0.0, %v5649
        %5651 = vmatprep.mubr.bf16.mxu0 0
        %5652 = vmatmul.mubr.bf16.gmra.mrb[0].mxu0 %v2967
        %v5653 = vpop.f32.mrb[0].mxu0
        %v5654 = vadd.f32 0.0, %v5653
        %v5655 = vpop.f32.mrb[0].mxu0
        %v5656 = vadd.f32 0.0, %v5655
        %v5657 = vpop.f32.mrb[0].mxu0
        %v5658 = vadd.f32 0.0, %v5657
        %v5659 = vpop.f32.mrb[0].mxu0
        %v5660 = vadd.f32 0.0, %v5659
        %5661 = vmatprep.mubr.bf16.mxu0 0
        %5662 = vmatmul.mubr.bf16.gmra.mrb[0].mxu0 %v2968
        %v5663 = vpop.f32.mrb[0].mxu0
        %v5664 = vadd.f32 0.0, %v5663
        %v5665 = vpop.f32.mrb[0].mxu0
        %v5666 = vadd.f32 0.0, %v5665
        %v5667 = vpop.f32.mrb[0].mxu0
        %v5668 = vadd.f32 0.0, %v5667
        %v5669 = vpop.f32.mrb[0].mxu0
        %v5670 = vadd.f32 0.0, %v5669
        %5671 = vmatprep.mubr.bf16.mxu0 0
        %5672 = vmatmul.mubr.bf16.gmra.mrb[0].mxu0 %v2969
        %v5673 = vpop.f32.mrb[0].mxu0
        %v5674 = vadd.f32 0.0, %v5673
        %v5675 = vpop.f32.mrb[0].mxu0
        %v5676 = vadd.f32 0.0, %v5675
        %v5677 = vpop.f32.mrb[0].mxu0
        %v5678 = vadd.f32 0.0, %v5677
        %v5679 = vpop.f32.mrb[0].mxu0
        %v5680 = vadd.f32 0.0, %v5679
        %5681 = vmatprep.mubr.bf16.mxu0 0
        %5682 = vmatmul.mubr.bf16.gmra.mrb[0].mxu0 %v2970
        %v5683 = vpop.f32.mrb[0].mxu0
        %v5684 = vadd.f32 0.0, %v5683
        %v5685 = vpop.f32.mrb[0].mxu0
        %v5686 = vadd.f32 0.0, %v5685
        %v5687 = vpop.f32.mrb[0].mxu0
        %v5688 = vadd.f32 0.0, %v5687
        %v5689 = vpop.f32.mrb[0].mxu0
        %v5690 = vadd.f32 0.0, %v5689
        %5691 = vmatprep.mubr.bf16.mxu0 0
        %5692 = vmatmul.mubr.bf16.gmra.mrb[0].mxu0 %v2971
        %v5693 = vpop.f32.mrb[0].mxu0
        %v5694 = vadd.f32 0.0, %v5693
        %v5695 = vpop.f32.mrb[0].mxu0
        %v5696 = vadd.f32 0.0, %v5695
        %v5697 = vpop.f32.mrb[0].mxu0
        %v5698 = vadd.f32 0.0, %v5697
        %v5699 = vpop.f32.mrb[0].mxu0
        %v5700 = vadd.f32 0.0, %v5699
        %5701 = vmatprep.mubr.bf16.mxu0 0
        %5702 = vmatmul.mubr.bf16.gmra.mrb[0].mxu0 %v2972
        %v5703 = vpop.f32.mrb[0].mxu0
        %v5704 = vadd.f32 0.0, %v5703
        %v5705 = vpop.f32.mrb[0].mxu0
        %v5706 = vadd.f32 0.0, %v5705
        %v5707 = vpop.f32.mrb[0].mxu0
        %v5708 = vadd.f32 0.0, %v5707
        %v5709 = vpop.f32.mrb[0].mxu0
        %v5710 = vadd.f32 0.0, %v5709
        %5711 = vmatprep.mubr.bf16.mxu0 0
        %5712 = vmatmul.mubr.bf16.gmra.mrb[0].mxu0 %v2973
        %v5713 = vpop.f32.mrb[0].mxu0
        %v5714 = vadd.f32 0.0, %v5713
        %v5715 = vpop.f32.mrb[0].mxu0
        %v5716 = vadd.f32 0.0, %v5715
        %v5717 = vpop.f32.mrb[0].mxu0
        %v5718 = vadd.f32 0.0, %v5717
        %v5719 = vpop.f32.mrb[0].mxu0
        %v5720 = vadd.f32 0.0, %v5719
        %5721 = vmatprep.mubr.bf16.mxu0 0
        %5722 = vmatmul.mubr.bf16.gmra.mrb[0].mxu0 %v2974
        %v5723 = vpop.f32.mrb[0].mxu0
        %v5724 = vadd.f32 0.0, %v5723
        %v5725 = vpop.f32.mrb[0].mxu0
        %v5726 = vadd.f32 0.0, %v5725
        %v5727 = vpop.f32.mrb[0].mxu0
        %v5728 = vadd.f32 0.0, %v5727
        %v5729 = vpop.f32.mrb[0].mxu0
        %v5730 = vadd.f32 0.0, %v5729
        %5731 = vmatprep.mubr.bf16.mxu0 0
        %5732 = vmatmul.mubr.bf16.gmra.mrb[0].mxu0 %v2975
        %v5733 = vpop.f32.mrb[0].mxu0
        %v5734 = vadd.f32 0.0, %v5733
        %v5735 = vpop.f32.mrb[0].mxu0
        %v5736 = vadd.f32 0.0, %v5735
        %v5737 = vpop.f32.mrb[0].mxu0
        %v5738 = vadd.f32 0.0, %v5737
        %v5739 = vpop.f32.mrb[0].mxu0
        %v5740 = vadd.f32 0.0, %v5739
        %5741 = vmatprep.mubr.bf16.mxu0 0
        %5742 = vmatmul.mubr.bf16.gmra.mrb[0].mxu0 %v2976
        %v5743 = vpop.f32.mrb[0].mxu0
        %v5744 = vadd.f32 0.0, %v5743
        %v5745 = vpop.f32.mrb[0].mxu0
        %v5746 = vadd.f32 0.0, %v5745
        %v5747 = vpop.f32.mrb[0].mxu0
        %v5748 = vadd.f32 0.0, %v5747
        %v5749 = vpop.f32.mrb[0].mxu0
        %v5750 = vadd.f32 0.0, %v5749
        %5751 = vmatprep.mubr.bf16.mxu0 0
        %5752 = vmatmul.mubr.bf16.gmra.mrb[0].mxu0 %v2977
        %v5753 = vpop.f32.mrb[0].mxu0
        %v5754 = vadd.f32 0.0, %v5753
        %v5755 = vpop.f32.mrb[0].mxu0
        %v5756 = vadd.f32 0.0, %v5755
        %v5757 = vpop.f32.mrb[0].mxu0
        %v5758 = vadd.f32 0.0, %v5757
        %v5759 = vpop.f32.mrb[0].mxu0
        %v5760 = vadd.f32 0.0, %v5759
        %5761 = vmatprep.mubr.bf16.mxu0 0
        %5762 = vmatmul.mubr.bf16.gmra.mrb[0].mxu0 %v2978
        %v5763 = vpop.f32.mrb[0].mxu0
        %v5764 = vadd.f32 0.0, %v5763
        %v5765 = vpop.f32.mrb[0].mxu0
        %v5766 = vadd.f32 0.0, %v5765
        %v5767 = vpop.f32.mrb[0].mxu0
        %v5768 = vadd.f32 0.0, %v5767
        %v5769 = vpop.f32.mrb[0].mxu0
        %v5770 = vadd.f32 0.0, %v5769
        %5771 = vmatprep.mubr.bf16.mxu0 0
        %5772 = vmatmul.mubr.bf16.gmra.mrb[0].mxu0 %v2979
        %v5773 = vpop.f32.mrb[0].mxu0
        %v5774 = vadd.f32 0.0, %v5773
        %v5775 = vpop.f32.mrb[0].mxu0
        %v5776 = vadd.f32 0.0, %v5775
        %v5777 = vpop.f32.mrb[0].mxu0
        %v5778 = vadd.f32 0.0, %v5777
        %v5779 = vpop.f32.mrb[0].mxu0
        %v5780 = vadd.f32 0.0, %v5779
        %5781 = vmatprep.mubr.bf16.mxu0 0
        %5782 = vmatmul.mubr.bf16.gmra.mrb[0].mxu0 %v2980
        %v5783 = vpop.f32.mrb[0].mxu0
        %v5784 = vadd.f32 0.0, %v5783
        %v5785 = vpop.f32.mrb[0].mxu0
        %v5786 = vadd.f32 0.0, %v5785
        %v5787 = vpop.f32.mrb[0].mxu0
        %v5788 = vadd.f32 0.0, %v5787
        %v5789 = vpop.f32.mrb[0].mxu0
        %v5790 = vadd.f32 0.0, %v5789
        %5791 = vmatprep.mubr.bf16.mxu0 0
        %5792 = vmatmul.mubr.bf16.gmra.mrb[0].mxu0 %v2981
        %v5793 = vpop.f32.mrb[0].mxu0
        %v5794 = vadd.f32 0.0, %v5793
        %v5795 = vpop.f32.mrb[0].mxu0
        %v5796 = vadd.f32 0.0, %v5795
        %v5797 = vpop.f32.mrb[0].mxu0
        %v5798 = vadd.f32 0.0, %v5797
        %v5799 = vpop.f32.mrb[0].mxu0
        %v5800 = vadd.f32 0.0, %v5799
        %5801 = vmatprep.mubr.bf16.mxu0 0
        %5802 = vmatmul.mubr.bf16.gmra.mrb[0].mxu0 %v2982
        %v5803 = vpop.f32.mrb[0].mxu0
        %v5804 = vadd.f32 0.0, %v5803
        %v5805 = vpop.f32.mrb[0].mxu0
        %v5806 = vadd.f32 0.0, %v5805
        %v5807 = vpop.f32.mrb[0].mxu0
        %v5808 = vadd.f32 0.0, %v5807
        %v5809 = vpop.f32.mrb[0].mxu0
        %v5810 = vadd.f32 0.0, %v5809
        %5811 = vmatprep.mubr.bf16.mxu0 0
        %5812 = vmatmul.mubr.bf16.gmra.mrb[0].mxu0 %v2983
        %v5813 = vpop.f32.mrb[0].mxu0
        %v5814 = vadd.f32 0.0, %v5813
        %v5815 = vpop.f32.mrb[0].mxu0
        %v5816 = vadd.f32 0.0, %v5815
        %v5817 = vpop.f32.mrb[0].mxu0
        %v5818 = vadd.f32 0.0, %v5817
        %v5819 = vpop.f32.mrb[0].mxu0
        %v5820 = vadd.f32 0.0, %v5819
        %5821 = vmatprep.mubr.bf16.mxu0 0
        %5822 = vmatmul.mubr.bf16.gmra.mrb[0].mxu0 %v2984
        %v5823 = vpop.f32.mrb[0].mxu0
        %v5824 = vadd.f32 0.0, %v5823
        %v5825 = vpop.f32.mrb[0].mxu0
        %v5826 = vadd.f32 0.0, %v5825
        %v5827 = vpop.f32.mrb[0].mxu0
        %v5828 = vadd.f32 0.0, %v5827
        %v5829 = vpop.f32.mrb[0].mxu0
        %v5830 = vadd.f32 0.0, %v5829
        %5831 = vmatprep.mubr.bf16.mxu0 0
        %5832 = vmatmul.mubr.bf16.gmra.mrb[0].mxu0 %v2985
        %v5833 = vpop.f32.mrb[0].mxu0
        %v5834 = vadd.f32 0.0, %v5833
        %v5835 = vpop.f32.mrb[0].mxu0
        %v5836 = vadd.f32 0.0, %v5835
        %v5837 = vpop.f32.mrb[0].mxu0
        %v5838 = vadd.f32 0.0, %v5837
        %v5839 = vpop.f32.mrb[0].mxu0
        %v5840 = vadd.f32 0.0, %v5839
        %5841 = vmatprep.mubr.bf16.mxu0 0
        %5842 = vmatmul.mubr.bf16.gmra.mrb[0].mxu0 %v2986
        %v5843 = vpop.f32.mrb[0].mxu0
        %v5844 = vadd.f32 0.0, %v5843
        %v5845 = vpop.f32.mrb[0].mxu0
        %v5846 = vadd.f32 0.0, %v5845
        %v5847 = vpop.f32.mrb[0].mxu0
        %v5848 = vadd.f32 0.0, %v5847
        %v5849 = vpop.f32.mrb[0].mxu0
        %v5850 = vadd.f32 0.0, %v5849
        %5851 = vmatprep.mubr.bf16.mxu0 0
        %5852 = vmatmul.mubr.bf16.gmra.mrb[0].mxu0 %v2987
        %v5853 = vpop.f32.mrb[0].mxu0
        %v5854 = vadd.f32 0.0, %v5853
        %v5855 = vpop.f32.mrb[0].mxu0
        %v5856 = vadd.f32 0.0, %v5855
        %v5857 = vpop.f32.mrb[0].mxu0
        %v5858 = vadd.f32 0.0, %v5857
        %v5859 = vpop.f32.mrb[0].mxu0
        %v5860 = vadd.f32 0.0, %v5859
        %5861 = vmatprep.mubr.bf16.mxu0 0
        %5862 = vmatmul.mubr.bf16.gmra.mrb[0].mxu0 %v2988
        %v5863 = vpop.f32.mrb[0].mxu0
        %v5864 = vadd.f32 0.0, %v5863
        %v5865 = vpop.f32.mrb[0].mxu0
        %v5866 = vadd.f32 0.0, %v5865
        %v5867 = vpop.f32.mrb[0].mxu0
        %v5868 = vadd.f32 0.0, %v5867
        %v5869 = vpop.f32.mrb[0].mxu0
        %v5870 = vadd.f32 0.0, %v5869
        %5871 = vdwg.mxu0
        %5872 = vmatprep.subr.bf16.mxu0 %v3252
        %5873 = vmatpush1.bf16.msra.mxu0 %v3251
        %5874 = vmatprep.subr.bf16.mxu0 %v3260
        %5875 = vmatpush1.bf16.msra.mxu0 %v3259
        %5876 = vmatprep.subr.bf16.mxu0 %v3268
        %5877 = vmatpush1.bf16.msra.mxu0 %v3267
        %5878 = vmatprep.subr.bf16.mxu0 %v3276
        %5879 = vmatpush1.bf16.msra.mxu0 %v3275
        %5880 = vmatprep.subr.bf16.mxu0 %v3284
        %5881 = vmatpush1.bf16.msra.mxu0 %v3283
        %5882 = vmatprep.subr.bf16.mxu0 %v3292
        %5883 = vmatpush1.bf16.msra.mxu0 %v3291
        %5884 = vmatprep.subr.bf16.mxu0 %v3300
        %5885 = vmatpush1.bf16.msra.mxu0 %v3299
        %5886 = vmatprep.subr.bf16.mxu0 %v3308
        %5887 = vmatpush1.bf16.msra.mxu0 %v3307
        %5888 = vmatprep.subr.bf16.mxu0 0
        %5889 = vmatpush1.bf16.msra.mxu0 0
        %5890 = vmatprep.subr.bf16.mxu0 0
        %5891 = vmatpush1.bf16.msra.mxu0 0
        %5892 = vmatprep.subr.bf16.mxu0 0
        %5893 = vmatpush1.bf16.msra.mxu0 0
        %5894 = vmatprep.subr.bf16.mxu0 0
        %5895 = vmatpush1.bf16.msra.mxu0 0
        %5896 = vmatprep.subr.bf16.mxu0 0
        %5897 = vmatpush1.bf16.msra.mxu0 0
        %5898 = vmatprep.subr.bf16.mxu0 0
        %5899 = vmatpush1.bf16.msra.mxu0 0
        %5900 = vmatprep.subr.bf16.mxu0 0
        %5901 = vmatpush1.bf16.msra.mxu0 0
        %5902 = vmatprep.subr.bf16.mxu0 0
        %5903 = vmatpush1.bf16.msra.mxu0 0
        %5904 = vmatprep.mubr.bf16.mxu0 0
        %5905 = vmatmul.mubr.bf16.gmra.mrb[0].mxu0 %v2909
        %v5906 = vpop.f32.mrb[0].mxu0
        %v5907 = vadd.f32 0.0, %v5906
        %v5908 = vpop.f32.mrb[0].mxu0
        %v5909 = vadd.f32 0.0, %v5908
        %v5910 = vpop.f32.mrb[0].mxu0
        %v5911 = vadd.f32 0.0, %v5910
        %v5912 = vpop.f32.mrb[0].mxu0
        %v5913 = vadd.f32 0.0, %v5912
        %5914 = vmatprep.mubr.bf16.mxu0 0
        %5915 = vmatmul.mubr.bf16.gmra.mrb[0].mxu0 %v2910
        %v5916 = vpop.f32.mrb[0].mxu0
        %v5917 = vadd.f32 0.0, %v5916
        %v5918 = vpop.f32.mrb[0].mxu0
        %v5919 = vadd.f32 0.0, %v5918
        %v5920 = vpop.f32.mrb[0].mxu0
        %v5921 = vadd.f32 0.0, %v5920
        %v5922 = vpop.f32.mrb[0].mxu0
        %v5923 = vadd.f32 0.0, %v5922
        %5924 = vmatprep.mubr.bf16.mxu0 0
        %5925 = vmatmul.mubr.bf16.gmra.mrb[0].mxu0 %v2911
        %v5926 = vpop.f32.mrb[0].mxu0
        %v5927 = vadd.f32 0.0, %v5926
        %v5928 = vpop.f32.mrb[0].mxu0
        %v5929 = vadd.f32 0.0, %v5928
        %v5930 = vpop.f32.mrb[0].mxu0
        %v5931 = vadd.f32 0.0, %v5930
        %v5932 = vpop.f32.mrb[0].mxu0
        %v5933 = vadd.f32 0.0, %v5932
        %5934 = vmatprep.mubr.bf16.mxu0 0
        %5935 = vmatmul.mubr.bf16.gmra.mrb[0].mxu0 %v2912
        %v5936 = vpop.f32.mrb[0].mxu0
        %v5937 = vadd.f32 0.0, %v5936
        %v5938 = vpop.f32.mrb[0].mxu0
        %v5939 = vadd.f32 0.0, %v5938
        %v5940 = vpop.f32.mrb[0].mxu0
        %v5941 = vadd.f32 0.0, %v5940
        %v5942 = vpop.f32.mrb[0].mxu0
        %v5943 = vadd.f32 0.0, %v5942
        %5944 = vmatprep.mubr.bf16.mxu0 0
        %5945 = vmatmul.mubr.bf16.gmra.mrb[0].mxu0 %v2913
        %v5946 = vpop.f32.mrb[0].mxu0
        %v5947 = vadd.f32 0.0, %v5946
        %v5948 = vpop.f32.mrb[0].mxu0
        %v5949 = vadd.f32 0.0, %v5948
        %v5950 = vpop.f32.mrb[0].mxu0
        %v5951 = vadd.f32 0.0, %v5950
        %v5952 = vpop.f32.mrb[0].mxu0
        %v5953 = vadd.f32 0.0, %v5952
        %5954 = vmatprep.mubr.bf16.mxu0 0
        %5955 = vmatmul.mubr.bf16.gmra.mrb[0].mxu0 %v2914
        %v5956 = vpop.f32.mrb[0].mxu0
        %v5957 = vadd.f32 0.0, %v5956
        %v5958 = vpop.f32.mrb[0].mxu0
        %v5959 = vadd.f32 0.0, %v5958
        %v5960 = vpop.f32.mrb[0].mxu0
        %v5961 = vadd.f32 0.0, %v5960
        %v5962 = vpop.f32.mrb[0].mxu0
        %v5963 = vadd.f32 0.0, %v5962
        %5964 = vmatprep.mubr.bf16.mxu0 0
        %5965 = vmatmul.mubr.bf16.gmra.mrb[0].mxu0 %v2915
        %v5966 = vpop.f32.mrb[0].mxu0
        %v5967 = vadd.f32 0.0, %v5966
        %v5968 = vpop.f32.mrb[0].mxu0
        %v5969 = vadd.f32 0.0, %v5968
        %v5970 = vpop.f32.mrb[0].mxu0
        %v5971 = vadd.f32 0.0, %v5970
        %v5972 = vpop.f32.mrb[0].mxu0
        %v5973 = vadd.f32 0.0, %v5972
        %5974 = vmatprep.mubr.bf16.mxu0 0
        %5975 = vmatmul.mubr.bf16.gmra.mrb[0].mxu0 %v2916
        %v5976 = vpop.f32.mrb[0].mxu0
        %v5977 = vadd.f32 0.0, %v5976
        %v5978 = vpop.f32.mrb[0].mxu0
        %v5979 = vadd.f32 0.0, %v5978
        %v5980 = vpop.f32.mrb[0].mxu0
        %v5981 = vadd.f32 0.0, %v5980
        %v5982 = vpop.f32.mrb[0].mxu0
        %v5983 = vadd.f32 0.0, %v5982
        %5984 = vmatprep.mubr.bf16.mxu0 0
        %5985 = vmatmul.mubr.bf16.gmra.mrb[0].mxu0 %v2917
        %v5986 = vpop.f32.mrb[0].mxu0
        %v5987 = vadd.f32 0.0, %v5986
        %v5988 = vpop.f32.mrb[0].mxu0
        %v5989 = vadd.f32 0.0, %v5988
        %v5990 = vpop.f32.mrb[0].mxu0
        %v5991 = vadd.f32 0.0, %v5990
        %v5992 = vpop.f32.mrb[0].mxu0
        %v5993 = vadd.f32 0.0, %v5992
        %5994 = vmatprep.mubr.bf16.mxu0 0
        %5995 = vmatmul.mubr.bf16.gmra.mrb[0].mxu0 %v2918
        %v5996 = vpop.f32.mrb[0].mxu0
        %v5997 = vadd.f32 0.0, %v5996
        %v5998 = vpop.f32.mrb[0].mxu0
        %v5999 = vadd.f32 0.0, %v5998
        %v6000 = vpop.f32.mrb[0].mxu0
        %v6001 = vadd.f32 0.0, %v6000
        %v6002 = vpop.f32.mrb[0].mxu0
        %v6003 = vadd.f32 0.0, %v6002
        %6004 = vmatprep.mubr.bf16.mxu0 0
        %6005 = vmatmul.mubr.bf16.gmra.mrb[0].mxu0 %v2919
        %v6006 = vpop.f32.mrb[0].mxu0
        %v6007 = vadd.f32 0.0, %v6006
        %v6008 = vpop.f32.mrb[0].mxu0
        %v6009 = vadd.f32 0.0, %v6008
        %v6010 = vpop.f32.mrb[0].mxu0
        %v6011 = vadd.f32 0.0, %v6010
        %v6012 = vpop.f32.mrb[0].mxu0
        %v6013 = vadd.f32 0.0, %v6012
        %6014 = vmatprep.mubr.bf16.mxu0 0
        %6015 = vmatmul.mubr.bf16.gmra.mrb[0].mxu0 %v2920
        %v6016 = vpop.f32.mrb[0].mxu0
        %v6017 = vadd.f32 0.0, %v6016
        %v6018 = vpop.f32.mrb[0].mxu0
        %v6019 = vadd.f32 0.0, %v6018
        %v6020 = vpop.f32.mrb[0].mxu0
        %v6021 = vadd.f32 0.0, %v6020
        %v6022 = vpop.f32.mrb[0].mxu0
        %v6023 = vadd.f32 0.0, %v6022
        %6024 = vmatprep.mubr.bf16.mxu0 0
        %6025 = vmatmul.mubr.bf16.gmra.mrb[0].mxu0 %v2921
        %v6026 = vpop.f32.mrb[0].mxu0
        %v6027 = vadd.f32 0.0, %v6026
        %v6028 = vpop.f32.mrb[0].mxu0
        %v6029 = vadd.f32 0.0, %v6028
        %v6030 = vpop.f32.mrb[0].mxu0
        %v6031 = vadd.f32 0.0, %v6030
        %v6032 = vpop.f32.mrb[0].mxu0
        %v6033 = vadd.f32 0.0, %v6032
        %6034 = vmatprep.mubr.bf16.mxu0 0
        %6035 = vmatmul.mubr.bf16.gmra.mrb[0].mxu0 %v2922
        %v6036 = vpop.f32.mrb[0].mxu0
        %v6037 = vadd.f32 0.0, %v6036
        %v6038 = vpop.f32.mrb[0].mxu0
        %v6039 = vadd.f32 0.0, %v6038
        %v6040 = vpop.f32.mrb[0].mxu0
        %v6041 = vadd.f32 0.0, %v6040
        %v6042 = vpop.f32.mrb[0].mxu0
        %v6043 = vadd.f32 0.0, %v6042
        %6044 = vmatprep.mubr.bf16.mxu0 0
        %6045 = vmatmul.mubr.bf16.gmra.mrb[0].mxu0 %v2923
        %v6046 = vpop.f32.mrb[0].mxu0
        %v6047 = vadd.f32 0.0, %v6046
        %v6048 = vpop.f32.mrb[0].mxu0
        %v6049 = vadd.f32 0.0, %v6048
        %v6050 = vpop.f32.mrb[0].mxu0
        %v6051 = vadd.f32 0.0, %v6050
        %v6052 = vpop.f32.mrb[0].mxu0
        %v6053 = vadd.f32 0.0, %v6052
        %6054 = vmatprep.mubr.bf16.mxu0 0
        %6055 = vmatmul.mubr.bf16.gmra.mrb[0].mxu0 %v2924
        %v6056 = vpop.f32.mrb[0].mxu0
        %v6057 = vadd.f32 0.0, %v6056
        %v6058 = vpop.f32.mrb[0].mxu0
        %v6059 = vadd.f32 0.0, %v6058
        %v6060 = vpop.f32.mrb[0].mxu0
        %v6061 = vadd.f32 0.0, %v6060
        %v6062 = vpop.f32.mrb[0].mxu0
        %v6063 = vadd.f32 0.0, %v6062
        %6064 = vmatprep.mubr.bf16.mxu0 0
        %6065 = vmatmul.mubr.bf16.gmra.mrb[0].mxu0 %v2925
        %v6066 = vpop.f32.mrb[0].mxu0
        %v6067 = vadd.f32 0.0, %v6066
        %v6068 = vpop.f32.mrb[0].mxu0
        %v6069 = vadd.f32 0.0, %v6068
        %v6070 = vpop.f32.mrb[0].mxu0
        %v6071 = vadd.f32 0.0, %v6070
        %v6072 = vpop.f32.mrb[0].mxu0
        %v6073 = vadd.f32 0.0, %v6072
        %6074 = vmatprep.mubr.bf16.mxu0 0
        %6075 = vmatmul.mubr.bf16.gmra.mrb[0].mxu0 %v2926
        %v6076 = vpop.f32.mrb[0].mxu0
        %v6077 = vadd.f32 0.0, %v6076
        %v6078 = vpop.f32.mrb[0].mxu0
        %v6079 = vadd.f32 0.0, %v6078
        %v6080 = vpop.f32.mrb[0].mxu0
        %v6081 = vadd.f32 0.0, %v6080
        %v6082 = vpop.f32.mrb[0].mxu0
        %v6083 = vadd.f32 0.0, %v6082
        %6084 = vmatprep.mubr.bf16.mxu0 0
        %6085 = vmatmul.mubr.bf16.gmra.mrb[0].mxu0 %v2927
        %v6086 = vpop.f32.mrb[0].mxu0
        %v6087 = vadd.f32 0.0, %v6086
        %v6088 = vpop.f32.mrb[0].mxu0
        %v6089 = vadd.f32 0.0, %v6088
        %v6090 = vpop.f32.mrb[0].mxu0
        %v6091 = vadd.f32 0.0, %v6090
        %v6092 = vpop.f32.mrb[0].mxu0
        %v6093 = vadd.f32 0.0, %v6092
        %6094 = vmatprep.mubr.bf16.mxu0 0
        %6095 = vmatmul.mubr.bf16.gmra.mrb[0].mxu0 %v2928
        %v6096 = vpop.f32.mrb[0].mxu0
        %v6097 = vadd.f32 0.0, %v6096
        %v6098 = vpop.f32.mrb[0].mxu0
        %v6099 = vadd.f32 0.0, %v6098
        %v6100 = vpop.f32.mrb[0].mxu0
        %v6101 = vadd.f32 0.0, %v6100
        %v6102 = vpop.f32.mrb[0].mxu0
        %v6103 = vadd.f32 0.0, %v6102
        %6104 = vmatprep.mubr.bf16.mxu0 0
        %6105 = vmatmul.mubr.bf16.gmra.mrb[0].mxu0 %v2929
        %v6106 = vpop.f32.mrb[0].mxu0
        %v6107 = vadd.f32 0.0, %v6106
        %v6108 = vpop.f32.mrb[0].mxu0
        %v6109 = vadd.f32 0.0, %v6108
        %v6110 = vpop.f32.mrb[0].mxu0
        %v6111 = vadd.f32 0.0, %v6110
        %v6112 = vpop.f32.mrb[0].mxu0
        %v6113 = vadd.f32 0.0, %v6112
        %6114 = vmatprep.mubr.bf16.mxu0 0
        %6115 = vmatmul.mubr.bf16.gmra.mrb[0].mxu0 %v2930
        %v6116 = vpop.f32.mrb[0].mxu0
        %v6117 = vadd.f32 0.0, %v6116
        %v6118 = vpop.f32.mrb[0].mxu0
        %v6119 = vadd.f32 0.0, %v6118
        %v6120 = vpop.f32.mrb[0].mxu0
        %v6121 = vadd.f32 0.0, %v6120
        %v6122 = vpop.f32.mrb[0].mxu0
        %v6123 = vadd.f32 0.0, %v6122
        %6124 = vmatprep.mubr.bf16.mxu0 0
        %6125 = vmatmul.mubr.bf16.gmra.mrb[0].mxu0 %v2931
        %v6126 = vpop.f32.mrb[0].mxu0
        %v6127 = vadd.f32 0.0, %v6126
        %v6128 = vpop.f32.mrb[0].mxu0
        %v6129 = vadd.f32 0.0, %v6128
        %v6130 = vpop.f32.mrb[0].mxu0
        %v6131 = vadd.f32 0.0, %v6130
        %v6132 = vpop.f32.mrb[0].mxu0
        %v6133 = vadd.f32 0.0, %v6132
        %6134 = vmatprep.mubr.bf16.mxu0 0
        %6135 = vmatmul.mubr.bf16.gmra.mrb[0].mxu0 %v2932
        %v6136 = vpop.f32.mrb[0].mxu0
        %v6137 = vadd.f32 0.0, %v6136
        %v6138 = vpop.f32.mrb[0].mxu0
        %v6139 = vadd.f32 0.0, %v6138
        %v6140 = vpop.f32.mrb[0].mxu0
        %v6141 = vadd.f32 0.0, %v6140
        %v6142 = vpop.f32.mrb[0].mxu0
        %v6143 = vadd.f32 0.0, %v6142
        %6144 = vmatprep.mubr.bf16.mxu0 0
        %6145 = vmatmul.mubr.bf16.gmra.mrb[0].mxu0 %v2933
        %v6146 = vpop.f32.mrb[0].mxu0
        %v6147 = vadd.f32 0.0, %v6146
        %v6148 = vpop.f32.mrb[0].mxu0
        %v6149 = vadd.f32 0.0, %v6148
        %v6150 = vpop.f32.mrb[0].mxu0
        %v6151 = vadd.f32 0.0, %v6150
        %v6152 = vpop.f32.mrb[0].mxu0
        %v6153 = vadd.f32 0.0, %v6152
        %6154 = vmatprep.mubr.bf16.mxu0 0
        %6155 = vmatmul.mubr.bf16.gmra.mrb[0].mxu0 %v2934
        %v6156 = vpop.f32.mrb[0].mxu0
        %v6157 = vadd.f32 0.0, %v6156
        %v6158 = vpop.f32.mrb[0].mxu0
        %v6159 = vadd.f32 0.0, %v6158
        %v6160 = vpop.f32.mrb[0].mxu0
        %v6161 = vadd.f32 0.0, %v6160
        %v6162 = vpop.f32.mrb[0].mxu0
        %v6163 = vadd.f32 0.0, %v6162
        %6164 = vmatprep.mubr.bf16.mxu0 0
        %6165 = vmatmul.mubr.bf16.gmra.mrb[0].mxu0 %v2935
        %v6166 = vpop.f32.mrb[0].mxu0
        %v6167 = vadd.f32 0.0, %v6166
        %v6168 = vpop.f32.mrb[0].mxu0
        %v6169 = vadd.f32 0.0, %v6168
        %v6170 = vpop.f32.mrb[0].mxu0
        %v6171 = vadd.f32 0.0, %v6170
        %v6172 = vpop.f32.mrb[0].mxu0
        %v6173 = vadd.f32 0.0, %v6172
        %6174 = vmatprep.mubr.bf16.mxu0 0
        %6175 = vmatmul.mubr.bf16.gmra.mrb[0].mxu0 %v2936
        %v6176 = vpop.f32.mrb[0].mxu0
        %v6177 = vadd.f32 0.0, %v6176
        %v6178 = vpop.f32.mrb[0].mxu0
        %v6179 = vadd.f32 0.0, %v6178
        %v6180 = vpop.f32.mrb[0].mxu0
        %v6181 = vadd.f32 0.0, %v6180
        %v6182 = vpop.f32.mrb[0].mxu0
        %v6183 = vadd.f32 0.0, %v6182
        %6184 = vmatprep.mubr.bf16.mxu0 0
        %6185 = vmatmul.mubr.bf16.gmra.mrb[0].mxu0 %v2937
        %v6186 = vpop.f32.mrb[0].mxu0
        %v6187 = vadd.f32 0.0, %v6186
        %v6188 = vpop.f32.mrb[0].mxu0
        %v6189 = vadd.f32 0.0, %v6188
        %v6190 = vpop.f32.mrb[0].mxu0
        %v6191 = vadd.f32 0.0, %v6190
        %v6192 = vpop.f32.mrb[0].mxu0
        %v6193 = vadd.f32 0.0, %v6192
        %6194 = vmatprep.mubr.bf16.mxu0 0
        %6195 = vmatmul.mubr.bf16.gmra.mrb[0].mxu0 %v2938
        %v6196 = vpop.f32.mrb[0].mxu0
        %v6197 = vadd.f32 0.0, %v6196
        %v6198 = vpop.f32.mrb[0].mxu0
        %v6199 = vadd.f32 0.0, %v6198
        %v6200 = vpop.f32.mrb[0].mxu0
        %v6201 = vadd.f32 0.0, %v6200
        %v6202 = vpop.f32.mrb[0].mxu0
        %v6203 = vadd.f32 0.0, %v6202
        %6204 = vmatprep.mubr.bf16.mxu0 0
        %6205 = vmatmul.mubr.bf16.gmra.mrb[0].mxu0 %v2939
        %v6206 = vpop.f32.mrb[0].mxu0
        %v6207 = vadd.f32 0.0, %v6206
        %v6208 = vpop.f32.mrb[0].mxu0
        %v6209 = vadd.f32 0.0, %v6208
        %v6210 = vpop.f32.mrb[0].mxu0
        %v6211 = vadd.f32 0.0, %v6210
        %v6212 = vpop.f32.mrb[0].mxu0
        %v6213 = vadd.f32 0.0, %v6212
        %6214 = vmatprep.mubr.bf16.mxu0 0
        %6215 = vmatmul.mubr.bf16.gmra.mrb[0].mxu0 %v2940
        %v6216 = vpop.f32.mrb[0].mxu0
        %v6217 = vadd.f32 0.0, %v6216
        %v6218 = vpop.f32.mrb[0].mxu0
        %v6219 = vadd.f32 0.0, %v6218
        %v6220 = vpop.f32.mrb[0].mxu0
        %v6221 = vadd.f32 0.0, %v6220
        %v6222 = vpop.f32.mrb[0].mxu0
        %v6223 = vadd.f32 0.0, %v6222
        %6224 = vmatprep.mubr.bf16.mxu0 0
        %6225 = vmatmul.mubr.bf16.gmra.mrb[0].mxu0 %v2941
        %v6226 = vpop.f32.mrb[0].mxu0
        %v6227 = vadd.f32 0.0, %v6226
        %v6228 = vpop.f32.mrb[0].mxu0
        %v6229 = vadd.f32 0.0, %v6228
        %v6230 = vpop.f32.mrb[0].mxu0
        %v6231 = vadd.f32 0.0, %v6230
        %v6232 = vpop.f32.mrb[0].mxu0
        %v6233 = vadd.f32 0.0, %v6232
        %6234 = vmatprep.mubr.bf16.mxu0 0
        %6235 = vmatmul.mubr.bf16.gmra.mrb[0].mxu0 %v2942
        %v6236 = vpop.f32.mrb[0].mxu0
        %v6237 = vadd.f32 0.0, %v6236
        %v6238 = vpop.f32.mrb[0].mxu0
        %v6239 = vadd.f32 0.0, %v6238
        %v6240 = vpop.f32.mrb[0].mxu0
        %v6241 = vadd.f32 0.0, %v6240
        %v6242 = vpop.f32.mrb[0].mxu0
        %v6243 = vadd.f32 0.0, %v6242
        %6244 = vmatprep.mubr.bf16.mxu0 0
        %6245 = vmatmul.mubr.bf16.gmra.mrb[0].mxu0 %v2943
        %v6246 = vpop.f32.mrb[0].mxu0
        %v6247 = vadd.f32 0.0, %v6246
        %v6248 = vpop.f32.mrb[0].mxu0
        %v6249 = vadd.f32 0.0, %v6248
        %v6250 = vpop.f32.mrb[0].mxu0
        %v6251 = vadd.f32 0.0, %v6250
        %v6252 = vpop.f32.mrb[0].mxu0
        %v6253 = vadd.f32 0.0, %v6252
        %6254 = vmatprep.mubr.bf16.mxu0 0
        %6255 = vmatmul.mubr.bf16.gmra.mrb[0].mxu0 %v2944
        %v6256 = vpop.f32.mrb[0].mxu0
        %v6257 = vadd.f32 0.0, %v6256
        %v6258 = vpop.f32.mrb[0].mxu0
        %v6259 = vadd.f32 0.0, %v6258
        %v6260 = vpop.f32.mrb[0].mxu0
        %v6261 = vadd.f32 0.0, %v6260
        %v6262 = vpop.f32.mrb[0].mxu0
        %v6263 = vadd.f32 0.0, %v6262
        %6264 = vmatprep.mubr.bf16.mxu0 0
        %6265 = vmatmul.mubr.bf16.gmra.mrb[0].mxu0 %v2945
        %v6266 = vpop.f32.mrb[0].mxu0
        %v6267 = vadd.f32 0.0, %v6266
        %v6268 = vpop.f32.mrb[0].mxu0
        %v6269 = vadd.f32 0.0, %v6268
        %v6270 = vpop.f32.mrb[0].mxu0
        %v6271 = vadd.f32 0.0, %v6270
        %v6272 = vpop.f32.mrb[0].mxu0
        %v6273 = vadd.f32 0.0, %v6272
        %6274 = vmatprep.mubr.bf16.mxu0 0
        %6275 = vmatmul.mubr.bf16.gmra.mrb[0].mxu0 %v2946
        %v6276 = vpop.f32.mrb[0].mxu0
        %v6277 = vadd.f32 0.0, %v6276
        %v6278 = vpop.f32.mrb[0].mxu0
        %v6279 = vadd.f32 0.0, %v6278
        %v6280 = vpop.f32.mrb[0].mxu0
        %v6281 = vadd.f32 0.0, %v6280
        %v6282 = vpop.f32.mrb[0].mxu0
        %v6283 = vadd.f32 0.0, %v6282
        %6284 = vmatprep.mubr.bf16.mxu0 0
        %6285 = vmatmul.mubr.bf16.gmra.mrb[0].mxu0 %v2947
        %v6286 = vpop.f32.mrb[0].mxu0
        %v6287 = vadd.f32 0.0, %v6286
        %v6288 = vpop.f32.mrb[0].mxu0
        %v6289 = vadd.f32 0.0, %v6288
        %v6290 = vpop.f32.mrb[0].mxu0
        %v6291 = vadd.f32 0.0, %v6290
        %v6292 = vpop.f32.mrb[0].mxu0
        %v6293 = vadd.f32 0.0, %v6292
        %6294 = vmatprep.mubr.bf16.mxu0 0
        %6295 = vmatmul.mubr.bf16.gmra.mrb[0].mxu0 %v2948
        %v6296 = vpop.f32.mrb[0].mxu0
        %v6297 = vadd.f32 0.0, %v6296
        %v6298 = vpop.f32.mrb[0].mxu0
        %v6299 = vadd.f32 0.0, %v6298
        %v6300 = vpop.f32.mrb[0].mxu0
        %v6301 = vadd.f32 0.0, %v6300
        %v6302 = vpop.f32.mrb[0].mxu0
        %v6303 = vadd.f32 0.0, %v6302
        %6304 = vmatprep.mubr.bf16.mxu0 0
        %6305 = vmatmul.mubr.bf16.gmra.mrb[0].mxu0 %v2949
        %v6306 = vpop.f32.mrb[0].mxu0
        %v6307 = vadd.f32 0.0, %v6306
        %v6308 = vpop.f32.mrb[0].mxu0
        %v6309 = vadd.f32 0.0, %v6308
        %v6310 = vpop.f32.mrb[0].mxu0
        %v6311 = vadd.f32 0.0, %v6310
        %v6312 = vpop.f32.mrb[0].mxu0
        %v6313 = vadd.f32 0.0, %v6312
        %6314 = vmatprep.mubr.bf16.mxu0 0
        %6315 = vmatmul.mubr.bf16.gmra.mrb[0].mxu0 %v2950
        %v6316 = vpop.f32.mrb[0].mxu0
        %v6317 = vadd.f32 0.0, %v6316
        %v6318 = vpop.f32.mrb[0].mxu0
        %v6319 = vadd.f32 0.0, %v6318
        %v6320 = vpop.f32.mrb[0].mxu0
        %v6321 = vadd.f32 0.0, %v6320
        %v6322 = vpop.f32.mrb[0].mxu0
        %v6323 = vadd.f32 0.0, %v6322
        %6324 = vmatprep.mubr.bf16.mxu0 0
        %6325 = vmatmul.mubr.bf16.gmra.mrb[0].mxu0 %v2951
        %v6326 = vpop.f32.mrb[0].mxu0
        %v6327 = vadd.f32 0.0, %v6326
        %v6328 = vpop.f32.mrb[0].mxu0
        %v6329 = vadd.f32 0.0, %v6328
        %v6330 = vpop.f32.mrb[0].mxu0
        %v6331 = vadd.f32 0.0, %v6330
        %v6332 = vpop.f32.mrb[0].mxu0
        %v6333 = vadd.f32 0.0, %v6332
        %6334 = vmatprep.mubr.bf16.mxu0 0
        %6335 = vmatmul.mubr.bf16.gmra.mrb[0].mxu0 %v2952
        %v6336 = vpop.f32.mrb[0].mxu0
        %v6337 = vadd.f32 0.0, %v6336
        %v6338 = vpop.f32.mrb[0].mxu0
        %v6339 = vadd.f32 0.0, %v6338
        %v6340 = vpop.f32.mrb[0].mxu0
        %v6341 = vadd.f32 0.0, %v6340
        %v6342 = vpop.f32.mrb[0].mxu0
        %v6343 = vadd.f32 0.0, %v6342
        %6344 = vmatprep.mubr.bf16.mxu0 0
        %6345 = vmatmul.mubr.bf16.gmra.mrb[0].mxu0 %v2953
        %v6346 = vpop.f32.mrb[0].mxu0
        %v6347 = vadd.f32 0.0, %v6346
        %v6348 = vpop.f32.mrb[0].mxu0
        %v6349 = vadd.f32 0.0, %v6348
        %v6350 = vpop.f32.mrb[0].mxu0
        %v6351 = vadd.f32 0.0, %v6350
        %v6352 = vpop.f32.mrb[0].mxu0
        %v6353 = vadd.f32 0.0, %v6352
        %6354 = vmatprep.mubr.bf16.mxu0 0
        %6355 = vmatmul.mubr.bf16.gmra.mrb[0].mxu0 %v2954
        %v6356 = vpop.f32.mrb[0].mxu0
        %v6357 = vadd.f32 0.0, %v6356
        %v6358 = vpop.f32.mrb[0].mxu0
        %v6359 = vadd.f32 0.0, %v6358
        %v6360 = vpop.f32.mrb[0].mxu0
        %v6361 = vadd.f32 0.0, %v6360
        %v6362 = vpop.f32.mrb[0].mxu0
        %v6363 = vadd.f32 0.0, %v6362
        %6364 = vmatprep.mubr.bf16.mxu0 0
        %6365 = vmatmul.mubr.bf16.gmra.mrb[0].mxu0 %v2955
        %v6366 = vpop.f32.mrb[0].mxu0
        %v6367 = vadd.f32 0.0, %v6366
        %v6368 = vpop.f32.mrb[0].mxu0
        %v6369 = vadd.f32 0.0, %v6368
        %v6370 = vpop.f32.mrb[0].mxu0
        %v6371 = vadd.f32 0.0, %v6370
        %v6372 = vpop.f32.mrb[0].mxu0
        %v6373 = vadd.f32 0.0, %v6372
        %6374 = vmatprep.mubr.bf16.mxu0 0
        %6375 = vmatmul.mubr.bf16.gmra.mrb[0].mxu0 %v2956
        %v6376 = vpop.f32.mrb[0].mxu0
        %v6377 = vadd.f32 0.0, %v6376
        %v6378 = vpop.f32.mrb[0].mxu0
        %v6379 = vadd.f32 0.0, %v6378
        %v6380 = vpop.f32.mrb[0].mxu0
        %v6381 = vadd.f32 0.0, %v6380
        %v6382 = vpop.f32.mrb[0].mxu0
        %v6383 = vadd.f32 0.0, %v6382
        %6384 = vmatprep.mubr.bf16.mxu0 0
        %6385 = vmatmul.mubr.bf16.gmra.mrb[0].mxu0 %v2957
        %v6386 = vpop.f32.mrb[0].mxu0
        %v6387 = vadd.f32 0.0, %v6386
        %v6388 = vpop.f32.mrb[0].mxu0
        %v6389 = vadd.f32 0.0, %v6388
        %v6390 = vpop.f32.mrb[0].mxu0
        %v6391 = vadd.f32 0.0, %v6390
        %v6392 = vpop.f32.mrb[0].mxu0
        %v6393 = vadd.f32 0.0, %v6392
        %6394 = vmatprep.mubr.bf16.mxu0 0
        %6395 = vmatmul.mubr.bf16.gmra.mrb[0].mxu0 %v2958
        %v6396 = vpop.f32.mrb[0].mxu0
        %v6397 = vadd.f32 0.0, %v6396
        %v6398 = vpop.f32.mrb[0].mxu0
        %v6399 = vadd.f32 0.0, %v6398
        %v6400 = vpop.f32.mrb[0].mxu0
        %v6401 = vadd.f32 0.0, %v6400
        %v6402 = vpop.f32.mrb[0].mxu0
        %v6403 = vadd.f32 0.0, %v6402
        %6404 = vmatprep.mubr.bf16.mxu0 0
        %6405 = vmatmul.mubr.bf16.gmra.mrb[0].mxu0 %v2959
        %v6406 = vpop.f32.mrb[0].mxu0
        %v6407 = vadd.f32 0.0, %v6406
        %v6408 = vpop.f32.mrb[0].mxu0
        %v6409 = vadd.f32 0.0, %v6408
        %v6410 = vpop.f32.mrb[0].mxu0
        %v6411 = vadd.f32 0.0, %v6410
        %v6412 = vpop.f32.mrb[0].mxu0
        %v6413 = vadd.f32 0.0, %v6412
        %6414 = vmatprep.mubr.bf16.mxu0 0
        %6415 = vmatmul.mubr.bf16.gmra.mrb[0].mxu0 %v2960
        %v6416 = vpop.f32.mrb[0].mxu0
        %v6417 = vadd.f32 0.0, %v6416
        %v6418 = vpop.f32.mrb[0].mxu0
        %v6419 = vadd.f32 0.0, %v6418
        %v6420 = vpop.f32.mrb[0].mxu0
        %v6421 = vadd.f32 0.0, %v6420
        %v6422 = vpop.f32.mrb[0].mxu0
        %v6423 = vadd.f32 0.0, %v6422
        %6424 = vmatprep.mubr.bf16.mxu0 0
        %6425 = vmatmul.mubr.bf16.gmra.mrb[0].mxu0 %v2961
        %v6426 = vpop.f32.mrb[0].mxu0
        %v6427 = vadd.f32 0.0, %v6426
        %v6428 = vpop.f32.mrb[0].mxu0
        %v6429 = vadd.f32 0.0, %v6428
        %v6430 = vpop.f32.mrb[0].mxu0
        %v6431 = vadd.f32 0.0, %v6430
        %v6432 = vpop.f32.mrb[0].mxu0
        %v6433 = vadd.f32 0.0, %v6432
        %6434 = vmatprep.mubr.bf16.mxu0 0
        %6435 = vmatmul.mubr.bf16.gmra.mrb[0].mxu0 %v2962
        %v6436 = vpop.f32.mrb[0].mxu0
        %v6437 = vadd.f32 0.0, %v6436
        %v6438 = vpop.f32.mrb[0].mxu0
        %v6439 = vadd.f32 0.0, %v6438
        %v6440 = vpop.f32.mrb[0].mxu0
        %v6441 = vadd.f32 0.0, %v6440
        %v6442 = vpop.f32.mrb[0].mxu0
        %v6443 = vadd.f32 0.0, %v6442
        %6444 = vmatprep.mubr.bf16.mxu0 0
        %6445 = vmatmul.mubr.bf16.gmra.mrb[0].mxu0 %v2963
        %v6446 = vpop.f32.mrb[0].mxu0
        %v6447 = vadd.f32 0.0, %v6446
        %v6448 = vpop.f32.mrb[0].mxu0
        %v6449 = vadd.f32 0.0, %v6448
        %v6450 = vpop.f32.mrb[0].mxu0
        %v6451 = vadd.f32 0.0, %v6450
        %v6452 = vpop.f32.mrb[0].mxu0
        %v6453 = vadd.f32 0.0, %v6452
        %6454 = vmatprep.mubr.bf16.mxu0 0
        %6455 = vmatmul.mubr.bf16.gmra.mrb[0].mxu0 %v2964
        %v6456 = vpop.f32.mrb[0].mxu0
        %v6457 = vadd.f32 0.0, %v6456
        %v6458 = vpop.f32.mrb[0].mxu0
        %v6459 = vadd.f32 0.0, %v6458
        %v6460 = vpop.f32.mrb[0].mxu0
        %v6461 = vadd.f32 0.0, %v6460
        %v6462 = vpop.f32.mrb[0].mxu0
        %v6463 = vadd.f32 0.0, %v6462
        %6464 = vmatprep.mubr.bf16.mxu0 0
        %6465 = vmatmul.mubr.bf16.gmra.mrb[0].mxu0 %v2965
        %v6466 = vpop.f32.mrb[0].mxu0
        %v6467 = vadd.f32 0.0, %v6466
        %v6468 = vpop.f32.mrb[0].mxu0
        %v6469 = vadd.f32 0.0, %v6468
        %v6470 = vpop.f32.mrb[0].mxu0
        %v6471 = vadd.f32 0.0, %v6470
        %v6472 = vpop.f32.mrb[0].mxu0
        %v6473 = vadd.f32 0.0, %v6472
        %6474 = vmatprep.mubr.bf16.mxu0 0
        %6475 = vmatmul.mubr.bf16.gmra.mrb[0].mxu0 %v2966
        %v6476 = vpop.f32.mrb[0].mxu0
        %v6477 = vadd.f32 0.0, %v6476
        %v6478 = vpop.f32.mrb[0].mxu0
        %v6479 = vadd.f32 0.0, %v6478
        %v6480 = vpop.f32.mrb[0].mxu0
        %v6481 = vadd.f32 0.0, %v6480
        %v6482 = vpop.f32.mrb[0].mxu0
        %v6483 = vadd.f32 0.0, %v6482
        %6484 = vmatprep.mubr.bf16.mxu0 0
        %6485 = vmatmul.mubr.bf16.gmra.mrb[0].mxu0 %v2967
        %v6486 = vpop.f32.mrb[0].mxu0
        %v6487 = vadd.f32 0.0, %v6486
        %v6488 = vpop.f32.mrb[0].mxu0
        %v6489 = vadd.f32 0.0, %v6488
        %v6490 = vpop.f32.mrb[0].mxu0
        %v6491 = vadd.f32 0.0, %v6490
        %v6492 = vpop.f32.mrb[0].mxu0
        %v6493 = vadd.f32 0.0, %v6492
        %6494 = vmatprep.mubr.bf16.mxu0 0
        %6495 = vmatmul.mubr.bf16.gmra.mrb[0].mxu0 %v2968
        %v6496 = vpop.f32.mrb[0].mxu0
        %v6497 = vadd.f32 0.0, %v6496
        %v6498 = vpop.f32.mrb[0].mxu0
        %v6499 = vadd.f32 0.0, %v6498
        %v6500 = vpop.f32.mrb[0].mxu0
        %v6501 = vadd.f32 0.0, %v6500
        %v6502 = vpop.f32.mrb[0].mxu0
        %v6503 = vadd.f32 0.0, %v6502
        %6504 = vmatprep.mubr.bf16.mxu0 0
        %6505 = vmatmul.mubr.bf16.gmra.mrb[0].mxu0 %v2969
        %v6506 = vpop.f32.mrb[0].mxu0
        %v6507 = vadd.f32 0.0, %v6506
        %v6508 = vpop.f32.mrb[0].mxu0
        %v6509 = vadd.f32 0.0, %v6508
        %v6510 = vpop.f32.mrb[0].mxu0
        %v6511 = vadd.f32 0.0, %v6510
        %v6512 = vpop.f32.mrb[0].mxu0
        %v6513 = vadd.f32 0.0, %v6512
        %6514 = vmatprep.mubr.bf16.mxu0 0
        %6515 = vmatmul.mubr.bf16.gmra.mrb[0].mxu0 %v2970
        %v6516 = vpop.f32.mrb[0].mxu0
        %v6517 = vadd.f32 0.0, %v6516
        %v6518 = vpop.f32.mrb[0].mxu0
        %v6519 = vadd.f32 0.0, %v6518
        %v6520 = vpop.f32.mrb[0].mxu0
        %v6521 = vadd.f32 0.0, %v6520
        %v6522 = vpop.f32.mrb[0].mxu0
        %v6523 = vadd.f32 0.0, %v6522
        %6524 = vmatprep.mubr.bf16.mxu0 0
        %6525 = vmatmul.mubr.bf16.gmra.mrb[0].mxu0 %v2971
        %v6526 = vpop.f32.mrb[0].mxu0
        %v6527 = vadd.f32 0.0, %v6526
        %v6528 = vpop.f32.mrb[0].mxu0
        %v6529 = vadd.f32 0.0, %v6528
        %v6530 = vpop.f32.mrb[0].mxu0
        %v6531 = vadd.f32 0.0, %v6530
        %v6532 = vpop.f32.mrb[0].mxu0
        %v6533 = vadd.f32 0.0, %v6532
        %6534 = vmatprep.mubr.bf16.mxu0 0
        %6535 = vmatmul.mubr.bf16.gmra.mrb[0].mxu0 %v2972
        %v6536 = vpop.f32.mrb[0].mxu0
        %v6537 = vadd.f32 0.0, %v6536
        %v6538 = vpop.f32.mrb[0].mxu0
        %v6539 = vadd.f32 0.0, %v6538
        %v6540 = vpop.f32.mrb[0].mxu0
        %v6541 = vadd.f32 0.0, %v6540
        %v6542 = vpop.f32.mrb[0].mxu0
        %v6543 = vadd.f32 0.0, %v6542
        %6544 = vmatprep.mubr.bf16.mxu0 0
        %6545 = vmatmul.mubr.bf16.gmra.mrb[0].mxu0 %v2973
        %v6546 = vpop.f32.mrb[0].mxu0
        %v6547 = vadd.f32 0.0, %v6546
        %v6548 = vpop.f32.mrb[0].mxu0
        %v6549 = vadd.f32 0.0, %v6548
        %v6550 = vpop.f32.mrb[0].mxu0
        %v6551 = vadd.f32 0.0, %v6550
        %v6552 = vpop.f32.mrb[0].mxu0
        %v6553 = vadd.f32 0.0, %v6552
        %6554 = vmatprep.mubr.bf16.mxu0 0
        %6555 = vmatmul.mubr.bf16.gmra.mrb[0].mxu0 %v2974
        %v6556 = vpop.f32.mrb[0].mxu0
        %v6557 = vadd.f32 0.0, %v6556
        %v6558 = vpop.f32.mrb[0].mxu0
        %v6559 = vadd.f32 0.0, %v6558
        %v6560 = vpop.f32.mrb[0].mxu0
        %v6561 = vadd.f32 0.0, %v6560
        %v6562 = vpop.f32.mrb[0].mxu0
        %v6563 = vadd.f32 0.0, %v6562
        %6564 = vmatprep.mubr.bf16.mxu0 0
        %6565 = vmatmul.mubr.bf16.gmra.mrb[0].mxu0 %v2975
        %v6566 = vpop.f32.mrb[0].mxu0
        %v6567 = vadd.f32 0.0, %v6566
        %v6568 = vpop.f32.mrb[0].mxu0
        %v6569 = vadd.f32 0.0, %v6568
        %v6570 = vpop.f32.mrb[0].mxu0
        %v6571 = vadd.f32 0.0, %v6570
        %v6572 = vpop.f32.mrb[0].mxu0
        %v6573 = vadd.f32 0.0, %v6572
        %6574 = vmatprep.mubr.bf16.mxu0 0
        %6575 = vmatmul.mubr.bf16.gmra.mrb[0].mxu0 %v2976
        %v6576 = vpop.f32.mrb[0].mxu0
        %v6577 = vadd.f32 0.0, %v6576
        %v6578 = vpop.f32.mrb[0].mxu0
        %v6579 = vadd.f32 0.0, %v6578
        %v6580 = vpop.f32.mrb[0].mxu0
        %v6581 = vadd.f32 0.0, %v6580
        %v6582 = vpop.f32.mrb[0].mxu0
        %v6583 = vadd.f32 0.0, %v6582
        %6584 = vmatprep.mubr.bf16.mxu0 0
        %6585 = vmatmul.mubr.bf16.gmra.mrb[0].mxu0 %v2977
        %v6586 = vpop.f32.mrb[0].mxu0
        %v6587 = vadd.f32 0.0, %v6586
        %v6588 = vpop.f32.mrb[0].mxu0
        %v6589 = vadd.f32 0.0, %v6588
        %v6590 = vpop.f32.mrb[0].mxu0
        %v6591 = vadd.f32 0.0, %v6590
        %v6592 = vpop.f32.mrb[0].mxu0
        %v6593 = vadd.f32 0.0, %v6592
        %6594 = vmatprep.mubr.bf16.mxu0 0
        %6595 = vmatmul.mubr.bf16.gmra.mrb[0].mxu0 %v2978
        %v6596 = vpop.f32.mrb[0].mxu0
        %v6597 = vadd.f32 0.0, %v6596
        %v6598 = vpop.f32.mrb[0].mxu0
        %v6599 = vadd.f32 0.0, %v6598
        %v6600 = vpop.f32.mrb[0].mxu0
        %v6601 = vadd.f32 0.0, %v6600
        %v6602 = vpop.f32.mrb[0].mxu0
        %v6603 = vadd.f32 0.0, %v6602
        %6604 = vmatprep.mubr.bf16.mxu0 0
        %6605 = vmatmul.mubr.bf16.gmra.mrb[0].mxu0 %v2979
        %v6606 = vpop.f32.mrb[0].mxu0
        %v6607 = vadd.f32 0.0, %v6606
        %v6608 = vpop.f32.mrb[0].mxu0
        %v6609 = vadd.f32 0.0, %v6608
        %v6610 = vpop.f32.mrb[0].mxu0
        %v6611 = vadd.f32 0.0, %v6610
        %v6612 = vpop.f32.mrb[0].mxu0
        %v6613 = vadd.f32 0.0, %v6612
        %6614 = vmatprep.mubr.bf16.mxu0 0
        %6615 = vmatmul.mubr.bf16.gmra.mrb[0].mxu0 %v2980
        %v6616 = vpop.f32.mrb[0].mxu0
        %v6617 = vadd.f32 0.0, %v6616
        %v6618 = vpop.f32.mrb[0].mxu0
        %v6619 = vadd.f32 0.0, %v6618
        %v6620 = vpop.f32.mrb[0].mxu0
        %v6621 = vadd.f32 0.0, %v6620
        %v6622 = vpop.f32.mrb[0].mxu0
        %v6623 = vadd.f32 0.0, %v6622
        %6624 = vmatprep.mubr.bf16.mxu0 0
        %6625 = vmatmul.mubr.bf16.gmra.mrb[0].mxu0 %v2981
        %v6626 = vpop.f32.mrb[0].mxu0
        %v6627 = vadd.f32 0.0, %v6626
        %v6628 = vpop.f32.mrb[0].mxu0
        %v6629 = vadd.f32 0.0, %v6628
        %v6630 = vpop.f32.mrb[0].mxu0
        %v6631 = vadd.f32 0.0, %v6630
        %v6632 = vpop.f32.mrb[0].mxu0
        %v6633 = vadd.f32 0.0, %v6632
        %6634 = vmatprep.mubr.bf16.mxu0 0
        %6635 = vmatmul.mubr.bf16.gmra.mrb[0].mxu0 %v2982
        %v6636 = vpop.f32.mrb[0].mxu0
        %v6637 = vadd.f32 0.0, %v6636
        %v6638 = vpop.f32.mrb[0].mxu0
        %v6639 = vadd.f32 0.0, %v6638
        %v6640 = vpop.f32.mrb[0].mxu0
        %v6641 = vadd.f32 0.0, %v6640
        %v6642 = vpop.f32.mrb[0].mxu0
        %v6643 = vadd.f32 0.0, %v6642
        %6644 = vmatprep.mubr.bf16.mxu0 0
        %6645 = vmatmul.mubr.bf16.gmra.mrb[0].mxu0 %v2983
        %v6646 = vpop.f32.mrb[0].mxu0
        %v6647 = vadd.f32 0.0, %v6646
        %v6648 = vpop.f32.mrb[0].mxu0
        %v6649 = vadd.f32 0.0, %v6648
        %v6650 = vpop.f32.mrb[0].mxu0
        %v6651 = vadd.f32 0.0, %v6650
        %v6652 = vpop.f32.mrb[0].mxu0
        %v6653 = vadd.f32 0.0, %v6652
        %6654 = vmatprep.mubr.bf16.mxu0 0
        %6655 = vmatmul.mubr.bf16.gmra.mrb[0].mxu0 %v2984
        %v6656 = vpop.f32.mrb[0].mxu0
        %v6657 = vadd.f32 0.0, %v6656
        %v6658 = vpop.f32.mrb[0].mxu0
        %v6659 = vadd.f32 0.0, %v6658
        %v6660 = vpop.f32.mrb[0].mxu0
        %v6661 = vadd.f32 0.0, %v6660
        %v6662 = vpop.f32.mrb[0].mxu0
        %v6663 = vadd.f32 0.0, %v6662
        %6664 = vmatprep.mubr.bf16.mxu0 0
        %6665 = vmatmul.mubr.bf16.gmra.mrb[0].mxu0 %v2985
        %v6666 = vpop.f32.mrb[0].mxu0
        %v6667 = vadd.f32 0.0, %v6666
        %v6668 = vpop.f32.mrb[0].mxu0
        %v6669 = vadd.f32 0.0, %v6668
        %v6670 = vpop.f32.mrb[0].mxu0
        %v6671 = vadd.f32 0.0, %v6670
        %v6672 = vpop.f32.mrb[0].mxu0
        %v6673 = vadd.f32 0.0, %v6672
        %6674 = vmatprep.mubr.bf16.mxu0 0
        %6675 = vmatmul.mubr.bf16.gmra.mrb[0].mxu0 %v2986
        %v6676 = vpop.f32.mrb[0].mxu0
        %v6677 = vadd.f32 0.0, %v6676
        %v6678 = vpop.f32.mrb[0].mxu0
        %v6679 = vadd.f32 0.0, %v6678
        %v6680 = vpop.f32.mrb[0].mxu0
        %v6681 = vadd.f32 0.0, %v6680
        %v6682 = vpop.f32.mrb[0].mxu0
        %v6683 = vadd.f32 0.0, %v6682
        %6684 = vmatprep.mubr.bf16.mxu0 0
        %6685 = vmatmul.mubr.bf16.gmra.mrb[0].mxu0 %v2987
        %v6686 = vpop.f32.mrb[0].mxu0
        %v6687 = vadd.f32 0.0, %v6686
        %v6688 = vpop.f32.mrb[0].mxu0
        %v6689 = vadd.f32 0.0, %v6688
        %v6690 = vpop.f32.mrb[0].mxu0
        %v6691 = vadd.f32 0.0, %v6690
        %v6692 = vpop.f32.mrb[0].mxu0
        %v6693 = vadd.f32 0.0, %v6692
        %6694 = vmatprep.mubr.bf16.mxu0 0
        %6695 = vmatmul.mubr.bf16.gmra.mrb[0].mxu0 %v2988
        %v6696 = vpop.f32.mrb[0].mxu0
        %v6697 = vadd.f32 0.0, %v6696
        %v6698 = vpop.f32.mrb[0].mxu0
        %v6699 = vadd.f32 0.0, %v6698
        %v6700 = vpop.f32.mrb[0].mxu0
        %v6701 = vadd.f32 0.0, %v6700
        %v6702 = vpop.f32.mrb[0].mxu0
        %v6703 = vadd.f32 0.0, %v6702
        %6704 = vdwg.mxu0
        %v6705 = vlaneseq
        %v6706 = vshrl.u32 %v6705, 7
        %v6707 = vadd.s32 %v6706, 8
        %v6708 = vadd.s32 %v6706, 16
        %v6709 = vadd.s32 %v6706, 24
        %v6710 = vadd.s32 %v6706, 32
        %v6711 = vadd.s32 %v6706, 40
        %v6712 = vadd.s32 %v6706, 48
        %v6713 = vadd.s32 %v6706, 56
        %v6714 = vadd.s32 %v6706, 64
        %v6715 = vadd.s32 %v6706, 72
        %v6716 = vadd.s32 %v6706, 80
        %v6717 = vadd.s32 %v6706, 88
        %v6718 = vadd.s32 %v6706, 96
        %v6719 = vadd.s32 %v6706, 104
        %v6720 = vadd.s32 %v6706, 112
        %v6721 = vadd.s32 %v6706, 120
        %v6722 = vadd.s32 %v6706, 128
        %v6723 = vadd.s32 %v6706, 136
        %v6724 = vadd.s32 %v6706, 144
        %v6725 = vadd.s32 %v6706, 152
        %v6726 = vadd.s32 %v6706, 160
        %v6727 = vadd.s32 %v6706, 168
        %v6728 = vadd.s32 %v6706, 176
        %v6729 = vadd.s32 %v6706, 184
        %v6730 = vadd.s32 %v6706, 192
        %v6731 = vadd.s32 %v6706, 200
        %v6732 = vadd.s32 %v6706, 208
        %v6733 = vadd.s32 %v6706, 216
        %v6734 = vadd.s32 %v6706, 224
        %v6735 = vadd.s32 %v6706, 232
        %v6736 = vadd.s32 %v6706, 240
        %v6737 = vadd.s32 %v6706, 248
        %v6738 = vadd.s32 %v6706, 256
        %v6739 = vadd.s32 %v6706, 264
        %v6740 = vadd.s32 %v6706, 272
        %v6741 = vadd.s32 %v6706, 280
        %v6742 = vadd.s32 %v6706, 288
        %v6743 = vadd.s32 %v6706, 296
        %v6744 = vadd.s32 %v6706, 304
        %v6745 = vadd.s32 %v6706, 312
        %v6746 = vadd.s32 %v6706, 320
        %v6747 = vadd.s32 %v6706, 328
        %v6748 = vadd.s32 %v6706, 336
        %v6749 = vadd.s32 %v6706, 344
        %v6750 = vadd.s32 %v6706, 352
        %v6751 = vadd.s32 %v6706, 360
        %v6752 = vadd.s32 %v6706, 368
        %v6753 = vadd.s32 %v6706, 376
        %v6754 = vadd.s32 %v6706, 384
        %v6755 = vadd.s32 %v6706, 392
        %v6756 = vadd.s32 %v6706, 400
        %v6757 = vadd.s32 %v6706, 408
        %v6758 = vadd.s32 %v6706, 416
        %v6759 = vadd.s32 %v6706, 424
        %v6760 = vadd.s32 %v6706, 432
        %v6761 = vadd.s32 %v6706, 440
        %v6762 = vadd.s32 %v6706, 448
        %v6763 = vadd.s32 %v6706, 456
        %v6764 = vadd.s32 %v6706, 464
        %v6765 = vadd.s32 %v6706, 472
        %v6766 = vadd.s32 %v6706, 480
        %v6767 = vadd.s32 %v6706, 488
        %v6768 = vadd.s32 %v6706, 496
        %v6769 = vadd.s32 %v6706, 504
        %v6770 = vadd.s32 %v6706, 512
        %v6771 = vadd.s32 %v6706, 520
        %v6772 = vadd.s32 %v6706, 528
        %v6773 = vadd.s32 %v6706, 536
        %v6774 = vadd.s32 %v6706, 544
        %v6775 = vadd.s32 %v6706, 552
        %v6776 = vadd.s32 %v6706, 560
        %v6777 = vadd.s32 %v6706, 568
        %v6778 = vadd.s32 %v6706, 576
        %v6779 = vadd.s32 %v6706, 584
        %v6780 = vadd.s32 %v6706, 592
        %v6781 = vadd.s32 %v6706, 600
        %v6782 = vadd.s32 %v6706, 608
        %v6783 = vadd.s32 %v6706, 616
        %v6784 = vadd.s32 %v6706, 624
        %v6785 = vadd.s32 %v6706, 632
        %v6786 = vadd.s32 %v6706, 640
        %v6787 = vadd.s32 %v6706, 648
        %v6788 = vadd.s32 %v6706, 656
        %v6789 = vadd.s32 %v6706, 664
        %v6790 = vadd.s32 %v6706, 672
        %v6791 = vadd.s32 %v6706, 680
        %v6792 = vadd.s32 %v6706, 688
        %v6793 = vadd.s32 %v6706, 696
        %v6794 = vadd.s32 %v6706, 704
        %v6795 = vadd.s32 %v6706, 712
        %v6796 = vadd.s32 %v6706, 720
        %v6797 = vadd.s32 %v6706, 728
        %v6798 = vadd.s32 %v6706, 736
        %v6799 = vadd.s32 %v6706, 744
        %v6800 = vadd.s32 %v6706, 752
        %v6801 = vadd.s32 %v6706, 760
        %v6802 = vadd.s32 %v6706, 768
        %v6803 = vadd.s32 %v6706, 776
        %v6804 = vadd.s32 %v6706, 784
        %v6805 = vadd.s32 %v6706, 792
        %v6806 = vadd.s32 %v6706, 800
        %v6807 = vadd.s32 %v6706, 808
        %v6808 = vadd.s32 %v6706, 816
        %v6809 = vadd.s32 %v6706, 824
        %v6810 = vadd.s32 %v6706, 832
        %v6811 = vadd.s32 %v6706, 840
        %v6812 = vadd.s32 %v6706, 848
        %v6813 = vadd.s32 %v6706, 856
        %v6814 = vadd.s32 %v6706, 864
        %v6815 = vadd.s32 %v6706, 872
        %v6816 = vadd.s32 %v6706, 880
        %v6817 = vadd.s32 %v6706, 888
        %v6818 = vadd.s32 %v6706, 896
        %v6819 = vadd.s32 %v6706, 904
        %v6820 = vadd.s32 %v6706, 912
        %v6821 = vadd.s32 %v6706, 920
        %v6822 = vadd.s32 %v6706, 928
        %v6823 = vadd.s32 %v6706, 936
        %v6824 = vadd.s32 %v6706, 944
        %v6825 = vadd.s32 %v6706, 952
        %v6826 = vadd.s32 %v6706, 960
        %v6827 = vadd.s32 %v6706, 968
        %v6828 = vadd.s32 %v6706, 976
        %v6829 = vadd.s32 %v6706, 984
        %v6830 = vadd.s32 %v6706, 992
        %v6831 = vadd.s32 %v6706, 1000
        %v6832 = vadd.s32 %v6706, 1008
        %v6833 = vadd.s32 %v6706, 1016
        %v6834 = vadd.s32 %v6706, 1024
        %v6835 = vadd.s32 %v6706, 1032
        %v6836 = vadd.s32 %v6706, 1040
        %v6837 = vadd.s32 %v6706, 1048
        %v6838 = vadd.s32 %v6706, 1056
        %v6839 = vadd.s32 %v6706, 1064
        %v6840 = vadd.s32 %v6706, 1072
        %v6841 = vadd.s32 %v6706, 1080
        %v6842 = vadd.s32 %v6706, 1088
        %v6843 = vadd.s32 %v6706, 1096
        %v6844 = vadd.s32 %v6706, 1104
        %v6845 = vadd.s32 %v6706, 1112
        %v6846 = vadd.s32 %v6706, 1120
        %v6847 = vadd.s32 %v6706, 1128
        %v6848 = vadd.s32 %v6706, 1136
        %v6849 = vadd.s32 %v6706, 1144
        %v6850 = vadd.s32 %v6706, 1152
        %v6851 = vadd.s32 %v6706, 1160
        %v6852 = vadd.s32 %v6706, 1168
        %v6853 = vadd.s32 %v6706, 1176
        %v6854 = vadd.s32 %v6706, 1184
        %v6855 = vadd.s32 %v6706, 1192
        %v6856 = vadd.s32 %v6706, 1200
        %v6857 = vadd.s32 %v6706, 1208
        %v6858 = vadd.s32 %v6706, 1216
        %v6859 = vadd.s32 %v6706, 1224
        %v6860 = vadd.s32 %v6706, 1232
        %v6861 = vadd.s32 %v6706, 1240
        %v6862 = vadd.s32 %v6706, 1248
        %v6863 = vadd.s32 %v6706, 1256
        %v6864 = vadd.s32 %v6706, 1264
        %v6865 = vadd.s32 %v6706, 1272
        %v6866 = vadd.s32 %v6706, %v396
        %v6867 = vadd.s32 %v6707, %v396
        %v6868 = vadd.s32 %v6708, %v396
        %v6869 = vadd.s32 %v6709, %v396
        %v6870 = vadd.s32 %v6710, %v396
        %v6871 = vadd.s32 %v6711, %v396
        %v6872 = vadd.s32 %v6712, %v396
        %v6873 = vadd.s32 %v6713, %v396
        %v6874 = vadd.s32 %v6714, %v396
        %v6875 = vadd.s32 %v6715, %v396
        %v6876 = vadd.s32 %v6716, %v396
        %v6877 = vadd.s32 %v6717, %v396
        %v6878 = vadd.s32 %v6718, %v396
        %v6879 = vadd.s32 %v6719, %v396
        %v6880 = vadd.s32 %v6720, %v396
        %v6881 = vadd.s32 %v6721, %v396
        %v6882 = vadd.s32 %v6722, %v396
        %v6883 = vadd.s32 %v6723, %v396
        %v6884 = vadd.s32 %v6724, %v396
        %v6885 = vadd.s32 %v6725, %v396
        %v6886 = vadd.s32 %v6726, %v396
        %v6887 = vadd.s32 %v6727, %v396
        %v6888 = vadd.s32 %v6728, %v396
        %v6889 = vadd.s32 %v6729, %v396
        %v6890 = vadd.s32 %v6730, %v396
        %v6891 = vadd.s32 %v6731, %v396
        %v6892 = vadd.s32 %v6732, %v396
        %v6893 = vadd.s32 %v6733, %v396
        %v6894 = vadd.s32 %v6734, %v396
        %v6895 = vadd.s32 %v6735, %v396
        %v6896 = vadd.s32 %v6736, %v396
        %v6897 = vadd.s32 %v6737, %v396
        %v6898 = vadd.s32 %v6738, %v396
        %v6899 = vadd.s32 %v6739, %v396
        %v6900 = vadd.s32 %v6740, %v396
        %v6901 = vadd.s32 %v6741, %v396
        %v6902 = vadd.s32 %v6742, %v396
        %v6903 = vadd.s32 %v6743, %v396
        %v6904 = vadd.s32 %v6744, %v396
        %v6905 = vadd.s32 %v6745, %v396
        %v6906 = vadd.s32 %v6746, %v396
        %v6907 = vadd.s32 %v6747, %v396
        %v6908 = vadd.s32 %v6748, %v396
        %v6909 = vadd.s32 %v6749, %v396
        %v6910 = vadd.s32 %v6750, %v396
        %v6911 = vadd.s32 %v6751, %v396
        %v6912 = vadd.s32 %v6752, %v396
        %v6913 = vadd.s32 %v6753, %v396
        %v6914 = vadd.s32 %v6754, %v396
        %v6915 = vadd.s32 %v6755, %v396
        %v6916 = vadd.s32 %v6756, %v396
        %v6917 = vadd.s32 %v6757, %v396
        %v6918 = vadd.s32 %v6758, %v396
        %v6919 = vadd.s32 %v6759, %v396
        %v6920 = vadd.s32 %v6760, %v396
        %v6921 = vadd.s32 %v6761, %v396
        %v6922 = vadd.s32 %v6762, %v396
        %v6923 = vadd.s32 %v6763, %v396
        %v6924 = vadd.s32 %v6764, %v396
        %v6925 = vadd.s32 %v6765, %v396
        %v6926 = vadd.s32 %v6766, %v396
        %v6927 = vadd.s32 %v6767, %v396
        %v6928 = vadd.s32 %v6768, %v396
        %v6929 = vadd.s32 %v6769, %v396
        %v6930 = vadd.s32 %v6770, %v396
        %v6931 = vadd.s32 %v6771, %v396
        %v6932 = vadd.s32 %v6772, %v396
        %v6933 = vadd.s32 %v6773, %v396
        %v6934 = vadd.s32 %v6774, %v396
        %v6935 = vadd.s32 %v6775, %v396
        %v6936 = vadd.s32 %v6776, %v396
        %v6937 = vadd.s32 %v6777, %v396
        %v6938 = vadd.s32 %v6778, %v396
        %v6939 = vadd.s32 %v6779, %v396
        %v6940 = vadd.s32 %v6780, %v396
        %v6941 = vadd.s32 %v6781, %v396
        %v6942 = vadd.s32 %v6782, %v396
        %v6943 = vadd.s32 %v6783, %v396
        %v6944 = vadd.s32 %v6784, %v396
        %v6945 = vadd.s32 %v6785, %v396
        %v6946 = vadd.s32 %v6786, %v396
        %v6947 = vadd.s32 %v6787, %v396
        %v6948 = vadd.s32 %v6788, %v396
        %v6949 = vadd.s32 %v6789, %v396
        %v6950 = vadd.s32 %v6790, %v396
        %v6951 = vadd.s32 %v6791, %v396
        %v6952 = vadd.s32 %v6792, %v396
        %v6953 = vadd.s32 %v6793, %v396
        %v6954 = vadd.s32 %v6794, %v396
        %v6955 = vadd.s32 %v6795, %v396
        %v6956 = vadd.s32 %v6796, %v396
        %v6957 = vadd.s32 %v6797, %v396
        %v6958 = vadd.s32 %v6798, %v396
        %v6959 = vadd.s32 %v6799, %v396
        %v6960 = vadd.s32 %v6800, %v396
        %v6961 = vadd.s32 %v6801, %v396
        %v6962 = vadd.s32 %v6802, %v396
        %v6963 = vadd.s32 %v6803, %v396
        %v6964 = vadd.s32 %v6804, %v396
        %v6965 = vadd.s32 %v6805, %v396
        %v6966 = vadd.s32 %v6806, %v396
        %v6967 = vadd.s32 %v6807, %v396
        %v6968 = vadd.s32 %v6808, %v396
        %v6969 = vadd.s32 %v6809, %v396
        %v6970 = vadd.s32 %v6810, %v396
        %v6971 = vadd.s32 %v6811, %v396
        %v6972 = vadd.s32 %v6812, %v396
        %v6973 = vadd.s32 %v6813, %v396
        %v6974 = vadd.s32 %v6814, %v396
        %v6975 = vadd.s32 %v6815, %v396
        %v6976 = vadd.s32 %v6816, %v396
        %v6977 = vadd.s32 %v6817, %v396
        %v6978 = vadd.s32 %v6818, %v396
        %v6979 = vadd.s32 %v6819, %v396
        %v6980 = vadd.s32 %v6820, %v396
        %v6981 = vadd.s32 %v6821, %v396
        %v6982 = vadd.s32 %v6822, %v396
        %v6983 = vadd.s32 %v6823, %v396
        %v6984 = vadd.s32 %v6824, %v396
        %v6985 = vadd.s32 %v6825, %v396
        %v6986 = vadd.s32 %v6826, %v396
        %v6987 = vadd.s32 %v6827, %v396
        %v6988 = vadd.s32 %v6828, %v396
        %v6989 = vadd.s32 %v6829, %v396
        %v6990 = vadd.s32 %v6830, %v396
        %v6991 = vadd.s32 %v6831, %v396
        %v6992 = vadd.s32 %v6832, %v396
        %v6993 = vadd.s32 %v6833, %v396
        %v6994 = vadd.s32 %v6834, %v396
        %v6995 = vadd.s32 %v6835, %v396
        %v6996 = vadd.s32 %v6836, %v396
        %v6997 = vadd.s32 %v6837, %v396
        %v6998 = vadd.s32 %v6838, %v396
        %v6999 = vadd.s32 %v6839, %v396
        %v7000 = vadd.s32 %v6840, %v396
        %v7001 = vadd.s32 %v6841, %v396
        %v7002 = vadd.s32 %v6842, %v396
        %v7003 = vadd.s32 %v6843, %v396
        %v7004 = vadd.s32 %v6844, %v396
        %v7005 = vadd.s32 %v6845, %v396
        %v7006 = vadd.s32 %v6846, %v396
        %v7007 = vadd.s32 %v6847, %v396
        %v7008 = vadd.s32 %v6848, %v396
        %v7009 = vadd.s32 %v6849, %v396
        %v7010 = vadd.s32 %v6850, %v396
        %v7011 = vadd.s32 %v6851, %v396
        %v7012 = vadd.s32 %v6852, %v396
        %v7013 = vadd.s32 %v6853, %v396
        %v7014 = vadd.s32 %v6854, %v396
        %v7015 = vadd.s32 %v6855, %v396
        %v7016 = vadd.s32 %v6856, %v396
        %v7017 = vadd.s32 %v6857, %v396
        %v7018 = vadd.s32 %v6858, %v396
        %v7019 = vadd.s32 %v6859, %v396
        %v7020 = vadd.s32 %v6860, %v396
        %v7021 = vadd.s32 %v6861, %v396
        %v7022 = vadd.s32 %v6862, %v396
        %v7023 = vadd.s32 %v6863, %v396
        %v7024 = vadd.s32 %v6864, %v396
        %v7025 = vadd.s32 %v6865, %v396
        %vm7026 = vcmp.lt.s32.totalorder %v6866, 1200
        %vm7027 = vcmp.lt.s32.totalorder %v6867, 1200
        %vm7028 = vcmp.lt.s32.totalorder %v6868, 1200
        %vm7029 = vcmp.lt.s32.totalorder %v6869, 1200
        %vm7030 = vcmp.lt.s32.totalorder %v6870, 1200
        %vm7031 = vcmp.lt.s32.totalorder %v6871, 1200
        %vm7032 = vcmp.lt.s32.totalorder %v6872, 1200
        %vm7033 = vcmp.lt.s32.totalorder %v6873, 1200
        %vm7034 = vcmp.lt.s32.totalorder %v6874, 1200
        %vm7035 = vcmp.lt.s32.totalorder %v6875, 1200
        %vm7036 = vcmp.lt.s32.totalorder %v6876, 1200
        %vm7037 = vcmp.lt.s32.totalorder %v6877, 1200
        %vm7038 = vcmp.lt.s32.totalorder %v6878, 1200
        %vm7039 = vcmp.lt.s32.totalorder %v6879, 1200
        %vm7040 = vcmp.lt.s32.totalorder %v6880, 1200
        %vm7041 = vcmp.lt.s32.totalorder %v6881, 1200
        %vm7042 = vcmp.lt.s32.totalorder %v6882, 1200
        %vm7043 = vcmp.lt.s32.totalorder %v6883, 1200
        %vm7044 = vcmp.lt.s32.totalorder %v6884, 1200
        %vm7045 = vcmp.lt.s32.totalorder %v6885, 1200
        %vm7046 = vcmp.lt.s32.totalorder %v6886, 1200
        %vm7047 = vcmp.lt.s32.totalorder %v6887, 1200
        %vm7048 = vcmp.lt.s32.totalorder %v6888, 1200
        %vm7049 = vcmp.lt.s32.totalorder %v6889, 1200
        %vm7050 = vcmp.lt.s32.totalorder %v6890, 1200
        %vm7051 = vcmp.lt.s32.totalorder %v6891, 1200
        %vm7052 = vcmp.lt.s32.totalorder %v6892, 1200
        %vm7053 = vcmp.lt.s32.totalorder %v6893, 1200
        %vm7054 = vcmp.lt.s32.totalorder %v6894, 1200
        %vm7055 = vcmp.lt.s32.totalorder %v6895, 1200
        %vm7056 = vcmp.lt.s32.totalorder %v6896, 1200
        %vm7057 = vcmp.lt.s32.totalorder %v6897, 1200
        %vm7058 = vcmp.lt.s32.totalorder %v6898, 1200
        %vm7059 = vcmp.lt.s32.totalorder %v6899, 1200
        %vm7060 = vcmp.lt.s32.totalorder %v6900, 1200
        %vm7061 = vcmp.lt.s32.totalorder %v6901, 1200
        %vm7062 = vcmp.lt.s32.totalorder %v6902, 1200
        %vm7063 = vcmp.lt.s32.totalorder %v6903, 1200
        %vm7064 = vcmp.lt.s32.totalorder %v6904, 1200
        %vm7065 = vcmp.lt.s32.totalorder %v6905, 1200
        %vm7066 = vcmp.lt.s32.totalorder %v6906, 1200
        %vm7067 = vcmp.lt.s32.totalorder %v6907, 1200
        %vm7068 = vcmp.lt.s32.totalorder %v6908, 1200
        %vm7069 = vcmp.lt.s32.totalorder %v6909, 1200
        %vm7070 = vcmp.lt.s32.totalorder %v6910, 1200
        %vm7071 = vcmp.lt.s32.totalorder %v6911, 1200
        %vm7072 = vcmp.lt.s32.totalorder %v6912, 1200
        %vm7073 = vcmp.lt.s32.totalorder %v6913, 1200
        %vm7074 = vcmp.lt.s32.totalorder %v6914, 1200
        %vm7075 = vcmp.lt.s32.totalorder %v6915, 1200
        %vm7076 = vcmp.lt.s32.totalorder %v6916, 1200
        %vm7077 = vcmp.lt.s32.totalorder %v6917, 1200
        %vm7078 = vcmp.lt.s32.totalorder %v6918, 1200
        %vm7079 = vcmp.lt.s32.totalorder %v6919, 1200
        %vm7080 = vcmp.lt.s32.totalorder %v6920, 1200
        %vm7081 = vcmp.lt.s32.totalorder %v6921, 1200
        %vm7082 = vcmp.lt.s32.totalorder %v6922, 1200
        %vm7083 = vcmp.lt.s32.totalorder %v6923, 1200
        %vm7084 = vcmp.lt.s32.totalorder %v6924, 1200
        %vm7085 = vcmp.lt.s32.totalorder %v6925, 1200
        %vm7086 = vcmp.lt.s32.totalorder %v6926, 1200
        %vm7087 = vcmp.lt.s32.totalorder %v6927, 1200
        %vm7088 = vcmp.lt.s32.totalorder %v6928, 1200
        %vm7089 = vcmp.lt.s32.totalorder %v6929, 1200
        %vm7090 = vcmp.lt.s32.totalorder %v6930, 1200
        %vm7091 = vcmp.lt.s32.totalorder %v6931, 1200
        %vm7092 = vcmp.lt.s32.totalorder %v6932, 1200
        %vm7093 = vcmp.lt.s32.totalorder %v6933, 1200
        %vm7094 = vcmp.lt.s32.totalorder %v6934, 1200
        %vm7095 = vcmp.lt.s32.totalorder %v6935, 1200
        %vm7096 = vcmp.lt.s32.totalorder %v6936, 1200
        %vm7097 = vcmp.lt.s32.totalorder %v6937, 1200
        %vm7098 = vcmp.lt.s32.totalorder %v6938, 1200
        %vm7099 = vcmp.lt.s32.totalorder %v6939, 1200
        %vm7100 = vcmp.lt.s32.totalorder %v6940, 1200
        %vm7101 = vcmp.lt.s32.totalorder %v6941, 1200
        %vm7102 = vcmp.lt.s32.totalorder %v6942, 1200
        %vm7103 = vcmp.lt.s32.totalorder %v6943, 1200
        %vm7104 = vcmp.lt.s32.totalorder %v6944, 1200
        %vm7105 = vcmp.lt.s32.totalorder %v6945, 1200
        %vm7106 = vcmp.lt.s32.totalorder %v6946, 1200
        %vm7107 = vcmp.lt.s32.totalorder %v6947, 1200
        %vm7108 = vcmp.lt.s32.totalorder %v6948, 1200
        %vm7109 = vcmp.lt.s32.totalorder %v6949, 1200
        %vm7110 = vcmp.lt.s32.totalorder %v6950, 1200
        %vm7111 = vcmp.lt.s32.totalorder %v6951, 1200
        %vm7112 = vcmp.lt.s32.totalorder %v6952, 1200
        %vm7113 = vcmp.lt.s32.totalorder %v6953, 1200
        %vm7114 = vcmp.lt.s32.totalorder %v6954, 1200
        %vm7115 = vcmp.lt.s32.totalorder %v6955, 1200
        %vm7116 = vcmp.lt.s32.totalorder %v6956, 1200
        %vm7117 = vcmp.lt.s32.totalorder %v6957, 1200
        %vm7118 = vcmp.lt.s32.totalorder %v6958, 1200
        %vm7119 = vcmp.lt.s32.totalorder %v6959, 1200
        %vm7120 = vcmp.lt.s32.totalorder %v6960, 1200
        %vm7121 = vcmp.lt.s32.totalorder %v6961, 1200
        %vm7122 = vcmp.lt.s32.totalorder %v6962, 1200
        %vm7123 = vcmp.lt.s32.totalorder %v6963, 1200
        %vm7124 = vcmp.lt.s32.totalorder %v6964, 1200
        %vm7125 = vcmp.lt.s32.totalorder %v6965, 1200
        %vm7126 = vcmp.lt.s32.totalorder %v6966, 1200
        %vm7127 = vcmp.lt.s32.totalorder %v6967, 1200
        %vm7128 = vcmp.lt.s32.totalorder %v6968, 1200
        %vm7129 = vcmp.lt.s32.totalorder %v6969, 1200
        %vm7130 = vcmp.lt.s32.totalorder %v6970, 1200
        %vm7131 = vcmp.lt.s32.totalorder %v6971, 1200
        %vm7132 = vcmp.lt.s32.totalorder %v6972, 1200
        %vm7133 = vcmp.lt.s32.totalorder %v6973, 1200
        %vm7134 = vcmp.lt.s32.totalorder %v6974, 1200
        %vm7135 = vcmp.lt.s32.totalorder %v6975, 1200
        %vm7136 = vcmp.lt.s32.totalorder %v6976, 1200
        %vm7137 = vcmp.lt.s32.totalorder %v6977, 1200
        %vm7138 = vcmp.lt.s32.totalorder %v6978, 1200
        %vm7139 = vcmp.lt.s32.totalorder %v6979, 1200
        %vm7140 = vcmp.lt.s32.totalorder %v6980, 1200
        %vm7141 = vcmp.lt.s32.totalorder %v6981, 1200
        %vm7142 = vcmp.lt.s32.totalorder %v6982, 1200
        %vm7143 = vcmp.lt.s32.totalorder %v6983, 1200
        %vm7144 = vcmp.lt.s32.totalorder %v6984, 1200
        %vm7145 = vcmp.lt.s32.totalorder %v6985, 1200
        %vm7146 = vcmp.lt.s32.totalorder %v6986, 1200
        %vm7147 = vcmp.lt.s32.totalorder %v6987, 1200
        %vm7148 = vcmp.lt.s32.totalorder %v6988, 1200
        %vm7149 = vcmp.lt.s32.totalorder %v6989, 1200
        %vm7150 = vcmp.lt.s32.totalorder %v6990, 1200
        %vm7151 = vcmp.lt.s32.totalorder %v6991, 1200
        %vm7152 = vcmp.lt.s32.totalorder %v6992, 1200
        %vm7153 = vcmp.lt.s32.totalorder %v6993, 1200
        %vm7154 = vcmp.lt.s32.totalorder %v6994, 1200
        %vm7155 = vcmp.lt.s32.totalorder %v6995, 1200
        %vm7156 = vcmp.lt.s32.totalorder %v6996, 1200
        %vm7157 = vcmp.lt.s32.totalorder %v6997, 1200
        %vm7158 = vcmp.lt.s32.totalorder %v6998, 1200
        %vm7159 = vcmp.lt.s32.totalorder %v6999, 1200
        %vm7160 = vcmp.lt.s32.totalorder %v7000, 1200
        %vm7161 = vcmp.lt.s32.totalorder %v7001, 1200
        %vm7162 = vcmp.lt.s32.totalorder %v7002, 1200
        %vm7163 = vcmp.lt.s32.totalorder %v7003, 1200
        %vm7164 = vcmp.lt.s32.totalorder %v7004, 1200
        %vm7165 = vcmp.lt.s32.totalorder %v7005, 1200
        %vm7166 = vcmp.lt.s32.totalorder %v7006, 1200
        %vm7167 = vcmp.lt.s32.totalorder %v7007, 1200
        %vm7168 = vcmp.lt.s32.totalorder %v7008, 1200
        %vm7169 = vcmp.lt.s32.totalorder %v7009, 1200
        %vm7170 = vcmp.lt.s32.totalorder %v7010, 1200
        %vm7171 = vcmp.lt.s32.totalorder %v7011, 1200
        %vm7172 = vcmp.lt.s32.totalorder %v7012, 1200
        %vm7173 = vcmp.lt.s32.totalorder %v7013, 1200
        %vm7174 = vcmp.lt.s32.totalorder %v7014, 1200
        %vm7175 = vcmp.lt.s32.totalorder %v7015, 1200
        %vm7176 = vcmp.lt.s32.totalorder %v7016, 1200
        %vm7177 = vcmp.lt.s32.totalorder %v7017, 1200
        %vm7178 = vcmp.lt.s32.totalorder %v7018, 1200
        %vm7179 = vcmp.lt.s32.totalorder %v7019, 1200
        %vm7180 = vcmp.lt.s32.totalorder %v7020, 1200
        %vm7181 = vcmp.lt.s32.totalorder %v7021, 1200
        %vm7182 = vcmp.lt.s32.totalorder %v7022, 1200
        %vm7183 = vcmp.lt.s32.totalorder %v7023, 1200
        %vm7184 = vcmp.lt.s32.totalorder %v7024, 1200
        %vm7185 = vcmp.lt.s32.totalorder %v7025, 1200
        %v7186 = vsel %vm7026, 1, 0
        %v7187 = vsel %vm7027, 1, 0
        %v7188 = vsel %vm7028, 1, 0
        %v7189 = vsel %vm7029, 1, 0
        %v7190 = vsel %vm7030, 1, 0
        %v7191 = vsel %vm7031, 1, 0
        %v7192 = vsel %vm7032, 1, 0
        %v7193 = vsel %vm7033, 1, 0
        %v7194 = vsel %vm7034, 1, 0
        %v7195 = vsel %vm7035, 1, 0
        %v7196 = vsel %vm7036, 1, 0
        %v7197 = vsel %vm7037, 1, 0
        %v7198 = vsel %vm7038, 1, 0
        %v7199 = vsel %vm7039, 1, 0
        %v7200 = vsel %vm7040, 1, 0
        %v7201 = vsel %vm7041, 1, 0
        %v7202 = vsel %vm7042, 1, 0
        %v7203 = vsel %vm7043, 1, 0
        %v7204 = vsel %vm7044, 1, 0
        %v7205 = vsel %vm7045, 1, 0
        %v7206 = vsel %vm7046, 1, 0
        %v7207 = vsel %vm7047, 1, 0
        %v7208 = vsel %vm7048, 1, 0
        %v7209 = vsel %vm7049, 1, 0
        %v7210 = vsel %vm7050, 1, 0
        %v7211 = vsel %vm7051, 1, 0
        %v7212 = vsel %vm7052, 1, 0
        %v7213 = vsel %vm7053, 1, 0
        %v7214 = vsel %vm7054, 1, 0
        %v7215 = vsel %vm7055, 1, 0
        %v7216 = vsel %vm7056, 1, 0
        %v7217 = vsel %vm7057, 1, 0
        %v7218 = vsel %vm7058, 1, 0
        %v7219 = vsel %vm7059, 1, 0
        %v7220 = vsel %vm7060, 1, 0
        %v7221 = vsel %vm7061, 1, 0
        %v7222 = vsel %vm7062, 1, 0
        %v7223 = vsel %vm7063, 1, 0
        %v7224 = vsel %vm7064, 1, 0
        %v7225 = vsel %vm7065, 1, 0
        %v7226 = vsel %vm7066, 1, 0
        %v7227 = vsel %vm7067, 1, 0
        %v7228 = vsel %vm7068, 1, 0
        %v7229 = vsel %vm7069, 1, 0
        %v7230 = vsel %vm7070, 1, 0
        %v7231 = vsel %vm7071, 1, 0
        %v7232 = vsel %vm7072, 1, 0
        %v7233 = vsel %vm7073, 1, 0
        %v7234 = vsel %vm7074, 1, 0
        %v7235 = vsel %vm7075, 1, 0
        %v7236 = vsel %vm7076, 1, 0
        %v7237 = vsel %vm7077, 1, 0
        %v7238 = vsel %vm7078, 1, 0
        %v7239 = vsel %vm7079, 1, 0
        %v7240 = vsel %vm7080, 1, 0
        %v7241 = vsel %vm7081, 1, 0
        %v7242 = vsel %vm7082, 1, 0
        %v7243 = vsel %vm7083, 1, 0
        %v7244 = vsel %vm7084, 1, 0
        %v7245 = vsel %vm7085, 1, 0
        %v7246 = vsel %vm7086, 1, 0
        %v7247 = vsel %vm7087, 1, 0
        %v7248 = vsel %vm7088, 1, 0
        %v7249 = vsel %vm7089, 1, 0
        %v7250 = vsel %vm7090, 1, 0
        %v7251 = vsel %vm7091, 1, 0
        %v7252 = vsel %vm7092, 1, 0
        %v7253 = vsel %vm7093, 1, 0
        %v7254 = vsel %vm7094, 1, 0
        %v7255 = vsel %vm7095, 1, 0
        %v7256 = vsel %vm7096, 1, 0
        %v7257 = vsel %vm7097, 1, 0
        %v7258 = vsel %vm7098, 1, 0
        %v7259 = vsel %vm7099, 1, 0
        %v7260 = vsel %vm7100, 1, 0
        %v7261 = vsel %vm7101, 1, 0
        %v7262 = vsel %vm7102, 1, 0
        %v7263 = vsel %vm7103, 1, 0
        %v7264 = vsel %vm7104, 1, 0
        %v7265 = vsel %vm7105, 1, 0
        %v7266 = vsel %vm7106, 1, 0
        %v7267 = vsel %vm7107, 1, 0
        %v7268 = vsel %vm7108, 1, 0
        %v7269 = vsel %vm7109, 1, 0
        %v7270 = vsel %vm7110, 1, 0
        %v7271 = vsel %vm7111, 1, 0
        %v7272 = vsel %vm7112, 1, 0
        %v7273 = vsel %vm7113, 1, 0
        %v7274 = vsel %vm7114, 1, 0
        %v7275 = vsel %vm7115, 1, 0
        %v7276 = vsel %vm7116, 1, 0
        %v7277 = vsel %vm7117, 1, 0
        %v7278 = vsel %vm7118, 1, 0
        %v7279 = vsel %vm7119, 1, 0
        %v7280 = vsel %vm7120, 1, 0
        %v7281 = vsel %vm7121, 1, 0
        %v7282 = vsel %vm7122, 1, 0
        %v7283 = vsel %vm7123, 1, 0
        %v7284 = vsel %vm7124, 1, 0
        %v7285 = vsel %vm7125, 1, 0
        %v7286 = vsel %vm7126, 1, 0
        %v7287 = vsel %vm7127, 1, 0
        %v7288 = vsel %vm7128, 1, 0
        %v7289 = vsel %vm7129, 1, 0
        %v7290 = vsel %vm7130, 1, 0
        %v7291 = vsel %vm7131, 1, 0
        %v7292 = vsel %vm7132, 1, 0
        %v7293 = vsel %vm7133, 1, 0
        %v7294 = vsel %vm7134, 1, 0
        %v7295 = vsel %vm7135, 1, 0
        %v7296 = vsel %vm7136, 1, 0
        %v7297 = vsel %vm7137, 1, 0
        %v7298 = vsel %vm7138, 1, 0
        %v7299 = vsel %vm7139, 1, 0
        %v7300 = vsel %vm7140, 1, 0
        %v7301 = vsel %vm7141, 1, 0
        %v7302 = vsel %vm7142, 1, 0
        %v7303 = vsel %vm7143, 1, 0
        %v7304 = vsel %vm7144, 1, 0
        %v7305 = vsel %vm7145, 1, 0
        %v7306 = vsel %vm7146, 1, 0
        %v7307 = vsel %vm7147, 1, 0
        %v7308 = vsel %vm7148, 1, 0
        %v7309 = vsel %vm7149, 1, 0
        %v7310 = vsel %vm7150, 1, 0
        %v7311 = vsel %vm7151, 1, 0
        %v7312 = vsel %vm7152, 1, 0
        %v7313 = vsel %vm7153, 1, 0
        %v7314 = vsel %vm7154, 1, 0
        %v7315 = vsel %vm7155, 1, 0
        %v7316 = vsel %vm7156, 1, 0
        %v7317 = vsel %vm7157, 1, 0
        %v7318 = vsel %vm7158, 1, 0
        %v7319 = vsel %vm7159, 1, 0
        %v7320 = vsel %vm7160, 1, 0
        %v7321 = vsel %vm7161, 1, 0
        %v7322 = vsel %vm7162, 1, 0
        %v7323 = vsel %vm7163, 1, 0
        %v7324 = vsel %vm7164, 1, 0
        %v7325 = vsel %vm7165, 1, 0
        %v7326 = vsel %vm7166, 1, 0
        %v7327 = vsel %vm7167, 1, 0
        %v7328 = vsel %vm7168, 1, 0
        %v7329 = vsel %vm7169, 1, 0
        %v7330 = vsel %vm7170, 1, 0
        %v7331 = vsel %vm7171, 1, 0
        %v7332 = vsel %vm7172, 1, 0
        %v7333 = vsel %vm7173, 1, 0
        %v7334 = vsel %vm7174, 1, 0
        %v7335 = vsel %vm7175, 1, 0
        %v7336 = vsel %vm7176, 1, 0
        %v7337 = vsel %vm7177, 1, 0
        %v7338 = vsel %vm7178, 1, 0
        %v7339 = vsel %vm7179, 1, 0
        %v7340 = vsel %vm7180, 1, 0
        %v7341 = vsel %vm7181, 1, 0
        %v7342 = vsel %vm7182, 1, 0
        %v7343 = vsel %vm7183, 1, 0
        %v7344 = vsel %vm7184, 1, 0
        %v7345 = vsel %vm7185, 1, 0
        %vm7346 = vcmp.eq.s32.totalorder %v7186, 1
        %vm7347 = vcmp.eq.s32.totalorder %v7187, 1
        %vm7348 = vcmp.eq.s32.totalorder %v7188, 1
        %vm7349 = vcmp.eq.s32.totalorder %v7189, 1
        %vm7350 = vcmp.eq.s32.totalorder %v7190, 1
        %vm7351 = vcmp.eq.s32.totalorder %v7191, 1
        %vm7352 = vcmp.eq.s32.totalorder %v7192, 1
        %vm7353 = vcmp.eq.s32.totalorder %v7193, 1
        %vm7354 = vcmp.eq.s32.totalorder %v7194, 1
        %vm7355 = vcmp.eq.s32.totalorder %v7195, 1
        %vm7356 = vcmp.eq.s32.totalorder %v7196, 1
        %vm7357 = vcmp.eq.s32.totalorder %v7197, 1
        %vm7358 = vcmp.eq.s32.totalorder %v7198, 1
        %vm7359 = vcmp.eq.s32.totalorder %v7199, 1
        %vm7360 = vcmp.eq.s32.totalorder %v7200, 1
        %vm7361 = vcmp.eq.s32.totalorder %v7201, 1
        %vm7362 = vcmp.eq.s32.totalorder %v7202, 1
        %vm7363 = vcmp.eq.s32.totalorder %v7203, 1
        %vm7364 = vcmp.eq.s32.totalorder %v7204, 1
        %vm7365 = vcmp.eq.s32.totalorder %v7205, 1
        %vm7366 = vcmp.eq.s32.totalorder %v7206, 1
        %vm7367 = vcmp.eq.s32.totalorder %v7207, 1
        %vm7368 = vcmp.eq.s32.totalorder %v7208, 1
        %vm7369 = vcmp.eq.s32.totalorder %v7209, 1
        %vm7370 = vcmp.eq.s32.totalorder %v7210, 1
        %vm7371 = vcmp.eq.s32.totalorder %v7211, 1
        %vm7372 = vcmp.eq.s32.totalorder %v7212, 1
        %vm7373 = vcmp.eq.s32.totalorder %v7213, 1
        %vm7374 = vcmp.eq.s32.totalorder %v7214, 1
        %vm7375 = vcmp.eq.s32.totalorder %v7215, 1
        %vm7376 = vcmp.eq.s32.totalorder %v7216, 1
        %vm7377 = vcmp.eq.s32.totalorder %v7217, 1
        %vm7378 = vcmp.eq.s32.totalorder %v7218, 1
        %vm7379 = vcmp.eq.s32.totalorder %v7219, 1
        %vm7380 = vcmp.eq.s32.totalorder %v7220, 1
        %vm7381 = vcmp.eq.s32.totalorder %v7221, 1
        %vm7382 = vcmp.eq.s32.totalorder %v7222, 1
        %vm7383 = vcmp.eq.s32.totalorder %v7223, 1
        %vm7384 = vcmp.eq.s32.totalorder %v7224, 1
        %vm7385 = vcmp.eq.s32.totalorder %v7225, 1
        %vm7386 = vcmp.eq.s32.totalorder %v7226, 1
        %vm7387 = vcmp.eq.s32.totalorder %v7227, 1
        %vm7388 = vcmp.eq.s32.totalorder %v7228, 1
        %vm7389 = vcmp.eq.s32.totalorder %v7229, 1
        %vm7390 = vcmp.eq.s32.totalorder %v7230, 1
        %vm7391 = vcmp.eq.s32.totalorder %v7231, 1
        %vm7392 = vcmp.eq.s32.totalorder %v7232, 1
        %vm7393 = vcmp.eq.s32.totalorder %v7233, 1
        %vm7394 = vcmp.eq.s32.totalorder %v7234, 1
        %vm7395 = vcmp.eq.s32.totalorder %v7235, 1
        %vm7396 = vcmp.eq.s32.totalorder %v7236, 1
        %vm7397 = vcmp.eq.s32.totalorder %v7237, 1
        %vm7398 = vcmp.eq.s32.totalorder %v7238, 1
        %vm7399 = vcmp.eq.s32.totalorder %v7239, 1
        %vm7400 = vcmp.eq.s32.totalorder %v7240, 1
        %vm7401 = vcmp.eq.s32.totalorder %v7241, 1
        %vm7402 = vcmp.eq.s32.totalorder %v7242, 1
        %vm7403 = vcmp.eq.s32.totalorder %v7243, 1
        %vm7404 = vcmp.eq.s32.totalorder %v7244, 1
        %vm7405 = vcmp.eq.s32.totalorder %v7245, 1
        %vm7406 = vcmp.eq.s32.totalorder %v7246, 1
        %vm7407 = vcmp.eq.s32.totalorder %v7247, 1
        %vm7408 = vcmp.eq.s32.totalorder %v7248, 1
        %vm7409 = vcmp.eq.s32.totalorder %v7249, 1
        %vm7410 = vcmp.eq.s32.totalorder %v7250, 1
        %vm7411 = vcmp.eq.s32.totalorder %v7251, 1
        %vm7412 = vcmp.eq.s32.totalorder %v7252, 1
        %vm7413 = vcmp.eq.s32.totalorder %v7253, 1
        %vm7414 = vcmp.eq.s32.totalorder %v7254, 1
        %vm7415 = vcmp.eq.s32.totalorder %v7255, 1
        %vm7416 = vcmp.eq.s32.totalorder %v7256, 1
        %vm7417 = vcmp.eq.s32.totalorder %v7257, 1
        %vm7418 = vcmp.eq.s32.totalorder %v7258, 1
        %vm7419 = vcmp.eq.s32.totalorder %v7259, 1
        %vm7420 = vcmp.eq.s32.totalorder %v7260, 1
        %vm7421 = vcmp.eq.s32.totalorder %v7261, 1
        %vm7422 = vcmp.eq.s32.totalorder %v7262, 1
        %vm7423 = vcmp.eq.s32.totalorder %v7263, 1
        %vm7424 = vcmp.eq.s32.totalorder %v7264, 1
        %vm7425 = vcmp.eq.s32.totalorder %v7265, 1
        %vm7426 = vcmp.eq.s32.totalorder %v7266, 1
        %vm7427 = vcmp.eq.s32.totalorder %v7267, 1
        %vm7428 = vcmp.eq.s32.totalorder %v7268, 1
        %vm7429 = vcmp.eq.s32.totalorder %v7269, 1
        %vm7430 = vcmp.eq.s32.totalorder %v7270, 1
        %vm7431 = vcmp.eq.s32.totalorder %v7271, 1
        %vm7432 = vcmp.eq.s32.totalorder %v7272, 1
        %vm7433 = vcmp.eq.s32.totalorder %v7273, 1
        %vm7434 = vcmp.eq.s32.totalorder %v7274, 1
        %vm7435 = vcmp.eq.s32.totalorder %v7275, 1
        %vm7436 = vcmp.eq.s32.totalorder %v7276, 1
        %vm7437 = vcmp.eq.s32.totalorder %v7277, 1
        %vm7438 = vcmp.eq.s32.totalorder %v7278, 1
        %vm7439 = vcmp.eq.s32.totalorder %v7279, 1
        %vm7440 = vcmp.eq.s32.totalorder %v7280, 1
        %vm7441 = vcmp.eq.s32.totalorder %v7281, 1
        %vm7442 = vcmp.eq.s32.totalorder %v7282, 1
        %vm7443 = vcmp.eq.s32.totalorder %v7283, 1
        %vm7444 = vcmp.eq.s32.totalorder %v7284, 1
        %vm7445 = vcmp.eq.s32.totalorder %v7285, 1
        %vm7446 = vcmp.eq.s32.totalorder %v7286, 1
        %vm7447 = vcmp.eq.s32.totalorder %v7287, 1
        %vm7448 = vcmp.eq.s32.totalorder %v7288, 1
        %vm7449 = vcmp.eq.s32.totalorder %v7289, 1
        %vm7450 = vcmp.eq.s32.totalorder %v7290, 1
        %vm7451 = vcmp.eq.s32.totalorder %v7291, 1
        %vm7452 = vcmp.eq.s32.totalorder %v7292, 1
        %vm7453 = vcmp.eq.s32.totalorder %v7293, 1
        %vm7454 = vcmp.eq.s32.totalorder %v7294, 1
        %vm7455 = vcmp.eq.s32.totalorder %v7295, 1
        %vm7456 = vcmp.eq.s32.totalorder %v7296, 1
        %vm7457 = vcmp.eq.s32.totalorder %v7297, 1
        %vm7458 = vcmp.eq.s32.totalorder %v7298, 1
        %vm7459 = vcmp.eq.s32.totalorder %v7299, 1
        %vm7460 = vcmp.eq.s32.totalorder %v7300, 1
        %vm7461 = vcmp.eq.s32.totalorder %v7301, 1
        %vm7462 = vcmp.eq.s32.totalorder %v7302, 1
        %vm7463 = vcmp.eq.s32.totalorder %v7303, 1
        %vm7464 = vcmp.eq.s32.totalorder %v7304, 1
        %vm7465 = vcmp.eq.s32.totalorder %v7305, 1
        %vm7466 = vcmp.eq.s32.totalorder %v7306, 1
        %vm7467 = vcmp.eq.s32.totalorder %v7307, 1
        %vm7468 = vcmp.eq.s32.totalorder %v7308, 1
        %vm7469 = vcmp.eq.s32.totalorder %v7309, 1
        %vm7470 = vcmp.eq.s32.totalorder %v7310, 1
        %vm7471 = vcmp.eq.s32.totalorder %v7311, 1
        %vm7472 = vcmp.eq.s32.totalorder %v7312, 1
        %vm7473 = vcmp.eq.s32.totalorder %v7313, 1
        %vm7474 = vcmp.eq.s32.totalorder %v7314, 1
        %vm7475 = vcmp.eq.s32.totalorder %v7315, 1
        %vm7476 = vcmp.eq.s32.totalorder %v7316, 1
        %vm7477 = vcmp.eq.s32.totalorder %v7317, 1
        %vm7478 = vcmp.eq.s32.totalorder %v7318, 1
        %vm7479 = vcmp.eq.s32.totalorder %v7319, 1
        %vm7480 = vcmp.eq.s32.totalorder %v7320, 1
        %vm7481 = vcmp.eq.s32.totalorder %v7321, 1
        %vm7482 = vcmp.eq.s32.totalorder %v7322, 1
        %vm7483 = vcmp.eq.s32.totalorder %v7323, 1
        %vm7484 = vcmp.eq.s32.totalorder %v7324, 1
        %vm7485 = vcmp.eq.s32.totalorder %v7325, 1
        %vm7486 = vcmp.eq.s32.totalorder %v7326, 1
        %vm7487 = vcmp.eq.s32.totalorder %v7327, 1
        %vm7488 = vcmp.eq.s32.totalorder %v7328, 1
        %vm7489 = vcmp.eq.s32.totalorder %v7329, 1
        %vm7490 = vcmp.eq.s32.totalorder %v7330, 1
        %vm7491 = vcmp.eq.s32.totalorder %v7331, 1
        %vm7492 = vcmp.eq.s32.totalorder %v7332, 1
        %vm7493 = vcmp.eq.s32.totalorder %v7333, 1
        %vm7494 = vcmp.eq.s32.totalorder %v7334, 1
        %vm7495 = vcmp.eq.s32.totalorder %v7335, 1
        %vm7496 = vcmp.eq.s32.totalorder %v7336, 1
        %vm7497 = vcmp.eq.s32.totalorder %v7337, 1
        %vm7498 = vcmp.eq.s32.totalorder %v7338, 1
        %vm7499 = vcmp.eq.s32.totalorder %v7339, 1
        %vm7500 = vcmp.eq.s32.totalorder %v7340, 1
        %vm7501 = vcmp.eq.s32.totalorder %v7341, 1
        %vm7502 = vcmp.eq.s32.totalorder %v7342, 1
        %vm7503 = vcmp.eq.s32.totalorder %v7343, 1
        %vm7504 = vcmp.eq.s32.totalorder %v7344, 1
        %vm7505 = vcmp.eq.s32.totalorder %v7345, 1
        %v7506 = vsel %vm7346, %v3408, -inf
        %v7507 = vsel %vm7346, %v3410, -inf
        %v7508 = vsel %vm7346, %v4241, -inf
        %v7509 = vsel %vm7346, %v4243, -inf
        %v7510 = vsel %vm7346, %v5074, -inf
        %v7511 = vsel %vm7346, %v5076, -inf
        %v7512 = vsel %vm7346, %v5907, -inf
        %v7513 = vsel %vm7346, %v5909, -inf
        %v7514 = vsel %vm7347, %v3412, -inf
        %v7515 = vsel %vm7347, %v3414, -inf
        %v7516 = vsel %vm7347, %v4245, -inf
        %v7517 = vsel %vm7347, %v4247, -inf
        %v7518 = vsel %vm7347, %v5078, -inf
        %v7519 = vsel %vm7347, %v5080, -inf
        %v7520 = vsel %vm7347, %v5911, -inf
        %v7521 = vsel %vm7347, %v5913, -inf
        %v7522 = vsel %vm7348, %v3418, -inf
        %v7523 = vsel %vm7348, %v3420, -inf
        %v7524 = vsel %vm7348, %v4251, -inf
        %v7525 = vsel %vm7348, %v4253, -inf
        %v7526 = vsel %vm7348, %v5084, -inf
        %v7527 = vsel %vm7348, %v5086, -inf
        %v7528 = vsel %vm7348, %v5917, -inf
        %v7529 = vsel %vm7348, %v5919, -inf
        %v7530 = vsel %vm7349, %v3422, -inf
        %v7531 = vsel %vm7349, %v3424, -inf
        %v7532 = vsel %vm7349, %v4255, -inf
        %v7533 = vsel %vm7349, %v4257, -inf
        %v7534 = vsel %vm7349, %v5088, -inf
        %v7535 = vsel %vm7349, %v5090, -inf
        %v7536 = vsel %vm7349, %v5921, -inf
        %v7537 = vsel %vm7349, %v5923, -inf
        %v7538 = vsel %vm7350, %v3428, -inf
        %v7539 = vsel %vm7350, %v3430, -inf
        %v7540 = vsel %vm7350, %v4261, -inf
        %v7541 = vsel %vm7350, %v4263, -inf
        %v7542 = vsel %vm7350, %v5094, -inf
        %v7543 = vsel %vm7350, %v5096, -inf
        %v7544 = vsel %vm7350, %v5927, -inf
        %v7545 = vsel %vm7350, %v5929, -inf
        %v7546 = vsel %vm7351, %v3432, -inf
        %v7547 = vsel %vm7351, %v3434, -inf
        %v7548 = vsel %vm7351, %v4265, -inf
        %v7549 = vsel %vm7351, %v4267, -inf
        %v7550 = vsel %vm7351, %v5098, -inf
        %v7551 = vsel %vm7351, %v5100, -inf
        %v7552 = vsel %vm7351, %v5931, -inf
        %v7553 = vsel %vm7351, %v5933, -inf
        %v7554 = vsel %vm7352, %v3438, -inf
        %v7555 = vsel %vm7352, %v3440, -inf
        %v7556 = vsel %vm7352, %v4271, -inf
        %v7557 = vsel %vm7352, %v4273, -inf
        %v7558 = vsel %vm7352, %v5104, -inf
        %v7559 = vsel %vm7352, %v5106, -inf
        %v7560 = vsel %vm7352, %v5937, -inf
        %v7561 = vsel %vm7352, %v5939, -inf
        %v7562 = vsel %vm7353, %v3442, -inf
        %v7563 = vsel %vm7353, %v3444, -inf
        %v7564 = vsel %vm7353, %v4275, -inf
        %v7565 = vsel %vm7353, %v4277, -inf
        %v7566 = vsel %vm7353, %v5108, -inf
        %v7567 = vsel %vm7353, %v5110, -inf
        %v7568 = vsel %vm7353, %v5941, -inf
        %v7569 = vsel %vm7353, %v5943, -inf
        %v7570 = vsel %vm7354, %v3448, -inf
        %v7571 = vsel %vm7354, %v3450, -inf
        %v7572 = vsel %vm7354, %v4281, -inf
        %v7573 = vsel %vm7354, %v4283, -inf
        %v7574 = vsel %vm7354, %v5114, -inf
        %v7575 = vsel %vm7354, %v5116, -inf
        %v7576 = vsel %vm7354, %v5947, -inf
        %v7577 = vsel %vm7354, %v5949, -inf
        %v7578 = vsel %vm7355, %v3452, -inf
        %v7579 = vsel %vm7355, %v3454, -inf
        %v7580 = vsel %vm7355, %v4285, -inf
        %v7581 = vsel %vm7355, %v4287, -inf
        %v7582 = vsel %vm7355, %v5118, -inf
        %v7583 = vsel %vm7355, %v5120, -inf
        %v7584 = vsel %vm7355, %v5951, -inf
        %v7585 = vsel %vm7355, %v5953, -inf
        %v7586 = vsel %vm7356, %v3458, -inf
        %v7587 = vsel %vm7356, %v3460, -inf
        %v7588 = vsel %vm7356, %v4291, -inf
        %v7589 = vsel %vm7356, %v4293, -inf
        %v7590 = vsel %vm7356, %v5124, -inf
        %v7591 = vsel %vm7356, %v5126, -inf
        %v7592 = vsel %vm7356, %v5957, -inf
        %v7593 = vsel %vm7356, %v5959, -inf
        %v7594 = vsel %vm7357, %v3462, -inf
        %v7595 = vsel %vm7357, %v3464, -inf
        %v7596 = vsel %vm7357, %v4295, -inf
        %v7597 = vsel %vm7357, %v4297, -inf
        %v7598 = vsel %vm7357, %v5128, -inf
        %v7599 = vsel %vm7357, %v5130, -inf
        %v7600 = vsel %vm7357, %v5961, -inf
        %v7601 = vsel %vm7357, %v5963, -inf
        %v7602 = vsel %vm7358, %v3468, -inf
        %v7603 = vsel %vm7358, %v3470, -inf
        %v7604 = vsel %vm7358, %v4301, -inf
        %v7605 = vsel %vm7358, %v4303, -inf
        %v7606 = vsel %vm7358, %v5134, -inf
        %v7607 = vsel %vm7358, %v5136, -inf
        %v7608 = vsel %vm7358, %v5967, -inf
        %v7609 = vsel %vm7358, %v5969, -inf
        %v7610 = vsel %vm7359, %v3472, -inf
        %v7611 = vsel %vm7359, %v3474, -inf
        %v7612 = vsel %vm7359, %v4305, -inf
        %v7613 = vsel %vm7359, %v4307, -inf
        %v7614 = vsel %vm7359, %v5138, -inf
        %v7615 = vsel %vm7359, %v5140, -inf
        %v7616 = vsel %vm7359, %v5971, -inf
        %v7617 = vsel %vm7359, %v5973, -inf
        %v7618 = vsel %vm7360, %v3478, -inf
        %v7619 = vsel %vm7360, %v3480, -inf
        %v7620 = vsel %vm7360, %v4311, -inf
        %v7621 = vsel %vm7360, %v4313, -inf
        %v7622 = vsel %vm7360, %v5144, -inf
        %v7623 = vsel %vm7360, %v5146, -inf
        %v7624 = vsel %vm7360, %v5977, -inf
        %v7625 = vsel %vm7360, %v5979, -inf
        %v7626 = vsel %vm7361, %v3482, -inf
        %v7627 = vsel %vm7361, %v3484, -inf
        %v7628 = vsel %vm7361, %v4315, -inf
        %v7629 = vsel %vm7361, %v4317, -inf
        %v7630 = vsel %vm7361, %v5148, -inf
        %v7631 = vsel %vm7361, %v5150, -inf
        %v7632 = vsel %vm7361, %v5981, -inf
        %v7633 = vsel %vm7361, %v5983, -inf
        %v7634 = vsel %vm7362, %v3488, -inf
        %v7635 = vsel %vm7362, %v3490, -inf
        %v7636 = vsel %vm7362, %v4321, -inf
        %v7637 = vsel %vm7362, %v4323, -inf
        %v7638 = vsel %vm7362, %v5154, -inf
        %v7639 = vsel %vm7362, %v5156, -inf
        %v7640 = vsel %vm7362, %v5987, -inf
        %v7641 = vsel %vm7362, %v5989, -inf
        %v7642 = vsel %vm7363, %v3492, -inf
        %v7643 = vsel %vm7363, %v3494, -inf
        %v7644 = vsel %vm7363, %v4325, -inf
        %v7645 = vsel %vm7363, %v4327, -inf
        %v7646 = vsel %vm7363, %v5158, -inf
        %v7647 = vsel %vm7363, %v5160, -inf
        %v7648 = vsel %vm7363, %v5991, -inf
        %v7649 = vsel %vm7363, %v5993, -inf
        %v7650 = vsel %vm7364, %v3498, -inf
        %v7651 = vsel %vm7364, %v3500, -inf
        %v7652 = vsel %vm7364, %v4331, -inf
        %v7653 = vsel %vm7364, %v4333, -inf
        %v7654 = vsel %vm7364, %v5164, -inf
        %v7655 = vsel %vm7364, %v5166, -inf
        %v7656 = vsel %vm7364, %v5997, -inf
        %v7657 = vsel %vm7364, %v5999, -inf
        %v7658 = vsel %vm7365, %v3502, -inf
        %v7659 = vsel %vm7365, %v3504, -inf
        %v7660 = vsel %vm7365, %v4335, -inf
        %v7661 = vsel %vm7365, %v4337, -inf
        %v7662 = vsel %vm7365, %v5168, -inf
        %v7663 = vsel %vm7365, %v5170, -inf
        %v7664 = vsel %vm7365, %v6001, -inf
        %v7665 = vsel %vm7365, %v6003, -inf
        %v7666 = vsel %vm7366, %v3508, -inf
        %v7667 = vsel %vm7366, %v3510, -inf
        %v7668 = vsel %vm7366, %v4341, -inf
        %v7669 = vsel %vm7366, %v4343, -inf
        %v7670 = vsel %vm7366, %v5174, -inf
        %v7671 = vsel %vm7366, %v5176, -inf
        %v7672 = vsel %vm7366, %v6007, -inf
        %v7673 = vsel %vm7366, %v6009, -inf
        %v7674 = vsel %vm7367, %v3512, -inf
        %v7675 = vsel %vm7367, %v3514, -inf
        %v7676 = vsel %vm7367, %v4345, -inf
        %v7677 = vsel %vm7367, %v4347, -inf
        %v7678 = vsel %vm7367, %v5178, -inf
        %v7679 = vsel %vm7367, %v5180, -inf
        %v7680 = vsel %vm7367, %v6011, -inf
        %v7681 = vsel %vm7367, %v6013, -inf
        %v7682 = vsel %vm7368, %v3518, -inf
        %v7683 = vsel %vm7368, %v3520, -inf
        %v7684 = vsel %vm7368, %v4351, -inf
        %v7685 = vsel %vm7368, %v4353, -inf
        %v7686 = vsel %vm7368, %v5184, -inf
        %v7687 = vsel %vm7368, %v5186, -inf
        %v7688 = vsel %vm7368, %v6017, -inf
        %v7689 = vsel %vm7368, %v6019, -inf
        %v7690 = vsel %vm7369, %v3522, -inf
        %v7691 = vsel %vm7369, %v3524, -inf
        %v7692 = vsel %vm7369, %v4355, -inf
        %v7693 = vsel %vm7369, %v4357, -inf
        %v7694 = vsel %vm7369, %v5188, -inf
        %v7695 = vsel %vm7369, %v5190, -inf
        %v7696 = vsel %vm7369, %v6021, -inf
        %v7697 = vsel %vm7369, %v6023, -inf
        %v7698 = vsel %vm7370, %v3528, -inf
        %v7699 = vsel %vm7370, %v3530, -inf
        %v7700 = vsel %vm7370, %v4361, -inf
        %v7701 = vsel %vm7370, %v4363, -inf
        %v7702 = vsel %vm7370, %v5194, -inf
        %v7703 = vsel %vm7370, %v5196, -inf
        %v7704 = vsel %vm7370, %v6027, -inf
        %v7705 = vsel %vm7370, %v6029, -inf
        %v7706 = vsel %vm7371, %v3532, -inf
        %v7707 = vsel %vm7371, %v3534, -inf
        %v7708 = vsel %vm7371, %v4365, -inf
        %v7709 = vsel %vm7371, %v4367, -inf
        %v7710 = vsel %vm7371, %v5198, -inf
        %v7711 = vsel %vm7371, %v5200, -inf
        %v7712 = vsel %vm7371, %v6031, -inf
        %v7713 = vsel %vm7371, %v6033, -inf
        %v7714 = vsel %vm7372, %v3538, -inf
        %v7715 = vsel %vm7372, %v3540, -inf
        %v7716 = vsel %vm7372, %v4371, -inf
        %v7717 = vsel %vm7372, %v4373, -inf
        %v7718 = vsel %vm7372, %v5204, -inf
        %v7719 = vsel %vm7372, %v5206, -inf
        %v7720 = vsel %vm7372, %v6037, -inf
        %v7721 = vsel %vm7372, %v6039, -inf
        %v7722 = vsel %vm7373, %v3542, -inf
        %v7723 = vsel %vm7373, %v3544, -inf
        %v7724 = vsel %vm7373, %v4375, -inf
        %v7725 = vsel %vm7373, %v4377, -inf
        %v7726 = vsel %vm7373, %v5208, -inf
        %v7727 = vsel %vm7373, %v5210, -inf
        %v7728 = vsel %vm7373, %v6041, -inf
        %v7729 = vsel %vm7373, %v6043, -inf
        %v7730 = vsel %vm7374, %v3548, -inf
        %v7731 = vsel %vm7374, %v3550, -inf
        %v7732 = vsel %vm7374, %v4381, -inf
        %v7733 = vsel %vm7374, %v4383, -inf
        %v7734 = vsel %vm7374, %v5214, -inf
        %v7735 = vsel %vm7374, %v5216, -inf
        %v7736 = vsel %vm7374, %v6047, -inf
        %v7737 = vsel %vm7374, %v6049, -inf
        %v7738 = vsel %vm7375, %v3552, -inf
        %v7739 = vsel %vm7375, %v3554, -inf
        %v7740 = vsel %vm7375, %v4385, -inf
        %v7741 = vsel %vm7375, %v4387, -inf
        %v7742 = vsel %vm7375, %v5218, -inf
        %v7743 = vsel %vm7375, %v5220, -inf
        %v7744 = vsel %vm7375, %v6051, -inf
        %v7745 = vsel %vm7375, %v6053, -inf
        %v7746 = vsel %vm7376, %v3558, -inf
        %v7747 = vsel %vm7376, %v3560, -inf
        %v7748 = vsel %vm7376, %v4391, -inf
        %v7749 = vsel %vm7376, %v4393, -inf
        %v7750 = vsel %vm7376, %v5224, -inf
        %v7751 = vsel %vm7376, %v5226, -inf
        %v7752 = vsel %vm7376, %v6057, -inf
        %v7753 = vsel %vm7376, %v6059, -inf
        %v7754 = vsel %vm7377, %v3562, -inf
        %v7755 = vsel %vm7377, %v3564, -inf
        %v7756 = vsel %vm7377, %v4395, -inf
        %v7757 = vsel %vm7377, %v4397, -inf
        %v7758 = vsel %vm7377, %v5228, -inf
        %v7759 = vsel %vm7377, %v5230, -inf
        %v7760 = vsel %vm7377, %v6061, -inf
        %v7761 = vsel %vm7377, %v6063, -inf
        %v7762 = vsel %vm7378, %v3568, -inf
        %v7763 = vsel %vm7378, %v3570, -inf
        %v7764 = vsel %vm7378, %v4401, -inf
        %v7765 = vsel %vm7378, %v4403, -inf
        %v7766 = vsel %vm7378, %v5234, -inf
        %v7767 = vsel %vm7378, %v5236, -inf
        %v7768 = vsel %vm7378, %v6067, -inf
        %v7769 = vsel %vm7378, %v6069, -inf
        %v7770 = vsel %vm7379, %v3572, -inf
        %v7771 = vsel %vm7379, %v3574, -inf
        %v7772 = vsel %vm7379, %v4405, -inf
        %v7773 = vsel %vm7379, %v4407, -inf
        %v7774 = vsel %vm7379, %v5238, -inf
        %v7775 = vsel %vm7379, %v5240, -inf
        %v7776 = vsel %vm7379, %v6071, -inf
        %v7777 = vsel %vm7379, %v6073, -inf
        %v7778 = vsel %vm7380, %v3578, -inf
        %v7779 = vsel %vm7380, %v3580, -inf
        %v7780 = vsel %vm7380, %v4411, -inf
        %v7781 = vsel %vm7380, %v4413, -inf
        %v7782 = vsel %vm7380, %v5244, -inf
        %v7783 = vsel %vm7380, %v5246, -inf
        %v7784 = vsel %vm7380, %v6077, -inf
        %v7785 = vsel %vm7380, %v6079, -inf
        %v7786 = vsel %vm7381, %v3582, -inf
        %v7787 = vsel %vm7381, %v3584, -inf
        %v7788 = vsel %vm7381, %v4415, -inf
        %v7789 = vsel %vm7381, %v4417, -inf
        %v7790 = vsel %vm7381, %v5248, -inf
        %v7791 = vsel %vm7381, %v5250, -inf
        %v7792 = vsel %vm7381, %v6081, -inf
        %v7793 = vsel %vm7381, %v6083, -inf
        %v7794 = vsel %vm7382, %v3588, -inf
        %v7795 = vsel %vm7382, %v3590, -inf
        %v7796 = vsel %vm7382, %v4421, -inf
        %v7797 = vsel %vm7382, %v4423, -inf
        %v7798 = vsel %vm7382, %v5254, -inf
        %v7799 = vsel %vm7382, %v5256, -inf
        %v7800 = vsel %vm7382, %v6087, -inf
        %v7801 = vsel %vm7382, %v6089, -inf
        %v7802 = vsel %vm7383, %v3592, -inf
        %v7803 = vsel %vm7383, %v3594, -inf
        %v7804 = vsel %vm7383, %v4425, -inf
        %v7805 = vsel %vm7383, %v4427, -inf
        %v7806 = vsel %vm7383, %v5258, -inf
        %v7807 = vsel %vm7383, %v5260, -inf
        %v7808 = vsel %vm7383, %v6091, -inf
        %v7809 = vsel %vm7383, %v6093, -inf
        %v7810 = vsel %vm7384, %v3598, -inf
        %v7811 = vsel %vm7384, %v3600, -inf
        %v7812 = vsel %vm7384, %v4431, -inf
        %v7813 = vsel %vm7384, %v4433, -inf
        %v7814 = vsel %vm7384, %v5264, -inf
        %v7815 = vsel %vm7384, %v5266, -inf
        %v7816 = vsel %vm7384, %v6097, -inf
        %v7817 = vsel %vm7384, %v6099, -inf
        %v7818 = vsel %vm7385, %v3602, -inf
        %v7819 = vsel %vm7385, %v3604, -inf
        %v7820 = vsel %vm7385, %v4435, -inf
        %v7821 = vsel %vm7385, %v4437, -inf
        %v7822 = vsel %vm7385, %v5268, -inf
        %v7823 = vsel %vm7385, %v5270, -inf
        %v7824 = vsel %vm7385, %v6101, -inf
        %v7825 = vsel %vm7385, %v6103, -inf
        %v7826 = vsel %vm7386, %v3608, -inf
        %v7827 = vsel %vm7386, %v3610, -inf
        %v7828 = vsel %vm7386, %v4441, -inf
        %v7829 = vsel %vm7386, %v4443, -inf
        %v7830 = vsel %vm7386, %v5274, -inf
        %v7831 = vsel %vm7386, %v5276, -inf
        %v7832 = vsel %vm7386, %v6107, -inf
        %v7833 = vsel %vm7386, %v6109, -inf
        %v7834 = vsel %vm7387, %v3612, -inf
        %v7835 = vsel %vm7387, %v3614, -inf
        %v7836 = vsel %vm7387, %v4445, -inf
        %v7837 = vsel %vm7387, %v4447, -inf
        %v7838 = vsel %vm7387, %v5278, -inf
        %v7839 = vsel %vm7387, %v5280, -inf
        %v7840 = vsel %vm7387, %v6111, -inf
        %v7841 = vsel %vm7387, %v6113, -inf
        %v7842 = vsel %vm7388, %v3618, -inf
        %v7843 = vsel %vm7388, %v3620, -inf
        %v7844 = vsel %vm7388, %v4451, -inf
        %v7845 = vsel %vm7388, %v4453, -inf
        %v7846 = vsel %vm7388, %v5284, -inf
        %v7847 = vsel %vm7388, %v5286, -inf
        %v7848 = vsel %vm7388, %v6117, -inf
        %v7849 = vsel %vm7388, %v6119, -inf
        %v7850 = vsel %vm7389, %v3622, -inf
        %v7851 = vsel %vm7389, %v3624, -inf
        %v7852 = vsel %vm7389, %v4455, -inf
        %v7853 = vsel %vm7389, %v4457, -inf
        %v7854 = vsel %vm7389, %v5288, -inf
        %v7855 = vsel %vm7389, %v5290, -inf
        %v7856 = vsel %vm7389, %v6121, -inf
        %v7857 = vsel %vm7389, %v6123, -inf
        %v7858 = vsel %vm7390, %v3628, -inf
        %v7859 = vsel %vm7390, %v3630, -inf
        %v7860 = vsel %vm7390, %v4461, -inf
        %v7861 = vsel %vm7390, %v4463, -inf
        %v7862 = vsel %vm7390, %v5294, -inf
        %v7863 = vsel %vm7390, %v5296, -inf
        %v7864 = vsel %vm7390, %v6127, -inf
        %v7865 = vsel %vm7390, %v6129, -inf
        %v7866 = vsel %vm7391, %v3632, -inf
        %v7867 = vsel %vm7391, %v3634, -inf
        %v7868 = vsel %vm7391, %v4465, -inf
        %v7869 = vsel %vm7391, %v4467, -inf
        %v7870 = vsel %vm7391, %v5298, -inf
        %v7871 = vsel %vm7391, %v5300, -inf
        %v7872 = vsel %vm7391, %v6131, -inf
        %v7873 = vsel %vm7391, %v6133, -inf
        %v7874 = vsel %vm7392, %v3638, -inf
        %v7875 = vsel %vm7392, %v3640, -inf
        %v7876 = vsel %vm7392, %v4471, -inf
        %v7877 = vsel %vm7392, %v4473, -inf
        %v7878 = vsel %vm7392, %v5304, -inf
        %v7879 = vsel %vm7392, %v5306, -inf
        %v7880 = vsel %vm7392, %v6137, -inf
        %v7881 = vsel %vm7392, %v6139, -inf
        %v7882 = vsel %vm7393, %v3642, -inf
        %v7883 = vsel %vm7393, %v3644, -inf
        %v7884 = vsel %vm7393, %v4475, -inf
        %v7885 = vsel %vm7393, %v4477, -inf
        %v7886 = vsel %vm7393, %v5308, -inf
        %v7887 = vsel %vm7393, %v5310, -inf
        %v7888 = vsel %vm7393, %v6141, -inf
        %v7889 = vsel %vm7393, %v6143, -inf
        %v7890 = vsel %vm7394, %v3648, -inf
        %v7891 = vsel %vm7394, %v3650, -inf
        %v7892 = vsel %vm7394, %v4481, -inf
        %v7893 = vsel %vm7394, %v4483, -inf
        %v7894 = vsel %vm7394, %v5314, -inf
        %v7895 = vsel %vm7394, %v5316, -inf
        %v7896 = vsel %vm7394, %v6147, -inf
        %v7897 = vsel %vm7394, %v6149, -inf
        %v7898 = vsel %vm7395, %v3652, -inf
        %v7899 = vsel %vm7395, %v3654, -inf
        %v7900 = vsel %vm7395, %v4485, -inf
        %v7901 = vsel %vm7395, %v4487, -inf
        %v7902 = vsel %vm7395, %v5318, -inf
        %v7903 = vsel %vm7395, %v5320, -inf
        %v7904 = vsel %vm7395, %v6151, -inf
        %v7905 = vsel %vm7395, %v6153, -inf
        %v7906 = vsel %vm7396, %v3658, -inf
        %v7907 = vsel %vm7396, %v3660, -inf
        %v7908 = vsel %vm7396, %v4491, -inf
        %v7909 = vsel %vm7396, %v4493, -inf
        %v7910 = vsel %vm7396, %v5324, -inf
        %v7911 = vsel %vm7396, %v5326, -inf
        %v7912 = vsel %vm7396, %v6157, -inf
        %v7913 = vsel %vm7396, %v6159, -inf
        %v7914 = vsel %vm7397, %v3662, -inf
        %v7915 = vsel %vm7397, %v3664, -inf
        %v7916 = vsel %vm7397, %v4495, -inf
        %v7917 = vsel %vm7397, %v4497, -inf
        %v7918 = vsel %vm7397, %v5328, -inf
        %v7919 = vsel %vm7397, %v5330, -inf
        %v7920 = vsel %vm7397, %v6161, -inf
        %v7921 = vsel %vm7397, %v6163, -inf
        %v7922 = vsel %vm7398, %v3668, -inf
        %v7923 = vsel %vm7398, %v3670, -inf
        %v7924 = vsel %vm7398, %v4501, -inf
        %v7925 = vsel %vm7398, %v4503, -inf
        %v7926 = vsel %vm7398, %v5334, -inf
        %v7927 = vsel %vm7398, %v5336, -inf
        %v7928 = vsel %vm7398, %v6167, -inf
        %v7929 = vsel %vm7398, %v6169, -inf
        %v7930 = vsel %vm7399, %v3672, -inf
        %v7931 = vsel %vm7399, %v3674, -inf
        %v7932 = vsel %vm7399, %v4505, -inf
        %v7933 = vsel %vm7399, %v4507, -inf
        %v7934 = vsel %vm7399, %v5338, -inf
        %v7935 = vsel %vm7399, %v5340, -inf
        %v7936 = vsel %vm7399, %v6171, -inf
        %v7937 = vsel %vm7399, %v6173, -inf
        %v7938 = vsel %vm7400, %v3678, -inf
        %v7939 = vsel %vm7400, %v3680, -inf
        %v7940 = vsel %vm7400, %v4511, -inf
        %v7941 = vsel %vm7400, %v4513, -inf
        %v7942 = vsel %vm7400, %v5344, -inf
        %v7943 = vsel %vm7400, %v5346, -inf
        %v7944 = vsel %vm7400, %v6177, -inf
        %v7945 = vsel %vm7400, %v6179, -inf
        %v7946 = vsel %vm7401, %v3682, -inf
        %v7947 = vsel %vm7401, %v3684, -inf
        %v7948 = vsel %vm7401, %v4515, -inf
        %v7949 = vsel %vm7401, %v4517, -inf
        %v7950 = vsel %vm7401, %v5348, -inf
        %v7951 = vsel %vm7401, %v5350, -inf
        %v7952 = vsel %vm7401, %v6181, -inf
        %v7953 = vsel %vm7401, %v6183, -inf
        %v7954 = vsel %vm7402, %v3688, -inf
        %v7955 = vsel %vm7402, %v3690, -inf
        %v7956 = vsel %vm7402, %v4521, -inf
        %v7957 = vsel %vm7402, %v4523, -inf
        %v7958 = vsel %vm7402, %v5354, -inf
        %v7959 = vsel %vm7402, %v5356, -inf
        %v7960 = vsel %vm7402, %v6187, -inf
        %v7961 = vsel %vm7402, %v6189, -inf
        %v7962 = vsel %vm7403, %v3692, -inf
        %v7963 = vsel %vm7403, %v3694, -inf
        %v7964 = vsel %vm7403, %v4525, -inf
        %v7965 = vsel %vm7403, %v4527, -inf
        %v7966 = vsel %vm7403, %v5358, -inf
        %v7967 = vsel %vm7403, %v5360, -inf
        %v7968 = vsel %vm7403, %v6191, -inf
        %v7969 = vsel %vm7403, %v6193, -inf
        %v7970 = vsel %vm7404, %v3698, -inf
        %v7971 = vsel %vm7404, %v3700, -inf
        %v7972 = vsel %vm7404, %v4531, -inf
        %v7973 = vsel %vm7404, %v4533, -inf
        %v7974 = vsel %vm7404, %v5364, -inf
        %v7975 = vsel %vm7404, %v5366, -inf
        %v7976 = vsel %vm7404, %v6197, -inf
        %v7977 = vsel %vm7404, %v6199, -inf
        %v7978 = vsel %vm7405, %v3702, -inf
        %v7979 = vsel %vm7405, %v3704, -inf
        %v7980 = vsel %vm7405, %v4535, -inf
        %v7981 = vsel %vm7405, %v4537, -inf
        %v7982 = vsel %vm7405, %v5368, -inf
        %v7983 = vsel %vm7405, %v5370, -inf
        %v7984 = vsel %vm7405, %v6201, -inf
        %v7985 = vsel %vm7405, %v6203, -inf
        %v7986 = vsel %vm7406, %v3708, -inf
        %v7987 = vsel %vm7406, %v3710, -inf
        %v7988 = vsel %vm7406, %v4541, -inf
        %v7989 = vsel %vm7406, %v4543, -inf
        %v7990 = vsel %vm7406, %v5374, -inf
        %v7991 = vsel %vm7406, %v5376, -inf
        %v7992 = vsel %vm7406, %v6207, -inf
        %v7993 = vsel %vm7406, %v6209, -inf
        %v7994 = vsel %vm7407, %v3712, -inf
        %v7995 = vsel %vm7407, %v3714, -inf
        %v7996 = vsel %vm7407, %v4545, -inf
        %v7997 = vsel %vm7407, %v4547, -inf
        %v7998 = vsel %vm7407, %v5378, -inf
        %v7999 = vsel %vm7407, %v5380, -inf
        %v8000 = vsel %vm7407, %v6211, -inf
        %v8001 = vsel %vm7407, %v6213, -inf
        %v8002 = vsel %vm7408, %v3718, -inf
        %v8003 = vsel %vm7408, %v3720, -inf
        %v8004 = vsel %vm7408, %v4551, -inf
        %v8005 = vsel %vm7408, %v4553, -inf
        %v8006 = vsel %vm7408, %v5384, -inf
        %v8007 = vsel %vm7408, %v5386, -inf
        %v8008 = vsel %vm7408, %v6217, -inf
        %v8009 = vsel %vm7408, %v6219, -inf
        %v8010 = vsel %vm7409, %v3722, -inf
        %v8011 = vsel %vm7409, %v3724, -inf
        %v8012 = vsel %vm7409, %v4555, -inf
        %v8013 = vsel %vm7409, %v4557, -inf
        %v8014 = vsel %vm7409, %v5388, -inf
        %v8015 = vsel %vm7409, %v5390, -inf
        %v8016 = vsel %vm7409, %v6221, -inf
        %v8017 = vsel %vm7409, %v6223, -inf
        %v8018 = vsel %vm7410, %v3728, -inf
        %v8019 = vsel %vm7410, %v3730, -inf
        %v8020 = vsel %vm7410, %v4561, -inf
        %v8021 = vsel %vm7410, %v4563, -inf
        %v8022 = vsel %vm7410, %v5394, -inf
        %v8023 = vsel %vm7410, %v5396, -inf
        %v8024 = vsel %vm7410, %v6227, -inf
        %v8025 = vsel %vm7410, %v6229, -inf
        %v8026 = vsel %vm7411, %v3732, -inf
        %v8027 = vsel %vm7411, %v3734, -inf
        %v8028 = vsel %vm7411, %v4565, -inf
        %v8029 = vsel %vm7411, %v4567, -inf
        %v8030 = vsel %vm7411, %v5398, -inf
        %v8031 = vsel %vm7411, %v5400, -inf
        %v8032 = vsel %vm7411, %v6231, -inf
        %v8033 = vsel %vm7411, %v6233, -inf
        %v8034 = vsel %vm7412, %v3738, -inf
        %v8035 = vsel %vm7412, %v3740, -inf
        %v8036 = vsel %vm7412, %v4571, -inf
        %v8037 = vsel %vm7412, %v4573, -inf
        %v8038 = vsel %vm7412, %v5404, -inf
        %v8039 = vsel %vm7412, %v5406, -inf
        %v8040 = vsel %vm7412, %v6237, -inf
        %v8041 = vsel %vm7412, %v6239, -inf
        %v8042 = vsel %vm7413, %v3742, -inf
        %v8043 = vsel %vm7413, %v3744, -inf
        %v8044 = vsel %vm7413, %v4575, -inf
        %v8045 = vsel %vm7413, %v4577, -inf
        %v8046 = vsel %vm7413, %v5408, -inf
        %v8047 = vsel %vm7413, %v5410, -inf
        %v8048 = vsel %vm7413, %v6241, -inf
        %v8049 = vsel %vm7413, %v6243, -inf
        %v8050 = vsel %vm7414, %v3748, -inf
        %v8051 = vsel %vm7414, %v3750, -inf
        %v8052 = vsel %vm7414, %v4581, -inf
        %v8053 = vsel %vm7414, %v4583, -inf
        %v8054 = vsel %vm7414, %v5414, -inf
        %v8055 = vsel %vm7414, %v5416, -inf
        %v8056 = vsel %vm7414, %v6247, -inf
        %v8057 = vsel %vm7414, %v6249, -inf
        %v8058 = vsel %vm7415, %v3752, -inf
        %v8059 = vsel %vm7415, %v3754, -inf
        %v8060 = vsel %vm7415, %v4585, -inf
        %v8061 = vsel %vm7415, %v4587, -inf
        %v8062 = vsel %vm7415, %v5418, -inf
        %v8063 = vsel %vm7415, %v5420, -inf
        %v8064 = vsel %vm7415, %v6251, -inf
        %v8065 = vsel %vm7415, %v6253, -inf
        %v8066 = vsel %vm7416, %v3758, -inf
        %v8067 = vsel %vm7416, %v3760, -inf
        %v8068 = vsel %vm7416, %v4591, -inf
        %v8069 = vsel %vm7416, %v4593, -inf
        %v8070 = vsel %vm7416, %v5424, -inf
        %v8071 = vsel %vm7416, %v5426, -inf
        %v8072 = vsel %vm7416, %v6257, -inf
        %v8073 = vsel %vm7416, %v6259, -inf
        %v8074 = vsel %vm7417, %v3762, -inf
        %v8075 = vsel %vm7417, %v3764, -inf
        %v8076 = vsel %vm7417, %v4595, -inf
        %v8077 = vsel %vm7417, %v4597, -inf
        %v8078 = vsel %vm7417, %v5428, -inf
        %v8079 = vsel %vm7417, %v5430, -inf
        %v8080 = vsel %vm7417, %v6261, -inf
        %v8081 = vsel %vm7417, %v6263, -inf
        %v8082 = vsel %vm7418, %v3768, -inf
        %v8083 = vsel %vm7418, %v3770, -inf
        %v8084 = vsel %vm7418, %v4601, -inf
        %v8085 = vsel %vm7418, %v4603, -inf
        %v8086 = vsel %vm7418, %v5434, -inf
        %v8087 = vsel %vm7418, %v5436, -inf
        %v8088 = vsel %vm7418, %v6267, -inf
        %v8089 = vsel %vm7418, %v6269, -inf
        %v8090 = vsel %vm7419, %v3772, -inf
        %v8091 = vsel %vm7419, %v3774, -inf
        %v8092 = vsel %vm7419, %v4605, -inf
        %v8093 = vsel %vm7419, %v4607, -inf
        %v8094 = vsel %vm7419, %v5438, -inf
        %v8095 = vsel %vm7419, %v5440, -inf
        %v8096 = vsel %vm7419, %v6271, -inf
        %v8097 = vsel %vm7419, %v6273, -inf
        %v8098 = vsel %vm7420, %v3778, -inf
        %v8099 = vsel %vm7420, %v3780, -inf
        %v8100 = vsel %vm7420, %v4611, -inf
        %v8101 = vsel %vm7420, %v4613, -inf
        %v8102 = vsel %vm7420, %v5444, -inf
        %v8103 = vsel %vm7420, %v5446, -inf
        %v8104 = vsel %vm7420, %v6277, -inf
        %v8105 = vsel %vm7420, %v6279, -inf
        %v8106 = vsel %vm7421, %v3782, -inf
        %v8107 = vsel %vm7421, %v3784, -inf
        %v8108 = vsel %vm7421, %v4615, -inf
        %v8109 = vsel %vm7421, %v4617, -inf
        %v8110 = vsel %vm7421, %v5448, -inf
        %v8111 = vsel %vm7421, %v5450, -inf
        %v8112 = vsel %vm7421, %v6281, -inf
        %v8113 = vsel %vm7421, %v6283, -inf
        %v8114 = vsel %vm7422, %v3788, -inf
        %v8115 = vsel %vm7422, %v3790, -inf
        %v8116 = vsel %vm7422, %v4621, -inf
        %v8117 = vsel %vm7422, %v4623, -inf
        %v8118 = vsel %vm7422, %v5454, -inf
        %v8119 = vsel %vm7422, %v5456, -inf
        %v8120 = vsel %vm7422, %v6287, -inf
        %v8121 = vsel %vm7422, %v6289, -inf
        %v8122 = vsel %vm7423, %v3792, -inf
        %v8123 = vsel %vm7423, %v3794, -inf
        %v8124 = vsel %vm7423, %v4625, -inf
        %v8125 = vsel %vm7423, %v4627, -inf
        %v8126 = vsel %vm7423, %v5458, -inf
        %v8127 = vsel %vm7423, %v5460, -inf
        %v8128 = vsel %vm7423, %v6291, -inf
        %v8129 = vsel %vm7423, %v6293, -inf
        %v8130 = vsel %vm7424, %v3798, -inf
        %v8131 = vsel %vm7424, %v3800, -inf
        %v8132 = vsel %vm7424, %v4631, -inf
        %v8133 = vsel %vm7424, %v4633, -inf
        %v8134 = vsel %vm7424, %v5464, -inf
        %v8135 = vsel %vm7424, %v5466, -inf
        %v8136 = vsel %vm7424, %v6297, -inf
        %v8137 = vsel %vm7424, %v6299, -inf
        %v8138 = vsel %vm7425, %v3802, -inf
        %v8139 = vsel %vm7425, %v3804, -inf
        %v8140 = vsel %vm7425, %v4635, -inf
        %v8141 = vsel %vm7425, %v4637, -inf
        %v8142 = vsel %vm7425, %v5468, -inf
        %v8143 = vsel %vm7425, %v5470, -inf
        %v8144 = vsel %vm7425, %v6301, -inf
        %v8145 = vsel %vm7425, %v6303, -inf
        %v8146 = vsel %vm7426, %v3808, -inf
        %v8147 = vsel %vm7426, %v3810, -inf
        %v8148 = vsel %vm7426, %v4641, -inf
        %v8149 = vsel %vm7426, %v4643, -inf
        %v8150 = vsel %vm7426, %v5474, -inf
        %v8151 = vsel %vm7426, %v5476, -inf
        %v8152 = vsel %vm7426, %v6307, -inf
        %v8153 = vsel %vm7426, %v6309, -inf
        %v8154 = vsel %vm7427, %v3812, -inf
        %v8155 = vsel %vm7427, %v3814, -inf
        %v8156 = vsel %vm7427, %v4645, -inf
        %v8157 = vsel %vm7427, %v4647, -inf
        %v8158 = vsel %vm7427, %v5478, -inf
        %v8159 = vsel %vm7427, %v5480, -inf
        %v8160 = vsel %vm7427, %v6311, -inf
        %v8161 = vsel %vm7427, %v6313, -inf
        %v8162 = vsel %vm7428, %v3818, -inf
        %v8163 = vsel %vm7428, %v3820, -inf
        %v8164 = vsel %vm7428, %v4651, -inf
        %v8165 = vsel %vm7428, %v4653, -inf
        %v8166 = vsel %vm7428, %v5484, -inf
        %v8167 = vsel %vm7428, %v5486, -inf
        %v8168 = vsel %vm7428, %v6317, -inf
        %v8169 = vsel %vm7428, %v6319, -inf
        %v8170 = vsel %vm7429, %v3822, -inf
        %v8171 = vsel %vm7429, %v3824, -inf
        %v8172 = vsel %vm7429, %v4655, -inf
        %v8173 = vsel %vm7429, %v4657, -inf
        %v8174 = vsel %vm7429, %v5488, -inf
        %v8175 = vsel %vm7429, %v5490, -inf
        %v8176 = vsel %vm7429, %v6321, -inf
        %v8177 = vsel %vm7429, %v6323, -inf
        %v8178 = vsel %vm7430, %v3828, -inf
        %v8179 = vsel %vm7430, %v3830, -inf
        %v8180 = vsel %vm7430, %v4661, -inf
        %v8181 = vsel %vm7430, %v4663, -inf
        %v8182 = vsel %vm7430, %v5494, -inf
        %v8183 = vsel %vm7430, %v5496, -inf
        %v8184 = vsel %vm7430, %v6327, -inf
        %v8185 = vsel %vm7430, %v6329, -inf
        %v8186 = vsel %vm7431, %v3832, -inf
        %v8187 = vsel %vm7431, %v3834, -inf
        %v8188 = vsel %vm7431, %v4665, -inf
        %v8189 = vsel %vm7431, %v4667, -inf
        %v8190 = vsel %vm7431, %v5498, -inf
        %v8191 = vsel %vm7431, %v5500, -inf
        %v8192 = vsel %vm7431, %v6331, -inf
        %v8193 = vsel %vm7431, %v6333, -inf
        %v8194 = vsel %vm7432, %v3838, -inf
        %v8195 = vsel %vm7432, %v3840, -inf
        %v8196 = vsel %vm7432, %v4671, -inf
        %v8197 = vsel %vm7432, %v4673, -inf
        %v8198 = vsel %vm7432, %v5504, -inf
        %v8199 = vsel %vm7432, %v5506, -inf
        %v8200 = vsel %vm7432, %v6337, -inf
        %v8201 = vsel %vm7432, %v6339, -inf
        %v8202 = vsel %vm7433, %v3842, -inf
        %v8203 = vsel %vm7433, %v3844, -inf
        %v8204 = vsel %vm7433, %v4675, -inf
        %v8205 = vsel %vm7433, %v4677, -inf
        %v8206 = vsel %vm7433, %v5508, -inf
        %v8207 = vsel %vm7433, %v5510, -inf
        %v8208 = vsel %vm7433, %v6341, -inf
        %v8209 = vsel %vm7433, %v6343, -inf
        %v8210 = vsel %vm7434, %v3848, -inf
        %v8211 = vsel %vm7434, %v3850, -inf
        %v8212 = vsel %vm7434, %v4681, -inf
        %v8213 = vsel %vm7434, %v4683, -inf
        %v8214 = vsel %vm7434, %v5514, -inf
        %v8215 = vsel %vm7434, %v5516, -inf
        %v8216 = vsel %vm7434, %v6347, -inf
        %v8217 = vsel %vm7434, %v6349, -inf
        %v8218 = vsel %vm7435, %v3852, -inf
        %v8219 = vsel %vm7435, %v3854, -inf
        %v8220 = vsel %vm7435, %v4685, -inf
        %v8221 = vsel %vm7435, %v4687, -inf
        %v8222 = vsel %vm7435, %v5518, -inf
        %v8223 = vsel %vm7435, %v5520, -inf
        %v8224 = vsel %vm7435, %v6351, -inf
        %v8225 = vsel %vm7435, %v6353, -inf
        %v8226 = vsel %vm7436, %v3858, -inf
        %v8227 = vsel %vm7436, %v3860, -inf
        %v8228 = vsel %vm7436, %v4691, -inf
        %v8229 = vsel %vm7436, %v4693, -inf
        %v8230 = vsel %vm7436, %v5524, -inf
        %v8231 = vsel %vm7436, %v5526, -inf
        %v8232 = vsel %vm7436, %v6357, -inf
        %v8233 = vsel %vm7436, %v6359, -inf
        %v8234 = vsel %vm7437, %v3862, -inf
        %v8235 = vsel %vm7437, %v3864, -inf
        %v8236 = vsel %vm7437, %v4695, -inf
        %v8237 = vsel %vm7437, %v4697, -inf
        %v8238 = vsel %vm7437, %v5528, -inf
        %v8239 = vsel %vm7437, %v5530, -inf
        %v8240 = vsel %vm7437, %v6361, -inf
        %v8241 = vsel %vm7437, %v6363, -inf
        %v8242 = vsel %vm7438, %v3868, -inf
        %v8243 = vsel %vm7438, %v3870, -inf
        %v8244 = vsel %vm7438, %v4701, -inf
        %v8245 = vsel %vm7438, %v4703, -inf
        %v8246 = vsel %vm7438, %v5534, -inf
        %v8247 = vsel %vm7438, %v5536, -inf
        %v8248 = vsel %vm7438, %v6367, -inf
        %v8249 = vsel %vm7438, %v6369, -inf
        %v8250 = vsel %vm7439, %v3872, -inf
        %v8251 = vsel %vm7439, %v3874, -inf
        %v8252 = vsel %vm7439, %v4705, -inf
        %v8253 = vsel %vm7439, %v4707, -inf
        %v8254 = vsel %vm7439, %v5538, -inf
        %v8255 = vsel %vm7439, %v5540, -inf
        %v8256 = vsel %vm7439, %v6371, -inf
        %v8257 = vsel %vm7439, %v6373, -inf
        %v8258 = vsel %vm7440, %v3878, -inf
        %v8259 = vsel %vm7440, %v3880, -inf
        %v8260 = vsel %vm7440, %v4711, -inf
        %v8261 = vsel %vm7440, %v4713, -inf
        %v8262 = vsel %vm7440, %v5544, -inf
        %v8263 = vsel %vm7440, %v5546, -inf
        %v8264 = vsel %vm7440, %v6377, -inf
        %v8265 = vsel %vm7440, %v6379, -inf
        %v8266 = vsel %vm7441, %v3882, -inf
        %v8267 = vsel %vm7441, %v3884, -inf
        %v8268 = vsel %vm7441, %v4715, -inf
        %v8269 = vsel %vm7441, %v4717, -inf
        %v8270 = vsel %vm7441, %v5548, -inf
        %v8271 = vsel %vm7441, %v5550, -inf
        %v8272 = vsel %vm7441, %v6381, -inf
        %v8273 = vsel %vm7441, %v6383, -inf
        %v8274 = vsel %vm7442, %v3888, -inf
        %v8275 = vsel %vm7442, %v3890, -inf
        %v8276 = vsel %vm7442, %v4721, -inf
        %v8277 = vsel %vm7442, %v4723, -inf
        %v8278 = vsel %vm7442, %v5554, -inf
        %v8279 = vsel %vm7442, %v5556, -inf
        %v8280 = vsel %vm7442, %v6387, -inf
        %v8281 = vsel %vm7442, %v6389, -inf
        %v8282 = vsel %vm7443, %v3892, -inf
        %v8283 = vsel %vm7443, %v3894, -inf
        %v8284 = vsel %vm7443, %v4725, -inf
        %v8285 = vsel %vm7443, %v4727, -inf
        %v8286 = vsel %vm7443, %v5558, -inf
        %v8287 = vsel %vm7443, %v5560, -inf
        %v8288 = vsel %vm7443, %v6391, -inf
        %v8289 = vsel %vm7443, %v6393, -inf
        %v8290 = vsel %vm7444, %v3898, -inf
        %v8291 = vsel %vm7444, %v3900, -inf
        %v8292 = vsel %vm7444, %v4731, -inf
        %v8293 = vsel %vm7444, %v4733, -inf
        %v8294 = vsel %vm7444, %v5564, -inf
        %v8295 = vsel %vm7444, %v5566, -inf
        %v8296 = vsel %vm7444, %v6397, -inf
        %v8297 = vsel %vm7444, %v6399, -inf
        %v8298 = vsel %vm7445, %v3902, -inf
        %v8299 = vsel %vm7445, %v3904, -inf
        %v8300 = vsel %vm7445, %v4735, -inf
        %v8301 = vsel %vm7445, %v4737, -inf
        %v8302 = vsel %vm7445, %v5568, -inf
        %v8303 = vsel %vm7445, %v5570, -inf
        %v8304 = vsel %vm7445, %v6401, -inf
        %v8305 = vsel %vm7445, %v6403, -inf
        %v8306 = vsel %vm7446, %v3908, -inf
        %v8307 = vsel %vm7446, %v3910, -inf
        %v8308 = vsel %vm7446, %v4741, -inf
        %v8309 = vsel %vm7446, %v4743, -inf
        %v8310 = vsel %vm7446, %v5574, -inf
        %v8311 = vsel %vm7446, %v5576, -inf
        %v8312 = vsel %vm7446, %v6407, -inf
        %v8313 = vsel %vm7446, %v6409, -inf
        %v8314 = vsel %vm7447, %v3912, -inf
        %v8315 = vsel %vm7447, %v3914, -inf
        %v8316 = vsel %vm7447, %v4745, -inf
        %v8317 = vsel %vm7447, %v4747, -inf
        %v8318 = vsel %vm7447, %v5578, -inf
        %v8319 = vsel %vm7447, %v5580, -inf
        %v8320 = vsel %vm7447, %v6411, -inf
        %v8321 = vsel %vm7447, %v6413, -inf
        %v8322 = vsel %vm7448, %v3918, -inf
        %v8323 = vsel %vm7448, %v3920, -inf
        %v8324 = vsel %vm7448, %v4751, -inf
        %v8325 = vsel %vm7448, %v4753, -inf
        %v8326 = vsel %vm7448, %v5584, -inf
        %v8327 = vsel %vm7448, %v5586, -inf
        %v8328 = vsel %vm7448, %v6417, -inf
        %v8329 = vsel %vm7448, %v6419, -inf
        %v8330 = vsel %vm7449, %v3922, -inf
        %v8331 = vsel %vm7449, %v3924, -inf
        %v8332 = vsel %vm7449, %v4755, -inf
        %v8333 = vsel %vm7449, %v4757, -inf
        %v8334 = vsel %vm7449, %v5588, -inf
        %v8335 = vsel %vm7449, %v5590, -inf
        %v8336 = vsel %vm7449, %v6421, -inf
        %v8337 = vsel %vm7449, %v6423, -inf
        %v8338 = vsel %vm7450, %v3928, -inf
        %v8339 = vsel %vm7450, %v3930, -inf
        %v8340 = vsel %vm7450, %v4761, -inf
        %v8341 = vsel %vm7450, %v4763, -inf
        %v8342 = vsel %vm7450, %v5594, -inf
        %v8343 = vsel %vm7450, %v5596, -inf
        %v8344 = vsel %vm7450, %v6427, -inf
        %v8345 = vsel %vm7450, %v6429, -inf
        %v8346 = vsel %vm7451, %v3932, -inf
        %v8347 = vsel %vm7451, %v3934, -inf
        %v8348 = vsel %vm7451, %v4765, -inf
        %v8349 = vsel %vm7451, %v4767, -inf
        %v8350 = vsel %vm7451, %v5598, -inf
        %v8351 = vsel %vm7451, %v5600, -inf
        %v8352 = vsel %vm7451, %v6431, -inf
        %v8353 = vsel %vm7451, %v6433, -inf
        %v8354 = vsel %vm7452, %v3938, -inf
        %v8355 = vsel %vm7452, %v3940, -inf
        %v8356 = vsel %vm7452, %v4771, -inf
        %v8357 = vsel %vm7452, %v4773, -inf
        %v8358 = vsel %vm7452, %v5604, -inf
        %v8359 = vsel %vm7452, %v5606, -inf
        %v8360 = vsel %vm7452, %v6437, -inf
        %v8361 = vsel %vm7452, %v6439, -inf
        %v8362 = vsel %vm7453, %v3942, -inf
        %v8363 = vsel %vm7453, %v3944, -inf
        %v8364 = vsel %vm7453, %v4775, -inf
        %v8365 = vsel %vm7453, %v4777, -inf
        %v8366 = vsel %vm7453, %v5608, -inf
        %v8367 = vsel %vm7453, %v5610, -inf
        %v8368 = vsel %vm7453, %v6441, -inf
        %v8369 = vsel %vm7453, %v6443, -inf
        %v8370 = vsel %vm7454, %v3948, -inf
        %v8371 = vsel %vm7454, %v3950, -inf
        %v8372 = vsel %vm7454, %v4781, -inf
        %v8373 = vsel %vm7454, %v4783, -inf
        %v8374 = vsel %vm7454, %v5614, -inf
        %v8375 = vsel %vm7454, %v5616, -inf
        %v8376 = vsel %vm7454, %v6447, -inf
        %v8377 = vsel %vm7454, %v6449, -inf
        %v8378 = vsel %vm7455, %v3952, -inf
        %v8379 = vsel %vm7455, %v3954, -inf
        %v8380 = vsel %vm7455, %v4785, -inf
        %v8381 = vsel %vm7455, %v4787, -inf
        %v8382 = vsel %vm7455, %v5618, -inf
        %v8383 = vsel %vm7455, %v5620, -inf
        %v8384 = vsel %vm7455, %v6451, -inf
        %v8385 = vsel %vm7455, %v6453, -inf
        %v8386 = vsel %vm7456, %v3958, -inf
        %v8387 = vsel %vm7456, %v3960, -inf
        %v8388 = vsel %vm7456, %v4791, -inf
        %v8389 = vsel %vm7456, %v4793, -inf
        %v8390 = vsel %vm7456, %v5624, -inf
        %v8391 = vsel %vm7456, %v5626, -inf
        %v8392 = vsel %vm7456, %v6457, -inf
        %v8393 = vsel %vm7456, %v6459, -inf
        %v8394 = vsel %vm7457, %v3962, -inf
        %v8395 = vsel %vm7457, %v3964, -inf
        %v8396 = vsel %vm7457, %v4795, -inf
        %v8397 = vsel %vm7457, %v4797, -inf
        %v8398 = vsel %vm7457, %v5628, -inf
        %v8399 = vsel %vm7457, %v5630, -inf
        %v8400 = vsel %vm7457, %v6461, -inf
        %v8401 = vsel %vm7457, %v6463, -inf
        %v8402 = vsel %vm7458, %v3968, -inf
        %v8403 = vsel %vm7458, %v3970, -inf
        %v8404 = vsel %vm7458, %v4801, -inf
        %v8405 = vsel %vm7458, %v4803, -inf
        %v8406 = vsel %vm7458, %v5634, -inf
        %v8407 = vsel %vm7458, %v5636, -inf
        %v8408 = vsel %vm7458, %v6467, -inf
        %v8409 = vsel %vm7458, %v6469, -inf
        %v8410 = vsel %vm7459, %v3972, -inf
        %v8411 = vsel %vm7459, %v3974, -inf
        %v8412 = vsel %vm7459, %v4805, -inf
        %v8413 = vsel %vm7459, %v4807, -inf
        %v8414 = vsel %vm7459, %v5638, -inf
        %v8415 = vsel %vm7459, %v5640, -inf
        %v8416 = vsel %vm7459, %v6471, -inf
        %v8417 = vsel %vm7459, %v6473, -inf
        %v8418 = vsel %vm7460, %v3978, -inf
        %v8419 = vsel %vm7460, %v3980, -inf
        %v8420 = vsel %vm7460, %v4811, -inf
        %v8421 = vsel %vm7460, %v4813, -inf
        %v8422 = vsel %vm7460, %v5644, -inf
        %v8423 = vsel %vm7460, %v5646, -inf
        %v8424 = vsel %vm7460, %v6477, -inf
        %v8425 = vsel %vm7460, %v6479, -inf
        %v8426 = vsel %vm7461, %v3982, -inf
        %v8427 = vsel %vm7461, %v3984, -inf
        %v8428 = vsel %vm7461, %v4815, -inf
        %v8429 = vsel %vm7461, %v4817, -inf
        %v8430 = vsel %vm7461, %v5648, -inf
        %v8431 = vsel %vm7461, %v5650, -inf
        %v8432 = vsel %vm7461, %v6481, -inf
        %v8433 = vsel %vm7461, %v6483, -inf
        %v8434 = vsel %vm7462, %v3988, -inf
        %v8435 = vsel %vm7462, %v3990, -inf
        %v8436 = vsel %vm7462, %v4821, -inf
        %v8437 = vsel %vm7462, %v4823, -inf
        %v8438 = vsel %vm7462, %v5654, -inf
        %v8439 = vsel %vm7462, %v5656, -inf
        %v8440 = vsel %vm7462, %v6487, -inf
        %v8441 = vsel %vm7462, %v6489, -inf
        %v8442 = vsel %vm7463, %v3992, -inf
        %v8443 = vsel %vm7463, %v3994, -inf
        %v8444 = vsel %vm7463, %v4825, -inf
        %v8445 = vsel %vm7463, %v4827, -inf
        %v8446 = vsel %vm7463, %v5658, -inf
        %v8447 = vsel %vm7463, %v5660, -inf
        %v8448 = vsel %vm7463, %v6491, -inf
        %v8449 = vsel %vm7463, %v6493, -inf
        %v8450 = vsel %vm7464, %v3998, -inf
        %v8451 = vsel %vm7464, %v4000, -inf
        %v8452 = vsel %vm7464, %v4831, -inf
        %v8453 = vsel %vm7464, %v4833, -inf
        %v8454 = vsel %vm7464, %v5664, -inf
        %v8455 = vsel %vm7464, %v5666, -inf
        %v8456 = vsel %vm7464, %v6497, -inf
        %v8457 = vsel %vm7464, %v6499, -inf
        %v8458 = vsel %vm7465, %v4002, -inf
        %v8459 = vsel %vm7465, %v4004, -inf
        %v8460 = vsel %vm7465, %v4835, -inf
        %v8461 = vsel %vm7465, %v4837, -inf
        %v8462 = vsel %vm7465, %v5668, -inf
        %v8463 = vsel %vm7465, %v5670, -inf
        %v8464 = vsel %vm7465, %v6501, -inf
        %v8465 = vsel %vm7465, %v6503, -inf
        %v8466 = vsel %vm7466, %v4008, -inf
        %v8467 = vsel %vm7466, %v4010, -inf
        %v8468 = vsel %vm7466, %v4841, -inf
        %v8469 = vsel %vm7466, %v4843, -inf
        %v8470 = vsel %vm7466, %v5674, -inf
        %v8471 = vsel %vm7466, %v5676, -inf
        %v8472 = vsel %vm7466, %v6507, -inf
        %v8473 = vsel %vm7466, %v6509, -inf
        %v8474 = vsel %vm7467, %v4012, -inf
        %v8475 = vsel %vm7467, %v4014, -inf
        %v8476 = vsel %vm7467, %v4845, -inf
        %v8477 = vsel %vm7467, %v4847, -inf
        %v8478 = vsel %vm7467, %v5678, -inf
        %v8479 = vsel %vm7467, %v5680, -inf
        %v8480 = vsel %vm7467, %v6511, -inf
        %v8481 = vsel %vm7467, %v6513, -inf
        %v8482 = vsel %vm7468, %v4018, -inf
        %v8483 = vsel %vm7468, %v4020, -inf
        %v8484 = vsel %vm7468, %v4851, -inf
        %v8485 = vsel %vm7468, %v4853, -inf
        %v8486 = vsel %vm7468, %v5684, -inf
        %v8487 = vsel %vm7468, %v5686, -inf
        %v8488 = vsel %vm7468, %v6517, -inf
        %v8489 = vsel %vm7468, %v6519, -inf
        %v8490 = vsel %vm7469, %v4022, -inf
        %v8491 = vsel %vm7469, %v4024, -inf
        %v8492 = vsel %vm7469, %v4855, -inf
        %v8493 = vsel %vm7469, %v4857, -inf
        %v8494 = vsel %vm7469, %v5688, -inf
        %v8495 = vsel %vm7469, %v5690, -inf
        %v8496 = vsel %vm7469, %v6521, -inf
        %v8497 = vsel %vm7469, %v6523, -inf
        %v8498 = vsel %vm7470, %v4028, -inf
        %v8499 = vsel %vm7470, %v4030, -inf
        %v8500 = vsel %vm7470, %v4861, -inf
        %v8501 = vsel %vm7470, %v4863, -inf
        %v8502 = vsel %vm7470, %v5694, -inf
        %v8503 = vsel %vm7470, %v5696, -inf
        %v8504 = vsel %vm7470, %v6527, -inf
        %v8505 = vsel %vm7470, %v6529, -inf
        %v8506 = vsel %vm7471, %v4032, -inf
        %v8507 = vsel %vm7471, %v4034, -inf
        %v8508 = vsel %vm7471, %v4865, -inf
        %v8509 = vsel %vm7471, %v4867, -inf
        %v8510 = vsel %vm7471, %v5698, -inf
        %v8511 = vsel %vm7471, %v5700, -inf
        %v8512 = vsel %vm7471, %v6531, -inf
        %v8513 = vsel %vm7471, %v6533, -inf
        %v8514 = vsel %vm7472, %v4038, -inf
        %v8515 = vsel %vm7472, %v4040, -inf
        %v8516 = vsel %vm7472, %v4871, -inf
        %v8517 = vsel %vm7472, %v4873, -inf
        %v8518 = vsel %vm7472, %v5704, -inf
        %v8519 = vsel %vm7472, %v5706, -inf
        %v8520 = vsel %vm7472, %v6537, -inf
        %v8521 = vsel %vm7472, %v6539, -inf
        %v8522 = vsel %vm7473, %v4042, -inf
        %v8523 = vsel %vm7473, %v4044, -inf
        %v8524 = vsel %vm7473, %v4875, -inf
        %v8525 = vsel %vm7473, %v4877, -inf
        %v8526 = vsel %vm7473, %v5708, -inf
        %v8527 = vsel %vm7473, %v5710, -inf
        %v8528 = vsel %vm7473, %v6541, -inf
        %v8529 = vsel %vm7473, %v6543, -inf
        %v8530 = vsel %vm7474, %v4048, -inf
        %v8531 = vsel %vm7474, %v4050, -inf
        %v8532 = vsel %vm7474, %v4881, -inf
        %v8533 = vsel %vm7474, %v4883, -inf
        %v8534 = vsel %vm7474, %v5714, -inf
        %v8535 = vsel %vm7474, %v5716, -inf
        %v8536 = vsel %vm7474, %v6547, -inf
        %v8537 = vsel %vm7474, %v6549, -inf
        %v8538 = vsel %vm7475, %v4052, -inf
        %v8539 = vsel %vm7475, %v4054, -inf
        %v8540 = vsel %vm7475, %v4885, -inf
        %v8541 = vsel %vm7475, %v4887, -inf
        %v8542 = vsel %vm7475, %v5718, -inf
        %v8543 = vsel %vm7475, %v5720, -inf
        %v8544 = vsel %vm7475, %v6551, -inf
        %v8545 = vsel %vm7475, %v6553, -inf
        %v8546 = vsel %vm7476, %v4058, -inf
        %v8547 = vsel %vm7476, %v4060, -inf
        %v8548 = vsel %vm7476, %v4891, -inf
        %v8549 = vsel %vm7476, %v4893, -inf
        %v8550 = vsel %vm7476, %v5724, -inf
        %v8551 = vsel %vm7476, %v5726, -inf
        %v8552 = vsel %vm7476, %v6557, -inf
        %v8553 = vsel %vm7476, %v6559, -inf
        %v8554 = vsel %vm7477, %v4062, -inf
        %v8555 = vsel %vm7477, %v4064, -inf
        %v8556 = vsel %vm7477, %v4895, -inf
        %v8557 = vsel %vm7477, %v4897, -inf
        %v8558 = vsel %vm7477, %v5728, -inf
        %v8559 = vsel %vm7477, %v5730, -inf
        %v8560 = vsel %vm7477, %v6561, -inf
        %v8561 = vsel %vm7477, %v6563, -inf
        %v8562 = vsel %vm7478, %v4068, -inf
        %v8563 = vsel %vm7478, %v4070, -inf
        %v8564 = vsel %vm7478, %v4901, -inf
        %v8565 = vsel %vm7478, %v4903, -inf
        %v8566 = vsel %vm7478, %v5734, -inf
        %v8567 = vsel %vm7478, %v5736, -inf
        %v8568 = vsel %vm7478, %v6567, -inf
        %v8569 = vsel %vm7478, %v6569, -inf
        %v8570 = vsel %vm7479, %v4072, -inf
        %v8571 = vsel %vm7479, %v4074, -inf
        %v8572 = vsel %vm7479, %v4905, -inf
        %v8573 = vsel %vm7479, %v4907, -inf
        %v8574 = vsel %vm7479, %v5738, -inf
        %v8575 = vsel %vm7479, %v5740, -inf
        %v8576 = vsel %vm7479, %v6571, -inf
        %v8577 = vsel %vm7479, %v6573, -inf
        %v8578 = vsel %vm7480, %v4078, -inf
        %v8579 = vsel %vm7480, %v4080, -inf
        %v8580 = vsel %vm7480, %v4911, -inf
        %v8581 = vsel %vm7480, %v4913, -inf
        %v8582 = vsel %vm7480, %v5744, -inf
        %v8583 = vsel %vm7480, %v5746, -inf
        %v8584 = vsel %vm7480, %v6577, -inf
        %v8585 = vsel %vm7480, %v6579, -inf
        %v8586 = vsel %vm7481, %v4082, -inf
        %v8587 = vsel %vm7481, %v4084, -inf
        %v8588 = vsel %vm7481, %v4915, -inf
        %v8589 = vsel %vm7481, %v4917, -inf
        %v8590 = vsel %vm7481, %v5748, -inf
        %v8591 = vsel %vm7481, %v5750, -inf
        %v8592 = vsel %vm7481, %v6581, -inf
        %v8593 = vsel %vm7481, %v6583, -inf
        %v8594 = vsel %vm7482, %v4088, -inf
        %v8595 = vsel %vm7482, %v4090, -inf
        %v8596 = vsel %vm7482, %v4921, -inf
        %v8597 = vsel %vm7482, %v4923, -inf
        %v8598 = vsel %vm7482, %v5754, -inf
        %v8599 = vsel %vm7482, %v5756, -inf
        %v8600 = vsel %vm7482, %v6587, -inf
        %v8601 = vsel %vm7482, %v6589, -inf
        %v8602 = vsel %vm7483, %v4092, -inf
        %v8603 = vsel %vm7483, %v4094, -inf
        %v8604 = vsel %vm7483, %v4925, -inf
        %v8605 = vsel %vm7483, %v4927, -inf
        %v8606 = vsel %vm7483, %v5758, -inf
        %v8607 = vsel %vm7483, %v5760, -inf
        %v8608 = vsel %vm7483, %v6591, -inf
        %v8609 = vsel %vm7483, %v6593, -inf
        %v8610 = vsel %vm7484, %v4098, -inf
        %v8611 = vsel %vm7484, %v4100, -inf
        %v8612 = vsel %vm7484, %v4931, -inf
        %v8613 = vsel %vm7484, %v4933, -inf
        %v8614 = vsel %vm7484, %v5764, -inf
        %v8615 = vsel %vm7484, %v5766, -inf
        %v8616 = vsel %vm7484, %v6597, -inf
        %v8617 = vsel %vm7484, %v6599, -inf
        %v8618 = vsel %vm7485, %v4102, -inf
        %v8619 = vsel %vm7485, %v4104, -inf
        %v8620 = vsel %vm7485, %v4935, -inf
        %v8621 = vsel %vm7485, %v4937, -inf
        %v8622 = vsel %vm7485, %v5768, -inf
        %v8623 = vsel %vm7485, %v5770, -inf
        %v8624 = vsel %vm7485, %v6601, -inf
        %v8625 = vsel %vm7485, %v6603, -inf
        %v8626 = vsel %vm7486, %v4108, -inf
        %v8627 = vsel %vm7486, %v4110, -inf
        %v8628 = vsel %vm7486, %v4941, -inf
        %v8629 = vsel %vm7486, %v4943, -inf
        %v8630 = vsel %vm7486, %v5774, -inf
        %v8631 = vsel %vm7486, %v5776, -inf
        %v8632 = vsel %vm7486, %v6607, -inf
        %v8633 = vsel %vm7486, %v6609, -inf
        %v8634 = vsel %vm7487, %v4112, -inf
        %v8635 = vsel %vm7487, %v4114, -inf
        %v8636 = vsel %vm7487, %v4945, -inf
        %v8637 = vsel %vm7487, %v4947, -inf
        %v8638 = vsel %vm7487, %v5778, -inf
        %v8639 = vsel %vm7487, %v5780, -inf
        %v8640 = vsel %vm7487, %v6611, -inf
        %v8641 = vsel %vm7487, %v6613, -inf
        %v8642 = vsel %vm7488, %v4118, -inf
        %v8643 = vsel %vm7488, %v4120, -inf
        %v8644 = vsel %vm7488, %v4951, -inf
        %v8645 = vsel %vm7488, %v4953, -inf
        %v8646 = vsel %vm7488, %v5784, -inf
        %v8647 = vsel %vm7488, %v5786, -inf
        %v8648 = vsel %vm7488, %v6617, -inf
        %v8649 = vsel %vm7488, %v6619, -inf
        %v8650 = vsel %vm7489, %v4122, -inf
        %v8651 = vsel %vm7489, %v4124, -inf
        %v8652 = vsel %vm7489, %v4955, -inf
        %v8653 = vsel %vm7489, %v4957, -inf
        %v8654 = vsel %vm7489, %v5788, -inf
        %v8655 = vsel %vm7489, %v5790, -inf
        %v8656 = vsel %vm7489, %v6621, -inf
        %v8657 = vsel %vm7489, %v6623, -inf
        %v8658 = vsel %vm7490, %v4128, -inf
        %v8659 = vsel %vm7490, %v4130, -inf
        %v8660 = vsel %vm7490, %v4961, -inf
        %v8661 = vsel %vm7490, %v4963, -inf
        %v8662 = vsel %vm7490, %v5794, -inf
        %v8663 = vsel %vm7490, %v5796, -inf
        %v8664 = vsel %vm7490, %v6627, -inf
        %v8665 = vsel %vm7490, %v6629, -inf
        %v8666 = vsel %vm7491, %v4132, -inf
        %v8667 = vsel %vm7491, %v4134, -inf
        %v8668 = vsel %vm7491, %v4965, -inf
        %v8669 = vsel %vm7491, %v4967, -inf
        %v8670 = vsel %vm7491, %v5798, -inf
        %v8671 = vsel %vm7491, %v5800, -inf
        %v8672 = vsel %vm7491, %v6631, -inf
        %v8673 = vsel %vm7491, %v6633, -inf
        %v8674 = vsel %vm7492, %v4138, -inf
        %v8675 = vsel %vm7492, %v4140, -inf
        %v8676 = vsel %vm7492, %v4971, -inf
        %v8677 = vsel %vm7492, %v4973, -inf
        %v8678 = vsel %vm7492, %v5804, -inf
        %v8679 = vsel %vm7492, %v5806, -inf
        %v8680 = vsel %vm7492, %v6637, -inf
        %v8681 = vsel %vm7492, %v6639, -inf
        %v8682 = vsel %vm7493, %v4142, -inf
        %v8683 = vsel %vm7493, %v4144, -inf
        %v8684 = vsel %vm7493, %v4975, -inf
        %v8685 = vsel %vm7493, %v4977, -inf
        %v8686 = vsel %vm7493, %v5808, -inf
        %v8687 = vsel %vm7493, %v5810, -inf
        %v8688 = vsel %vm7493, %v6641, -inf
        %v8689 = vsel %vm7493, %v6643, -inf
        %v8690 = vsel %vm7494, %v4148, -inf
        %v8691 = vsel %vm7494, %v4150, -inf
        %v8692 = vsel %vm7494, %v4981, -inf
        %v8693 = vsel %vm7494, %v4983, -inf
        %v8694 = vsel %vm7494, %v5814, -inf
        %v8695 = vsel %vm7494, %v5816, -inf
        %v8696 = vsel %vm7494, %v6647, -inf
        %v8697 = vsel %vm7494, %v6649, -inf
        %v8698 = vsel %vm7495, %v4152, -inf
        %v8699 = vsel %vm7495, %v4154, -inf
        %v8700 = vsel %vm7495, %v4985, -inf
        %v8701 = vsel %vm7495, %v4987, -inf
        %v8702 = vsel %vm7495, %v5818, -inf
        %v8703 = vsel %vm7495, %v5820, -inf
        %v8704 = vsel %vm7495, %v6651, -inf
        %v8705 = vsel %vm7495, %v6653, -inf
        %v8706 = vsel %vm7496, %v4158, -inf
        %v8707 = vsel %vm7496, %v4160, -inf
        %v8708 = vsel %vm7496, %v4991, -inf
        %v8709 = vsel %vm7496, %v4993, -inf
        %v8710 = vsel %vm7496, %v5824, -inf
        %v8711 = vsel %vm7496, %v5826, -inf
        %v8712 = vsel %vm7496, %v6657, -inf
        %v8713 = vsel %vm7496, %v6659, -inf
        %v8714 = vsel %vm7497, %v4162, -inf
        %v8715 = vsel %vm7497, %v4164, -inf
        %v8716 = vsel %vm7497, %v4995, -inf
        %v8717 = vsel %vm7497, %v4997, -inf
        %v8718 = vsel %vm7497, %v5828, -inf
        %v8719 = vsel %vm7497, %v5830, -inf
        %v8720 = vsel %vm7497, %v6661, -inf
        %v8721 = vsel %vm7497, %v6663, -inf
        %v8722 = vsel %vm7498, %v4168, -inf
        %v8723 = vsel %vm7498, %v4170, -inf
        %v8724 = vsel %vm7498, %v5001, -inf
        %v8725 = vsel %vm7498, %v5003, -inf
        %v8726 = vsel %vm7498, %v5834, -inf
        %v8727 = vsel %vm7498, %v5836, -inf
        %v8728 = vsel %vm7498, %v6667, -inf
        %v8729 = vsel %vm7498, %v6669, -inf
        %v8730 = vsel %vm7499, %v4172, -inf
        %v8731 = vsel %vm7499, %v4174, -inf
        %v8732 = vsel %vm7499, %v5005, -inf
        %v8733 = vsel %vm7499, %v5007, -inf
        %v8734 = vsel %vm7499, %v5838, -inf
        %v8735 = vsel %vm7499, %v5840, -inf
        %v8736 = vsel %vm7499, %v6671, -inf
        %v8737 = vsel %vm7499, %v6673, -inf
        %v8738 = vsel %vm7500, %v4178, -inf
        %v8739 = vsel %vm7500, %v4180, -inf
        %v8740 = vsel %vm7500, %v5011, -inf
        %v8741 = vsel %vm7500, %v5013, -inf
        %v8742 = vsel %vm7500, %v5844, -inf
        %v8743 = vsel %vm7500, %v5846, -inf
        %v8744 = vsel %vm7500, %v6677, -inf
        %v8745 = vsel %vm7500, %v6679, -inf
        %v8746 = vsel %vm7501, %v4182, -inf
        %v8747 = vsel %vm7501, %v4184, -inf
        %v8748 = vsel %vm7501, %v5015, -inf
        %v8749 = vsel %vm7501, %v5017, -inf
        %v8750 = vsel %vm7501, %v5848, -inf
        %v8751 = vsel %vm7501, %v5850, -inf
        %v8752 = vsel %vm7501, %v6681, -inf
        %v8753 = vsel %vm7501, %v6683, -inf
        %v8754 = vsel %vm7502, %v4188, -inf
        %v8755 = vsel %vm7502, %v4190, -inf
        %v8756 = vsel %vm7502, %v5021, -inf
        %v8757 = vsel %vm7502, %v5023, -inf
        %v8758 = vsel %vm7502, %v5854, -inf
        %v8759 = vsel %vm7502, %v5856, -inf
        %v8760 = vsel %vm7502, %v6687, -inf
        %v8761 = vsel %vm7502, %v6689, -inf
        %v8762 = vsel %vm7503, %v4192, -inf
        %v8763 = vsel %vm7503, %v4194, -inf
        %v8764 = vsel %vm7503, %v5025, -inf
        %v8765 = vsel %vm7503, %v5027, -inf
        %v8766 = vsel %vm7503, %v5858, -inf
        %v8767 = vsel %vm7503, %v5860, -inf
        %v8768 = vsel %vm7503, %v6691, -inf
        %v8769 = vsel %vm7503, %v6693, -inf
        %v8770 = vsel %vm7504, %v4198, -inf
        %v8771 = vsel %vm7504, %v4200, -inf
        %v8772 = vsel %vm7504, %v5031, -inf
        %v8773 = vsel %vm7504, %v5033, -inf
        %v8774 = vsel %vm7504, %v5864, -inf
        %v8775 = vsel %vm7504, %v5866, -inf
        %v8776 = vsel %vm7504, %v6697, -inf
        %v8777 = vsel %vm7504, %v6699, -inf
        %v8778 = vsel %vm7505, %v4202, -inf
        %v8779 = vsel %vm7505, %v4204, -inf
        %v8780 = vsel %vm7505, %v5035, -inf
        %v8781 = vsel %vm7505, %v5037, -inf
        %v8782 = vsel %vm7505, %v5868, -inf
        %v8783 = vsel %vm7505, %v5870, -inf
        %v8784 = vsel %vm7505, %v6701, -inf
        %v8785 = vsel %vm7505, %v6703, -inf
        %v8786 = vld [vmem:[%s356] sm:$0xff]
        %v8787 = vmax.f32 %v7506, %v7514
        %v8788 = vmax.f32 %v8787, %v7522
        %v8789 = vmax.f32 %v8788, %v7530
        %v8790 = vmax.f32 %v8789, %v7538
        %v8791 = vmax.f32 %v8790, %v7546
        %v8792 = vmax.f32 %v8791, %v7554
        %v8793 = vmax.f32 %v8792, %v7562
        %v8794 = vmax.f32 %v8793, %v7570
        %v8795 = vmax.f32 %v8794, %v7578
        %v8796 = vmax.f32 %v8795, %v7586
        %v8797 = vmax.f32 %v8796, %v7594
        %v8798 = vmax.f32 %v8797, %v7602
        %v8799 = vmax.f32 %v8798, %v7610
        %v8800 = vmax.f32 %v8799, %v7618
        %v8801 = vmax.f32 %v8800, %v7626
        %v8802 = vmax.f32 %v8801, %v7634
        %v8803 = vmax.f32 %v8802, %v7642
        %v8804 = vmax.f32 %v8803, %v7650
        %v8805 = vmax.f32 %v8804, %v7658
        %v8806 = vmax.f32 %v8805, %v7666
        %v8807 = vmax.f32 %v8806, %v7674
        %v8808 = vmax.f32 %v8807, %v7682
        %v8809 = vmax.f32 %v8808, %v7690
        %v8810 = vmax.f32 %v8809, %v7698
        %v8811 = vmax.f32 %v8810, %v7706
        %v8812 = vmax.f32 %v8811, %v7714
        %v8813 = vmax.f32 %v8812, %v7722
        %v8814 = vmax.f32 %v8813, %v7730
        %v8815 = vmax.f32 %v8814, %v7738
        %v8816 = vmax.f32 %v8815, %v7746
        %v8817 = vmax.f32 %v8816, %v7754
        %v8818 = vmax.f32 %v8817, %v7762
        %v8819 = vmax.f32 %v8818, %v7770
        %v8820 = vmax.f32 %v8819, %v7778
        %v8821 = vmax.f32 %v8820, %v7786
        %v8822 = vmax.f32 %v8821, %v7794
        %v8823 = vmax.f32 %v8822, %v7802
        %v8824 = vmax.f32 %v8823, %v7810
        %v8825 = vmax.f32 %v8824, %v7818
        %v8826 = vmax.f32 %v8825, %v7826
        %v8827 = vmax.f32 %v8826, %v7834
        %v8828 = vmax.f32 %v8827, %v7842
        %v8829 = vmax.f32 %v8828, %v7850
        %v8830 = vmax.f32 %v8829, %v7858
        %v8831 = vmax.f32 %v8830, %v7866
        %v8832 = vmax.f32 %v8831, %v7874
        %v8833 = vmax.f32 %v8832, %v7882
        %v8834 = vmax.f32 %v8833, %v7890
        %v8835 = vmax.f32 %v8834, %v7898
        %v8836 = vmax.f32 %v8835, %v7906
        %v8837 = vmax.f32 %v8836, %v7914
        %v8838 = vmax.f32 %v8837, %v7922
        %v8839 = vmax.f32 %v8838, %v7930
        %v8840 = vmax.f32 %v8839, %v7938
        %v8841 = vmax.f32 %v8840, %v7946
        %v8842 = vmax.f32 %v8841, %v7954
        %v8843 = vmax.f32 %v8842, %v7962
        %v8844 = vmax.f32 %v8843, %v7970
        %v8845 = vmax.f32 %v8844, %v7978
        %v8846 = vmax.f32 %v8845, %v7986
        %v8847 = vmax.f32 %v8846, %v7994
        %v8848 = vmax.f32 %v8847, %v8002
        %v8849 = vmax.f32 %v8848, %v8010
        %v8850 = vmax.f32 %v8849, %v8018
        %v8851 = vmax.f32 %v8850, %v8026
        %v8852 = vmax.f32 %v8851, %v8034
        %v8853 = vmax.f32 %v8852, %v8042
        %v8854 = vmax.f32 %v8853, %v8050
        %v8855 = vmax.f32 %v8854, %v8058
        %v8856 = vmax.f32 %v8855, %v8066
        %v8857 = vmax.f32 %v8856, %v8074
        %v8858 = vmax.f32 %v8857, %v8082
        %v8859 = vmax.f32 %v8858, %v8090
        %v8860 = vmax.f32 %v8859, %v8098
        %v8861 = vmax.f32 %v8860, %v8106
        %v8862 = vmax.f32 %v8861, %v8114
        %v8863 = vmax.f32 %v8862, %v8122
        %v8864 = vmax.f32 %v8863, %v8130
        %v8865 = vmax.f32 %v8864, %v8138
        %v8866 = vmax.f32 %v8865, %v8146
        %v8867 = vmax.f32 %v8866, %v8154
        %v8868 = vmax.f32 %v8867, %v8162
        %v8869 = vmax.f32 %v8868, %v8170
        %v8870 = vmax.f32 %v8869, %v8178
        %v8871 = vmax.f32 %v8870, %v8186
        %v8872 = vmax.f32 %v8871, %v8194
        %v8873 = vmax.f32 %v8872, %v8202
        %v8874 = vmax.f32 %v8873, %v8210
        %v8875 = vmax.f32 %v8874, %v8218
        %v8876 = vmax.f32 %v8875, %v8226
        %v8877 = vmax.f32 %v8876, %v8234
        %v8878 = vmax.f32 %v8877, %v8242
        %v8879 = vmax.f32 %v8878, %v8250
        %v8880 = vmax.f32 %v8879, %v8258
        %v8881 = vmax.f32 %v8880, %v8266
        %v8882 = vmax.f32 %v8881, %v8274
        %v8883 = vmax.f32 %v8882, %v8282
        %v8884 = vmax.f32 %v8883, %v8290
        %v8885 = vmax.f32 %v8884, %v8298
        %v8886 = vmax.f32 %v8885, %v8306
        %v8887 = vmax.f32 %v8886, %v8314
        %v8888 = vmax.f32 %v8887, %v8322
        %v8889 = vmax.f32 %v8888, %v8330
        %v8890 = vmax.f32 %v8889, %v8338
        %v8891 = vmax.f32 %v8890, %v8346
        %v8892 = vmax.f32 %v8891, %v8354
        %v8893 = vmax.f32 %v8892, %v8362
        %v8894 = vmax.f32 %v8893, %v8370
        %v8895 = vmax.f32 %v8894, %v8378
        %v8896 = vmax.f32 %v8895, %v8386
        %v8897 = vmax.f32 %v8896, %v8394
        %v8898 = vmax.f32 %v8897, %v8402
        %v8899 = vmax.f32 %v8898, %v8410
        %v8900 = vmax.f32 %v8899, %v8418
        %v8901 = vmax.f32 %v8900, %v8426
        %v8902 = vmax.f32 %v8901, %v8434
        %v8903 = vmax.f32 %v8902, %v8442
        %v8904 = vmax.f32 %v8903, %v8450
        %v8905 = vmax.f32 %v8904, %v8458
        %v8906 = vmax.f32 %v8905, %v8466
        %v8907 = vmax.f32 %v8906, %v8474
        %v8908 = vmax.f32 %v8907, %v8482
        %v8909 = vmax.f32 %v8908, %v8490
        %v8910 = vmax.f32 %v8909, %v8498
        %v8911 = vmax.f32 %v8910, %v8506
        %v8912 = vmax.f32 %v8911, %v8514
        %v8913 = vmax.f32 %v8912, %v8522
        %v8914 = vmax.f32 %v8913, %v8530
        %v8915 = vmax.f32 %v8914, %v8538
        %v8916 = vmax.f32 %v8915, %v8546
        %v8917 = vmax.f32 %v8916, %v8554
        %v8918 = vmax.f32 %v8917, %v8562
        %v8919 = vmax.f32 %v8918, %v8570
        %v8920 = vmax.f32 %v8919, %v8578
        %v8921 = vmax.f32 %v8920, %v8586
        %v8922 = vmax.f32 %v8921, %v8594
        %v8923 = vmax.f32 %v8922, %v8602
        %v8924 = vmax.f32 %v8923, %v8610
        %v8925 = vmax.f32 %v8924, %v8618
        %v8926 = vmax.f32 %v8925, %v8626
        %v8927 = vmax.f32 %v8926, %v8634
        %v8928 = vmax.f32 %v8927, %v8642
        %v8929 = vmax.f32 %v8928, %v8650
        %v8930 = vmax.f32 %v8929, %v8658
        %v8931 = vmax.f32 %v8930, %v8666
        %v8932 = vmax.f32 %v8931, %v8674
        %v8933 = vmax.f32 %v8932, %v8682
        %v8934 = vmax.f32 %v8933, %v8690
        %v8935 = vmax.f32 %v8934, %v8698
        %v8936 = vmax.f32 %v8935, %v8706
        %v8937 = vmax.f32 %v8936, %v8714
        %v8938 = vmax.f32 %v8937, %v8722
        %v8939 = vmax.f32 %v8938, %v8730
        %v8940 = vmax.f32 %v8939, %v8738
        %v8941 = vmax.f32 %v8940, %v8746
        %v8942 = vmax.f32 %v8941, %v8754
        %v8943 = vmax.f32 %v8942, %v8762
        %v8944 = vmax.f32 %v8943, %v8770
        %v8945 = vmax.f32 %v8944, %v8778
        %v8946 = vrot.slane %v8945, 4
        %v8947 = vmax.f32 %v8945, %v8946
        %v8948 = vrot.slane %v8947, 2
        %v8949 = vmax.f32 %v8947, %v8948
        %v8950 = vrot.slane %v8949, 1
        %v8951 = vmax.f32 %v8949, %v8950
        %v8952 = vmax.f32 %v7507, %v7515
        %v8953 = vmax.f32 %v8952, %v7523
        %v8954 = vmax.f32 %v8953, %v7531
        %v8955 = vmax.f32 %v8954, %v7539
        %v8956 = vmax.f32 %v8955, %v7547
        %v8957 = vmax.f32 %v8956, %v7555
        %v8958 = vmax.f32 %v8957, %v7563
        %v8959 = vmax.f32 %v8958, %v7571
        %v8960 = vmax.f32 %v8959, %v7579
        %v8961 = vmax.f32 %v8960, %v7587
        %v8962 = vmax.f32 %v8961, %v7595
        %v8963 = vmax.f32 %v8962, %v7603
        %v8964 = vmax.f32 %v8963, %v7611
        %v8965 = vmax.f32 %v8964, %v7619
        %v8966 = vmax.f32 %v8965, %v7627
        %v8967 = vmax.f32 %v8966, %v7635
        %v8968 = vmax.f32 %v8967, %v7643
        %v8969 = vmax.f32 %v8968, %v7651
        %v8970 = vmax.f32 %v8969, %v7659
        %v8971 = vmax.f32 %v8970, %v7667
        %v8972 = vmax.f32 %v8971, %v7675
        %v8973 = vmax.f32 %v8972, %v7683
        %v8974 = vmax.f32 %v8973, %v7691
        %v8975 = vmax.f32 %v8974, %v7699
        %v8976 = vmax.f32 %v8975, %v7707
        %v8977 = vmax.f32 %v8976, %v7715
        %v8978 = vmax.f32 %v8977, %v7723
        %v8979 = vmax.f32 %v8978, %v7731
        %v8980 = vmax.f32 %v8979, %v7739
        %v8981 = vmax.f32 %v8980, %v7747
        %v8982 = vmax.f32 %v8981, %v7755
        %v8983 = vmax.f32 %v8982, %v7763
        %v8984 = vmax.f32 %v8983, %v7771
        %v8985 = vmax.f32 %v8984, %v7779
        %v8986 = vmax.f32 %v8985, %v7787
        %v8987 = vmax.f32 %v8986, %v7795
        %v8988 = vmax.f32 %v8987, %v7803
        %v8989 = vmax.f32 %v8988, %v7811
        %v8990 = vmax.f32 %v8989, %v7819
        %v8991 = vmax.f32 %v8990, %v7827
        %v8992 = vmax.f32 %v8991, %v7835
        %v8993 = vmax.f32 %v8992, %v7843
        %v8994 = vmax.f32 %v8993, %v7851
        %v8995 = vmax.f32 %v8994, %v7859
        %v8996 = vmax.f32 %v8995, %v7867
        %v8997 = vmax.f32 %v8996, %v7875
        %v8998 = vmax.f32 %v8997, %v7883
        %v8999 = vmax.f32 %v8998, %v7891
        %v9000 = vmax.f32 %v8999, %v7899
        %v9001 = vmax.f32 %v9000, %v7907
        %v9002 = vmax.f32 %v9001, %v7915
        %v9003 = vmax.f32 %v9002, %v7923
        %v9004 = vmax.f32 %v9003, %v7931
        %v9005 = vmax.f32 %v9004, %v7939
        %v9006 = vmax.f32 %v9005, %v7947
        %v9007 = vmax.f32 %v9006, %v7955
        %v9008 = vmax.f32 %v9007, %v7963
        %v9009 = vmax.f32 %v9008, %v7971
        %v9010 = vmax.f32 %v9009, %v7979
        %v9011 = vmax.f32 %v9010, %v7987
        %v9012 = vmax.f32 %v9011, %v7995
        %v9013 = vmax.f32 %v9012, %v8003
        %v9014 = vmax.f32 %v9013, %v8011
        %v9015 = vmax.f32 %v9014, %v8019
        %v9016 = vmax.f32 %v9015, %v8027
        %v9017 = vmax.f32 %v9016, %v8035
        %v9018 = vmax.f32 %v9017, %v8043
        %v9019 = vmax.f32 %v9018, %v8051
        %v9020 = vmax.f32 %v9019, %v8059
        %v9021 = vmax.f32 %v9020, %v8067
        %v9022 = vmax.f32 %v9021, %v8075
        %v9023 = vmax.f32 %v9022, %v8083
        %v9024 = vmax.f32 %v9023, %v8091
        %v9025 = vmax.f32 %v9024, %v8099
        %v9026 = vmax.f32 %v9025, %v8107
        %v9027 = vmax.f32 %v9026, %v8115
        %v9028 = vmax.f32 %v9027, %v8123
        %v9029 = vmax.f32 %v9028, %v8131
        %v9030 = vmax.f32 %v9029, %v8139
        %v9031 = vmax.f32 %v9030, %v8147
        %v9032 = vmax.f32 %v9031, %v8155
        %v9033 = vmax.f32 %v9032, %v8163
        %v9034 = vmax.f32 %v9033, %v8171
        %v9035 = vmax.f32 %v9034, %v8179
        %v9036 = vmax.f32 %v9035, %v8187
        %v9037 = vmax.f32 %v9036, %v8195
        %v9038 = vmax.f32 %v9037, %v8203
        %v9039 = vmax.f32 %v9038, %v8211
        %v9040 = vmax.f32 %v9039, %v8219
        %v9041 = vmax.f32 %v9040, %v8227
        %v9042 = vmax.f32 %v9041, %v8235
        %v9043 = vmax.f32 %v9042, %v8243
        %v9044 = vmax.f32 %v9043, %v8251
        %v9045 = vmax.f32 %v9044, %v8259
        %v9046 = vmax.f32 %v9045, %v8267
        %v9047 = vmax.f32 %v9046, %v8275
        %v9048 = vmax.f32 %v9047, %v8283
        %v9049 = vmax.f32 %v9048, %v8291
        %v9050 = vmax.f32 %v9049, %v8299
        %v9051 = vmax.f32 %v9050, %v8307
        %v9052 = vmax.f32 %v9051, %v8315
        %v9053 = vmax.f32 %v9052, %v8323
        %v9054 = vmax.f32 %v9053, %v8331
        %v9055 = vmax.f32 %v9054, %v8339
        %v9056 = vmax.f32 %v9055, %v8347
        %v9057 = vmax.f32 %v9056, %v8355
        %v9058 = vmax.f32 %v9057, %v8363
        %v9059 = vmax.f32 %v9058, %v8371
        %v9060 = vmax.f32 %v9059, %v8379
        %v9061 = vmax.f32 %v9060, %v8387
        %v9062 = vmax.f32 %v9061, %v8395
        %v9063 = vmax.f32 %v9062, %v8403
        %v9064 = vmax.f32 %v9063, %v8411
        %v9065 = vmax.f32 %v9064, %v8419
        %v9066 = vmax.f32 %v9065, %v8427
        %v9067 = vmax.f32 %v9066, %v8435
        %v9068 = vmax.f32 %v9067, %v8443
        %v9069 = vmax.f32 %v9068, %v8451
        %v9070 = vmax.f32 %v9069, %v8459
        %v9071 = vmax.f32 %v9070, %v8467
        %v9072 = vmax.f32 %v9071, %v8475
        %v9073 = vmax.f32 %v9072, %v8483
        %v9074 = vmax.f32 %v9073, %v8491
        %v9075 = vmax.f32 %v9074, %v8499
        %v9076 = vmax.f32 %v9075, %v8507
        %v9077 = vmax.f32 %v9076, %v8515
        %v9078 = vmax.f32 %v9077, %v8523
        %v9079 = vmax.f32 %v9078, %v8531
        %v9080 = vmax.f32 %v9079, %v8539
        %v9081 = vmax.f32 %v9080, %v8547
        %v9082 = vmax.f32 %v9081, %v8555
        %v9083 = vmax.f32 %v9082, %v8563
        %v9084 = vmax.f32 %v9083, %v8571
        %v9085 = vmax.f32 %v9084, %v8579
        %v9086 = vmax.f32 %v9085, %v8587
        %v9087 = vmax.f32 %v9086, %v8595
        %v9088 = vmax.f32 %v9087, %v8603
        %v9089 = vmax.f32 %v9088, %v8611
        %v9090 = vmax.f32 %v9089, %v8619
        %v9091 = vmax.f32 %v9090, %v8627
        %v9092 = vmax.f32 %v9091, %v8635
        %v9093 = vmax.f32 %v9092, %v8643
        %v9094 = vmax.f32 %v9093, %v8651
        %v9095 = vmax.f32 %v9094, %v8659
        %v9096 = vmax.f32 %v9095, %v8667
        %v9097 = vmax.f32 %v9096, %v8675
        %v9098 = vmax.f32 %v9097, %v8683
        %v9099 = vmax.f32 %v9098, %v8691
        %v9100 = vmax.f32 %v9099, %v8699
        %v9101 = vmax.f32 %v9100, %v8707
        %v9102 = vmax.f32 %v9101, %v8715
        %v9103 = vmax.f32 %v9102, %v8723
        %v9104 = vmax.f32 %v9103, %v8731
        %v9105 = vmax.f32 %v9104, %v8739
        %v9106 = vmax.f32 %v9105, %v8747
        %v9107 = vmax.f32 %v9106, %v8755
        %v9108 = vmax.f32 %v9107, %v8763
        %v9109 = vmax.f32 %v9108, %v8771
        %v9110 = vmax.f32 %v9109, %v8779
        %v9111 = vrot.slane %v9110, 4
        %v9112 = vmax.f32 %v9110, %v9111
        %v9113 = vrot.slane %v9112, 2
        %v9114 = vmax.f32 %v9112, %v9113
        %v9115 = vrot.slane %v9114, 1
        %v9116 = vmax.f32 %v9114, %v9115
        %v9117 = vmax.f32 %v7508, %v7516
        %v9118 = vmax.f32 %v9117, %v7524
        %v9119 = vmax.f32 %v9118, %v7532
        %v9120 = vmax.f32 %v9119, %v7540
        %v9121 = vmax.f32 %v9120, %v7548
        %v9122 = vmax.f32 %v9121, %v7556
        %v9123 = vmax.f32 %v9122, %v7564
        %v9124 = vmax.f32 %v9123, %v7572
        %v9125 = vmax.f32 %v9124, %v7580
        %v9126 = vmax.f32 %v9125, %v7588
        %v9127 = vmax.f32 %v9126, %v7596
        %v9128 = vmax.f32 %v9127, %v7604
        %v9129 = vmax.f32 %v9128, %v7612
        %v9130 = vmax.f32 %v9129, %v7620
        %v9131 = vmax.f32 %v9130, %v7628
        %v9132 = vmax.f32 %v9131, %v7636
        %v9133 = vmax.f32 %v9132, %v7644
        %v9134 = vmax.f32 %v9133, %v7652
        %v9135 = vmax.f32 %v9134, %v7660
        %v9136 = vmax.f32 %v9135, %v7668
        %v9137 = vmax.f32 %v9136, %v7676
        %v9138 = vmax.f32 %v9137, %v7684
        %v9139 = vmax.f32 %v9138, %v7692
        %v9140 = vmax.f32 %v9139, %v7700
        %v9141 = vmax.f32 %v9140, %v7708
        %v9142 = vmax.f32 %v9141, %v7716
        %v9143 = vmax.f32 %v9142, %v7724
        %v9144 = vmax.f32 %v9143, %v7732
        %v9145 = vmax.f32 %v9144, %v7740
        %v9146 = vmax.f32 %v9145, %v7748
        %v9147 = vmax.f32 %v9146, %v7756
        %v9148 = vmax.f32 %v9147, %v7764
        %v9149 = vmax.f32 %v9148, %v7772
        %v9150 = vmax.f32 %v9149, %v7780
        %v9151 = vmax.f32 %v9150, %v7788
        %v9152 = vmax.f32 %v9151, %v7796
        %v9153 = vmax.f32 %v9152, %v7804
        %v9154 = vmax.f32 %v9153, %v7812
        %v9155 = vmax.f32 %v9154, %v7820
        %v9156 = vmax.f32 %v9155, %v7828
        %v9157 = vmax.f32 %v9156, %v7836
        %v9158 = vmax.f32 %v9157, %v7844
        %v9159 = vmax.f32 %v9158, %v7852
        %v9160 = vmax.f32 %v9159, %v7860
        %v9161 = vmax.f32 %v9160, %v7868
        %v9162 = vmax.f32 %v9161, %v7876
        %v9163 = vmax.f32 %v9162, %v7884
        %v9164 = vmax.f32 %v9163, %v7892
        %v9165 = vmax.f32 %v9164, %v7900
        %v9166 = vmax.f32 %v9165, %v7908
        %v9167 = vmax.f32 %v9166, %v7916
        %v9168 = vmax.f32 %v9167, %v7924
        %v9169 = vmax.f32 %v9168, %v7932
        %v9170 = vmax.f32 %v9169, %v7940
        %v9171 = vmax.f32 %v9170, %v7948
        %v9172 = vmax.f32 %v9171, %v7956
        %v9173 = vmax.f32 %v9172, %v7964
        %v9174 = vmax.f32 %v9173, %v7972
        %v9175 = vmax.f32 %v9174, %v7980
        %v9176 = vmax.f32 %v9175, %v7988
        %v9177 = vmax.f32 %v9176, %v7996
        %v9178 = vmax.f32 %v9177, %v8004
        %v9179 = vmax.f32 %v9178, %v8012
        %v9180 = vmax.f32 %v9179, %v8020
        %v9181 = vmax.f32 %v9180, %v8028
        %v9182 = vmax.f32 %v9181, %v8036
        %v9183 = vmax.f32 %v9182, %v8044
        %v9184 = vmax.f32 %v9183, %v8052
        %v9185 = vmax.f32 %v9184, %v8060
        %v9186 = vmax.f32 %v9185, %v8068
        %v9187 = vmax.f32 %v9186, %v8076
        %v9188 = vmax.f32 %v9187, %v8084
        %v9189 = vmax.f32 %v9188, %v8092
        %v9190 = vmax.f32 %v9189, %v8100
        %v9191 = vmax.f32 %v9190, %v8108
        %v9192 = vmax.f32 %v9191, %v8116
        %v9193 = vmax.f32 %v9192, %v8124
        %v9194 = vmax.f32 %v9193, %v8132
        %v9195 = vmax.f32 %v9194, %v8140
        %v9196 = vmax.f32 %v9195, %v8148
        %v9197 = vmax.f32 %v9196, %v8156
        %v9198 = vmax.f32 %v9197, %v8164
        %v9199 = vmax.f32 %v9198, %v8172
        %v9200 = vmax.f32 %v9199, %v8180
        %v9201 = vmax.f32 %v9200, %v8188
        %v9202 = vmax.f32 %v9201, %v8196
        %v9203 = vmax.f32 %v9202, %v8204
        %v9204 = vmax.f32 %v9203, %v8212
        %v9205 = vmax.f32 %v9204, %v8220
        %v9206 = vmax.f32 %v9205, %v8228
        %v9207 = vmax.f32 %v9206, %v8236
        %v9208 = vmax.f32 %v9207, %v8244
        %v9209 = vmax.f32 %v9208, %v8252
        %v9210 = vmax.f32 %v9209, %v8260
        %v9211 = vmax.f32 %v9210, %v8268
        %v9212 = vmax.f32 %v9211, %v8276
        %v9213 = vmax.f32 %v9212, %v8284
        %v9214 = vmax.f32 %v9213, %v8292
        %v9215 = vmax.f32 %v9214, %v8300
        %v9216 = vmax.f32 %v9215, %v8308
        %v9217 = vmax.f32 %v9216, %v8316
        %v9218 = vmax.f32 %v9217, %v8324
        %v9219 = vmax.f32 %v9218, %v8332
        %v9220 = vmax.f32 %v9219, %v8340
        %v9221 = vmax.f32 %v9220, %v8348
        %v9222 = vmax.f32 %v9221, %v8356
        %v9223 = vmax.f32 %v9222, %v8364
        %v9224 = vmax.f32 %v9223, %v8372
        %v9225 = vmax.f32 %v9224, %v8380
        %v9226 = vmax.f32 %v9225, %v8388
        %v9227 = vmax.f32 %v9226, %v8396
        %v9228 = vmax.f32 %v9227, %v8404
        %v9229 = vmax.f32 %v9228, %v8412
        %v9230 = vmax.f32 %v9229, %v8420
        %v9231 = vmax.f32 %v9230, %v8428
        %v9232 = vmax.f32 %v9231, %v8436
        %v9233 = vmax.f32 %v9232, %v8444
        %v9234 = vmax.f32 %v9233, %v8452
        %v9235 = vmax.f32 %v9234, %v8460
        %v9236 = vmax.f32 %v9235, %v8468
        %v9237 = vmax.f32 %v9236, %v8476
        %v9238 = vmax.f32 %v9237, %v8484
        %v9239 = vmax.f32 %v9238, %v8492
        %v9240 = vmax.f32 %v9239, %v8500
        %v9241 = vmax.f32 %v9240, %v8508
        %v9242 = vmax.f32 %v9241, %v8516
        %v9243 = vmax.f32 %v9242, %v8524
        %v9244 = vmax.f32 %v9243, %v8532
        %v9245 = vmax.f32 %v9244, %v8540
        %v9246 = vmax.f32 %v9245, %v8548
        %v9247 = vmax.f32 %v9246, %v8556
        %v9248 = vmax.f32 %v9247, %v8564
        %v9249 = vmax.f32 %v9248, %v8572
        %v9250 = vmax.f32 %v9249, %v8580
        %v9251 = vmax.f32 %v9250, %v8588
        %v9252 = vmax.f32 %v9251, %v8596
        %v9253 = vmax.f32 %v9252, %v8604
        %v9254 = vmax.f32 %v9253, %v8612
        %v9255 = vmax.f32 %v9254, %v8620
        %v9256 = vmax.f32 %v9255, %v8628
        %v9257 = vmax.f32 %v9256, %v8636
        %v9258 = vmax.f32 %v9257, %v8644
        %v9259 = vmax.f32 %v9258, %v8652
        %v9260 = vmax.f32 %v9259, %v8660
        %v9261 = vmax.f32 %v9260, %v8668
        %v9262 = vmax.f32 %v9261, %v8676
        %v9263 = vmax.f32 %v9262, %v8684
        %v9264 = vmax.f32 %v9263, %v8692
        %v9265 = vmax.f32 %v9264, %v8700
        %v9266 = vmax.f32 %v9265, %v8708
        %v9267 = vmax.f32 %v9266, %v8716
        %v9268 = vmax.f32 %v9267, %v8724
        %v9269 = vmax.f32 %v9268, %v8732
        %v9270 = vmax.f32 %v9269, %v8740
        %v9271 = vmax.f32 %v9270, %v8748
        %v9272 = vmax.f32 %v9271, %v8756
        %v9273 = vmax.f32 %v9272, %v8764
        %v9274 = vmax.f32 %v9273, %v8772
        %v9275 = vmax.f32 %v9274, %v8780
        %v9276 = vrot.slane %v9275, 4
        %v9277 = vmax.f32 %v9275, %v9276
        %v9278 = vrot.slane %v9277, 2
        %v9279 = vmax.f32 %v9277, %v9278
        %v9280 = vrot.slane %v9279, 1
        %v9281 = vmax.f32 %v9279, %v9280
        %v9282 = vmax.f32 %v7509, %v7517
        %v9283 = vmax.f32 %v9282, %v7525
        %v9284 = vmax.f32 %v9283, %v7533
        %v9285 = vmax.f32 %v9284, %v7541
        %v9286 = vmax.f32 %v9285, %v7549
        %v9287 = vmax.f32 %v9286, %v7557
        %v9288 = vmax.f32 %v9287, %v7565
        %v9289 = vmax.f32 %v9288, %v7573
        %v9290 = vmax.f32 %v9289, %v7581
        %v9291 = vmax.f32 %v9290, %v7589
        %v9292 = vmax.f32 %v9291, %v7597
        %v9293 = vmax.f32 %v9292, %v7605
        %v9294 = vmax.f32 %v9293, %v7613
        %v9295 = vmax.f32 %v9294, %v7621
        %v9296 = vmax.f32 %v9295, %v7629
        %v9297 = vmax.f32 %v9296, %v7637
        %v9298 = vmax.f32 %v9297, %v7645
        %v9299 = vmax.f32 %v9298, %v7653
        %v9300 = vmax.f32 %v9299, %v7661
        %v9301 = vmax.f32 %v9300, %v7669
        %v9302 = vmax.f32 %v9301, %v7677
        %v9303 = vmax.f32 %v9302, %v7685
        %v9304 = vmax.f32 %v9303, %v7693
        %v9305 = vmax.f32 %v9304, %v7701
        %v9306 = vmax.f32 %v9305, %v7709
        %v9307 = vmax.f32 %v9306, %v7717
        %v9308 = vmax.f32 %v9307, %v7725
        %v9309 = vmax.f32 %v9308, %v7733
        %v9310 = vmax.f32 %v9309, %v7741
        %v9311 = vmax.f32 %v9310, %v7749
        %v9312 = vmax.f32 %v9311, %v7757
        %v9313 = vmax.f32 %v9312, %v7765
        %v9314 = vmax.f32 %v9313, %v7773
        %v9315 = vmax.f32 %v9314, %v7781
        %v9316 = vmax.f32 %v9315, %v7789
        %v9317 = vmax.f32 %v9316, %v7797
        %v9318 = vmax.f32 %v9317, %v7805
        %v9319 = vmax.f32 %v9318, %v7813
        %v9320 = vmax.f32 %v9319, %v7821
        %v9321 = vmax.f32 %v9320, %v7829
        %v9322 = vmax.f32 %v9321, %v7837
        %v9323 = vmax.f32 %v9322, %v7845
        %v9324 = vmax.f32 %v9323, %v7853
        %v9325 = vmax.f32 %v9324, %v7861
        %v9326 = vmax.f32 %v9325, %v7869
        %v9327 = vmax.f32 %v9326, %v7877
        %v9328 = vmax.f32 %v9327, %v7885
        %v9329 = vmax.f32 %v9328, %v7893
        %v9330 = vmax.f32 %v9329, %v7901
        %v9331 = vmax.f32 %v9330, %v7909
        %v9332 = vmax.f32 %v9331, %v7917
        %v9333 = vmax.f32 %v9332, %v7925
        %v9334 = vmax.f32 %v9333, %v7933
        %v9335 = vmax.f32 %v9334, %v7941
        %v9336 = vmax.f32 %v9335, %v7949
        %v9337 = vmax.f32 %v9336, %v7957
        %v9338 = vmax.f32 %v9337, %v7965
        %v9339 = vmax.f32 %v9338, %v7973
        %v9340 = vmax.f32 %v9339, %v7981
        %v9341 = vmax.f32 %v9340, %v7989
        %v9342 = vmax.f32 %v9341, %v7997
        %v9343 = vmax.f32 %v9342, %v8005
        %v9344 = vmax.f32 %v9343, %v8013
        %v9345 = vmax.f32 %v9344, %v8021
        %v9346 = vmax.f32 %v9345, %v8029
        %v9347 = vmax.f32 %v9346, %v8037
        %v9348 = vmax.f32 %v9347, %v8045
        %v9349 = vmax.f32 %v9348, %v8053
        %v9350 = vmax.f32 %v9349, %v8061
        %v9351 = vmax.f32 %v9350, %v8069
        %v9352 = vmax.f32 %v9351, %v8077
        %v9353 = vmax.f32 %v9352, %v8085
        %v9354 = vmax.f32 %v9353, %v8093
        %v9355 = vmax.f32 %v9354, %v8101
        %v9356 = vmax.f32 %v9355, %v8109
        %v9357 = vmax.f32 %v9356, %v8117
        %v9358 = vmax.f32 %v9357, %v8125
        %v9359 = vmax.f32 %v9358, %v8133
        %v9360 = vmax.f32 %v9359, %v8141
        %v9361 = vmax.f32 %v9360, %v8149
        %v9362 = vmax.f32 %v9361, %v8157
        %v9363 = vmax.f32 %v9362, %v8165
        %v9364 = vmax.f32 %v9363, %v8173
        %v9365 = vmax.f32 %v9364, %v8181
        %v9366 = vmax.f32 %v9365, %v8189
        %v9367 = vmax.f32 %v9366, %v8197
        %v9368 = vmax.f32 %v9367, %v8205
        %v9369 = vmax.f32 %v9368, %v8213
        %v9370 = vmax.f32 %v9369, %v8221
        %v9371 = vmax.f32 %v9370, %v8229
        %v9372 = vmax.f32 %v9371, %v8237
        %v9373 = vmax.f32 %v9372, %v8245
        %v9374 = vmax.f32 %v9373, %v8253
        %v9375 = vmax.f32 %v9374, %v8261
        %v9376 = vmax.f32 %v9375, %v8269
        %v9377 = vmax.f32 %v9376, %v8277
        %v9378 = vmax.f32 %v9377, %v8285
        %v9379 = vmax.f32 %v9378, %v8293
        %v9380 = vmax.f32 %v9379, %v8301
        %v9381 = vmax.f32 %v9380, %v8309
        %v9382 = vmax.f32 %v9381, %v8317
        %v9383 = vmax.f32 %v9382, %v8325
        %v9384 = vmax.f32 %v9383, %v8333
        %v9385 = vmax.f32 %v9384, %v8341
        %v9386 = vmax.f32 %v9385, %v8349
        %v9387 = vmax.f32 %v9386, %v8357
        %v9388 = vmax.f32 %v9387, %v8365
        %v9389 = vmax.f32 %v9388, %v8373
        %v9390 = vmax.f32 %v9389, %v8381
        %v9391 = vmax.f32 %v9390, %v8389
        %v9392 = vmax.f32 %v9391, %v8397
        %v9393 = vmax.f32 %v9392, %v8405
        %v9394 = vmax.f32 %v9393, %v8413
        %v9395 = vmax.f32 %v9394, %v8421
        %v9396 = vmax.f32 %v9395, %v8429
        %v9397 = vmax.f32 %v9396, %v8437
        %v9398 = vmax.f32 %v9397, %v8445
        %v9399 = vmax.f32 %v9398, %v8453
        %v9400 = vmax.f32 %v9399, %v8461
        %v9401 = vmax.f32 %v9400, %v8469
        %v9402 = vmax.f32 %v9401, %v8477
        %v9403 = vmax.f32 %v9402, %v8485
        %v9404 = vmax.f32 %v9403, %v8493
        %v9405 = vmax.f32 %v9404, %v8501
        %v9406 = vmax.f32 %v9405, %v8509
        %v9407 = vmax.f32 %v9406, %v8517
        %v9408 = vmax.f32 %v9407, %v8525
        %v9409 = vmax.f32 %v9408, %v8533
        %v9410 = vmax.f32 %v9409, %v8541
        %v9411 = vmax.f32 %v9410, %v8549
        %v9412 = vmax.f32 %v9411, %v8557
        %v9413 = vmax.f32 %v9412, %v8565
        %v9414 = vmax.f32 %v9413, %v8573
        %v9415 = vmax.f32 %v9414, %v8581
        %v9416 = vmax.f32 %v9415, %v8589
        %v9417 = vmax.f32 %v9416, %v8597
        %v9418 = vmax.f32 %v9417, %v8605
        %v9419 = vmax.f32 %v9418, %v8613
        %v9420 = vmax.f32 %v9419, %v8621
        %v9421 = vmax.f32 %v9420, %v8629
        %v9422 = vmax.f32 %v9421, %v8637
        %v9423 = vmax.f32 %v9422, %v8645
        %v9424 = vmax.f32 %v9423, %v8653
        %v9425 = vmax.f32 %v9424, %v8661
        %v9426 = vmax.f32 %v9425, %v8669
        %v9427 = vmax.f32 %v9426, %v8677
        %v9428 = vmax.f32 %v9427, %v8685
        %v9429 = vmax.f32 %v9428, %v8693
        %v9430 = vmax.f32 %v9429, %v8701
        %v9431 = vmax.f32 %v9430, %v8709
        %v9432 = vmax.f32 %v9431, %v8717
        %v9433 = vmax.f32 %v9432, %v8725
        %v9434 = vmax.f32 %v9433, %v8733
        %v9435 = vmax.f32 %v9434, %v8741
        %v9436 = vmax.f32 %v9435, %v8749
        %v9437 = vmax.f32 %v9436, %v8757
        %v9438 = vmax.f32 %v9437, %v8765
        %v9439 = vmax.f32 %v9438, %v8773
        %v9440 = vmax.f32 %v9439, %v8781
        %v9441 = vrot.slane %v9440, 4
        %v9442 = vmax.f32 %v9440, %v9441
        %v9443 = vrot.slane %v9442, 2
        %v9444 = vmax.f32 %v9442, %v9443
        %v9445 = vrot.slane %v9444, 1
        %v9446 = vmax.f32 %v9444, %v9445
        %v9447 = vmax.f32 %v7510, %v7518
        %v9448 = vmax.f32 %v9447, %v7526
        %v9449 = vmax.f32 %v9448, %v7534
        %v9450 = vmax.f32 %v9449, %v7542
        %v9451 = vmax.f32 %v9450, %v7550
        %v9452 = vmax.f32 %v9451, %v7558
        %v9453 = vmax.f32 %v9452, %v7566
        %v9454 = vmax.f32 %v9453, %v7574
        %v9455 = vmax.f32 %v9454, %v7582
        %v9456 = vmax.f32 %v9455, %v7590
        %v9457 = vmax.f32 %v9456, %v7598
        %v9458 = vmax.f32 %v9457, %v7606
        %v9459 = vmax.f32 %v9458, %v7614
        %v9460 = vmax.f32 %v9459, %v7622
        %v9461 = vmax.f32 %v9460, %v7630
        %v9462 = vmax.f32 %v9461, %v7638
        %v9463 = vmax.f32 %v9462, %v7646
        %v9464 = vmax.f32 %v9463, %v7654
        %v9465 = vmax.f32 %v9464, %v7662
        %v9466 = vmax.f32 %v9465, %v7670
        %v9467 = vmax.f32 %v9466, %v7678
        %v9468 = vmax.f32 %v9467, %v7686
        %v9469 = vmax.f32 %v9468, %v7694
        %v9470 = vmax.f32 %v9469, %v7702
        %v9471 = vmax.f32 %v9470, %v7710
        %v9472 = vmax.f32 %v9471, %v7718
        %v9473 = vmax.f32 %v9472, %v7726
        %v9474 = vmax.f32 %v9473, %v7734
        %v9475 = vmax.f32 %v9474, %v7742
        %v9476 = vmax.f32 %v9475, %v7750
        %v9477 = vmax.f32 %v9476, %v7758
        %v9478 = vmax.f32 %v9477, %v7766
        %v9479 = vmax.f32 %v9478, %v7774
        %v9480 = vmax.f32 %v9479, %v7782
        %v9481 = vmax.f32 %v9480, %v7790
        %v9482 = vmax.f32 %v9481, %v7798
        %v9483 = vmax.f32 %v9482, %v7806
        %v9484 = vmax.f32 %v9483, %v7814
        %v9485 = vmax.f32 %v9484, %v7822
        %v9486 = vmax.f32 %v9485, %v7830
        %v9487 = vmax.f32 %v9486, %v7838
        %v9488 = vmax.f32 %v9487, %v7846
        %v9489 = vmax.f32 %v9488, %v7854
        %v9490 = vmax.f32 %v9489, %v7862
        %v9491 = vmax.f32 %v9490, %v7870
        %v9492 = vmax.f32 %v9491, %v7878
        %v9493 = vmax.f32 %v9492, %v7886
        %v9494 = vmax.f32 %v9493, %v7894
        %v9495 = vmax.f32 %v9494, %v7902
        %v9496 = vmax.f32 %v9495, %v7910
        %v9497 = vmax.f32 %v9496, %v7918
        %v9498 = vmax.f32 %v9497, %v7926
        %v9499 = vmax.f32 %v9498, %v7934
        %v9500 = vmax.f32 %v9499, %v7942
        %v9501 = vmax.f32 %v9500, %v7950
        %v9502 = vmax.f32 %v9501, %v7958
        %v9503 = vmax.f32 %v9502, %v7966
        %v9504 = vmax.f32 %v9503, %v7974
        %v9505 = vmax.f32 %v9504, %v7982
        %v9506 = vmax.f32 %v9505, %v7990
        %v9507 = vmax.f32 %v9506, %v7998
        %v9508 = vmax.f32 %v9507, %v8006
        %v9509 = vmax.f32 %v9508, %v8014
        %v9510 = vmax.f32 %v9509, %v8022
        %v9511 = vmax.f32 %v9510, %v8030
        %v9512 = vmax.f32 %v9511, %v8038
        %v9513 = vmax.f32 %v9512, %v8046
        %v9514 = vmax.f32 %v9513, %v8054
        %v9515 = vmax.f32 %v9514, %v8062
        %v9516 = vmax.f32 %v9515, %v8070
        %v9517 = vmax.f32 %v9516, %v8078
        %v9518 = vmax.f32 %v9517, %v8086
        %v9519 = vmax.f32 %v9518, %v8094
        %v9520 = vmax.f32 %v9519, %v8102
        %v9521 = vmax.f32 %v9520, %v8110
        %v9522 = vmax.f32 %v9521, %v8118
        %v9523 = vmax.f32 %v9522, %v8126
        %v9524 = vmax.f32 %v9523, %v8134
        %v9525 = vmax.f32 %v9524, %v8142
        %v9526 = vmax.f32 %v9525, %v8150
        %v9527 = vmax.f32 %v9526, %v8158
        %v9528 = vmax.f32 %v9527, %v8166
        %v9529 = vmax.f32 %v9528, %v8174
        %v9530 = vmax.f32 %v9529, %v8182
        %v9531 = vmax.f32 %v9530, %v8190
        %v9532 = vmax.f32 %v9531, %v8198
        %v9533 = vmax.f32 %v9532, %v8206
        %v9534 = vmax.f32 %v9533, %v8214
        %v9535 = vmax.f32 %v9534, %v8222
        %v9536 = vmax.f32 %v9535, %v8230
        %v9537 = vmax.f32 %v9536, %v8238
        %v9538 = vmax.f32 %v9537, %v8246
        %v9539 = vmax.f32 %v9538, %v8254
        %v9540 = vmax.f32 %v9539, %v8262
        %v9541 = vmax.f32 %v9540, %v8270
        %v9542 = vmax.f32 %v9541, %v8278
        %v9543 = vmax.f32 %v9542, %v8286
        %v9544 = vmax.f32 %v9543, %v8294
        %v9545 = vmax.f32 %v9544, %v8302
        %v9546 = vmax.f32 %v9545, %v8310
        %v9547 = vmax.f32 %v9546, %v8318
        %v9548 = vmax.f32 %v9547, %v8326
        %v9549 = vmax.f32 %v9548, %v8334
        %v9550 = vmax.f32 %v9549, %v8342
        %v9551 = vmax.f32 %v9550, %v8350
        %v9552 = vmax.f32 %v9551, %v8358
        %v9553 = vmax.f32 %v9552, %v8366
        %v9554 = vmax.f32 %v9553, %v8374
        %v9555 = vmax.f32 %v9554, %v8382
        %v9556 = vmax.f32 %v9555, %v8390
        %v9557 = vmax.f32 %v9556, %v8398
        %v9558 = vmax.f32 %v9557, %v8406
        %v9559 = vmax.f32 %v9558, %v8414
        %v9560 = vmax.f32 %v9559, %v8422
        %v9561 = vmax.f32 %v9560, %v8430
        %v9562 = vmax.f32 %v9561, %v8438
        %v9563 = vmax.f32 %v9562, %v8446
        %v9564 = vmax.f32 %v9563, %v8454
        %v9565 = vmax.f32 %v9564, %v8462
        %v9566 = vmax.f32 %v9565, %v8470
        %v9567 = vmax.f32 %v9566, %v8478
        %v9568 = vmax.f32 %v9567, %v8486
        %v9569 = vmax.f32 %v9568, %v8494
        %v9570 = vmax.f32 %v9569, %v8502
        %v9571 = vmax.f32 %v9570, %v8510
        %v9572 = vmax.f32 %v9571, %v8518
        %v9573 = vmax.f32 %v9572, %v8526
        %v9574 = vmax.f32 %v9573, %v8534
        %v9575 = vmax.f32 %v9574, %v8542
        %v9576 = vmax.f32 %v9575, %v8550
        %v9577 = vmax.f32 %v9576, %v8558
        %v9578 = vmax.f32 %v9577, %v8566
        %v9579 = vmax.f32 %v9578, %v8574
        %v9580 = vmax.f32 %v9579, %v8582
        %v9581 = vmax.f32 %v9580, %v8590
        %v9582 = vmax.f32 %v9581, %v8598
        %v9583 = vmax.f32 %v9582, %v8606
        %v9584 = vmax.f32 %v9583, %v8614
        %v9585 = vmax.f32 %v9584, %v8622
        %v9586 = vmax.f32 %v9585, %v8630
        %v9587 = vmax.f32 %v9586, %v8638
        %v9588 = vmax.f32 %v9587, %v8646
        %v9589 = vmax.f32 %v9588, %v8654
        %v9590 = vmax.f32 %v9589, %v8662
        %v9591 = vmax.f32 %v9590, %v8670
        %v9592 = vmax.f32 %v9591, %v8678
        %v9593 = vmax.f32 %v9592, %v8686
        %v9594 = vmax.f32 %v9593, %v8694
        %v9595 = vmax.f32 %v9594, %v8702
        %v9596 = vmax.f32 %v9595, %v8710
        %v9597 = vmax.f32 %v9596, %v8718
        %v9598 = vmax.f32 %v9597, %v8726
        %v9599 = vmax.f32 %v9598, %v8734
        %v9600 = vmax.f32 %v9599, %v8742
        %v9601 = vmax.f32 %v9600, %v8750
        %v9602 = vmax.f32 %v9601, %v8758
        %v9603 = vmax.f32 %v9602, %v8766
        %v9604 = vmax.f32 %v9603, %v8774
        %v9605 = vmax.f32 %v9604, %v8782
        %v9606 = vrot.slane %v9605, 4
        %v9607 = vmax.f32 %v9605, %v9606
        %v9608 = vrot.slane %v9607, 2
        %v9609 = vmax.f32 %v9607, %v9608
        %v9610 = vrot.slane %v9609, 1
        %v9611 = vmax.f32 %v9609, %v9610
        %v9612 = vmax.f32 %v7511, %v7519
        %v9613 = vmax.f32 %v9612, %v7527
        %v9614 = vmax.f32 %v9613, %v7535
        %v9615 = vmax.f32 %v9614, %v7543
        %v9616 = vmax.f32 %v9615, %v7551
        %v9617 = vmax.f32 %v9616, %v7559
        %v9618 = vmax.f32 %v9617, %v7567
        %v9619 = vmax.f32 %v9618, %v7575
        %v9620 = vmax.f32 %v9619, %v7583
        %v9621 = vmax.f32 %v9620, %v7591
        %v9622 = vmax.f32 %v9621, %v7599
        %v9623 = vmax.f32 %v9622, %v7607
        %v9624 = vmax.f32 %v9623, %v7615
        %v9625 = vmax.f32 %v9624, %v7623
        %v9626 = vmax.f32 %v9625, %v7631
        %v9627 = vmax.f32 %v9626, %v7639
        %v9628 = vmax.f32 %v9627, %v7647
        %v9629 = vmax.f32 %v9628, %v7655
        %v9630 = vmax.f32 %v9629, %v7663
        %v9631 = vmax.f32 %v9630, %v7671
        %v9632 = vmax.f32 %v9631, %v7679
        %v9633 = vmax.f32 %v9632, %v7687
        %v9634 = vmax.f32 %v9633, %v7695
        %v9635 = vmax.f32 %v9634, %v7703
        %v9636 = vmax.f32 %v9635, %v7711
        %v9637 = vmax.f32 %v9636, %v7719
        %v9638 = vmax.f32 %v9637, %v7727
        %v9639 = vmax.f32 %v9638, %v7735
        %v9640 = vmax.f32 %v9639, %v7743
        %v9641 = vmax.f32 %v9640, %v7751
        %v9642 = vmax.f32 %v9641, %v7759
        %v9643 = vmax.f32 %v9642, %v7767
        %v9644 = vmax.f32 %v9643, %v7775
        %v9645 = vmax.f32 %v9644, %v7783
        %v9646 = vmax.f32 %v9645, %v7791
        %v9647 = vmax.f32 %v9646, %v7799
        %v9648 = vmax.f32 %v9647, %v7807
        %v9649 = vmax.f32 %v9648, %v7815
        %v9650 = vmax.f32 %v9649, %v7823
        %v9651 = vmax.f32 %v9650, %v7831
        %v9652 = vmax.f32 %v9651, %v7839
        %v9653 = vmax.f32 %v9652, %v7847
        %v9654 = vmax.f32 %v9653, %v7855
        %v9655 = vmax.f32 %v9654, %v7863
        %v9656 = vmax.f32 %v9655, %v7871
        %v9657 = vmax.f32 %v9656, %v7879
        %v9658 = vmax.f32 %v9657, %v7887
        %v9659 = vmax.f32 %v9658, %v7895
        %v9660 = vmax.f32 %v9659, %v7903
        %v9661 = vmax.f32 %v9660, %v7911
        %v9662 = vmax.f32 %v9661, %v7919
        %v9663 = vmax.f32 %v9662, %v7927
        %v9664 = vmax.f32 %v9663, %v7935
        %v9665 = vmax.f32 %v9664, %v7943
        %v9666 = vmax.f32 %v9665, %v7951
        %v9667 = vmax.f32 %v9666, %v7959
        %v9668 = vmax.f32 %v9667, %v7967
        %v9669 = vmax.f32 %v9668, %v7975
        %v9670 = vmax.f32 %v9669, %v7983
        %v9671 = vmax.f32 %v9670, %v7991
        %v9672 = vmax.f32 %v9671, %v7999
        %v9673 = vmax.f32 %v9672, %v8007
        %v9674 = vmax.f32 %v9673, %v8015
        %v9675 = vmax.f32 %v9674, %v8023
        %v9676 = vmax.f32 %v9675, %v8031
        %v9677 = vmax.f32 %v9676, %v8039
        %v9678 = vmax.f32 %v9677, %v8047
        %v9679 = vmax.f32 %v9678, %v8055
        %v9680 = vmax.f32 %v9679, %v8063
        %v9681 = vmax.f32 %v9680, %v8071
        %v9682 = vmax.f32 %v9681, %v8079
        %v9683 = vmax.f32 %v9682, %v8087
        %v9684 = vmax.f32 %v9683, %v8095
        %v9685 = vmax.f32 %v9684, %v8103
        %v9686 = vmax.f32 %v9685, %v8111
        %v9687 = vmax.f32 %v9686, %v8119
        %v9688 = vmax.f32 %v9687, %v8127
        %v9689 = vmax.f32 %v9688, %v8135
        %v9690 = vmax.f32 %v9689, %v8143
        %v9691 = vmax.f32 %v9690, %v8151
        %v9692 = vmax.f32 %v9691, %v8159
        %v9693 = vmax.f32 %v9692, %v8167
        %v9694 = vmax.f32 %v9693, %v8175
        %v9695 = vmax.f32 %v9694, %v8183
        %v9696 = vmax.f32 %v9695, %v8191
        %v9697 = vmax.f32 %v9696, %v8199
        %v9698 = vmax.f32 %v9697, %v8207
        %v9699 = vmax.f32 %v9698, %v8215
        %v9700 = vmax.f32 %v9699, %v8223
        %v9701 = vmax.f32 %v9700, %v8231
        %v9702 = vmax.f32 %v9701, %v8239
        %v9703 = vmax.f32 %v9702, %v8247
        %v9704 = vmax.f32 %v9703, %v8255
        %v9705 = vmax.f32 %v9704, %v8263
        %v9706 = vmax.f32 %v9705, %v8271
        %v9707 = vmax.f32 %v9706, %v8279
        %v9708 = vmax.f32 %v9707, %v8287
        %v9709 = vmax.f32 %v9708, %v8295
        %v9710 = vmax.f32 %v9709, %v8303
        %v9711 = vmax.f32 %v9710, %v8311
        %v9712 = vmax.f32 %v9711, %v8319
        %v9713 = vmax.f32 %v9712, %v8327
        %v9714 = vmax.f32 %v9713, %v8335
        %v9715 = vmax.f32 %v9714, %v8343
        %v9716 = vmax.f32 %v9715, %v8351
        %v9717 = vmax.f32 %v9716, %v8359
        %v9718 = vmax.f32 %v9717, %v8367
        %v9719 = vmax.f32 %v9718, %v8375
        %v9720 = vmax.f32 %v9719, %v8383
        %v9721 = vmax.f32 %v9720, %v8391
        %v9722 = vmax.f32 %v9721, %v8399
        %v9723 = vmax.f32 %v9722, %v8407
        %v9724 = vmax.f32 %v9723, %v8415
        %v9725 = vmax.f32 %v9724, %v8423
        %v9726 = vmax.f32 %v9725, %v8431
        %v9727 = vmax.f32 %v9726, %v8439
        %v9728 = vmax.f32 %v9727, %v8447
        %v9729 = vmax.f32 %v9728, %v8455
        %v9730 = vmax.f32 %v9729, %v8463
        %v9731 = vmax.f32 %v9730, %v8471
        %v9732 = vmax.f32 %v9731, %v8479
        %v9733 = vmax.f32 %v9732, %v8487
        %v9734 = vmax.f32 %v9733, %v8495
        %v9735 = vmax.f32 %v9734, %v8503
        %v9736 = vmax.f32 %v9735, %v8511
        %v9737 = vmax.f32 %v9736, %v8519
        %v9738 = vmax.f32 %v9737, %v8527
        %v9739 = vmax.f32 %v9738, %v8535
        %v9740 = vmax.f32 %v9739, %v8543
        %v9741 = vmax.f32 %v9740, %v8551
        %v9742 = vmax.f32 %v9741, %v8559
        %v9743 = vmax.f32 %v9742, %v8567
        %v9744 = vmax.f32 %v9743, %v8575
        %v9745 = vmax.f32 %v9744, %v8583
        %v9746 = vmax.f32 %v9745, %v8591
        %v9747 = vmax.f32 %v9746, %v8599
        %v9748 = vmax.f32 %v9747, %v8607
        %v9749 = vmax.f32 %v9748, %v8615
        %v9750 = vmax.f32 %v9749, %v8623
        %v9751 = vmax.f32 %v9750, %v8631
        %v9752 = vmax.f32 %v9751, %v8639
        %v9753 = vmax.f32 %v9752, %v8647
        %v9754 = vmax.f32 %v9753, %v8655
        %v9755 = vmax.f32 %v9754, %v8663
        %v9756 = vmax.f32 %v9755, %v8671
        %v9757 = vmax.f32 %v9756, %v8679
        %v9758 = vmax.f32 %v9757, %v8687
        %v9759 = vmax.f32 %v9758, %v8695
        %v9760 = vmax.f32 %v9759, %v8703
        %v9761 = vmax.f32 %v9760, %v8711
        %v9762 = vmax.f32 %v9761, %v8719
        %v9763 = vmax.f32 %v9762, %v8727
        %v9764 = vmax.f32 %v9763, %v8735
        %v9765 = vmax.f32 %v9764, %v8743
        %v9766 = vmax.f32 %v9765, %v8751
        %v9767 = vmax.f32 %v9766, %v8759
        %v9768 = vmax.f32 %v9767, %v8767
        %v9769 = vmax.f32 %v9768, %v8775
        %v9770 = vmax.f32 %v9769, %v8783
        %v9771 = vrot.slane %v9770, 4
        %v9772 = vmax.f32 %v9770, %v9771
        %v9773 = vrot.slane %v9772, 2
        %v9774 = vmax.f32 %v9772, %v9773
        %v9775 = vrot.slane %v9774, 1
        %v9776 = vmax.f32 %v9774, %v9775
        %v9777 = vmax.f32 %v7512, %v7520
        %v9778 = vmax.f32 %v9777, %v7528
        %v9779 = vmax.f32 %v9778, %v7536
        %v9780 = vmax.f32 %v9779, %v7544
        %v9781 = vmax.f32 %v9780, %v7552
        %v9782 = vmax.f32 %v9781, %v7560
        %v9783 = vmax.f32 %v9782, %v7568
        %v9784 = vmax.f32 %v9783, %v7576
        %v9785 = vmax.f32 %v9784, %v7584
        %v9786 = vmax.f32 %v9785, %v7592
        %v9787 = vmax.f32 %v9786, %v7600
        %v9788 = vmax.f32 %v9787, %v7608
        %v9789 = vmax.f32 %v9788, %v7616
        %v9790 = vmax.f32 %v9789, %v7624
        %v9791 = vmax.f32 %v9790, %v7632
        %v9792 = vmax.f32 %v9791, %v7640
        %v9793 = vmax.f32 %v9792, %v7648
        %v9794 = vmax.f32 %v9793, %v7656
        %v9795 = vmax.f32 %v9794, %v7664
        %v9796 = vmax.f32 %v9795, %v7672
        %v9797 = vmax.f32 %v9796, %v7680
        %v9798 = vmax.f32 %v9797, %v7688
        %v9799 = vmax.f32 %v9798, %v7696
        %v9800 = vmax.f32 %v9799, %v7704
        %v9801 = vmax.f32 %v9800, %v7712
        %v9802 = vmax.f32 %v9801, %v7720
        %v9803 = vmax.f32 %v9802, %v7728
        %v9804 = vmax.f32 %v9803, %v7736
        %v9805 = vmax.f32 %v9804, %v7744
        %v9806 = vmax.f32 %v9805, %v7752
        %v9807 = vmax.f32 %v9806, %v7760
        %v9808 = vmax.f32 %v9807, %v7768
        %v9809 = vmax.f32 %v9808, %v7776
        %v9810 = vmax.f32 %v9809, %v7784
        %v9811 = vmax.f32 %v9810, %v7792
        %v9812 = vmax.f32 %v9811, %v7800
        %v9813 = vmax.f32 %v9812, %v7808
        %v9814 = vmax.f32 %v9813, %v7816
        %v9815 = vmax.f32 %v9814, %v7824
        %v9816 = vmax.f32 %v9815, %v7832
        %v9817 = vmax.f32 %v9816, %v7840
        %v9818 = vmax.f32 %v9817, %v7848
        %v9819 = vmax.f32 %v9818, %v7856
        %v9820 = vmax.f32 %v9819, %v7864
        %v9821 = vmax.f32 %v9820, %v7872
        %v9822 = vmax.f32 %v9821, %v7880
        %v9823 = vmax.f32 %v9822, %v7888
        %v9824 = vmax.f32 %v9823, %v7896
        %v9825 = vmax.f32 %v9824, %v7904
        %v9826 = vmax.f32 %v9825, %v7912
        %v9827 = vmax.f32 %v9826, %v7920
        %v9828 = vmax.f32 %v9827, %v7928
        %v9829 = vmax.f32 %v9828, %v7936
        %v9830 = vmax.f32 %v9829, %v7944
        %v9831 = vmax.f32 %v9830, %v7952
        %v9832 = vmax.f32 %v9831, %v7960
        %v9833 = vmax.f32 %v9832, %v7968
        %v9834 = vmax.f32 %v9833, %v7976
        %v9835 = vmax.f32 %v9834, %v7984
        %v9836 = vmax.f32 %v9835, %v7992
        %v9837 = vmax.f32 %v9836, %v8000
        %v9838 = vmax.f32 %v9837, %v8008
        %v9839 = vmax.f32 %v9838, %v8016
        %v9840 = vmax.f32 %v9839, %v8024
        %v9841 = vmax.f32 %v9840, %v8032
        %v9842 = vmax.f32 %v9841, %v8040
        %v9843 = vmax.f32 %v9842, %v8048
        %v9844 = vmax.f32 %v9843, %v8056
        %v9845 = vmax.f32 %v9844, %v8064
        %v9846 = vmax.f32 %v9845, %v8072
        %v9847 = vmax.f32 %v9846, %v8080
        %v9848 = vmax.f32 %v9847, %v8088
        %v9849 = vmax.f32 %v9848, %v8096
        %v9850 = vmax.f32 %v9849, %v8104
        %v9851 = vmax.f32 %v9850, %v8112
        %v9852 = vmax.f32 %v9851, %v8120
        %v9853 = vmax.f32 %v9852, %v8128
        %v9854 = vmax.f32 %v9853, %v8136
        %v9855 = vmax.f32 %v9854, %v8144
        %v9856 = vmax.f32 %v9855, %v8152
        %v9857 = vmax.f32 %v9856, %v8160
        %v9858 = vmax.f32 %v9857, %v8168
        %v9859 = vmax.f32 %v9858, %v8176
        %v9860 = vmax.f32 %v9859, %v8184
        %v9861 = vmax.f32 %v9860, %v8192
        %v9862 = vmax.f32 %v9861, %v8200
        %v9863 = vmax.f32 %v9862, %v8208
        %v9864 = vmax.f32 %v9863, %v8216
        %v9865 = vmax.f32 %v9864, %v8224
        %v9866 = vmax.f32 %v9865, %v8232
        %v9867 = vmax.f32 %v9866, %v8240
        %v9868 = vmax.f32 %v9867, %v8248
        %v9869 = vmax.f32 %v9868, %v8256
        %v9870 = vmax.f32 %v9869, %v8264
        %v9871 = vmax.f32 %v9870, %v8272
        %v9872 = vmax.f32 %v9871, %v8280
        %v9873 = vmax.f32 %v9872, %v8288
        %v9874 = vmax.f32 %v9873, %v8296
        %v9875 = vmax.f32 %v9874, %v8304
        %v9876 = vmax.f32 %v9875, %v8312
        %v9877 = vmax.f32 %v9876, %v8320
        %v9878 = vmax.f32 %v9877, %v8328
        %v9879 = vmax.f32 %v9878, %v8336
        %v9880 = vmax.f32 %v9879, %v8344
        %v9881 = vmax.f32 %v9880, %v8352
        %v9882 = vmax.f32 %v9881, %v8360
        %v9883 = vmax.f32 %v9882, %v8368
        %v9884 = vmax.f32 %v9883, %v8376
        %v9885 = vmax.f32 %v9884, %v8384
        %v9886 = vmax.f32 %v9885, %v8392
        %v9887 = vmax.f32 %v9886, %v8400
        %v9888 = vmax.f32 %v9887, %v8408
        %v9889 = vmax.f32 %v9888, %v8416
        %v9890 = vmax.f32 %v9889, %v8424
        %v9891 = vmax.f32 %v9890, %v8432
        %v9892 = vmax.f32 %v9891, %v8440
        %v9893 = vmax.f32 %v9892, %v8448
        %v9894 = vmax.f32 %v9893, %v8456
        %v9895 = vmax.f32 %v9894, %v8464
        %v9896 = vmax.f32 %v9895, %v8472
        %v9897 = vmax.f32 %v9896, %v8480
        %v9898 = vmax.f32 %v9897, %v8488
        %v9899 = vmax.f32 %v9898, %v8496
        %v9900 = vmax.f32 %v9899, %v8504
        %v9901 = vmax.f32 %v9900, %v8512
        %v9902 = vmax.f32 %v9901, %v8520
        %v9903 = vmax.f32 %v9902, %v8528
        %v9904 = vmax.f32 %v9903, %v8536
        %v9905 = vmax.f32 %v9904, %v8544
        %v9906 = vmax.f32 %v9905, %v8552
        %v9907 = vmax.f32 %v9906, %v8560
        %v9908 = vmax.f32 %v9907, %v8568
        %v9909 = vmax.f32 %v9908, %v8576
        %v9910 = vmax.f32 %v9909, %v8584
        %v9911 = vmax.f32 %v9910, %v8592
        %v9912 = vmax.f32 %v9911, %v8600
        %v9913 = vmax.f32 %v9912, %v8608
        %v9914 = vmax.f32 %v9913, %v8616
        %v9915 = vmax.f32 %v9914, %v8624
        %v9916 = vmax.f32 %v9915, %v8632
        %v9917 = vmax.f32 %v9916, %v8640
        %v9918 = vmax.f32 %v9917, %v8648
        %v9919 = vmax.f32 %v9918, %v8656
        %v9920 = vmax.f32 %v9919, %v8664
        %v9921 = vmax.f32 %v9920, %v8672
        %v9922 = vmax.f32 %v9921, %v8680
        %v9923 = vmax.f32 %v9922, %v8688
        %v9924 = vmax.f32 %v9923, %v8696
        %v9925 = vmax.f32 %v9924, %v8704
        %v9926 = vmax.f32 %v9925, %v8712
        %v9927 = vmax.f32 %v9926, %v8720
        %v9928 = vmax.f32 %v9927, %v8728
        %v9929 = vmax.f32 %v9928, %v8736
        %v9930 = vmax.f32 %v9929, %v8744
        %v9931 = vmax.f32 %v9930, %v8752
        %v9932 = vmax.f32 %v9931, %v8760
        %v9933 = vmax.f32 %v9932, %v8768
        %v9934 = vmax.f32 %v9933, %v8776
        %v9935 = vmax.f32 %v9934, %v8784
        %v9936 = vrot.slane %v9935, 4
        %v9937 = vmax.f32 %v9935, %v9936
        %v9938 = vrot.slane %v9937, 2
        %v9939 = vmax.f32 %v9937, %v9938
        %v9940 = vrot.slane %v9939, 1
        %v9941 = vmax.f32 %v9939, %v9940
        %v9942 = vmax.f32 %v7513, %v7521
        %v9943 = vmax.f32 %v9942, %v7529
        %v9944 = vmax.f32 %v9943, %v7537
        %v9945 = vmax.f32 %v9944, %v7545
        %v9946 = vmax.f32 %v9945, %v7553
        %v9947 = vmax.f32 %v9946, %v7561
        %v9948 = vmax.f32 %v9947, %v7569
        %v9949 = vmax.f32 %v9948, %v7577
        %v9950 = vmax.f32 %v9949, %v7585
        %v9951 = vmax.f32 %v9950, %v7593
        %v9952 = vmax.f32 %v9951, %v7601
        %v9953 = vmax.f32 %v9952, %v7609
        %v9954 = vmax.f32 %v9953, %v7617
        %v9955 = vmax.f32 %v9954, %v7625
        %v9956 = vmax.f32 %v9955, %v7633
        %v9957 = vmax.f32 %v9956, %v7641
        %v9958 = vmax.f32 %v9957, %v7649
        %v9959 = vmax.f32 %v9958, %v7657
        %v9960 = vmax.f32 %v9959, %v7665
        %v9961 = vmax.f32 %v9960, %v7673
        %v9962 = vmax.f32 %v9961, %v7681
        %v9963 = vmax.f32 %v9962, %v7689
        %v9964 = vmax.f32 %v9963, %v7697
        %v9965 = vmax.f32 %v9964, %v7705
        %v9966 = vmax.f32 %v9965, %v7713
        %v9967 = vmax.f32 %v9966, %v7721
        %v9968 = vmax.f32 %v9967, %v7729
        %v9969 = vmax.f32 %v9968, %v7737
        %v9970 = vmax.f32 %v9969, %v7745
        %v9971 = vmax.f32 %v9970, %v7753
        %v9972 = vmax.f32 %v9971, %v7761
        %v9973 = vmax.f32 %v9972, %v7769
        %v9974 = vmax.f32 %v9973, %v7777
        %v9975 = vmax.f32 %v9974, %v7785
        %v9976 = vmax.f32 %v9975, %v7793
        %v9977 = vmax.f32 %v9976, %v7801
        %v9978 = vmax.f32 %v9977, %v7809
        %v9979 = vmax.f32 %v9978, %v7817
        %v9980 = vmax.f32 %v9979, %v7825
        %v9981 = vmax.f32 %v9980, %v7833
        %v9982 = vmax.f32 %v9981, %v7841
        %v9983 = vmax.f32 %v9982, %v7849
        %v9984 = vmax.f32 %v9983, %v7857
        %v9985 = vmax.f32 %v9984, %v7865
        %v9986 = vmax.f32 %v9985, %v7873
        %v9987 = vmax.f32 %v9986, %v7881
        %v9988 = vmax.f32 %v9987, %v7889
        %v9989 = vmax.f32 %v9988, %v7897
        %v9990 = vmax.f32 %v9989, %v7905
        %v9991 = vmax.f32 %v9990, %v7913
        %v9992 = vmax.f32 %v9991, %v7921
        %v9993 = vmax.f32 %v9992, %v7929
        %v9994 = vmax.f32 %v9993, %v7937
        %v9995 = vmax.f32 %v9994, %v7945
        %v9996 = vmax.f32 %v9995, %v7953
        %v9997 = vmax.f32 %v9996, %v7961
        %v9998 = vmax.f32 %v9997, %v7969
        %v9999 = vmax.f32 %v9998, %v7977
        %v10000 = vmax.f32 %v9999, %v7985
        %v10001 = vmax.f32 %v10000, %v7993
        %v10002 = vmax.f32 %v10001, %v8001
        %v10003 = vmax.f32 %v10002, %v8009
        %v10004 = vmax.f32 %v10003, %v8017
        %v10005 = vmax.f32 %v10004, %v8025
        %v10006 = vmax.f32 %v10005, %v8033
        %v10007 = vmax.f32 %v10006, %v8041
        %v10008 = vmax.f32 %v10007, %v8049
        %v10009 = vmax.f32 %v10008, %v8057
        %v10010 = vmax.f32 %v10009, %v8065
        %v10011 = vmax.f32 %v10010, %v8073
        %v10012 = vmax.f32 %v10011, %v8081
        %v10013 = vmax.f32 %v10012, %v8089
        %v10014 = vmax.f32 %v10013, %v8097
        %v10015 = vmax.f32 %v10014, %v8105
        %v10016 = vmax.f32 %v10015, %v8113
        %v10017 = vmax.f32 %v10016, %v8121
        %v10018 = vmax.f32 %v10017, %v8129
        %v10019 = vmax.f32 %v10018, %v8137
        %v10020 = vmax.f32 %v10019, %v8145
        %v10021 = vmax.f32 %v10020, %v8153
        %v10022 = vmax.f32 %v10021, %v8161
        %v10023 = vmax.f32 %v10022, %v8169
        %v10024 = vmax.f32 %v10023, %v8177
        %v10025 = vmax.f32 %v10024, %v8185
        %v10026 = vmax.f32 %v10025, %v8193
        %v10027 = vmax.f32 %v10026, %v8201
        %v10028 = vmax.f32 %v10027, %v8209
        %v10029 = vmax.f32 %v10028, %v8217
        %v10030 = vmax.f32 %v10029, %v8225
        %v10031 = vmax.f32 %v10030, %v8233
        %v10032 = vmax.f32 %v10031, %v8241
        %v10033 = vmax.f32 %v10032, %v8249
        %v10034 = vmax.f32 %v10033, %v8257
        %v10035 = vmax.f32 %v10034, %v8265
        %v10036 = vmax.f32 %v10035, %v8273
        %v10037 = vmax.f32 %v10036, %v8281
        %v10038 = vmax.f32 %v10037, %v8289
        %v10039 = vmax.f32 %v10038, %v8297
        %v10040 = vmax.f32 %v10039, %v8305
        %v10041 = vmax.f32 %v10040, %v8313
        %v10042 = vmax.f32 %v10041, %v8321
        %v10043 = vmax.f32 %v10042, %v8329
        %v10044 = vmax.f32 %v10043, %v8337
        %v10045 = vmax.f32 %v10044, %v8345
        %v10046 = vmax.f32 %v10045, %v8353
        %v10047 = vmax.f32 %v10046, %v8361
        %v10048 = vmax.f32 %v10047, %v8369
        %v10049 = vmax.f32 %v10048, %v8377
        %v10050 = vmax.f32 %v10049, %v8385
        %v10051 = vmax.f32 %v10050, %v8393
        %v10052 = vmax.f32 %v10051, %v8401
        %v10053 = vmax.f32 %v10052, %v8409
        %v10054 = vmax.f32 %v10053, %v8417
        %v10055 = vmax.f32 %v10054, %v8425
        %v10056 = vmax.f32 %v10055, %v8433
        %v10057 = vmax.f32 %v10056, %v8441
        %v10058 = vmax.f32 %v10057, %v8449
        %v10059 = vmax.f32 %v10058, %v8457
        %v10060 = vmax.f32 %v10059, %v8465
        %v10061 = vmax.f32 %v10060, %v8473
        %v10062 = vmax.f32 %v10061, %v8481
        %v10063 = vmax.f32 %v10062, %v8489
        %v10064 = vmax.f32 %v10063, %v8497
        %v10065 = vmax.f32 %v10064, %v8505
        %v10066 = vmax.f32 %v10065, %v8513
        %v10067 = vmax.f32 %v10066, %v8521
        %v10068 = vmax.f32 %v10067, %v8529
        %v10069 = vmax.f32 %v10068, %v8537
        %v10070 = vmax.f32 %v10069, %v8545
        %v10071 = vmax.f32 %v10070, %v8553
        %v10072 = vmax.f32 %v10071, %v8561
        %v10073 = vmax.f32 %v10072, %v8569
        %v10074 = vmax.f32 %v10073, %v8577
        %v10075 = vmax.f32 %v10074, %v8585
        %v10076 = vmax.f32 %v10075, %v8593
        %v10077 = vmax.f32 %v10076, %v8601
        %v10078 = vmax.f32 %v10077, %v8609
        %v10079 = vmax.f32 %v10078, %v8617
        %v10080 = vmax.f32 %v10079, %v8625
        %v10081 = vmax.f32 %v10080, %v8633
        %v10082 = vmax.f32 %v10081, %v8641
        %v10083 = vmax.f32 %v10082, %v8649
        %v10084 = vmax.f32 %v10083, %v8657
        %v10085 = vmax.f32 %v10084, %v8665
        %v10086 = vmax.f32 %v10085, %v8673
        %v10087 = vmax.f32 %v10086, %v8681
        %v10088 = vmax.f32 %v10087, %v8689
        %v10089 = vmax.f32 %v10088, %v8697
        %v10090 = vmax.f32 %v10089, %v8705
        %v10091 = vmax.f32 %v10090, %v8713
        %v10092 = vmax.f32 %v10091, %v8721
        %v10093 = vmax.f32 %v10092, %v8729
        %v10094 = vmax.f32 %v10093, %v8737
        %v10095 = vmax.f32 %v10094, %v8745
        %v10096 = vmax.f32 %v10095, %v8753
        %v10097 = vmax.f32 %v10096, %v8761
        %v10098 = vmax.f32 %v10097, %v8769
        %v10099 = vmax.f32 %v10098, %v8777
        %v10100 = vmax.f32 %v10099, %v8785
        %v10101 = vrot.slane %v10100, 4
        %v10102 = vmax.f32 %v10100, %v10101
        %v10103 = vrot.slane %v10102, 2
        %v10104 = vmax.f32 %v10102, %v10103
        %v10105 = vrot.slane %v10104, 1
        %v10106 = vmax.f32 %v10104, %v10105
        %v10115 = vcombine.low %v8951, %v9116
        %v10116 = vcombine.low %v9281, %v9446
        %v10117 = vcombine.low %v9611, %v9776
        %v10118 = vcombine.low %v9941, %v10106
        %v10120 = vunpack.c.l.s4 1966171168
        %v10121 = vunpack.c.0.s8 %v10120
        %v10122 = vlaneseq
        %v10123 = vshrl.u32 %v10122, 7
        %v10124 = vsub.s32 %v10121, %v10123
        %v10125 = vrot.slane %v10115, %v10124
        %v10127 = vunpack.c.l.s4 1966171168
        %v10128 = vunpack.c.0.s8 %v10127
        %v10129 = vlaneseq
        %v10130 = vshrl.u32 %v10129, 7
        %v10131 = vsub.s32 %v10128, %v10130
        %v10132 = vrot.slane %v10116, %v10131
        %v10134 = vunpack.c.l.s4 1966171168
        %v10135 = vunpack.c.0.s8 %v10134
        %v10136 = vlaneseq
        %v10137 = vshrl.u32 %v10136, 7
        %v10138 = vsub.s32 %v10135, %v10137
        %v10139 = vrot.slane %v10117, %v10138
        %v10141 = vunpack.c.l.s4 1966171168
        %v10142 = vunpack.c.0.s8 %v10141
        %v10143 = vlaneseq
        %v10144 = vshrl.u32 %v10143, 7
        %v10145 = vsub.s32 %v10142, %v10144
        %v10146 = vrot.slane %v10118, %v10145
        %v10147 = vcombine.low %v10125, %v10132
        %v10148 = vcombine.low %v10139, %v10146
        %v10150 = vunpack.c.l.s4 1966171168
        %v10151 = vunpack.c.0.s8 %v10150
        %v10152 = vlaneseq
        %v10153 = vshrl.u32 %v10152, 7
        %v10154 = vsub.s32 %v10151, %v10153
        %v10155 = vrot.slane %v10147, %v10154
        %v10157 = vunpack.c.l.s4 1966171168
        %v10158 = vunpack.c.0.s8 %v10157
        %v10159 = vlaneseq
        %v10160 = vshrl.u32 %v10159, 7
        %v10161 = vsub.s32 %v10158, %v10160
        %v10162 = vrot.slane %v10148, %v10161
        %v10163 = vcombine.low %v10155, %v10162
        %v10165 = vmax.f32 %v8786, %v10163
        %10166 = vst [vmem:[%s356] sm:$0xff] %v10165
        // Predicated region
        $region69: #{tpu_custom_call.1} parent=47 // pred_check
          %p10167 = pneg %p359
        $region70: #{tpu_custom_call.1} parent=47 // pred_check_branch
          %10169 = sbr.rel (%p10167) target = $region72
        $region71: #{tpu_custom_call.1} parent=47 // pred_region
          %v10170 = vld [vmem:[%s356] sm:$0xff]
          %v10171 = vld [vmem:[%s6] sm:$0xff]
          %v10172 = vadd.f32 %v10170, %v10171
          %v10173 = vmax.f32 %v10172, 0.0
          %10174 = vst [vmem:[%s356] sm:$0xff] %v10173
        $region72: #{tpu_custom_call.1} parent=47 // pred_fallthru
          _
        %s10175 = sand.u32 %s200, 1
        %s10176 = scalar_lea.sflag [#allocation4], %s10175
        %s10177 = sand.u32 %s200, 1
        %s10178 = smul.addr %s10177, 8
        %s10179 = scalar_lea.vmem [#allocation10], %s10178
        // Predicated region
        $region73: #{tpu_custom_call.1} parent=47 // pred_check
          %p10180 = pneg %p210
        $region74: #{tpu_custom_call.1} parent=47 // pred_check_branch
          %10182 = sbr.rel (%p10180) target = $region76
        $region75: #{tpu_custom_call.1} parent=47 // pred_region
          %s10184 = ssub.s32 128, 128
          %10185 = vsyncadd %s10176, %s10184
          %s10186 = smul.addr %s30, 8
          %s10187 = smul.addr %s10186, 16
          %s10188 = scalar_lea.hbm %s7, %s10187
          %s10190 = sshll.u32 %s10179, 4
          %s10191 = int_to_ptr.vmem [resolvable:$true] %s10190
          %10193 = dma.vmem_to_hbm [thread:$0]  %s10191, 128, %s10188, %s10176
        $region76: #{tpu_custom_call.1} parent=47 // pred_fallthru
          _
      $region48: #{tpu_custom_call.1} parent=5 // pred_fallthru
        _
      %p10194 = scmp.le.s32.totalorder 2, %s21
      // Predicated region
      $region77: #{tpu_custom_call.1} parent=5 // pred_check
        %p10195 = pneg %p10194
      $region78: #{tpu_custom_call.1} parent=5 // pred_check_branch
        %10197 = sbr.rel (%p10195) target = $region80
      $region79: #{tpu_custom_call.1} parent=5 // pred_region
        %s10198 = ssub.s32 %s21, 2
        // Predicated region
        $region81: #{tpu_custom_call.1} parent=79 // pred_check
          %p10199 = pneg %p216
        $region82: #{tpu_custom_call.1} parent=79 // pred_check_branch
          %10201 = sbr.rel (%p10199) target = $region84
        $region83: #{tpu_custom_call.1} parent=79 // pred_region
          %s10202 = sand.u32 %s201, 1
          %s10203 = scalar_lea.sflag [#allocation4], %s10202
          %s10204 = sand.u32 %s201, 1
          %s10205 = smul.addr %s10204, 8
          %s10206 = scalar_lea.vmem [#allocation10], %s10205
          %10207 = dma.done %s10203, 128
        $region84: #{tpu_custom_call.1} parent=79 // pred_fallthru
          _
      $region80: #{tpu_custom_call.1} parent=5 // pred_fallthru
        _
    $region6: #{tpu_custom_call.1} parent=1 // loop_footer
      %s25 = sadd.s32 1, %s21
    $region7: #{tpu_custom_call.1} parent=1 // loop_footer_branch
      %20 = sbr.rel target = $region3
    $region8: #{tpu_custom_call.1} parent=1 // loop_exit
      _
    %10208 = vsyncpa [#allocation3], 1
    %s10209 = scalar_lea.sflag [#allocation3], 1
    %10210 = vsyncpa %s10209, 1
    %10211 = vsyncpa [#allocation6], 1
    %10212 = vsyncpa [#allocation9], 1
    %10213 = vsyncpa [#allocation4], 1
    %s10214 = scalar_lea.sflag [#allocation4], 1
    %10215 = vsyncpa %s10214, 1

</llo_original>
